<compile_context>
chip_gen: v5e
topology: v5e:2x2
jax: 0.10.0
libtpu: 0.0.40
codegen_flags: <defaults>
</compile_context>

<pallas_src>
import functools

import jax
import jax.numpy as jnp
from jax.experimental import pallas as pl
from jax.experimental.pallas import tpu as pltpu

BN_EPS = 1e-5
VMEM_LIMIT = 32 * 1024 * 1024


def _round_up(v, m):
    return (v + m - 1) // m * m


# -----------------------------------------------------------------------------
# Kernels
# -----------------------------------------------------------------------------
def _conv_bn_relu_kernel(p_ref, w_ref, gamma_ref, beta_ref, o_ref):
    """patches (R, K) @ w (K, N) -> training-mode BN (single pass) -> ReLU."""
    acc = jnp.dot(p_ref[...], w_ref[...], preferred_element_type=jnp.float32)
    n = acc.shape[0]
    mean = jnp.sum(acc, axis=0, keepdims=True) * (1.0 / n)
    msq = jnp.sum(acc * acc, axis=0, keepdims=True) * (1.0 / n)
    var = jnp.maximum(msq - mean * mean, 0.0)
    acc = (acc - mean) * jax.lax.rsqrt(var + BN_EPS) * gamma_ref[...] + beta_ref[...]
    o_ref[...] = jnp.maximum(acc, 0.0)


def _head_kernel(p_ref, w4_ref, g4_ref, b4_ref, w5_ref, bias5_ref, o_ref, *, batch):
    """cnn4 + BN4 + ReLU + pool4(2x2,s1 over a 2x2 map) + cnn5 + bias + ReLU."""
    acc = jnp.dot(p_ref[...], w4_ref[...], preferred_element_type=jnp.float32)  # (B*4, 640)
    n = acc.shape[0]
    mean = jnp.sum(acc, axis=0, keepdims=True) * (1.0 / n)
    msq = jnp.sum(acc * acc, axis=0, keepdims=True) * (1.0 / n)
    var = jnp.maximum(msq - mean * mean, 0.0)
    acc = (acc - mean) * jax.lax.rsqrt(var + BN_EPS) * g4_ref[...] + b4_ref[...]
    acc = jnp.maximum(acc, 0.0)

    rp = n // batch  # rows (spatial positions) per image == 4 for 32x32 inputs
    pooled = jnp.concatenate(
        [jnp.max(acc[b * rp:(b + 1) * rp], axis=0, keepdims=True) for b in range(batch)],
        axis=0)                                                         # (B, 640)
    out = jnp.dot(pooled, w5_ref[...], preferred_element_type=jnp.float32) + bias5_ref[...]
    o_ref[...] = jnp.maximum(out, 0.0)


# -----------------------------------------------------------------------------
# Layer wrappers (lane-dense padding, im2col glue, pallas_call plumbing)
# -----------------------------------------------------------------------------
def _im2col(x, k):
    """x: (G, B, H, W, C) -> patches (G, B*Ho*Wo, k*k*C); column order (dy,dx,c)."""
    G, B, H, W, C = x.shape
    Ho, Wo = H - k + 1, W - k + 1
    cols = [x[:, :, dy:dy + Ho, dx:dx + Wo, :] for dy in range(k) for dx in range(k)]
    p = cols[0] if len(cols) == 1 else jnp.concatenate(cols, axis=-1)
    return p.reshape(G, B * Ho * Wo, k * k * C), (B, Ho, Wo)


def conv_bn_relu_layer(x, w, gamma, beta):
    """relu(bn(conv(x))) for one stage; both branches via a parallel grid axis."""
    G, _, _, _, Cact = x.shape
    k, _, cin, cout = w.shape
    cout_pad = _round_up(cout, 128)

    patches, (B, Ho, Wo) = _im2col(x, k)
    R = B * Ho * Wo
    K = k * k * Cact
    K_pad = _round_up(K, 128)
    if K_pad != K:
        patches = jnp.pad(patches, ((0, 0), (0, 0), (0, K_pad - K)))

    # pad weight cin up to the activation's (padded) channel count, cout to 128x.
    w2 = jnp.pad(w, ((0, 0), (0, 0), (0, Cact - cin), (0, cout_pad - cout)))
    w2 = w2.reshape(K, cout_pad)
    if K_pad != K:
        w2 = jnp.pad(w2, ((0, K_pad - K), (0, 0)))

    scale = jnp.pad(gamma, (0, cout_pad - cout), constant_values=1.0).reshape(1, cout_pad)
    shift = jnp.pad(beta, (0, cout_pad - cout)).reshape(1, cout_pad)

    out = pl.pallas_call(
        _conv_bn_relu_kernel,
        grid=(G,),
        in_specs=[
            pl.BlockSpec((None, R, K_pad), lambda g: (g, 0, 0)),
            pl.BlockSpec((K_pad, cout_pad), lambda g: (0, 0)),
            pl.BlockSpec((1, cout_pad), lambda g: (0, 0)),
            pl.BlockSpec((1, cout_pad), lambda g: (0, 0)),
        ],
        out_specs=pl.BlockSpec((None, R, cout_pad), lambda g: (g, 0, 0)),
        out_shape=jax.ShapeDtypeStruct((G, R, cout_pad), jnp.float32),
        compiler_params=pltpu.CompilerParams(
            dimension_semantics=("parallel",),
            vmem_limit_bytes=VMEM_LIMIT),
        cost_estimate=pl.CostEstimate(
            flops=2 * G * R * K_pad * cout_pad,
            transcendentals=0,
            bytes_accessed=4 * (G * R * K_pad + K_pad * cout_pad + G * R * cout_pad)),
    )(patches, w2, scale, shift)
    return out.reshape(G, B, Ho, Wo, cout_pad)


def head_layer(x, w4, gamma4, beta4, w5, bias5):
    """cnn4 + bn4 + relu + pool4 + cnn5 + bias + relu, fully fused per branch."""
    G, B, H, W, Cact = x.shape
    k = 3
    Ho, Wo = H - k + 1, W - k + 1
    assert (Ho, Wo) == (2, 2), "head path assumes the 32x32-input geometry"
    cin4, cout4 = w4.shape[2], w4.shape[3]
    cin5, cout5 = w5.shape[2], w5.shape[3]
    c4_pad = _round_up(cout4, 128)   # 640
    c5_pad = _round_up(cout5, 128)   # 128

    patches, _ = _im2col(x, k)                          # (G, B*4, 9*Cact)
    R = B * Ho * Wo
    K = k * k * Cact

    w4p = jnp.pad(w4, ((0, 0), (0, 0), (0, Cact - cin4), (0, c4_pad - cout4)))
    w4p = w4p.reshape(K, c4_pad)
    g4 = jnp.pad(gamma4, (0, c4_pad - cout4), constant_values=1.0).reshape(1, c4_pad)
    b4 = jnp.pad(beta4, (0, c4_pad - cout4)).reshape(1, c4_pad)
    w5p = jnp.pad(w5, ((0, 0), (0, 0), (0, c4_pad - cin5), (0, c5_pad - cout5)))
    w5p = w5p.reshape(c4_pad, c5_pad)
    b5 = jnp.pad(bias5, (0, c5_pad - cout5)).reshape(1, c5_pad)

    out = pl.pallas_call(
        functools.partial(_head_kernel, batch=B),
        grid=(G,),
        in_specs=[
            pl.BlockSpec((None, R, K), lambda g: (g, 0, 0)),
            pl.BlockSpec((K, c4_pad), lambda g: (0, 0)),
            pl.BlockSpec((1, c4_pad), lambda g: (0, 0)),
            pl.BlockSpec((1, c4_pad), lambda g: (0, 0)),
            pl.BlockSpec((c4_pad, c5_pad), lambda g: (0, 0)),
            pl.BlockSpec((1, c5_pad), lambda g: (0, 0)),
        ],
        out_specs=pl.BlockSpec((None, B, c5_pad), lambda g: (g, 0, 0)),
        out_shape=jax.ShapeDtypeStruct((G, B, c5_pad), jnp.float32),
        compiler_params=pltpu.CompilerParams(
            dimension_semantics=("parallel",),
            vmem_limit_bytes=VMEM_LIMIT),
        cost_estimate=pl.CostEstimate(
            flops=2 * G * (R * K * c4_pad + B * c4_pad * c5_pad),
            transcendentals=0,
            bytes_accessed=4 * (G * R * K + K * c4_pad + c4_pad * c5_pad + G * B * c5_pad)),
    )(patches, w4p, g4, b4, w5p, b5)
    return out                                           # (G, B, c5_pad)


def maxpool(x, stride):
    """nn.MaxPool2d(2, stride), floor mode, on (G, B, H, W, C).  Pure XLA glue
    that fuses with the next layer's im2col (no Pallas launch, no HBM copies)."""
    G, B, H, W, C = x.shape
    Ho = (H - 2) // stride + 1
    Wo = (W - 2) // stride + 1
    parts = [x[:, :, dy:dy + stride * (Ho - 1) + 1:stride,
                     dx:dx + stride * (Wo - 1) + 1:stride, :]
             for dy in range(2) for dx in range(2)]
    return jnp.maximum(jnp.maximum(parts[0], parts[1]),
                       jnp.maximum(parts[2], parts[3]))


# -----------------------------------------------------------------------------
# Parameters (deterministic, PyTorch-default-style uniform init)
# -----------------------------------------------------------------------------
def init_params(key):
    def conv_init(k_, ks, cin, cout):
        kw, kb = jax.random.split(k_)
        bound = 1.0 / (cin * ks * ks) ** 0.5
        w = jax.random.uniform(kw, (ks, ks, cin, cout), jnp.float32, -bound, bound)
        b = jax.random.uniform(kb, (cout,), jnp.float32, -bound, bound)
        return w, b

    cfg = [("cnn1", 5, 1, 5), ("cnn2", 3, 5, 25), ("cnn3", 3, 25, 125),
           ("cnn4", 3, 125, 625), ("cnn5", 1, 625, 125)]
    keys = jax.random.split(key, len(cfg))
    # Biases for cnn1-4 are generated for parity with the torch module but are
    # never used: training-mode BN mean-subtraction cancels them exactly.
    params = {name: conv_init(k_, ks, cin, cout)
              for k_, (name, ks, cin, cout) in zip(keys, cfg)}
    for name, c in [("bn1", 5), ("bn2", 25), ("bn3", 125), ("bn4", 625)]:
        params[name] = (jnp.ones((c,), jnp.float32), jnp.zeros((c,), jnp.float32))
    return params


# -----------------------------------------------------------------------------
# Forward pass
# -----------------------------------------------------------------------------
@jax.jit
def siamese_forward(params, input1, input2):
    # Stack the two branches on a leading axis -> becomes the parallel grid axis.
    x = jnp.stack([input1, input2], axis=0).astype(jnp.float32)   # (2, B, 1, H, W)
    x = jnp.transpose(x, (0, 1, 3, 4, 2))                         # (2, B, H, W, 1)

    w1, _ = params["cnn1"]; g1, bt1 = params["bn1"]
    x = conv_bn_relu_layer(x, w1, g1, bt1)     # (2, B, 28, 28, 128)
    x = maxpool(x, 2)                          # (2, B, 14, 14, 128)

    w2, _ = params["cnn2"]; g2, bt2 = params["bn2"]
    x = conv_bn_relu_layer(x, w2, g2, bt2)     # (2, B, 12, 12, 128)
    x = maxpool(x, 1)                          # (2, B, 11, 11, 128)

    w3, _ = params["cnn3"]; g3, bt3 = params["bn3"]
    x = conv_bn_relu_layer(x, w3, g3, bt3)     # (2, B, 9, 9, 128)
    x = maxpool(x, 2)                          # (2, B, 4, 4, 128)

    w4, _ = params["cnn4"]; g4, bt4 = params["bn4"]
    w5, b5 = params["cnn5"]
    x = head_layer(x, w4, g4, bt4, w5, b5)     # (2, B, 128)

    out = x[..., :125]                         # drop lane padding -> (2, B, 125)
    return out[0], out[1]                      # matches out.view(-1, 125) per branch


if __name__ == "__main__":
    key = jax.random.PRNGKey(0)
    kp, k1, k2 = jax.random.split(key, 3)
    params = init_params(kp)

    # Smallest spatial size that survives the conv/pool stack is 32x32.
    x1 = jax.random.normal(k1, (2, 1, 32, 32), jnp.float32)
    x2 = jax.random.normal(k2, (2, 1, 32, 32), jnp.float32)

    o1, o2 = siamese_forward(params, x1, x2)
    jax.block_until_ready((o1, o2))
    assert o1.shape == (2, 125) and o2.shape == (2, 125)
    assert bool(jnp.all(jnp.isfinite(o1))) and bool(jnp.all(jnp.isfinite(o2)))
    print("KERNEL_OK")
</pallas_src>

<mosaic_0001>
module attributes {stable_mosaic.version = 11 : i64} {
  func.func @_conv_bn_relu_kernel(%arg0: i32, %arg1: memref<1x1568x128xf32, #tpu.memory_space<vmem>>, %arg2: memref<128x128xf32, #tpu.memory_space<vmem>>, %arg3: memref<1x128xf32, #tpu.memory_space<vmem>>, %arg4: memref<1x128xf32, #tpu.memory_space<vmem>>, %arg5: memref<1x1568x128xf32, #tpu.memory_space<vmem>>) attributes {dimension_semantics = [#tpu.dimension_semantics<parallel>], iteration_bounds = array<i64: 2>, scalar_prefetch = 0 : i64, scratch_operands = 0 : i64, tpu.core_type = #tpu.core_type<tc>, window_params = [{transform_indices = @transform_0, window_bounds = array<i64: 1, 1568, 128>}, {pipeline_mode = #tpu.pipeline_mode<synchronous>, transform_indices = @transform_1, window_bounds = array<i64: 128, 128>}, {pipeline_mode = #tpu.pipeline_mode<synchronous>, transform_indices = @transform_2, window_bounds = array<i64: 1, 128>}, {pipeline_mode = #tpu.pipeline_mode<synchronous>, transform_indices = @transform_3, window_bounds = array<i64: 1, 128>}, {transform_indices = @transform_4, window_bounds = array<i64: 1, 1568, 128>}]} {
    %c0 = arith.constant 0 : index
    %c0_0 = arith.constant 0 : index
    %c0_1 = arith.constant 0 : index
    %0 = vector.load %arg1[%c0, %c0_0, %c0_1] : memref<1x1568x128xf32, #tpu.memory_space<vmem>>, vector<1x1568x128xf32>
    %1 = vector.shape_cast %0 : vector<1x1568x128xf32> to vector<1568x128xf32>
    %c0_2 = arith.constant 0 : index
    %c0_3 = arith.constant 0 : index
    %2 = vector.load %arg2[%c0_2, %c0_3] : memref<128x128xf32, #tpu.memory_space<vmem>>, vector<128x128xf32>
    %cst = arith.constant dense<0.000000e+00> : vector<1568x128xf32>
    %3 = tpu.matmul %1, %2, %cst {dimension_numbers = #tpu.dot_dimension_numbers<[1], [0], [0], [1], [0, 0, 1, 1], [], []>} : vector<1568x128xf32>, vector<128x128xf32>, vector<1568x128xf32> -> vector<1568x128xf32>
    %cst_4 = arith.constant dense<0.000000e+00> : vector<128xf32>
    %4 = vector.multi_reduction <add>, %3, %cst_4 [0] : vector<1568x128xf32> to vector<128xf32>
    %5 = vector.shape_cast %4 : vector<128xf32> to vector<1x128xf32>
    %cst_5 = arith.constant 6.37755089E-4 : f32
    %6 = vector.broadcast %cst_5 : f32 to vector<1x128xf32>
    %7 = arith.mulf %5, %6 : vector<1x128xf32>
    %8 = arith.mulf %3, %3 : vector<1568x128xf32>
    %cst_6 = arith.constant dense<0.000000e+00> : vector<128xf32>
    %9 = vector.multi_reduction <add>, %8, %cst_6 [0] : vector<1568x128xf32> to vector<128xf32>
    %10 = vector.shape_cast %9 : vector<128xf32> to vector<1x128xf32>
    %cst_7 = arith.constant 6.37755089E-4 : f32
    %11 = vector.broadcast %cst_7 : f32 to vector<1x128xf32>
    %12 = arith.mulf %10, %11 : vector<1x128xf32>
    %13 = arith.mulf %7, %7 : vector<1x128xf32>
    %14 = arith.subf %12, %13 : vector<1x128xf32>
    %cst_8 = arith.constant 0.000000e+00 : f32
    %15 = vector.broadcast %cst_8 : f32 to vector<1x128xf32>
    %16 = arith.maximumf %14, %15 : vector<1x128xf32>
    %17 = vector.broadcast %7 : vector<1x128xf32> to vector<1568x128xf32>
    %18 = arith.subf %3, %17 : vector<1568x128xf32>
    %cst_9 = arith.constant 9.99999974E-6 : f32
    %19 = vector.broadcast %cst_9 : f32 to vector<1x128xf32>
    %20 = arith.addf %16, %19 : vector<1x128xf32>
    %21 = math.rsqrt %20 : vector<1x128xf32>
    %22 = vector.broadcast %21 : vector<1x128xf32> to vector<1568x128xf32>
    %23 = arith.mulf %18, %22 : vector<1568x128xf32>
    %c0_10 = arith.constant 0 : index
    %c0_11 = arith.constant 0 : index
    %24 = vector.load %arg3[%c0_10, %c0_11] : memref<1x128xf32, #tpu.memory_space<vmem>>, vector<1x128xf32>
    %25 = vector.broadcast %24 : vector<1x128xf32> to vector<1568x128xf32>
    %26 = arith.mulf %23, %25 : vector<1568x128xf32>
    %c0_12 = arith.constant 0 : index
    %c0_13 = arith.constant 0 : index
    %27 = vector.load %arg4[%c0_12, %c0_13] : memref<1x128xf32, #tpu.memory_space<vmem>>, vector<1x128xf32>
    %28 = vector.broadcast %27 : vector<1x128xf32> to vector<1568x128xf32>
    %29 = arith.addf %26, %28 : vector<1568x128xf32>
    %cst_14 = arith.constant 0.000000e+00 : f32
    %30 = vector.broadcast %cst_14 : f32 to vector<1568x128xf32>
    %31 = arith.maximumf %29, %30 : vector<1568x128xf32>
    %c0_15 = arith.constant 0 : index
    %c0_16 = arith.constant 0 : index
    %c0_17 = arith.constant 0 : index
    %32 = vector.load %arg5[%c0_15, %c0_16, %c0_17] : memref<1x1568x128xf32, #tpu.memory_space<vmem>>, vector<1x1568x128xf32>
    %33 = vector.shape_cast %32 : vector<1x1568x128xf32> to vector<1568x128xf32>
    %34 = vector.shape_cast %31 : vector<1568x128xf32> to vector<1x1568x128xf32>
    tpu.vector_store %arg5[%c0_15, %c0_16, %c0_17], %34 {strides = array<i32>} : memref<1x1568x128xf32, #tpu.memory_space<vmem>>, vector<1x1568x128xf32>,
    return
  }
  func.func @transform_0(%arg0: i32) -> (i32, i32, i32) {
    %c0_i32 = arith.constant 0 : i32
    %c0_i32_0 = arith.constant 0 : i32
    %c0_i32_1 = arith.constant 0 : i32
    return %arg0, %c0_i32, %c0_i32_0 : i32, i32, i32
  }
  func.func @transform_1(%arg0: i32) -> (i32, i32) {
    %c0_i32 = arith.constant 0 : i32
    %c0_i32_0 = arith.constant 0 : i32
    %c0_i32_1 = arith.constant 0 : i32
    return %c0_i32, %c0_i32_0 : i32, i32
  }
  func.func @transform_2(%arg0: i32) -> (i32, i32) {
    %c0_i32 = arith.constant 0 : i32
    %c0_i32_0 = arith.constant 0 : i32
    %c0_i32_1 = arith.constant 0 : i32
    return %c0_i32, %c0_i32_0 : i32, i32
  }
  func.func @transform_3(%arg0: i32) -> (i32, i32) {
    %c0_i32 = arith.constant 0 : i32
    %c0_i32_0 = arith.constant 0 : i32
    %c0_i32_1 = arith.constant 0 : i32
    return %c0_i32, %c0_i32_0 : i32, i32
  }
  func.func @transform_4(%arg0: i32) -> (i32, i32, i32) {
    %c0_i32 = arith.constant 0 : i32
    %c0_i32_0 = arith.constant 0 : i32
    %c0_i32_1 = arith.constant 0 : i32
    return %arg0, %c0_i32, %c0_i32_0 : i32, i32, i32
  }
}

module attributes {stable_mosaic.version = 11 : i64} {
  func.func @_conv_bn_relu_kernel(%arg0: i32, %arg1: memref<1x288x1152xf32, #tpu.memory_space<vmem>>, %arg2: memref<1152x128xf32, #tpu.memory_space<vmem>>, %arg3: memref<1x128xf32, #tpu.memory_space<vmem>>, %arg4: memref<1x128xf32, #tpu.memory_space<vmem>>, %arg5: memref<1x288x128xf32, #tpu.memory_space<vmem>>) attributes {dimension_semantics = [#tpu.dimension_semantics<parallel>], iteration_bounds = array<i64: 2>, scalar_prefetch = 0 : i64, scratch_operands = 0 : i64, tpu.core_type = #tpu.core_type<tc>, window_params = [{transform_indices = @transform_0, window_bounds = array<i64: 1, 288, 1152>}, {pipeline_mode = #tpu.pipeline_mode<synchronous>, transform_indices = @transform_1, window_bounds = array<i64: 1152, 128>}, {pipeline_mode = #tpu.pipeline_mode<synchronous>, transform_indices = @transform_2, window_bounds = array<i64: 1, 128>}, {pipeline_mode = #tpu.pipeline_mode<synchronous>, transform_indices = @transform_3, window_bounds = array<i64: 1, 128>}, {transform_indices = @transform_4, window_bounds = array<i64: 1, 288, 128>}]} {
    %c0 = arith.constant 0 : index
    %c0_0 = arith.constant 0 : index
    %c0_1 = arith.constant 0 : index
    %0 = vector.load %arg1[%c0, %c0_0, %c0_1] : memref<1x288x1152xf32, #tpu.memory_space<vmem>>, vector<1x288x1152xf32>
    %1 = vector.shape_cast %0 : vector<1x288x1152xf32> to vector<288x1152xf32>
    %c0_2 = arith.constant 0 : index
    %c0_3 = arith.constant 0 : index
    %2 = vector.load %arg2[%c0_2, %c0_3] : memref<1152x128xf32, #tpu.memory_space<vmem>>, vector<1152x128xf32>
    %cst = arith.constant dense<0.000000e+00> : vector<288x128xf32>
    %3 = tpu.matmul %1, %2, %cst {dimension_numbers = #tpu.dot_dimension_numbers<[1], [0], [0], [1], [0, 0, 1, 1], [], []>} : vector<288x1152xf32>, vector<1152x128xf32>, vector<288x128xf32> -> vector<288x128xf32>
    %cst_4 = arith.constant dense<0.000000e+00> : vector<128xf32>
    %4 = vector.multi_reduction <add>, %3, %cst_4 [0] : vector<288x128xf32> to vector<128xf32>
    %5 = vector.shape_cast %4 : vector<128xf32> to vector<1x128xf32>
    %cst_5 = arith.constant 0.00347222225 : f32
    %6 = vector.broadcast %cst_5 : f32 to vector<1x128xf32>
    %7 = arith.mulf %5, %6 : vector<1x128xf32>
    %8 = arith.mulf %3, %3 : vector<288x128xf32>
    %cst_6 = arith.constant dense<0.000000e+00> : vector<128xf32>
    %9 = vector.multi_reduction <add>, %8, %cst_6 [0] : vector<288x128xf32> to vector<128xf32>
    %10 = vector.shape_cast %9 : vector<128xf32> to vector<1x128xf32>
    %cst_7 = arith.constant 0.00347222225 : f32
    %11 = vector.broadcast %cst_7 : f32 to vector<1x128xf32>
    %12 = arith.mulf %10, %11 : vector<1x128xf32>
    %13 = arith.mulf %7, %7 : vector<1x128xf32>
    %14 = arith.subf %12, %13 : vector<1x128xf32>
    %cst_8 = arith.constant 0.000000e+00 : f32
    %15 = vector.broadcast %cst_8 : f32 to vector<1x128xf32>
    %16 = arith.maximumf %14, %15 : vector<1x128xf32>
    %17 = vector.broadcast %7 : vector<1x128xf32> to vector<288x128xf32>
    %18 = arith.subf %3, %17 : vector<288x128xf32>
    %cst_9 = arith.constant 9.99999974E-6 : f32
    %19 = vector.broadcast %cst_9 : f32 to vector<1x128xf32>
    %20 = arith.addf %16, %19 : vector<1x128xf32>
    %21 = math.rsqrt %20 : vector<1x128xf32>
    %22 = vector.broadcast %21 : vector<1x128xf32> to vector<288x128xf32>
    %23 = arith.mulf %18, %22 : vector<288x128xf32>
    %c0_10 = arith.constant 0 : index
    %c0_11 = arith.constant 0 : index
    %24 = vector.load %arg3[%c0_10, %c0_11] : memref<1x128xf32, #tpu.memory_space<vmem>>, vector<1x128xf32>
    %25 = vector.broadcast %24 : vector<1x128xf32> to vector<288x128xf32>
    %26 = arith.mulf %23, %25 : vector<288x128xf32>
    %c0_12 = arith.constant 0 : index
    %c0_13 = arith.constant 0 : index
    %27 = vector.load %arg4[%c0_12, %c0_13] : memref<1x128xf32, #tpu.memory_space<vmem>>, vector<1x128xf32>
    %28 = vector.broadcast %27 : vector<1x128xf32> to vector<288x128xf32>
    %29 = arith.addf %26, %28 : vector<288x128xf32>
    %cst_14 = arith.constant 0.000000e+00 : f32
    %30 = vector.broadcast %cst_14 : f32 to vector<288x128xf32>
    %31 = arith.maximumf %29, %30 : vector<288x128xf32>
    %c0_15 = arith.constant 0 : index
    %c0_16 = arith.constant 0 : index
    %c0_17 = arith.constant 0 : index
    %32 = vector.load %arg5[%c0_15, %c0_16, %c0_17] : memref<1x288x128xf32, #tpu.memory_space<vmem>>, vector<1x288x128xf32>
    %33 = vector.shape_cast %32 : vector<1x288x128xf32> to vector<288x128xf32>
    %34 = vector.shape_cast %31 : vector<288x128xf32> to vector<1x288x128xf32>
    tpu.vector_store %arg5[%c0_15, %c0_16, %c0_17], %34 {strides = array<i32>} : memref<1x288x128xf32, #tpu.memory_space<vmem>>, vector<1x288x128xf32>,
    return
  }
  func.func @transform_0(%arg0: i32) -> (i32, i32, i32) {
    %c0_i32 = arith.constant 0 : i32
    %c0_i32_0 = arith.constant 0 : i32
    %c0_i32_1 = arith.constant 0 : i32
    return %arg0, %c0_i32, %c0_i32_0 : i32, i32, i32
  }
  func.func @transform_1(%arg0: i32) -> (i32, i32) {
    %c0_i32 = arith.constant 0 : i32
    %c0_i32_0 = arith.constant 0 : i32
    %c0_i32_1 = arith.constant 0 : i32
    return %c0_i32, %c0_i32_0 : i32, i32
  }
  func.func @transform_2(%arg0: i32) -> (i32, i32) {
    %c0_i32 = arith.constant 0 : i32
    %c0_i32_0 = arith.constant 0 : i32
    %c0_i32_1 = arith.constant 0 : i32
    return %c0_i32, %c0_i32_0 : i32, i32
  }
  func.func @transform_3(%arg0: i32) -> (i32, i32) {
    %c0_i32 = arith.constant 0 : i32
    %c0_i32_0 = arith.constant 0 : i32
    %c0_i32_1 = arith.constant 0 : i32
    return %c0_i32, %c0_i32_0 : i32, i32
  }
  func.func @transform_4(%arg0: i32) -> (i32, i32, i32) {
    %c0_i32 = arith.constant 0 : i32
    %c0_i32_0 = arith.constant 0 : i32
    %c0_i32_1 = arith.constant 0 : i32
    return %arg0, %c0_i32, %c0_i32_0 : i32, i32, i32
  }
}

module attributes {stable_mosaic.version = 11 : i64} {
  func.func @_conv_bn_relu_kernel(%arg0: i32, %arg1: memref<1x162x1152xf32, #tpu.memory_space<vmem>>, %arg2: memref<1152x128xf32, #tpu.memory_space<vmem>>, %arg3: memref<1x128xf32, #tpu.memory_space<vmem>>, %arg4: memref<1x128xf32, #tpu.memory_space<vmem>>, %arg5: memref<1x162x128xf32, #tpu.memory_space<vmem>>) attributes {dimension_semantics = [#tpu.dimension_semantics<parallel>], iteration_bounds = array<i64: 2>, scalar_prefetch = 0 : i64, scratch_operands = 0 : i64, tpu.core_type = #tpu.core_type<tc>, window_params = [{transform_indices = @transform_0, window_bounds = array<i64: 1, 162, 1152>}, {pipeline_mode = #tpu.pipeline_mode<synchronous>, transform_indices = @transform_1, window_bounds = array<i64: 1152, 128>}, {pipeline_mode = #tpu.pipeline_mode<synchronous>, transform_indices = @transform_2, window_bounds = array<i64: 1, 128>}, {pipeline_mode = #tpu.pipeline_mode<synchronous>, transform_indices = @transform_3, window_bounds = array<i64: 1, 128>}, {transform_indices = @transform_4, window_bounds = array<i64: 1, 162, 128>}]} {
    %c0 = arith.constant 0 : index
    %c0_0 = arith.constant 0 : index
    %c0_1 = arith.constant 0 : index
    %0 = vector.load %arg1[%c0, %c0_0, %c0_1] : memref<1x162x1152xf32, #tpu.memory_space<vmem>>, vector<1x162x1152xf32>
    %1 = vector.shape_cast %0 : vector<1x162x1152xf32> to vector<162x1152xf32>
    %c0_2 = arith.constant 0 : index
    %c0_3 = arith.constant 0 : index
    %2 = vector.load %arg2[%c0_2, %c0_3] : memref<1152x128xf32, #tpu.memory_space<vmem>>, vector<1152x128xf32>
    %cst = arith.constant dense<0.000000e+00> : vector<162x128xf32>
    %3 = tpu.matmul %1, %2, %cst {dimension_numbers = #tpu.dot_dimension_numbers<[1], [0], [0], [1], [0, 0, 1, 1], [], []>} : vector<162x1152xf32>, vector<1152x128xf32>, vector<162x128xf32> -> vector<162x128xf32>
    %cst_4 = arith.constant dense<0.000000e+00> : vector<128xf32>
    %4 = vector.multi_reduction <add>, %3, %cst_4 [0] : vector<162x128xf32> to vector<128xf32>
    %5 = vector.shape_cast %4 : vector<128xf32> to vector<1x128xf32>
    %cst_5 = arith.constant 0.00617283955 : f32
    %6 = vector.broadcast %cst_5 : f32 to vector<1x128xf32>
    %7 = arith.mulf %5, %6 : vector<1x128xf32>
    %8 = arith.mulf %3, %3 : vector<162x128xf32>
    %cst_6 = arith.constant dense<0.000000e+00> : vector<128xf32>
    %9 = vector.multi_reduction <add>, %8, %cst_6 [0] : vector<162x128xf32> to vector<128xf32>
    %10 = vector.shape_cast %9 : vector<128xf32> to vector<1x128xf32>
    %cst_7 = arith.constant 0.00617283955 : f32
    %11 = vector.broadcast %cst_7 : f32 to vector<1x128xf32>
    %12 = arith.mulf %10, %11 : vector<1x128xf32>
    %13 = arith.mulf %7, %7 : vector<1x128xf32>
    %14 = arith.subf %12, %13 : vector<1x128xf32>
    %cst_8 = arith.constant 0.000000e+00 : f32
    %15 = vector.broadcast %cst_8 : f32 to vector<1x128xf32>
    %16 = arith.maximumf %14, %15 : vector<1x128xf32>
    %17 = vector.broadcast %7 : vector<1x128xf32> to vector<162x128xf32>
    %18 = arith.subf %3, %17 : vector<162x128xf32>
    %cst_9 = arith.constant 9.99999974E-6 : f32
    %19 = vector.broadcast %cst_9 : f32 to vector<1x128xf32>
    %20 = arith.addf %16, %19 : vector<1x128xf32>
    %21 = math.rsqrt %20 : vector<1x128xf32>
    %22 = vector.broadcast %21 : vector<1x128xf32> to vector<162x128xf32>
    %23 = arith.mulf %18, %22 : vector<162x128xf32>
    %c0_10 = arith.constant 0 : index
    %c0_11 = arith.constant 0 : index
    %24 = vector.load %arg3[%c0_10, %c0_11] : memref<1x128xf32, #tpu.memory_space<vmem>>, vector<1x128xf32>
    %25 = vector.broadcast %24 : vector<1x128xf32> to vector<162x128xf32>
    %26 = arith.mulf %23, %25 : vector<162x128xf32>
    %c0_12 = arith.constant 0 : index
    %c0_13 = arith.constant 0 : index
    %27 = vector.load %arg4[%c0_12, %c0_13] : memref<1x128xf32, #tpu.memory_space<vmem>>, vector<1x128xf32>
    %28 = vector.broadcast %27 : vector<1x128xf32> to vector<162x128xf32>
    %29 = arith.addf %26, %28 : vector<162x128xf32>
    %cst_14 = arith.constant 0.000000e+00 : f32
    %30 = vector.broadcast %cst_14 : f32 to vector<162x128xf32>
    %31 = arith.maximumf %29, %30 : vector<162x128xf32>
    %c0_15 = arith.constant 0 : index
    %c0_16 = arith.constant 0 : index
    %c0_17 = arith.constant 0 : index
    %32 = vector.load %arg5[%c0_15, %c0_16, %c0_17] : memref<1x162x128xf32, #tpu.memory_space<vmem>>, vector<1x162x128xf32>
    %33 = vector.shape_cast %32 : vector<1x162x128xf32> to vector<162x128xf32>
    %34 = vector.shape_cast %31 : vector<162x128xf32> to vector<1x162x128xf32>
    tpu.vector_store %arg5[%c0_15, %c0_16, %c0_17], %34 {strides = array<i32>} : memref<1x162x128xf32, #tpu.memory_space<vmem>>, vector<1x162x128xf32>,
    return
  }
  func.func @transform_0(%arg0: i32) -> (i32, i32, i32) {
    %c0_i32 = arith.constant 0 : i32
    %c0_i32_0 = arith.constant 0 : i32
    %c0_i32_1 = arith.constant 0 : i32
    return %arg0, %c0_i32, %c0_i32_0 : i32, i32, i32
  }
  func.func @transform_1(%arg0: i32) -> (i32, i32) {
    %c0_i32 = arith.constant 0 : i32
    %c0_i32_0 = arith.constant 0 : i32
    %c0_i32_1 = arith.constant 0 : i32
    return %c0_i32, %c0_i32_0 : i32, i32
  }
  func.func @transform_2(%arg0: i32) -> (i32, i32) {
    %c0_i32 = arith.constant 0 : i32
    %c0_i32_0 = arith.constant 0 : i32
    %c0_i32_1 = arith.constant 0 : i32
    return %c0_i32, %c0_i32_0 : i32, i32
  }
  func.func @transform_3(%arg0: i32) -> (i32, i32) {
    %c0_i32 = arith.constant 0 : i32
    %c0_i32_0 = arith.constant 0 : i32
    %c0_i32_1 = arith.constant 0 : i32
    return %c0_i32, %c0_i32_0 : i32, i32
  }
  func.func @transform_4(%arg0: i32) -> (i32, i32, i32) {
    %c0_i32 = arith.constant 0 : i32
    %c0_i32_0 = arith.constant 0 : i32
    %c0_i32_1 = arith.constant 0 : i32
    return %arg0, %c0_i32, %c0_i32_0 : i32, i32, i32
  }
}

module attributes {stable_mosaic.version = 11 : i64} {
  func.func @_head_kernel(%arg0: i32, %arg1: memref<1x8x1152xf32, #tpu.memory_space<vmem>>, %arg2: memref<1152x640xf32, #tpu.memory_space<vmem>>, %arg3: memref<1x640xf32, #tpu.memory_space<vmem>>, %arg4: memref<1x640xf32, #tpu.memory_space<vmem>>, %arg5: memref<640x128xf32, #tpu.memory_space<vmem>>, %arg6: memref<1x128xf32, #tpu.memory_space<vmem>>, %arg7: memref<1x2x128xf32, #tpu.memory_space<vmem>>) attributes {dimension_semantics = [#tpu.dimension_semantics<parallel>], iteration_bounds = array<i64: 2>, scalar_prefetch = 0 : i64, scratch_operands = 0 : i64, tpu.core_type = #tpu.core_type<tc>, window_params = [{transform_indices = @transform_0, window_bounds = array<i64: 1, 8, 1152>}, {pipeline_mode = #tpu.pipeline_mode<synchronous>, transform_indices = @transform_1, window_bounds = array<i64: 1152, 640>}, {pipeline_mode = #tpu.pipeline_mode<synchronous>, transform_indices = @transform_2, window_bounds = array<i64: 1, 640>}, {pipeline_mode = #tpu.pipeline_mode<synchronous>, transform_indices = @transform_3, window_bounds = array<i64: 1, 640>}, {pipeline_mode = #tpu.pipeline_mode<synchronous>, transform_indices = @transform_4, window_bounds = array<i64: 640, 128>}, {pipeline_mode = #tpu.pipeline_mode<synchronous>, transform_indices = @transform_5, window_bounds = array<i64: 1, 128>}, {transform_indices = @transform_6, window_bounds = array<i64: 1, 2, 128>}]} {
    %c0 = arith.constant 0 : index
    %c0_0 = arith.constant 0 : index
    %c0_1 = arith.constant 0 : index
    %0 = vector.load %arg1[%c0, %c0_0, %c0_1] : memref<1x8x1152xf32, #tpu.memory_space<vmem>>, vector<1x8x1152xf32>
    %1 = vector.shape_cast %0 : vector<1x8x1152xf32> to vector<8x1152xf32>
    %c0_2 = arith.constant 0 : index
    %c0_3 = arith.constant 0 : index
    %2 = vector.load %arg2[%c0_2, %c0_3] : memref<1152x640xf32, #tpu.memory_space<vmem>>, vector<1152x640xf32>
    %cst = arith.constant dense<0.000000e+00> : vector<8x640xf32>
    %3 = tpu.matmul %1, %2, %cst {dimension_numbers = #tpu.dot_dimension_numbers<[1], [0], [0], [1], [0, 0, 1, 1], [], []>} : vector<8x1152xf32>, vector<1152x640xf32>, vector<8x640xf32> -> vector<8x640xf32>
    %cst_4 = arith.constant dense<0.000000e+00> : vector<640xf32>
    %4 = vector.multi_reduction <add>, %3, %cst_4 [0] : vector<8x640xf32> to vector<640xf32>
    %5 = vector.shape_cast %4 : vector<640xf32> to vector<1x640xf32>
    %cst_5 = arith.constant 1.250000e-01 : f32
    %6 = vector.broadcast %cst_5 : f32 to vector<1x640xf32>
    %7 = arith.mulf %5, %6 : vector<1x640xf32>
    %8 = arith.mulf %3, %3 : vector<8x640xf32>
    %cst_6 = arith.constant dense<0.000000e+00> : vector<640xf32>
    %9 = vector.multi_reduction <add>, %8, %cst_6 [0] : vector<8x640xf32> to vector<640xf32>
    %10 = vector.shape_cast %9 : vector<640xf32> to vector<1x640xf32>
    %cst_7 = arith.constant 1.250000e-01 : f32
    %11 = vector.broadcast %cst_7 : f32 to vector<1x640xf32>
    %12 = arith.mulf %10, %11 : vector<1x640xf32>
    %13 = arith.mulf %7, %7 : vector<1x640xf32>
    %14 = arith.subf %12, %13 : vector<1x640xf32>
    %cst_8 = arith.constant 0.000000e+00 : f32
    %15 = vector.broadcast %cst_8 : f32 to vector<1x640xf32>
    %16 = arith.maximumf %14, %15 : vector<1x640xf32>
    %17 = vector.broadcast %7 : vector<1x640xf32> to vector<8x640xf32>
    %18 = arith.subf %3, %17 : vector<8x640xf32>
    %cst_9 = arith.constant 9.99999974E-6 : f32
    %19 = vector.broadcast %cst_9 : f32 to vector<1x640xf32>
    %20 = arith.addf %16, %19 : vector<1x640xf32>
    %21 = math.rsqrt %20 : vector<1x640xf32>
    %22 = vector.broadcast %21 : vector<1x640xf32> to vector<8x640xf32>
    %23 = arith.mulf %18, %22 : vector<8x640xf32>
    %c0_10 = arith.constant 0 : index
    %c0_11 = arith.constant 0 : index
    %24 = vector.load %arg3[%c0_10, %c0_11] : memref<1x640xf32, #tpu.memory_space<vmem>>, vector<1x640xf32>
    %25 = vector.broadcast %24 : vector<1x640xf32> to vector<8x640xf32>
    %26 = arith.mulf %23, %25 : vector<8x640xf32>
    %c0_12 = arith.constant 0 : index
    %c0_13 = arith.constant 0 : index
    %27 = vector.load %arg4[%c0_12, %c0_13] : memref<1x640xf32, #tpu.memory_space<vmem>>, vector<1x640xf32>
    %28 = vector.broadcast %27 : vector<1x640xf32> to vector<8x640xf32>
    %29 = arith.addf %26, %28 : vector<8x640xf32>
    %cst_14 = arith.constant 0.000000e+00 : f32
    %30 = vector.broadcast %cst_14 : f32 to vector<8x640xf32>
    %31 = arith.maximumf %29, %30 : vector<8x640xf32>
    %32 = vector.extract_strided_slice %31 {offsets = [0, 0], sizes = [4, 640], strides = [1, 1]} : vector<8x640xf32> to vector<4x640xf32>
    %cst_15 = arith.constant dense<0xFF800000> : vector<640xf32>
    %33 = vector.multi_reduction <maximumf>, %32, %cst_15 [0] : vector<4x640xf32> to vector<640xf32>
    %34 = vector.shape_cast %33 : vector<640xf32> to vector<1x640xf32>
    %35 = vector.extract_strided_slice %31 {offsets = [4, 0], sizes = [4, 640], strides = [1, 1]} : vector<8x640xf32> to vector<4x640xf32>
    %cst_16 = arith.constant dense<0xFF800000> : vector<640xf32>
    %36 = vector.multi_reduction <maximumf>, %35, %cst_16 [0] : vector<4x640xf32> to vector<640xf32>
    %37 = vector.shape_cast %36 : vector<640xf32> to vector<1x640xf32>
    %38 = tpu.concatenate %34, %37 in 0 : vector<1x640xf32>, vector<1x640xf32> -> vector<2x640xf32>
    %c0_17 = arith.constant 0 : index
    %c0_18 = arith.constant 0 : index
    %39 = vector.load %arg5[%c0_17, %c0_18] : memref<640x128xf32, #tpu.memory_space<vmem>>, vector<640x128xf32>
    %cst_19 = arith.constant dense<0.000000e+00> : vector<2x128xf32>
    %40 = tpu.matmul %38, %39, %cst_19 {dimension_numbers = #tpu.dot_dimension_numbers<[1], [0], [0], [1], [0, 0, 1, 1], [], []>} : vector<2x640xf32>, vector<640x128xf32>, vector<2x128xf32> -> vector<2x128xf32>
    %c0_20 = arith.constant 0 : index
    %c0_21 = arith.constant 0 : index
    %41 = vector.load %arg6[%c0_20, %c0_21] : memref<1x128xf32, #tpu.memory_space<vmem>>, vector<1x128xf32>
    %42 = vector.broadcast %41 : vector<1x128xf32> to vector<2x128xf32>
    %43 = arith.addf %40, %42 : vector<2x128xf32>
    %cst_22 = arith.constant 0.000000e+00 : f32
    %44 = vector.broadcast %cst_22 : f32 to vector<2x128xf32>
    %45 = arith.maximumf %43, %44 : vector<2x128xf32>
    %c0_23 = arith.constant 0 : index
    %c0_24 = arith.constant 0 : index
    %c0_25 = arith.constant 0 : index
    %46 = vector.load %arg7[%c0_23, %c0_24, %c0_25] : memref<1x2x128xf32, #tpu.memory_space<vmem>>, vector<1x2x128xf32>
    %47 = vector.shape_cast %46 : vector<1x2x128xf32> to vector<2x128xf32>
    %48 = vector.shape_cast %45 : vector<2x128xf32> to vector<1x2x128xf32>
    tpu.vector_store %arg7[%c0_23, %c0_24, %c0_25], %48 {strides = array<i32>} : memref<1x2x128xf32, #tpu.memory_space<vmem>>, vector<1x2x128xf32>,
    return
  }
  func.func @transform_0(%arg0: i32) -> (i32, i32, i32) {
    %c0_i32 = arith.constant 0 : i32
    %c0_i32_0 = arith.constant 0 : i32
    %c0_i32_1 = arith.constant 0 : i32
    return %arg0, %c0_i32, %c0_i32_0 : i32, i32, i32
  }
  func.func @transform_1(%arg0: i32) -> (i32, i32) {
    %c0_i32 = arith.constant 0 : i32
    %c0_i32_0 = arith.constant 0 : i32
    %c0_i32_1 = arith.constant 0 : i32
    return %c0_i32, %c0_i32_0 : i32, i32
  }
  func.func @transform_2(%arg0: i32) -> (i32, i32) {
    %c0_i32 = arith.constant 0 : i32
    %c0_i32_0 = arith.constant 0 : i32
    %c0_i32_1 = arith.constant 0 : i32
    return %c0_i32, %c0_i32_0 : i32, i32
  }
  func.func @transform_3(%arg0: i32) -> (i32, i32) {
    %c0_i32 = arith.constant 0 : i32
    %c0_i32_0 = arith.constant 0 : i32
    %c0_i32_1 = arith.constant 0 : i32
    return %c0_i32, %c0_i32_0 : i32, i32
  }
  func.func @transform_4(%arg0: i32) -> (i32, i32) {
    %c0_i32 = arith.constant 0 : i32
    %c0_i32_0 = arith.constant 0 : i32
    %c0_i32_1 = arith.constant 0 : i32
    return %c0_i32, %c0_i32_0 : i32, i32
  }
  func.func @transform_5(%arg0: i32) -> (i32, i32) {
    %c0_i32 = arith.constant 0 : i32
    %c0_i32_0 = arith.constant 0 : i32
    %c0_i32_1 = arith.constant 0 : i32
    return %c0_i32, %c0_i32_0 : i32, i32
  }
  func.func @transform_6(%arg0: i32) -> (i32, i32, i32) {
    %c0_i32 = arith.constant 0 : i32
    %c0_i32_0 = arith.constant 0 : i32
    %c0_i32_1 = arith.constant 0 : i32
    return %arg0, %c0_i32, %c0_i32_0 : i32, i32, i32
  }
}

</mosaic_0001>

<llo_original>
// kernel: siamese_forward.4
$region0: #{siamese_forward.4}
  #allocation0 [shape = 'u32[]', space=smem, size = 0x4, offset = 0x4, fixed_abs, tag = 'smem constant byte address 0x4 - core index']
  #allocation1 [shape = 'u32[72,128]{1,0:T(1,128)}', space=vmem, size = 0x9000, scoped, tag = 'internal scratch']
  %s0 = inlined_call_operand.vmem [shape: f32[2,1568,128], index: 0, kind: input, shape index: {}]
  %s1 = inlined_call_operand.vmem [shape: f32[128,128], index: 1, kind: input, shape index: {}]
  %s2 = inlined_call_operand.vmem [shape: f32[1,128], index: 2, kind: input, shape index: {}]
  %s3 = inlined_call_operand.vmem [shape: f32[1,128], index: 3, kind: input, shape index: {}]
  %s4 = inlined_call_operand.vmem [shape: f32[2,1568,128], index: 4, kind: output, shape index: {}]
  %s5 = sld [smem:[#allocation0]]
  $region49: #{siamese_forward.4} parent=0
    _
  %s7 = ssub.s32 1, %s5
  %s8 = scalar_select 0, %s7, %s5
  loop: start=0, step=1, limit=4
  $region2: #{siamese_forward.4} parent=0 // loop_pre_header
    _
  $region3: #{siamese_forward.4} parent=0 // loop_header
    %s10 = sphi 0, %s14
    %p11 = scmp.ge.s32.totalorder %s10, 4
    %s20 = sphi 0, %s22
    %s23 = sphi 0, %s20
    %s24 = sphi 0, %s23
    %s40 = sphi 0, %s24
    %s44 = sphi 0, %s44
    %s46 = sphi 0, %s44
    %s47 = sphi 0, %s46
    %s61 = sphi 0, %s47
    %s65 = sphi 0, %s65
    %s67 = sphi 0, %s65
    %s68 = sphi 0, %s67
    %s82 = sphi 0, %s68
    %s86 = sphi 0, %s86
    %s88 = sphi 0, %s86
    %s89 = sphi 0, %s88
    %s103 = sphi 0, %s89
    %s109 = sphi 0, %s111
    %s112 = sphi 0, %s109
    %s113 = sphi 0, %s112
    %s129 = sphi 0, %s113
  $region4: #{siamese_forward.4} parent=0 // loop_header_branch
    %13 = sbr.rel (%p11) target = $region8
  $region5: #{siamese_forward.4} parent=0 // loop_body
    %s15 = ssub.s32 %s10, 1
    %s16 = ssub.s32 %s10, 2
    %s17 = sadd.s32 %s10, 1
    %s18 = ssub.s32 %s10, %s17
    %p19 = scmp.eq.s32.totalorder %s18, 0
    %s21 = sadd.s32 %s20, 1
    %s22 = scalar_select %p19, %s20, %s21
    %p25 = pneg %p19
    %p26 = scmp.eq.s32.totalorder %s10, 1
    %p27 = por %p25, %p26
    %p28 = scmp.ne.s32.totalorder %s20, %s23
    %p29 = scmp.eq.s32.totalorder %s10, 0
    %p30 = por %p28, %p29
    %p31 = scmp.ne.s32.totalorder %s20, %s23
    %p32 = scmp.eq.s32.totalorder %s15, 1
    %p33 = por %p31, %p32
    %p34 = scmp.ne.s32.totalorder %s23, %s24
    %p35 = scmp.eq.s32.totalorder %s15, 0
    %p36 = por %p34, %p35
    %p37 = scmp.ne.s32.totalorder %s23, %s24
    %p38 = scmp.eq.s32.totalorder %s16, 1
    %p39 = por %p37, %p38
    %p41 = scmp.ne.s32.totalorder %s24, %s40
    %p42 = scmp.eq.s32.totalorder %s16, 0
    %p43 = por %p41, %p42
    %s45 = sadd.s32 %s44, 1
    %p48 = scmp.eq.s32.totalorder %s10, 1
    %p49 = scmp.ne.s32.totalorder %s44, %s46
    %p50 = scmp.eq.s32.totalorder %s10, 0
    %p51 = por %p49, %p50
    %p52 = scmp.ne.s32.totalorder %s44, %s46
    %p53 = scmp.eq.s32.totalorder %s15, 1
    %p54 = por %p52, %p53
    %p55 = scmp.ne.s32.totalorder %s46, %s47
    %p56 = scmp.eq.s32.totalorder %s15, 0
    %p57 = por %p55, %p56
    %p58 = scmp.ne.s32.totalorder %s46, %s47
    %p59 = scmp.eq.s32.totalorder %s16, 1
    %p60 = por %p58, %p59
    %p62 = scmp.ne.s32.totalorder %s47, %s61
    %p63 = scmp.eq.s32.totalorder %s16, 0
    %p64 = por %p62, %p63
    %s66 = sadd.s32 %s65, 1
    %p69 = scmp.eq.s32.totalorder %s10, 1
    %p70 = scmp.ne.s32.totalorder %s65, %s67
    %p71 = scmp.eq.s32.totalorder %s10, 0
    %p72 = por %p70, %p71
    %p73 = scmp.ne.s32.totalorder %s65, %s67
    %p74 = scmp.eq.s32.totalorder %s15, 1
    %p75 = por %p73, %p74
    %p76 = scmp.ne.s32.totalorder %s67, %s68
    %p77 = scmp.eq.s32.totalorder %s15, 0
    %p78 = por %p76, %p77
    %p79 = scmp.ne.s32.totalorder %s67, %s68
    %p80 = scmp.eq.s32.totalorder %s16, 1
    %p81 = por %p79, %p80
    %p83 = scmp.ne.s32.totalorder %s68, %s82
    %p84 = scmp.eq.s32.totalorder %s16, 0
    %p85 = por %p83, %p84
    %s87 = sadd.s32 %s86, 1
    %p90 = scmp.eq.s32.totalorder %s10, 1
    %p91 = scmp.ne.s32.totalorder %s86, %s88
    %p92 = scmp.eq.s32.totalorder %s10, 0
    %p93 = por %p91, %p92
    %p94 = scmp.ne.s32.totalorder %s86, %s88
    %p95 = scmp.eq.s32.totalorder %s15, 1
    %p96 = por %p94, %p95
    %p97 = scmp.ne.s32.totalorder %s88, %s89
    %p98 = scmp.eq.s32.totalorder %s15, 0
    %p99 = por %p97, %p98
    %p100 = scmp.ne.s32.totalorder %s88, %s89
    %p101 = scmp.eq.s32.totalorder %s16, 1
    %p102 = por %p100, %p101
    %p104 = scmp.ne.s32.totalorder %s89, %s103
    %p105 = scmp.eq.s32.totalorder %s16, 0
    %p106 = por %p104, %p105
    %s107 = ssub.s32 %s10, %s17
    %p108 = scmp.eq.s32.totalorder %s107, 0
    %s110 = sadd.s32 %s109, 1
    %s111 = scalar_select %p108, %s109, %s110
    %p114 = pneg %p108
    %p115 = scmp.eq.s32.totalorder %s10, 1
    %p116 = por %p114, %p115
    %p117 = scmp.ne.s32.totalorder %s109, %s112
    %p118 = scmp.eq.s32.totalorder %s10, 0
    %p119 = por %p117, %p118
    %p120 = scmp.ne.s32.totalorder %s109, %s112
    %p121 = scmp.eq.s32.totalorder %s15, 1
    %p122 = por %p120, %p121
    %p123 = scmp.ne.s32.totalorder %s112, %s113
    %p124 = scmp.eq.s32.totalorder %s15, 0
    %p125 = por %p123, %p124
    %p126 = scmp.ne.s32.totalorder %s112, %s113
    %p127 = scmp.eq.s32.totalorder %s16, 1
    %p128 = por %p126, %p127
    %p130 = scmp.ne.s32.totalorder %s113, %s129
    %p131 = scmp.eq.s32.totalorder %s16, 0
    %p132 = por %p130, %p131
    %p133 = scmp.le.s32.totalorder 1, %s10
    %p134 = scmp.lt.s32.totalorder %s10, 3
    %p135 = pnand %p133, %p134
    %p136 = pneg %p135
    // Predicated region
    $region9: #{siamese_forward.4} parent=5 // pred_check
      _
    $region10: #{siamese_forward.4} parent=5 // pred_check_branch
      %138 = sbr.rel (%p135) target = $region12
    $region11: #{siamese_forward.4} parent=5 // pred_region
      %s139 = ssub.s32 %s10, 1
      // Predicated region
      $region13: #{siamese_forward.4} parent=11 // pred_check
        %p140 = pneg %p57
      $region14: #{siamese_forward.4} parent=11 // pred_check_branch
        %142 = sbr.rel (%p140) target = $region16
      $region15: #{siamese_forward.4} parent=11 // pred_region
        _
      $region16: #{siamese_forward.4} parent=11 // pred_fallthru
        _
      // Predicated region
      $region17: #{siamese_forward.4} parent=11 // pred_check
        %p143 = pneg %p78
      $region18: #{siamese_forward.4} parent=11 // pred_check_branch
        %145 = sbr.rel (%p143) target = $region20
      $region19: #{siamese_forward.4} parent=11 // pred_region
        _
      $region20: #{siamese_forward.4} parent=11 // pred_fallthru
        _
      // Predicated region
      $region21: #{siamese_forward.4} parent=11 // pred_check
        %p146 = pneg %p99
      $region22: #{siamese_forward.4} parent=11 // pred_check_branch
        %148 = sbr.rel (%p146) target = $region24
      $region23: #{siamese_forward.4} parent=11 // pred_region
        _
      $region24: #{siamese_forward.4} parent=11 // pred_fallthru
        _
    $region12: #{siamese_forward.4} parent=5 // pred_fallthru
      _
    %p149 = scmp.lt.s32.totalorder %s10, 2
    // Predicated region
    $region25: #{siamese_forward.4} parent=5 // pred_check
      %p150 = pneg %p149
    $region26: #{siamese_forward.4} parent=5 // pred_check_branch
      %152 = sbr.rel (%p150) target = $region28
    $region27: #{siamese_forward.4} parent=5 // pred_region
      // Predicated region
      $region29: #{siamese_forward.4} parent=27 // pred_check
        %p153 = pneg %p30
      $region30: #{siamese_forward.4} parent=27 // pred_check_branch
        %155 = sbr.rel (%p153) target = $region32
      $region31: #{siamese_forward.4} parent=27 // pred_region
        %p156 = scmp.lt.s32.totalorder %s10, 1
        %s157 = scalar_select %p156, %s10, 1
        %s158 = smul.addr %s157, 196
        %s159 = smul.addr %s158, 8
        %s160 = scalar_lea.vmem %s0, %s159
      $region32: #{siamese_forward.4} parent=27 // pred_fallthru
        _
    $region28: #{siamese_forward.4} parent=5 // pred_fallthru
      _
    %p161 = scmp.le.s32.totalorder 1, %s10
    %p162 = scmp.lt.s32.totalorder %s10, 3
    %p163 = pnand %p161, %p162
    %p164 = pneg %p163
    // Predicated region
    $region33: #{siamese_forward.4} parent=5 // pred_check
      _
    $region34: #{siamese_forward.4} parent=5 // pred_check_branch
      %166 = sbr.rel (%p163) target = $region36
    $region35: #{siamese_forward.4} parent=5 // pred_region
      %s167 = ssub.s32 %s10, 1
      %p168 = scmp.lt.s32.totalorder %s15, 1
      %s169 = scalar_select %p168, %s15, 1
      %s170 = smul.addr %s169, 196
      %s171 = smul.addr %s170, 8
      %s172 = scalar_lea.vmem %s0, %s171
      %p173 = pneg %p36
      %p174 = pneg %p33
      %p175 = pneg %p57
      %p176 = pneg %p54
      %p177 = pneg %p78
      %p178 = pneg %p75
      %p179 = pneg %p99
      %p180 = pneg %p96
      %p181 = pneg %p125
      %p182 = pneg %p122
      %p183 = scmp.lt.s32.totalorder %s15, 1
      %s184 = scalar_select %p183, %s15, 1
      %s185 = smul.addr %s184, 196
      %s186 = smul.addr %s185, 8
      %s187 = scalar_lea.vmem %s4, %s186
      %p188 = scmp.lt.s32.totalorder %s15, 1
      %s189 = scalar_select %p188, %s15, 1
      %s190 = smul.addr %s189, 196
      %s191 = smul.addr %s190, 8
      %s192 = scalar_lea.vmem %s0, %s191
      %p193 = scmp.lt.s32.totalorder %s15, 1
      %s194 = scalar_select %p193, %s15, 1
      %s195 = smul.addr %s194, 196
      %s196 = smul.addr %s195, 8
      %s197 = scalar_lea.vmem %s4, %s196
      %v198 = vld [vmem:[%s192] sm:$0xff]
      %v199 = vld [vmem:[%s192 + $0x8] sm:$0xff]
      %v200 = vld [vmem:[%s192 + $0x10] sm:$0xff]
      %v201 = vld [vmem:[%s192 + $0x18] sm:$0xff]
      %v202 = vld [vmem:[%s192 + $0x20] sm:$0xff]
      %v203 = vld [vmem:[%s192 + $0x28] sm:$0xff]
      %v204 = vld [vmem:[%s192 + $0x30] sm:$0xff]
      %v205 = vld [vmem:[%s192 + $0x38] sm:$0xff]
      %v206 = vld [vmem:[%s192 + $0x40] sm:$0xff]
      %v207 = vld [vmem:[%s192 + $0x48] sm:$0xff]
      %v208 = vld [vmem:[%s192 + $0x50] sm:$0xff]
      %v209 = vld [vmem:[%s192 + $0x58] sm:$0xff]
      %v210 = vld [vmem:[%s192 + $0x60] sm:$0xff]
      %v211 = vld [vmem:[%s192 + $0x68] sm:$0xff]
      %v212 = vld [vmem:[%s192 + $0x70] sm:$0xff]
      %v213 = vld [vmem:[%s192 + $0x78] sm:$0xff]
      %v214 = vld [vmem:[%s192 + $0x80] sm:$0xff]
      %v215 = vld [vmem:[%s192 + $0x88] sm:$0xff]
      %v216 = vld [vmem:[%s192 + $0x90] sm:$0xff]
      %v217 = vld [vmem:[%s192 + $0x98] sm:$0xff]
      %v218 = vld [vmem:[%s192 + $0xa0] sm:$0xff]
      %v219 = vld [vmem:[%s192 + $0xa8] sm:$0xff]
      %v220 = vld [vmem:[%s192 + $0xb0] sm:$0xff]
      %v221 = vld [vmem:[%s192 + $0xb8] sm:$0xff]
      %v222 = vld [vmem:[%s192 + $0xc0] sm:$0xff]
      %v223 = vld [vmem:[%s192 + $0xc8] sm:$0xff]
      %v224 = vld [vmem:[%s192 + $0xd0] sm:$0xff]
      %v225 = vld [vmem:[%s192 + $0xd8] sm:$0xff]
      %v226 = vld [vmem:[%s192 + $0xe0] sm:$0xff]
      %v227 = vld [vmem:[%s192 + $0xe8] sm:$0xff]
      %v228 = vld [vmem:[%s192 + $0xf0] sm:$0xff]
      %v229 = vld [vmem:[%s192 + $0xf8] sm:$0xff]
      %v230 = vld [vmem:[%s192 + $0x100] sm:$0xff]
      %v231 = vld [vmem:[%s192 + $0x108] sm:$0xff]
      %v232 = vld [vmem:[%s192 + $0x110] sm:$0xff]
      %v233 = vld [vmem:[%s192 + $0x118] sm:$0xff]
      %v234 = vld [vmem:[%s192 + $0x120] sm:$0xff]
      %v235 = vld [vmem:[%s192 + $0x128] sm:$0xff]
      %v236 = vld [vmem:[%s192 + $0x130] sm:$0xff]
      %v237 = vld [vmem:[%s192 + $0x138] sm:$0xff]
      %v238 = vld [vmem:[%s192 + $0x140] sm:$0xff]
      %v239 = vld [vmem:[%s192 + $0x148] sm:$0xff]
      %v240 = vld [vmem:[%s192 + $0x150] sm:$0xff]
      %v241 = vld [vmem:[%s192 + $0x158] sm:$0xff]
      %v242 = vld [vmem:[%s192 + $0x160] sm:$0xff]
      %v243 = vld [vmem:[%s192 + $0x168] sm:$0xff]
      %v244 = vld [vmem:[%s192 + $0x170] sm:$0xff]
      %v245 = vld [vmem:[%s192 + $0x178] sm:$0xff]
      %v246 = vld [vmem:[%s192 + $0x180] sm:$0xff]
      %v247 = vld [vmem:[%s192 + $0x188] sm:$0xff]
      %v248 = vld [vmem:[%s192 + $0x190] sm:$0xff]
      %v249 = vld [vmem:[%s192 + $0x198] sm:$0xff]
      %v250 = vld [vmem:[%s192 + $0x1a0] sm:$0xff]
      %v251 = vld [vmem:[%s192 + $0x1a8] sm:$0xff]
      %v252 = vld [vmem:[%s192 + $0x1b0] sm:$0xff]
      %v253 = vld [vmem:[%s192 + $0x1b8] sm:$0xff]
      %v254 = vld [vmem:[%s192 + $0x1c0] sm:$0xff]
      %v255 = vld [vmem:[%s192 + $0x1c8] sm:$0xff]
      %v256 = vld [vmem:[%s192 + $0x1d0] sm:$0xff]
      %v257 = vld [vmem:[%s192 + $0x1d8] sm:$0xff]
      %v258 = vld [vmem:[%s192 + $0x1e0] sm:$0xff]
      %v259 = vld [vmem:[%s192 + $0x1e8] sm:$0xff]
      %v260 = vld [vmem:[%s192 + $0x1f0] sm:$0xff]
      %v261 = vld [vmem:[%s192 + $0x1f8] sm:$0xff]
      %v262 = vld [vmem:[%s192 + $0x200] sm:$0xff]
      %v263 = vld [vmem:[%s192 + $0x208] sm:$0xff]
      %v264 = vld [vmem:[%s192 + $0x210] sm:$0xff]
      %v265 = vld [vmem:[%s192 + $0x218] sm:$0xff]
      %v266 = vld [vmem:[%s192 + $0x220] sm:$0xff]
      %v267 = vld [vmem:[%s192 + $0x228] sm:$0xff]
      %v268 = vld [vmem:[%s192 + $0x230] sm:$0xff]
      %v269 = vld [vmem:[%s192 + $0x238] sm:$0xff]
      %v270 = vld [vmem:[%s192 + $0x240] sm:$0xff]
      %v271 = vld [vmem:[%s192 + $0x248] sm:$0xff]
      %v272 = vld [vmem:[%s192 + $0x250] sm:$0xff]
      %v273 = vld [vmem:[%s192 + $0x258] sm:$0xff]
      %v274 = vld [vmem:[%s192 + $0x260] sm:$0xff]
      %v275 = vld [vmem:[%s192 + $0x268] sm:$0xff]
      %v276 = vld [vmem:[%s192 + $0x270] sm:$0xff]
      %v277 = vld [vmem:[%s192 + $0x278] sm:$0xff]
      %v278 = vld [vmem:[%s192 + $0x280] sm:$0xff]
      %v279 = vld [vmem:[%s192 + $0x288] sm:$0xff]
      %v280 = vld [vmem:[%s192 + $0x290] sm:$0xff]
      %v281 = vld [vmem:[%s192 + $0x298] sm:$0xff]
      %v282 = vld [vmem:[%s192 + $0x2a0] sm:$0xff]
      %v283 = vld [vmem:[%s192 + $0x2a8] sm:$0xff]
      %v284 = vld [vmem:[%s192 + $0x2b0] sm:$0xff]
      %v285 = vld [vmem:[%s192 + $0x2b8] sm:$0xff]
      %v286 = vld [vmem:[%s192 + $0x2c0] sm:$0xff]
      %v287 = vld [vmem:[%s192 + $0x2c8] sm:$0xff]
      %v288 = vld [vmem:[%s192 + $0x2d0] sm:$0xff]
      %v289 = vld [vmem:[%s192 + $0x2d8] sm:$0xff]
      %v290 = vld [vmem:[%s192 + $0x2e0] sm:$0xff]
      %v291 = vld [vmem:[%s192 + $0x2e8] sm:$0xff]
      %v292 = vld [vmem:[%s192 + $0x2f0] sm:$0xff]
      %v293 = vld [vmem:[%s192 + $0x2f8] sm:$0xff]
      %v294 = vld [vmem:[%s192 + $0x300] sm:$0xff]
      %v295 = vld [vmem:[%s192 + $0x308] sm:$0xff]
      %v296 = vld [vmem:[%s192 + $0x310] sm:$0xff]
      %v297 = vld [vmem:[%s192 + $0x318] sm:$0xff]
      %v298 = vld [vmem:[%s192 + $0x320] sm:$0xff]
      %v299 = vld [vmem:[%s192 + $0x328] sm:$0xff]
      %v300 = vld [vmem:[%s192 + $0x330] sm:$0xff]
      %v301 = vld [vmem:[%s192 + $0x338] sm:$0xff]
      %v302 = vld [vmem:[%s192 + $0x340] sm:$0xff]
      %v303 = vld [vmem:[%s192 + $0x348] sm:$0xff]
      %v304 = vld [vmem:[%s192 + $0x350] sm:$0xff]
      %v305 = vld [vmem:[%s192 + $0x358] sm:$0xff]
      %v306 = vld [vmem:[%s192 + $0x360] sm:$0xff]
      %v307 = vld [vmem:[%s192 + $0x368] sm:$0xff]
      %v308 = vld [vmem:[%s192 + $0x370] sm:$0xff]
      %v309 = vld [vmem:[%s192 + $0x378] sm:$0xff]
      %v310 = vld [vmem:[%s192 + $0x380] sm:$0xff]
      %v311 = vld [vmem:[%s192 + $0x388] sm:$0xff]
      %v312 = vld [vmem:[%s192 + $0x390] sm:$0xff]
      %v313 = vld [vmem:[%s192 + $0x398] sm:$0xff]
      %v314 = vld [vmem:[%s192 + $0x3a0] sm:$0xff]
      %v315 = vld [vmem:[%s192 + $0x3a8] sm:$0xff]
      %v316 = vld [vmem:[%s192 + $0x3b0] sm:$0xff]
      %v317 = vld [vmem:[%s192 + $0x3b8] sm:$0xff]
      %v318 = vld [vmem:[%s192 + $0x3c0] sm:$0xff]
      %v319 = vld [vmem:[%s192 + $0x3c8] sm:$0xff]
      %v320 = vld [vmem:[%s192 + $0x3d0] sm:$0xff]
      %v321 = vld [vmem:[%s192 + $0x3d8] sm:$0xff]
      %v322 = vld [vmem:[%s192 + $0x3e0] sm:$0xff]
      %v323 = vld [vmem:[%s192 + $0x3e8] sm:$0xff]
      %v324 = vld [vmem:[%s192 + $0x3f0] sm:$0xff]
      %v325 = vld [vmem:[%s192 + $0x3f8] sm:$0xff]
      %v326 = vld [vmem:[%s192 + $0x400] sm:$0xff]
      %v327 = vld [vmem:[%s192 + $0x408] sm:$0xff]
      %v328 = vld [vmem:[%s192 + $0x410] sm:$0xff]
      %v329 = vld [vmem:[%s192 + $0x418] sm:$0xff]
      %v330 = vld [vmem:[%s192 + $0x420] sm:$0xff]
      %v331 = vld [vmem:[%s192 + $0x428] sm:$0xff]
      %v332 = vld [vmem:[%s192 + $0x430] sm:$0xff]
      %v333 = vld [vmem:[%s192 + $0x438] sm:$0xff]
      %v334 = vld [vmem:[%s192 + $0x440] sm:$0xff]
      %v335 = vld [vmem:[%s192 + $0x448] sm:$0xff]
      %v336 = vld [vmem:[%s192 + $0x450] sm:$0xff]
      %v337 = vld [vmem:[%s192 + $0x458] sm:$0xff]
      %v338 = vld [vmem:[%s192 + $0x460] sm:$0xff]
      %v339 = vld [vmem:[%s192 + $0x468] sm:$0xff]
      %v340 = vld [vmem:[%s192 + $0x470] sm:$0xff]
      %v341 = vld [vmem:[%s192 + $0x478] sm:$0xff]
      %v342 = vld [vmem:[%s192 + $0x480] sm:$0xff]
      %v343 = vld [vmem:[%s192 + $0x488] sm:$0xff]
      %v344 = vld [vmem:[%s192 + $0x490] sm:$0xff]
      %v345 = vld [vmem:[%s192 + $0x498] sm:$0xff]
      %v346 = vld [vmem:[%s192 + $0x4a0] sm:$0xff]
      %v347 = vld [vmem:[%s192 + $0x4a8] sm:$0xff]
      %v348 = vld [vmem:[%s192 + $0x4b0] sm:$0xff]
      %v349 = vld [vmem:[%s192 + $0x4b8] sm:$0xff]
      %v350 = vld [vmem:[%s192 + $0x4c0] sm:$0xff]
      %v351 = vld [vmem:[%s192 + $0x4c8] sm:$0xff]
      %v352 = vld [vmem:[%s192 + $0x4d0] sm:$0xff]
      %v353 = vld [vmem:[%s192 + $0x4d8] sm:$0xff]
      %v354 = vld [vmem:[%s192 + $0x4e0] sm:$0xff]
      %v355 = vld [vmem:[%s192 + $0x4e8] sm:$0xff]
      %v356 = vld [vmem:[%s192 + $0x4f0] sm:$0xff]
      %v357 = vld [vmem:[%s192 + $0x4f8] sm:$0xff]
      %v358 = vld [vmem:[%s192 + $0x500] sm:$0xff]
      %v359 = vld [vmem:[%s192 + $0x508] sm:$0xff]
      %v360 = vld [vmem:[%s192 + $0x510] sm:$0xff]
      %v361 = vld [vmem:[%s192 + $0x518] sm:$0xff]
      %v362 = vld [vmem:[%s192 + $0x520] sm:$0xff]
      %v363 = vld [vmem:[%s192 + $0x528] sm:$0xff]
      %v364 = vld [vmem:[%s192 + $0x530] sm:$0xff]
      %v365 = vld [vmem:[%s192 + $0x538] sm:$0xff]
      %v366 = vld [vmem:[%s192 + $0x540] sm:$0xff]
      %v367 = vld [vmem:[%s192 + $0x548] sm:$0xff]
      %v368 = vld [vmem:[%s192 + $0x550] sm:$0xff]
      %v369 = vld [vmem:[%s192 + $0x558] sm:$0xff]
      %v370 = vld [vmem:[%s192 + $0x560] sm:$0xff]
      %v371 = vld [vmem:[%s192 + $0x568] sm:$0xff]
      %v372 = vld [vmem:[%s192 + $0x570] sm:$0xff]
      %v373 = vld [vmem:[%s192 + $0x578] sm:$0xff]
      %v374 = vld [vmem:[%s192 + $0x580] sm:$0xff]
      %v375 = vld [vmem:[%s192 + $0x588] sm:$0xff]
      %v376 = vld [vmem:[%s192 + $0x590] sm:$0xff]
      %v377 = vld [vmem:[%s192 + $0x598] sm:$0xff]
      %v378 = vld [vmem:[%s192 + $0x5a0] sm:$0xff]
      %v379 = vld [vmem:[%s192 + $0x5a8] sm:$0xff]
      %v380 = vld [vmem:[%s192 + $0x5b0] sm:$0xff]
      %v381 = vld [vmem:[%s192 + $0x5b8] sm:$0xff]
      %v382 = vld [vmem:[%s192 + $0x5c0] sm:$0xff]
      %v383 = vld [vmem:[%s192 + $0x5c8] sm:$0xff]
      %v384 = vld [vmem:[%s192 + $0x5d0] sm:$0xff]
      %v385 = vld [vmem:[%s192 + $0x5d8] sm:$0xff]
      %v386 = vld [vmem:[%s192 + $0x5e0] sm:$0xff]
      %v387 = vld [vmem:[%s192 + $0x5e8] sm:$0xff]
      %v388 = vld [vmem:[%s192 + $0x5f0] sm:$0xff]
      %v389 = vld [vmem:[%s192 + $0x5f8] sm:$0xff]
      %v390 = vld [vmem:[%s192 + $0x600] sm:$0xff]
      %v391 = vld [vmem:[%s192 + $0x608] sm:$0xff]
      %v392 = vld [vmem:[%s192 + $0x610] sm:$0xff]
      %v393 = vld [vmem:[%s192 + $0x618] sm:$0xff]
      %v394 = vld [vmem:[%s1] sm:$0xff]
      %v395 = vld [vmem:[%s1 + $0x8] sm:$0xff]
      %v396 = vld [vmem:[%s1 + $0x10] sm:$0xff]
      %v397 = vld [vmem:[%s1 + $0x18] sm:$0xff]
      %v398 = vld [vmem:[%s1 + $0x20] sm:$0xff]
      %v399 = vld [vmem:[%s1 + $0x28] sm:$0xff]
      %v400 = vld [vmem:[%s1 + $0x30] sm:$0xff]
      %v401 = vld [vmem:[%s1 + $0x38] sm:$0xff]
      %v402 = vld [vmem:[%s1 + $0x40] sm:$0xff]
      %v403 = vld [vmem:[%s1 + $0x48] sm:$0xff]
      %v404 = vld [vmem:[%s1 + $0x50] sm:$0xff]
      %v405 = vld [vmem:[%s1 + $0x58] sm:$0xff]
      %v406 = vld [vmem:[%s1 + $0x60] sm:$0xff]
      %v407 = vld [vmem:[%s1 + $0x68] sm:$0xff]
      %v408 = vld [vmem:[%s1 + $0x70] sm:$0xff]
      %v409 = vld [vmem:[%s1 + $0x78] sm:$0xff]
      %410 = vmatpush.msra.mxu0 %v409
      %411 = vmatpush.msra.mxu0 %v408
      %412 = vmatpush.msra.mxu0 %v407
      %413 = vmatpush.msra.mxu0 %v406
      %414 = vmatpush.msra.mxu0 %v405
      %415 = vmatpush.msra.mxu0 %v404
      %416 = vmatpush.msra.mxu0 %v403
      %417 = vmatpush.msra.mxu0 %v402
      %418 = vmatpush.msra.mxu0 %v401
      %419 = vmatpush.msra.mxu0 %v400
      %420 = vmatpush.msra.mxu0 %v399
      %421 = vmatpush.msra.mxu0 %v398
      %422 = vmatpush.msra.mxu0 %v397
      %423 = vmatpush.msra.mxu0 %v396
      %424 = vmatpush.msra.mxu0 %v395
      %425 = vmatpush.msra.mxu0 %v394
      %426 = vmatmul.f32.gmra.mxu0 %v198
      %v427 = vpop.f32.mrf.mxu0
      %v428 = vadd.f32 0.0, %v427
      %429 = vmatmul.f32.gmra.mxu0 %v199
      %v430 = vpop.f32.mrf.mxu0
      %v431 = vadd.f32 0.0, %v430
      %432 = vmatmul.f32.gmra.mxu0 %v200
      %v433 = vpop.f32.mrf.mxu0
      %v434 = vadd.f32 0.0, %v433
      %435 = vmatmul.f32.gmra.mxu0 %v201
      %v436 = vpop.f32.mrf.mxu0
      %v437 = vadd.f32 0.0, %v436
      %438 = vmatmul.f32.gmra.mxu0 %v202
      %v439 = vpop.f32.mrf.mxu0
      %v440 = vadd.f32 0.0, %v439
      %441 = vmatmul.f32.gmra.mxu0 %v203
      %v442 = vpop.f32.mrf.mxu0
      %v443 = vadd.f32 0.0, %v442
      %444 = vmatmul.f32.gmra.mxu0 %v204
      %v445 = vpop.f32.mrf.mxu0
      %v446 = vadd.f32 0.0, %v445
      %447 = vmatmul.f32.gmra.mxu0 %v205
      %v448 = vpop.f32.mrf.mxu0
      %v449 = vadd.f32 0.0, %v448
      %450 = vmatmul.f32.gmra.mxu0 %v206
      %v451 = vpop.f32.mrf.mxu0
      %v452 = vadd.f32 0.0, %v451
      %453 = vmatmul.f32.gmra.mxu0 %v207
      %v454 = vpop.f32.mrf.mxu0
      %v455 = vadd.f32 0.0, %v454
      %456 = vmatmul.f32.gmra.mxu0 %v208
      %v457 = vpop.f32.mrf.mxu0
      %v458 = vadd.f32 0.0, %v457
      %459 = vmatmul.f32.gmra.mxu0 %v209
      %v460 = vpop.f32.mrf.mxu0
      %v461 = vadd.f32 0.0, %v460
      %462 = vmatmul.f32.gmra.mxu0 %v210
      %v463 = vpop.f32.mrf.mxu0
      %v464 = vadd.f32 0.0, %v463
      %465 = vmatmul.f32.gmra.mxu0 %v211
      %v466 = vpop.f32.mrf.mxu0
      %v467 = vadd.f32 0.0, %v466
      %468 = vmatmul.f32.gmra.mxu0 %v212
      %v469 = vpop.f32.mrf.mxu0
      %v470 = vadd.f32 0.0, %v469
      %471 = vmatmul.f32.gmra.mxu0 %v213
      %v472 = vpop.f32.mrf.mxu0
      %v473 = vadd.f32 0.0, %v472
      %474 = vmatmul.f32.gmra.mxu0 %v214
      %v475 = vpop.f32.mrf.mxu0
      %v476 = vadd.f32 0.0, %v475
      %477 = vmatmul.f32.gmra.mxu0 %v215
      %v478 = vpop.f32.mrf.mxu0
      %v479 = vadd.f32 0.0, %v478
      %480 = vmatmul.f32.gmra.mxu0 %v216
      %v481 = vpop.f32.mrf.mxu0
      %v482 = vadd.f32 0.0, %v481
      %483 = vmatmul.f32.gmra.mxu0 %v217
      %v484 = vpop.f32.mrf.mxu0
      %v485 = vadd.f32 0.0, %v484
      %486 = vmatmul.f32.gmra.mxu0 %v218
      %v487 = vpop.f32.mrf.mxu0
      %v488 = vadd.f32 0.0, %v487
      %489 = vmatmul.f32.gmra.mxu0 %v219
      %v490 = vpop.f32.mrf.mxu0
      %v491 = vadd.f32 0.0, %v490
      %492 = vmatmul.f32.gmra.mxu0 %v220
      %v493 = vpop.f32.mrf.mxu0
      %v494 = vadd.f32 0.0, %v493
      %495 = vmatmul.f32.gmra.mxu0 %v221
      %v496 = vpop.f32.mrf.mxu0
      %v497 = vadd.f32 0.0, %v496
      %498 = vmatmul.f32.gmra.mxu0 %v222
      %v499 = vpop.f32.mrf.mxu0
      %v500 = vadd.f32 0.0, %v499
      %501 = vmatmul.f32.gmra.mxu0 %v223
      %v502 = vpop.f32.mrf.mxu0
      %v503 = vadd.f32 0.0, %v502
      %504 = vmatmul.f32.gmra.mxu0 %v224
      %v505 = vpop.f32.mrf.mxu0
      %v506 = vadd.f32 0.0, %v505
      %507 = vmatmul.f32.gmra.mxu0 %v225
      %v508 = vpop.f32.mrf.mxu0
      %v509 = vadd.f32 0.0, %v508
      %510 = vmatmul.f32.gmra.mxu0 %v226
      %v511 = vpop.f32.mrf.mxu0
      %v512 = vadd.f32 0.0, %v511
      %513 = vmatmul.f32.gmra.mxu0 %v227
      %v514 = vpop.f32.mrf.mxu0
      %v515 = vadd.f32 0.0, %v514
      %516 = vmatmul.f32.gmra.mxu0 %v228
      %v517 = vpop.f32.mrf.mxu0
      %v518 = vadd.f32 0.0, %v517
      %519 = vmatmul.f32.gmra.mxu0 %v229
      %v520 = vpop.f32.mrf.mxu0
      %v521 = vadd.f32 0.0, %v520
      %522 = vmatmul.f32.gmra.mxu0 %v230
      %v523 = vpop.f32.mrf.mxu0
      %v524 = vadd.f32 0.0, %v523
      %525 = vmatmul.f32.gmra.mxu0 %v231
      %v526 = vpop.f32.mrf.mxu0
      %v527 = vadd.f32 0.0, %v526
      %528 = vmatmul.f32.gmra.mxu0 %v232
      %v529 = vpop.f32.mrf.mxu0
      %v530 = vadd.f32 0.0, %v529
      %531 = vmatmul.f32.gmra.mxu0 %v233
      %v532 = vpop.f32.mrf.mxu0
      %v533 = vadd.f32 0.0, %v532
      %534 = vmatmul.f32.gmra.mxu0 %v234
      %v535 = vpop.f32.mrf.mxu0
      %v536 = vadd.f32 0.0, %v535
      %537 = vmatmul.f32.gmra.mxu0 %v235
      %v538 = vpop.f32.mrf.mxu0
      %v539 = vadd.f32 0.0, %v538
      %540 = vmatmul.f32.gmra.mxu0 %v236
      %v541 = vpop.f32.mrf.mxu0
      %v542 = vadd.f32 0.0, %v541
      %543 = vmatmul.f32.gmra.mxu0 %v237
      %v544 = vpop.f32.mrf.mxu0
      %v545 = vadd.f32 0.0, %v544
      %546 = vmatmul.f32.gmra.mxu0 %v238
      %v547 = vpop.f32.mrf.mxu0
      %v548 = vadd.f32 0.0, %v547
      %549 = vmatmul.f32.gmra.mxu0 %v239
      %v550 = vpop.f32.mrf.mxu0
      %v551 = vadd.f32 0.0, %v550
      %552 = vmatmul.f32.gmra.mxu0 %v240
      %v553 = vpop.f32.mrf.mxu0
      %v554 = vadd.f32 0.0, %v553
      %555 = vmatmul.f32.gmra.mxu0 %v241
      %v556 = vpop.f32.mrf.mxu0
      %v557 = vadd.f32 0.0, %v556
      %558 = vmatmul.f32.gmra.mxu0 %v242
      %v559 = vpop.f32.mrf.mxu0
      %v560 = vadd.f32 0.0, %v559
      %561 = vmatmul.f32.gmra.mxu0 %v243
      %v562 = vpop.f32.mrf.mxu0
      %v563 = vadd.f32 0.0, %v562
      %564 = vmatmul.f32.gmra.mxu0 %v244
      %v565 = vpop.f32.mrf.mxu0
      %v566 = vadd.f32 0.0, %v565
      %567 = vmatmul.f32.gmra.mxu0 %v245
      %v568 = vpop.f32.mrf.mxu0
      %v569 = vadd.f32 0.0, %v568
      %570 = vmatmul.f32.gmra.mxu0 %v246
      %v571 = vpop.f32.mrf.mxu0
      %v572 = vadd.f32 0.0, %v571
      %573 = vmatmul.f32.gmra.mxu0 %v247
      %v574 = vpop.f32.mrf.mxu0
      %v575 = vadd.f32 0.0, %v574
      %576 = vmatmul.f32.gmra.mxu0 %v248
      %v577 = vpop.f32.mrf.mxu0
      %v578 = vadd.f32 0.0, %v577
      %579 = vmatmul.f32.gmra.mxu0 %v249
      %v580 = vpop.f32.mrf.mxu0
      %v581 = vadd.f32 0.0, %v580
      %582 = vmatmul.f32.gmra.mxu0 %v250
      %v583 = vpop.f32.mrf.mxu0
      %v584 = vadd.f32 0.0, %v583
      %585 = vmatmul.f32.gmra.mxu0 %v251
      %v586 = vpop.f32.mrf.mxu0
      %v587 = vadd.f32 0.0, %v586
      %588 = vmatmul.f32.gmra.mxu0 %v252
      %v589 = vpop.f32.mrf.mxu0
      %v590 = vadd.f32 0.0, %v589
      %591 = vmatmul.f32.gmra.mxu0 %v253
      %v592 = vpop.f32.mrf.mxu0
      %v593 = vadd.f32 0.0, %v592
      %594 = vmatmul.f32.gmra.mxu0 %v254
      %v595 = vpop.f32.mrf.mxu0
      %v596 = vadd.f32 0.0, %v595
      %597 = vmatmul.f32.gmra.mxu0 %v255
      %v598 = vpop.f32.mrf.mxu0
      %v599 = vadd.f32 0.0, %v598
      %600 = vmatmul.f32.gmra.mxu0 %v256
      %v601 = vpop.f32.mrf.mxu0
      %v602 = vadd.f32 0.0, %v601
      %603 = vmatmul.f32.gmra.mxu0 %v257
      %v604 = vpop.f32.mrf.mxu0
      %v605 = vadd.f32 0.0, %v604
      %606 = vmatmul.f32.gmra.mxu0 %v258
      %v607 = vpop.f32.mrf.mxu0
      %v608 = vadd.f32 0.0, %v607
      %609 = vmatmul.f32.gmra.mxu0 %v259
      %v610 = vpop.f32.mrf.mxu0
      %v611 = vadd.f32 0.0, %v610
      %612 = vmatmul.f32.gmra.mxu0 %v260
      %v613 = vpop.f32.mrf.mxu0
      %v614 = vadd.f32 0.0, %v613
      %615 = vmatmul.f32.gmra.mxu0 %v261
      %v616 = vpop.f32.mrf.mxu0
      %v617 = vadd.f32 0.0, %v616
      %618 = vmatmul.f32.gmra.mxu0 %v262
      %v619 = vpop.f32.mrf.mxu0
      %v620 = vadd.f32 0.0, %v619
      %621 = vmatmul.f32.gmra.mxu0 %v263
      %v622 = vpop.f32.mrf.mxu0
      %v623 = vadd.f32 0.0, %v622
      %624 = vmatmul.f32.gmra.mxu0 %v264
      %v625 = vpop.f32.mrf.mxu0
      %v626 = vadd.f32 0.0, %v625
      %627 = vmatmul.f32.gmra.mxu0 %v265
      %v628 = vpop.f32.mrf.mxu0
      %v629 = vadd.f32 0.0, %v628
      %630 = vmatmul.f32.gmra.mxu0 %v266
      %v631 = vpop.f32.mrf.mxu0
      %v632 = vadd.f32 0.0, %v631
      %633 = vmatmul.f32.gmra.mxu0 %v267
      %v634 = vpop.f32.mrf.mxu0
      %v635 = vadd.f32 0.0, %v634
      %636 = vmatmul.f32.gmra.mxu0 %v268
      %v637 = vpop.f32.mrf.mxu0
      %v638 = vadd.f32 0.0, %v637
      %639 = vmatmul.f32.gmra.mxu0 %v269
      %v640 = vpop.f32.mrf.mxu0
      %v641 = vadd.f32 0.0, %v640
      %642 = vmatmul.f32.gmra.mxu0 %v270
      %v643 = vpop.f32.mrf.mxu0
      %v644 = vadd.f32 0.0, %v643
      %645 = vmatmul.f32.gmra.mxu0 %v271
      %v646 = vpop.f32.mrf.mxu0
      %v647 = vadd.f32 0.0, %v646
      %648 = vmatmul.f32.gmra.mxu0 %v272
      %v649 = vpop.f32.mrf.mxu0
      %v650 = vadd.f32 0.0, %v649
      %651 = vmatmul.f32.gmra.mxu0 %v273
      %v652 = vpop.f32.mrf.mxu0
      %v653 = vadd.f32 0.0, %v652
      %654 = vmatmul.f32.gmra.mxu0 %v274
      %v655 = vpop.f32.mrf.mxu0
      %v656 = vadd.f32 0.0, %v655
      %657 = vmatmul.f32.gmra.mxu0 %v275
      %v658 = vpop.f32.mrf.mxu0
      %v659 = vadd.f32 0.0, %v658
      %660 = vmatmul.f32.gmra.mxu0 %v276
      %v661 = vpop.f32.mrf.mxu0
      %v662 = vadd.f32 0.0, %v661
      %663 = vmatmul.f32.gmra.mxu0 %v277
      %v664 = vpop.f32.mrf.mxu0
      %v665 = vadd.f32 0.0, %v664
      %666 = vmatmul.f32.gmra.mxu0 %v278
      %v667 = vpop.f32.mrf.mxu0
      %v668 = vadd.f32 0.0, %v667
      %669 = vmatmul.f32.gmra.mxu0 %v279
      %v670 = vpop.f32.mrf.mxu0
      %v671 = vadd.f32 0.0, %v670
      %672 = vmatmul.f32.gmra.mxu0 %v280
      %v673 = vpop.f32.mrf.mxu0
      %v674 = vadd.f32 0.0, %v673
      %675 = vmatmul.f32.gmra.mxu0 %v281
      %v676 = vpop.f32.mrf.mxu0
      %v677 = vadd.f32 0.0, %v676
      %678 = vmatmul.f32.gmra.mxu0 %v282
      %v679 = vpop.f32.mrf.mxu0
      %v680 = vadd.f32 0.0, %v679
      %681 = vmatmul.f32.gmra.mxu0 %v283
      %v682 = vpop.f32.mrf.mxu0
      %v683 = vadd.f32 0.0, %v682
      %684 = vmatmul.f32.gmra.mxu0 %v284
      %v685 = vpop.f32.mrf.mxu0
      %v686 = vadd.f32 0.0, %v685
      %687 = vmatmul.f32.gmra.mxu0 %v285
      %v688 = vpop.f32.mrf.mxu0
      %v689 = vadd.f32 0.0, %v688
      %690 = vmatmul.f32.gmra.mxu0 %v286
      %v691 = vpop.f32.mrf.mxu0
      %v692 = vadd.f32 0.0, %v691
      %693 = vmatmul.f32.gmra.mxu0 %v287
      %v694 = vpop.f32.mrf.mxu0
      %v695 = vadd.f32 0.0, %v694
      %696 = vmatmul.f32.gmra.mxu0 %v288
      %v697 = vpop.f32.mrf.mxu0
      %v698 = vadd.f32 0.0, %v697
      %699 = vmatmul.f32.gmra.mxu0 %v289
      %v700 = vpop.f32.mrf.mxu0
      %v701 = vadd.f32 0.0, %v700
      %702 = vmatmul.f32.gmra.mxu0 %v290
      %v703 = vpop.f32.mrf.mxu0
      %v704 = vadd.f32 0.0, %v703
      %705 = vmatmul.f32.gmra.mxu0 %v291
      %v706 = vpop.f32.mrf.mxu0
      %v707 = vadd.f32 0.0, %v706
      %708 = vmatmul.f32.gmra.mxu0 %v292
      %v709 = vpop.f32.mrf.mxu0
      %v710 = vadd.f32 0.0, %v709
      %711 = vmatmul.f32.gmra.mxu0 %v293
      %v712 = vpop.f32.mrf.mxu0
      %v713 = vadd.f32 0.0, %v712
      %714 = vmatmul.f32.gmra.mxu0 %v294
      %v715 = vpop.f32.mrf.mxu0
      %v716 = vadd.f32 0.0, %v715
      %717 = vmatmul.f32.gmra.mxu0 %v295
      %v718 = vpop.f32.mrf.mxu0
      %v719 = vadd.f32 0.0, %v718
      %720 = vmatmul.f32.gmra.mxu0 %v296
      %v721 = vpop.f32.mrf.mxu0
      %v722 = vadd.f32 0.0, %v721
      %723 = vmatmul.f32.gmra.mxu0 %v297
      %v724 = vpop.f32.mrf.mxu0
      %v725 = vadd.f32 0.0, %v724
      %726 = vmatmul.f32.gmra.mxu0 %v298
      %v727 = vpop.f32.mrf.mxu0
      %v728 = vadd.f32 0.0, %v727
      %729 = vmatmul.f32.gmra.mxu0 %v299
      %v730 = vpop.f32.mrf.mxu0
      %v731 = vadd.f32 0.0, %v730
      %732 = vmatmul.f32.gmra.mxu0 %v300
      %v733 = vpop.f32.mrf.mxu0
      %v734 = vadd.f32 0.0, %v733
      %735 = vmatmul.f32.gmra.mxu0 %v301
      %v736 = vpop.f32.mrf.mxu0
      %v737 = vadd.f32 0.0, %v736
      %738 = vmatmul.f32.gmra.mxu0 %v302
      %v739 = vpop.f32.mrf.mxu0
      %v740 = vadd.f32 0.0, %v739
      %741 = vmatmul.f32.gmra.mxu0 %v303
      %v742 = vpop.f32.mrf.mxu0
      %v743 = vadd.f32 0.0, %v742
      %744 = vmatmul.f32.gmra.mxu0 %v304
      %v745 = vpop.f32.mrf.mxu0
      %v746 = vadd.f32 0.0, %v745
      %747 = vmatmul.f32.gmra.mxu0 %v305
      %v748 = vpop.f32.mrf.mxu0
      %v749 = vadd.f32 0.0, %v748
      %750 = vmatmul.f32.gmra.mxu0 %v306
      %v751 = vpop.f32.mrf.mxu0
      %v752 = vadd.f32 0.0, %v751
      %753 = vmatmul.f32.gmra.mxu0 %v307
      %v754 = vpop.f32.mrf.mxu0
      %v755 = vadd.f32 0.0, %v754
      %756 = vmatmul.f32.gmra.mxu0 %v308
      %v757 = vpop.f32.mrf.mxu0
      %v758 = vadd.f32 0.0, %v757
      %759 = vmatmul.f32.gmra.mxu0 %v309
      %v760 = vpop.f32.mrf.mxu0
      %v761 = vadd.f32 0.0, %v760
      %762 = vmatmul.f32.gmra.mxu0 %v310
      %v763 = vpop.f32.mrf.mxu0
      %v764 = vadd.f32 0.0, %v763
      %765 = vmatmul.f32.gmra.mxu0 %v311
      %v766 = vpop.f32.mrf.mxu0
      %v767 = vadd.f32 0.0, %v766
      %768 = vmatmul.f32.gmra.mxu0 %v312
      %v769 = vpop.f32.mrf.mxu0
      %v770 = vadd.f32 0.0, %v769
      %771 = vmatmul.f32.gmra.mxu0 %v313
      %v772 = vpop.f32.mrf.mxu0
      %v773 = vadd.f32 0.0, %v772
      %774 = vmatmul.f32.gmra.mxu0 %v314
      %v775 = vpop.f32.mrf.mxu0
      %v776 = vadd.f32 0.0, %v775
      %777 = vmatmul.f32.gmra.mxu0 %v315
      %v778 = vpop.f32.mrf.mxu0
      %v779 = vadd.f32 0.0, %v778
      %780 = vmatmul.f32.gmra.mxu0 %v316
      %v781 = vpop.f32.mrf.mxu0
      %v782 = vadd.f32 0.0, %v781
      %783 = vmatmul.f32.gmra.mxu0 %v317
      %v784 = vpop.f32.mrf.mxu0
      %v785 = vadd.f32 0.0, %v784
      %786 = vmatmul.f32.gmra.mxu0 %v318
      %v787 = vpop.f32.mrf.mxu0
      %v788 = vadd.f32 0.0, %v787
      %789 = vmatmul.f32.gmra.mxu0 %v319
      %v790 = vpop.f32.mrf.mxu0
      %v791 = vadd.f32 0.0, %v790
      %792 = vmatmul.f32.gmra.mxu0 %v320
      %v793 = vpop.f32.mrf.mxu0
      %v794 = vadd.f32 0.0, %v793
      %795 = vmatmul.f32.gmra.mxu0 %v321
      %v796 = vpop.f32.mrf.mxu0
      %v797 = vadd.f32 0.0, %v796
      %798 = vmatmul.f32.gmra.mxu0 %v322
      %v799 = vpop.f32.mrf.mxu0
      %v800 = vadd.f32 0.0, %v799
      %801 = vmatmul.f32.gmra.mxu0 %v323
      %v802 = vpop.f32.mrf.mxu0
      %v803 = vadd.f32 0.0, %v802
      %804 = vmatmul.f32.gmra.mxu0 %v324
      %v805 = vpop.f32.mrf.mxu0
      %v806 = vadd.f32 0.0, %v805
      %807 = vmatmul.f32.gmra.mxu0 %v325
      %v808 = vpop.f32.mrf.mxu0
      %v809 = vadd.f32 0.0, %v808
      %810 = vmatmul.f32.gmra.mxu0 %v326
      %v811 = vpop.f32.mrf.mxu0
      %v812 = vadd.f32 0.0, %v811
      %813 = vmatmul.f32.gmra.mxu0 %v327
      %v814 = vpop.f32.mrf.mxu0
      %v815 = vadd.f32 0.0, %v814
      %816 = vmatmul.f32.gmra.mxu0 %v328
      %v817 = vpop.f32.mrf.mxu0
      %v818 = vadd.f32 0.0, %v817
      %819 = vmatmul.f32.gmra.mxu0 %v329
      %v820 = vpop.f32.mrf.mxu0
      %v821 = vadd.f32 0.0, %v820
      %822 = vmatmul.f32.gmra.mxu0 %v330
      %v823 = vpop.f32.mrf.mxu0
      %v824 = vadd.f32 0.0, %v823
      %825 = vmatmul.f32.gmra.mxu0 %v331
      %v826 = vpop.f32.mrf.mxu0
      %v827 = vadd.f32 0.0, %v826
      %828 = vmatmul.f32.gmra.mxu0 %v332
      %v829 = vpop.f32.mrf.mxu0
      %v830 = vadd.f32 0.0, %v829
      %831 = vmatmul.f32.gmra.mxu0 %v333
      %v832 = vpop.f32.mrf.mxu0
      %v833 = vadd.f32 0.0, %v832
      %834 = vmatmul.f32.gmra.mxu0 %v334
      %v835 = vpop.f32.mrf.mxu0
      %v836 = vadd.f32 0.0, %v835
      %837 = vmatmul.f32.gmra.mxu0 %v335
      %v838 = vpop.f32.mrf.mxu0
      %v839 = vadd.f32 0.0, %v838
      %840 = vmatmul.f32.gmra.mxu0 %v336
      %v841 = vpop.f32.mrf.mxu0
      %v842 = vadd.f32 0.0, %v841
      %843 = vmatmul.f32.gmra.mxu0 %v337
      %v844 = vpop.f32.mrf.mxu0
      %v845 = vadd.f32 0.0, %v844
      %846 = vmatmul.f32.gmra.mxu0 %v338
      %v847 = vpop.f32.mrf.mxu0
      %v848 = vadd.f32 0.0, %v847
      %849 = vmatmul.f32.gmra.mxu0 %v339
      %v850 = vpop.f32.mrf.mxu0
      %v851 = vadd.f32 0.0, %v850
      %852 = vmatmul.f32.gmra.mxu0 %v340
      %v853 = vpop.f32.mrf.mxu0
      %v854 = vadd.f32 0.0, %v853
      %855 = vmatmul.f32.gmra.mxu0 %v341
      %v856 = vpop.f32.mrf.mxu0
      %v857 = vadd.f32 0.0, %v856
      %858 = vmatmul.f32.gmra.mxu0 %v342
      %v859 = vpop.f32.mrf.mxu0
      %v860 = vadd.f32 0.0, %v859
      %861 = vmatmul.f32.gmra.mxu0 %v343
      %v862 = vpop.f32.mrf.mxu0
      %v863 = vadd.f32 0.0, %v862
      %864 = vmatmul.f32.gmra.mxu0 %v344
      %v865 = vpop.f32.mrf.mxu0
      %v866 = vadd.f32 0.0, %v865
      %867 = vmatmul.f32.gmra.mxu0 %v345
      %v868 = vpop.f32.mrf.mxu0
      %v869 = vadd.f32 0.0, %v868
      %870 = vmatmul.f32.gmra.mxu0 %v346
      %v871 = vpop.f32.mrf.mxu0
      %v872 = vadd.f32 0.0, %v871
      %873 = vmatmul.f32.gmra.mxu0 %v347
      %v874 = vpop.f32.mrf.mxu0
      %v875 = vadd.f32 0.0, %v874
      %876 = vmatmul.f32.gmra.mxu0 %v348
      %v877 = vpop.f32.mrf.mxu0
      %v878 = vadd.f32 0.0, %v877
      %879 = vmatmul.f32.gmra.mxu0 %v349
      %v880 = vpop.f32.mrf.mxu0
      %v881 = vadd.f32 0.0, %v880
      %882 = vmatmul.f32.gmra.mxu0 %v350
      %v883 = vpop.f32.mrf.mxu0
      %v884 = vadd.f32 0.0, %v883
      %885 = vmatmul.f32.gmra.mxu0 %v351
      %v886 = vpop.f32.mrf.mxu0
      %v887 = vadd.f32 0.0, %v886
      %888 = vmatmul.f32.gmra.mxu0 %v352
      %v889 = vpop.f32.mrf.mxu0
      %v890 = vadd.f32 0.0, %v889
      %891 = vmatmul.f32.gmra.mxu0 %v353
      %v892 = vpop.f32.mrf.mxu0
      %v893 = vadd.f32 0.0, %v892
      %894 = vmatmul.f32.gmra.mxu0 %v354
      %v895 = vpop.f32.mrf.mxu0
      %v896 = vadd.f32 0.0, %v895
      %897 = vmatmul.f32.gmra.mxu0 %v355
      %v898 = vpop.f32.mrf.mxu0
      %v899 = vadd.f32 0.0, %v898
      %900 = vmatmul.f32.gmra.mxu0 %v356
      %v901 = vpop.f32.mrf.mxu0
      %v902 = vadd.f32 0.0, %v901
      %903 = vmatmul.f32.gmra.mxu0 %v357
      %v904 = vpop.f32.mrf.mxu0
      %v905 = vadd.f32 0.0, %v904
      %906 = vmatmul.f32.gmra.mxu0 %v358
      %v907 = vpop.f32.mrf.mxu0
      %v908 = vadd.f32 0.0, %v907
      %909 = vmatmul.f32.gmra.mxu0 %v359
      %v910 = vpop.f32.mrf.mxu0
      %v911 = vadd.f32 0.0, %v910
      %912 = vmatmul.f32.gmra.mxu0 %v360
      %v913 = vpop.f32.mrf.mxu0
      %v914 = vadd.f32 0.0, %v913
      %915 = vmatmul.f32.gmra.mxu0 %v361
      %v916 = vpop.f32.mrf.mxu0
      %v917 = vadd.f32 0.0, %v916
      %918 = vmatmul.f32.gmra.mxu0 %v362
      %v919 = vpop.f32.mrf.mxu0
      %v920 = vadd.f32 0.0, %v919
      %921 = vmatmul.f32.gmra.mxu0 %v363
      %v922 = vpop.f32.mrf.mxu0
      %v923 = vadd.f32 0.0, %v922
      %924 = vmatmul.f32.gmra.mxu0 %v364
      %v925 = vpop.f32.mrf.mxu0
      %v926 = vadd.f32 0.0, %v925
      %927 = vmatmul.f32.gmra.mxu0 %v365
      %v928 = vpop.f32.mrf.mxu0
      %v929 = vadd.f32 0.0, %v928
      %930 = vmatmul.f32.gmra.mxu0 %v366
      %v931 = vpop.f32.mrf.mxu0
      %v932 = vadd.f32 0.0, %v931
      %933 = vmatmul.f32.gmra.mxu0 %v367
      %v934 = vpop.f32.mrf.mxu0
      %v935 = vadd.f32 0.0, %v934
      %936 = vmatmul.f32.gmra.mxu0 %v368
      %v937 = vpop.f32.mrf.mxu0
      %v938 = vadd.f32 0.0, %v937
      %939 = vmatmul.f32.gmra.mxu0 %v369
      %v940 = vpop.f32.mrf.mxu0
      %v941 = vadd.f32 0.0, %v940
      %942 = vmatmul.f32.gmra.mxu0 %v370
      %v943 = vpop.f32.mrf.mxu0
      %v944 = vadd.f32 0.0, %v943
      %945 = vmatmul.f32.gmra.mxu0 %v371
      %v946 = vpop.f32.mrf.mxu0
      %v947 = vadd.f32 0.0, %v946
      %948 = vmatmul.f32.gmra.mxu0 %v372
      %v949 = vpop.f32.mrf.mxu0
      %v950 = vadd.f32 0.0, %v949
      %951 = vmatmul.f32.gmra.mxu0 %v373
      %v952 = vpop.f32.mrf.mxu0
      %v953 = vadd.f32 0.0, %v952
      %954 = vmatmul.f32.gmra.mxu0 %v374
      %v955 = vpop.f32.mrf.mxu0
      %v956 = vadd.f32 0.0, %v955
      %957 = vmatmul.f32.gmra.mxu0 %v375
      %v958 = vpop.f32.mrf.mxu0
      %v959 = vadd.f32 0.0, %v958
      %960 = vmatmul.f32.gmra.mxu0 %v376
      %v961 = vpop.f32.mrf.mxu0
      %v962 = vadd.f32 0.0, %v961
      %963 = vmatmul.f32.gmra.mxu0 %v377
      %v964 = vpop.f32.mrf.mxu0
      %v965 = vadd.f32 0.0, %v964
      %966 = vmatmul.f32.gmra.mxu0 %v378
      %v967 = vpop.f32.mrf.mxu0
      %v968 = vadd.f32 0.0, %v967
      %969 = vmatmul.f32.gmra.mxu0 %v379
      %v970 = vpop.f32.mrf.mxu0
      %v971 = vadd.f32 0.0, %v970
      %972 = vmatmul.f32.gmra.mxu0 %v380
      %v973 = vpop.f32.mrf.mxu0
      %v974 = vadd.f32 0.0, %v973
      %975 = vmatmul.f32.gmra.mxu0 %v381
      %v976 = vpop.f32.mrf.mxu0
      %v977 = vadd.f32 0.0, %v976
      %978 = vmatmul.f32.gmra.mxu0 %v382
      %v979 = vpop.f32.mrf.mxu0
      %v980 = vadd.f32 0.0, %v979
      %981 = vmatmul.f32.gmra.mxu0 %v383
      %v982 = vpop.f32.mrf.mxu0
      %v983 = vadd.f32 0.0, %v982
      %984 = vmatmul.f32.gmra.mxu0 %v384
      %v985 = vpop.f32.mrf.mxu0
      %v986 = vadd.f32 0.0, %v985
      %987 = vmatmul.f32.gmra.mxu0 %v385
      %v988 = vpop.f32.mrf.mxu0
      %v989 = vadd.f32 0.0, %v988
      %990 = vmatmul.f32.gmra.mxu0 %v386
      %v991 = vpop.f32.mrf.mxu0
      %v992 = vadd.f32 0.0, %v991
      %993 = vmatmul.f32.gmra.mxu0 %v387
      %v994 = vpop.f32.mrf.mxu0
      %v995 = vadd.f32 0.0, %v994
      %996 = vmatmul.f32.gmra.mxu0 %v388
      %v997 = vpop.f32.mrf.mxu0
      %v998 = vadd.f32 0.0, %v997
      %999 = vmatmul.f32.gmra.mxu0 %v389
      %v1000 = vpop.f32.mrf.mxu0
      %v1001 = vadd.f32 0.0, %v1000
      %1002 = vmatmul.f32.gmra.mxu0 %v390
      %v1003 = vpop.f32.mrf.mxu0
      %v1004 = vadd.f32 0.0, %v1003
      %1005 = vmatmul.f32.gmra.mxu0 %v391
      %v1006 = vpop.f32.mrf.mxu0
      %v1007 = vadd.f32 0.0, %v1006
      %1008 = vmatmul.f32.gmra.mxu0 %v392
      %v1009 = vpop.f32.mrf.mxu0
      %v1010 = vadd.f32 0.0, %v1009
      %1011 = vmatmul.f32.gmra.mxu0 %v393
      %v1012 = vpop.f32.mrf.mxu0
      %v1013 = vadd.f32 0.0, %v1012
      %1014 = vdwg.mxu0
      %v1015 = vadd.f32 %v428, %v431
      %v1016 = vadd.f32 %v1015, %v434
      %v1017 = vadd.f32 %v1016, %v437
      %v1018 = vadd.f32 %v1017, %v440
      %v1019 = vadd.f32 %v1018, %v443
      %v1020 = vadd.f32 %v1019, %v446
      %v1021 = vadd.f32 %v1020, %v449
      %v1022 = vadd.f32 %v1021, %v452
      %v1023 = vadd.f32 %v1022, %v455
      %v1024 = vadd.f32 %v1023, %v458
      %v1025 = vadd.f32 %v1024, %v461
      %v1026 = vadd.f32 %v1025, %v464
      %v1027 = vadd.f32 %v1026, %v467
      %v1028 = vadd.f32 %v1027, %v470
      %v1029 = vadd.f32 %v1028, %v473
      %v1030 = vadd.f32 %v1029, %v476
      %v1031 = vadd.f32 %v1030, %v479
      %v1032 = vadd.f32 %v1031, %v482
      %v1033 = vadd.f32 %v1032, %v485
      %v1034 = vadd.f32 %v1033, %v488
      %v1035 = vadd.f32 %v1034, %v491
      %v1036 = vadd.f32 %v1035, %v494
      %v1037 = vadd.f32 %v1036, %v497
      %v1038 = vadd.f32 %v1037, %v500
      %v1039 = vadd.f32 %v1038, %v503
      %v1040 = vadd.f32 %v1039, %v506
      %v1041 = vadd.f32 %v1040, %v509
      %v1042 = vadd.f32 %v1041, %v512
      %v1043 = vadd.f32 %v1042, %v515
      %v1044 = vadd.f32 %v1043, %v518
      %v1045 = vadd.f32 %v1044, %v521
      %v1046 = vadd.f32 %v1045, %v524
      %v1047 = vadd.f32 %v1046, %v527
      %v1048 = vadd.f32 %v1047, %v530
      %v1049 = vadd.f32 %v1048, %v533
      %v1050 = vadd.f32 %v1049, %v536
      %v1051 = vadd.f32 %v1050, %v539
      %v1052 = vadd.f32 %v1051, %v542
      %v1053 = vadd.f32 %v1052, %v545
      %v1054 = vadd.f32 %v1053, %v548
      %v1055 = vadd.f32 %v1054, %v551
      %v1056 = vadd.f32 %v1055, %v554
      %v1057 = vadd.f32 %v1056, %v557
      %v1058 = vadd.f32 %v1057, %v560
      %v1059 = vadd.f32 %v1058, %v563
      %v1060 = vadd.f32 %v1059, %v566
      %v1061 = vadd.f32 %v1060, %v569
      %v1062 = vadd.f32 %v1061, %v572
      %v1063 = vadd.f32 %v1062, %v575
      %v1064 = vadd.f32 %v1063, %v578
      %v1065 = vadd.f32 %v1064, %v581
      %v1066 = vadd.f32 %v1065, %v584
      %v1067 = vadd.f32 %v1066, %v587
      %v1068 = vadd.f32 %v1067, %v590
      %v1069 = vadd.f32 %v1068, %v593
      %v1070 = vadd.f32 %v1069, %v596
      %v1071 = vadd.f32 %v1070, %v599
      %v1072 = vadd.f32 %v1071, %v602
      %v1073 = vadd.f32 %v1072, %v605
      %v1074 = vadd.f32 %v1073, %v608
      %v1075 = vadd.f32 %v1074, %v611
      %v1076 = vadd.f32 %v1075, %v614
      %v1077 = vadd.f32 %v1076, %v617
      %v1078 = vadd.f32 %v1077, %v620
      %v1079 = vadd.f32 %v1078, %v623
      %v1080 = vadd.f32 %v1079, %v626
      %v1081 = vadd.f32 %v1080, %v629
      %v1082 = vadd.f32 %v1081, %v632
      %v1083 = vadd.f32 %v1082, %v635
      %v1084 = vadd.f32 %v1083, %v638
      %v1085 = vadd.f32 %v1084, %v641
      %v1086 = vadd.f32 %v1085, %v644
      %v1087 = vadd.f32 %v1086, %v647
      %v1088 = vadd.f32 %v1087, %v650
      %v1089 = vadd.f32 %v1088, %v653
      %v1090 = vadd.f32 %v1089, %v656
      %v1091 = vadd.f32 %v1090, %v659
      %v1092 = vadd.f32 %v1091, %v662
      %v1093 = vadd.f32 %v1092, %v665
      %v1094 = vadd.f32 %v1093, %v668
      %v1095 = vadd.f32 %v1094, %v671
      %v1096 = vadd.f32 %v1095, %v674
      %v1097 = vadd.f32 %v1096, %v677
      %v1098 = vadd.f32 %v1097, %v680
      %v1099 = vadd.f32 %v1098, %v683
      %v1100 = vadd.f32 %v1099, %v686
      %v1101 = vadd.f32 %v1100, %v689
      %v1102 = vadd.f32 %v1101, %v692
      %v1103 = vadd.f32 %v1102, %v695
      %v1104 = vadd.f32 %v1103, %v698
      %v1105 = vadd.f32 %v1104, %v701
      %v1106 = vadd.f32 %v1105, %v704
      %v1107 = vadd.f32 %v1106, %v707
      %v1108 = vadd.f32 %v1107, %v710
      %v1109 = vadd.f32 %v1108, %v713
      %v1110 = vadd.f32 %v1109, %v716
      %v1111 = vadd.f32 %v1110, %v719
      %v1112 = vadd.f32 %v1111, %v722
      %v1113 = vadd.f32 %v1112, %v725
      %v1114 = vadd.f32 %v1113, %v728
      %v1115 = vadd.f32 %v1114, %v731
      %v1116 = vadd.f32 %v1115, %v734
      %v1117 = vadd.f32 %v1116, %v737
      %v1118 = vadd.f32 %v1117, %v740
      %v1119 = vadd.f32 %v1118, %v743
      %v1120 = vadd.f32 %v1119, %v746
      %v1121 = vadd.f32 %v1120, %v749
      %v1122 = vadd.f32 %v1121, %v752
      %v1123 = vadd.f32 %v1122, %v755
      %v1124 = vadd.f32 %v1123, %v758
      %v1125 = vadd.f32 %v1124, %v761
      %v1126 = vadd.f32 %v1125, %v764
      %v1127 = vadd.f32 %v1126, %v767
      %v1128 = vadd.f32 %v1127, %v770
      %v1129 = vadd.f32 %v1128, %v773
      %v1130 = vadd.f32 %v1129, %v776
      %v1131 = vadd.f32 %v1130, %v779
      %v1132 = vadd.f32 %v1131, %v782
      %v1133 = vadd.f32 %v1132, %v785
      %v1134 = vadd.f32 %v1133, %v788
      %v1135 = vadd.f32 %v1134, %v791
      %v1136 = vadd.f32 %v1135, %v794
      %v1137 = vadd.f32 %v1136, %v797
      %v1138 = vadd.f32 %v1137, %v800
      %v1139 = vadd.f32 %v1138, %v803
      %v1140 = vadd.f32 %v1139, %v806
      %v1141 = vadd.f32 %v1140, %v809
      %v1142 = vadd.f32 %v1141, %v812
      %v1143 = vadd.f32 %v1142, %v815
      %v1144 = vadd.f32 %v1143, %v818
      %v1145 = vadd.f32 %v1144, %v821
      %v1146 = vadd.f32 %v1145, %v824
      %v1147 = vadd.f32 %v1146, %v827
      %v1148 = vadd.f32 %v1147, %v830
      %v1149 = vadd.f32 %v1148, %v833
      %v1150 = vadd.f32 %v1149, %v836
      %v1151 = vadd.f32 %v1150, %v839
      %v1152 = vadd.f32 %v1151, %v842
      %v1153 = vadd.f32 %v1152, %v845
      %v1154 = vadd.f32 %v1153, %v848
      %v1155 = vadd.f32 %v1154, %v851
      %v1156 = vadd.f32 %v1155, %v854
      %v1157 = vadd.f32 %v1156, %v857
      %v1158 = vadd.f32 %v1157, %v860
      %v1159 = vadd.f32 %v1158, %v863
      %v1160 = vadd.f32 %v1159, %v866
      %v1161 = vadd.f32 %v1160, %v869
      %v1162 = vadd.f32 %v1161, %v872
      %v1163 = vadd.f32 %v1162, %v875
      %v1164 = vadd.f32 %v1163, %v878
      %v1165 = vadd.f32 %v1164, %v881
      %v1166 = vadd.f32 %v1165, %v884
      %v1167 = vadd.f32 %v1166, %v887
      %v1168 = vadd.f32 %v1167, %v890
      %v1169 = vadd.f32 %v1168, %v893
      %v1170 = vadd.f32 %v1169, %v896
      %v1171 = vadd.f32 %v1170, %v899
      %v1172 = vadd.f32 %v1171, %v902
      %v1173 = vadd.f32 %v1172, %v905
      %v1174 = vadd.f32 %v1173, %v908
      %v1175 = vadd.f32 %v1174, %v911
      %v1176 = vadd.f32 %v1175, %v914
      %v1177 = vadd.f32 %v1176, %v917
      %v1178 = vadd.f32 %v1177, %v920
      %v1179 = vadd.f32 %v1178, %v923
      %v1180 = vadd.f32 %v1179, %v926
      %v1181 = vadd.f32 %v1180, %v929
      %v1182 = vadd.f32 %v1181, %v932
      %v1183 = vadd.f32 %v1182, %v935
      %v1184 = vadd.f32 %v1183, %v938
      %v1185 = vadd.f32 %v1184, %v941
      %v1186 = vadd.f32 %v1185, %v944
      %v1187 = vadd.f32 %v1186, %v947
      %v1188 = vadd.f32 %v1187, %v950
      %v1189 = vadd.f32 %v1188, %v953
      %v1190 = vadd.f32 %v1189, %v956
      %v1191 = vadd.f32 %v1190, %v959
      %v1192 = vadd.f32 %v1191, %v962
      %v1193 = vadd.f32 %v1192, %v965
      %v1194 = vadd.f32 %v1193, %v968
      %v1195 = vadd.f32 %v1194, %v971
      %v1196 = vadd.f32 %v1195, %v974
      %v1197 = vadd.f32 %v1196, %v977
      %v1198 = vadd.f32 %v1197, %v980
      %v1199 = vadd.f32 %v1198, %v983
      %v1200 = vadd.f32 %v1199, %v986
      %v1201 = vadd.f32 %v1200, %v989
      %v1202 = vadd.f32 %v1201, %v992
      %v1203 = vadd.f32 %v1202, %v995
      %v1204 = vadd.f32 %v1203, %v998
      %v1205 = vadd.f32 %v1204, %v1001
      %v1206 = vadd.f32 %v1205, %v1004
      %v1207 = vadd.f32 %v1206, %v1007
      %v1208 = vadd.f32 %v1207, %v1010
      %v1209 = vadd.f32 %v1208, %v1013
      %v1210 = vrot.slane %v1209, 4
      %v1211 = vadd.f32 %v1209, %v1210
      %v1212 = vrot.slane %v1211, 2
      %v1213 = vadd.f32 %v1211, %v1212
      %v1214 = vrot.slane %v1213, 1
      %v1215 = vadd.f32 %v1213, %v1214
      %v1216 = vmul.f32 %v1215, 0.0006377551
      %v1217 = vmul.f32 %v428, %v428
      %v1218 = vmul.f32 %v431, %v431
      %v1219 = vmul.f32 %v434, %v434
      %v1220 = vmul.f32 %v437, %v437
      %v1221 = vmul.f32 %v440, %v440
      %v1222 = vmul.f32 %v443, %v443
      %v1223 = vmul.f32 %v446, %v446
      %v1224 = vmul.f32 %v449, %v449
      %v1225 = vmul.f32 %v452, %v452
      %v1226 = vmul.f32 %v455, %v455
      %v1227 = vmul.f32 %v458, %v458
      %v1228 = vmul.f32 %v461, %v461
      %v1229 = vmul.f32 %v464, %v464
      %v1230 = vmul.f32 %v467, %v467
      %v1231 = vmul.f32 %v470, %v470
      %v1232 = vmul.f32 %v473, %v473
      %v1233 = vmul.f32 %v476, %v476
      %v1234 = vmul.f32 %v479, %v479
      %v1235 = vmul.f32 %v482, %v482
      %v1236 = vmul.f32 %v485, %v485
      %v1237 = vmul.f32 %v488, %v488
      %v1238 = vmul.f32 %v491, %v491
      %v1239 = vmul.f32 %v494, %v494
      %v1240 = vmul.f32 %v497, %v497
      %v1241 = vmul.f32 %v500, %v500
      %v1242 = vmul.f32 %v503, %v503
      %v1243 = vmul.f32 %v506, %v506
      %v1244 = vmul.f32 %v509, %v509
      %v1245 = vmul.f32 %v512, %v512
      %v1246 = vmul.f32 %v515, %v515
      %v1247 = vmul.f32 %v518, %v518
      %v1248 = vmul.f32 %v521, %v521
      %v1249 = vmul.f32 %v524, %v524
      %v1250 = vmul.f32 %v527, %v527
      %v1251 = vmul.f32 %v530, %v530
      %v1252 = vmul.f32 %v533, %v533
      %v1253 = vmul.f32 %v536, %v536
      %v1254 = vmul.f32 %v539, %v539
      %v1255 = vmul.f32 %v542, %v542
      %v1256 = vmul.f32 %v545, %v545
      %v1257 = vmul.f32 %v548, %v548
      %v1258 = vmul.f32 %v551, %v551
      %v1259 = vmul.f32 %v554, %v554
      %v1260 = vmul.f32 %v557, %v557
      %v1261 = vmul.f32 %v560, %v560
      %v1262 = vmul.f32 %v563, %v563
      %v1263 = vmul.f32 %v566, %v566
      %v1264 = vmul.f32 %v569, %v569
      %v1265 = vmul.f32 %v572, %v572
      %v1266 = vmul.f32 %v575, %v575
      %v1267 = vmul.f32 %v578, %v578
      %v1268 = vmul.f32 %v581, %v581
      %v1269 = vmul.f32 %v584, %v584
      %v1270 = vmul.f32 %v587, %v587
      %v1271 = vmul.f32 %v590, %v590
      %v1272 = vmul.f32 %v593, %v593
      %v1273 = vmul.f32 %v596, %v596
      %v1274 = vmul.f32 %v599, %v599
      %v1275 = vmul.f32 %v602, %v602
      %v1276 = vmul.f32 %v605, %v605
      %v1277 = vmul.f32 %v608, %v608
      %v1278 = vmul.f32 %v611, %v611
      %v1279 = vmul.f32 %v614, %v614
      %v1280 = vmul.f32 %v617, %v617
      %v1281 = vmul.f32 %v620, %v620
      %v1282 = vmul.f32 %v623, %v623
      %v1283 = vmul.f32 %v626, %v626
      %v1284 = vmul.f32 %v629, %v629
      %v1285 = vmul.f32 %v632, %v632
      %v1286 = vmul.f32 %v635, %v635
      %v1287 = vmul.f32 %v638, %v638
      %v1288 = vmul.f32 %v641, %v641
      %v1289 = vmul.f32 %v644, %v644
      %v1290 = vmul.f32 %v647, %v647
      %v1291 = vmul.f32 %v650, %v650
      %v1292 = vmul.f32 %v653, %v653
      %v1293 = vmul.f32 %v656, %v656
      %v1294 = vmul.f32 %v659, %v659
      %v1295 = vmul.f32 %v662, %v662
      %v1296 = vmul.f32 %v665, %v665
      %v1297 = vmul.f32 %v668, %v668
      %v1298 = vmul.f32 %v671, %v671
      %v1299 = vmul.f32 %v674, %v674
      %v1300 = vmul.f32 %v677, %v677
      %v1301 = vmul.f32 %v680, %v680
      %v1302 = vmul.f32 %v683, %v683
      %v1303 = vmul.f32 %v686, %v686
      %v1304 = vmul.f32 %v689, %v689
      %v1305 = vmul.f32 %v692, %v692
      %v1306 = vmul.f32 %v695, %v695
      %v1307 = vmul.f32 %v698, %v698
      %v1308 = vmul.f32 %v701, %v701
      %v1309 = vmul.f32 %v704, %v704
      %v1310 = vmul.f32 %v707, %v707
      %v1311 = vmul.f32 %v710, %v710
      %v1312 = vmul.f32 %v713, %v713
      %v1313 = vmul.f32 %v716, %v716
      %v1314 = vmul.f32 %v719, %v719
      %v1315 = vmul.f32 %v722, %v722
      %v1316 = vmul.f32 %v725, %v725
      %v1317 = vmul.f32 %v728, %v728
      %v1318 = vmul.f32 %v731, %v731
      %v1319 = vmul.f32 %v734, %v734
      %v1320 = vmul.f32 %v737, %v737
      %v1321 = vmul.f32 %v740, %v740
      %v1322 = vmul.f32 %v743, %v743
      %v1323 = vmul.f32 %v746, %v746
      %v1324 = vmul.f32 %v749, %v749
      %v1325 = vmul.f32 %v752, %v752
      %v1326 = vmul.f32 %v755, %v755
      %v1327 = vmul.f32 %v758, %v758
      %v1328 = vmul.f32 %v761, %v761
      %v1329 = vmul.f32 %v764, %v764
      %v1330 = vmul.f32 %v767, %v767
      %v1331 = vmul.f32 %v770, %v770
      %v1332 = vmul.f32 %v773, %v773
      %v1333 = vmul.f32 %v776, %v776
      %v1334 = vmul.f32 %v779, %v779
      %v1335 = vmul.f32 %v782, %v782
      %v1336 = vmul.f32 %v785, %v785
      %v1337 = vmul.f32 %v788, %v788
      %v1338 = vmul.f32 %v791, %v791
      %v1339 = vmul.f32 %v794, %v794
      %v1340 = vmul.f32 %v797, %v797
      %v1341 = vmul.f32 %v800, %v800
      %v1342 = vmul.f32 %v803, %v803
      %v1343 = vmul.f32 %v806, %v806
      %v1344 = vmul.f32 %v809, %v809
      %v1345 = vmul.f32 %v812, %v812
      %v1346 = vmul.f32 %v815, %v815
      %v1347 = vmul.f32 %v818, %v818
      %v1348 = vmul.f32 %v821, %v821
      %v1349 = vmul.f32 %v824, %v824
      %v1350 = vmul.f32 %v827, %v827
      %v1351 = vmul.f32 %v830, %v830
      %v1352 = vmul.f32 %v833, %v833
      %v1353 = vmul.f32 %v836, %v836
      %v1354 = vmul.f32 %v839, %v839
      %v1355 = vmul.f32 %v842, %v842
      %v1356 = vmul.f32 %v845, %v845
      %v1357 = vmul.f32 %v848, %v848
      %v1358 = vmul.f32 %v851, %v851
      %v1359 = vmul.f32 %v854, %v854
      %v1360 = vmul.f32 %v857, %v857
      %v1361 = vmul.f32 %v860, %v860
      %v1362 = vmul.f32 %v863, %v863
      %v1363 = vmul.f32 %v866, %v866
      %v1364 = vmul.f32 %v869, %v869
      %v1365 = vmul.f32 %v872, %v872
      %v1366 = vmul.f32 %v875, %v875
      %v1367 = vmul.f32 %v878, %v878
      %v1368 = vmul.f32 %v881, %v881
      %v1369 = vmul.f32 %v884, %v884
      %v1370 = vmul.f32 %v887, %v887
      %v1371 = vmul.f32 %v890, %v890
      %v1372 = vmul.f32 %v893, %v893
      %v1373 = vmul.f32 %v896, %v896
      %v1374 = vmul.f32 %v899, %v899
      %v1375 = vmul.f32 %v902, %v902
      %v1376 = vmul.f32 %v905, %v905
      %v1377 = vmul.f32 %v908, %v908
      %v1378 = vmul.f32 %v911, %v911
      %v1379 = vmul.f32 %v914, %v914
      %v1380 = vmul.f32 %v917, %v917
      %v1381 = vmul.f32 %v920, %v920
      %v1382 = vmul.f32 %v923, %v923
      %v1383 = vmul.f32 %v926, %v926
      %v1384 = vmul.f32 %v929, %v929
      %v1385 = vmul.f32 %v932, %v932
      %v1386 = vmul.f32 %v935, %v935
      %v1387 = vmul.f32 %v938, %v938
      %v1388 = vmul.f32 %v941, %v941
      %v1389 = vmul.f32 %v944, %v944
      %v1390 = vmul.f32 %v947, %v947
      %v1391 = vmul.f32 %v950, %v950
      %v1392 = vmul.f32 %v953, %v953
      %v1393 = vmul.f32 %v956, %v956
      %v1394 = vmul.f32 %v959, %v959
      %v1395 = vmul.f32 %v962, %v962
      %v1396 = vmul.f32 %v965, %v965
      %v1397 = vmul.f32 %v968, %v968
      %v1398 = vmul.f32 %v971, %v971
      %v1399 = vmul.f32 %v974, %v974
      %v1400 = vmul.f32 %v977, %v977
      %v1401 = vmul.f32 %v980, %v980
      %v1402 = vmul.f32 %v983, %v983
      %v1403 = vmul.f32 %v986, %v986
      %v1404 = vmul.f32 %v989, %v989
      %v1405 = vmul.f32 %v992, %v992
      %v1406 = vmul.f32 %v995, %v995
      %v1407 = vmul.f32 %v998, %v998
      %v1408 = vmul.f32 %v1001, %v1001
      %v1409 = vmul.f32 %v1004, %v1004
      %v1410 = vmul.f32 %v1007, %v1007
      %v1411 = vmul.f32 %v1010, %v1010
      %v1412 = vmul.f32 %v1013, %v1013
      %v1413 = vadd.f32 %v1217, %v1218
      %v1414 = vadd.f32 %v1413, %v1219
      %v1415 = vadd.f32 %v1414, %v1220
      %v1416 = vadd.f32 %v1415, %v1221
      %v1417 = vadd.f32 %v1416, %v1222
      %v1418 = vadd.f32 %v1417, %v1223
      %v1419 = vadd.f32 %v1418, %v1224
      %v1420 = vadd.f32 %v1419, %v1225
      %v1421 = vadd.f32 %v1420, %v1226
      %v1422 = vadd.f32 %v1421, %v1227
      %v1423 = vadd.f32 %v1422, %v1228
      %v1424 = vadd.f32 %v1423, %v1229
      %v1425 = vadd.f32 %v1424, %v1230
      %v1426 = vadd.f32 %v1425, %v1231
      %v1427 = vadd.f32 %v1426, %v1232
      %v1428 = vadd.f32 %v1427, %v1233
      %v1429 = vadd.f32 %v1428, %v1234
      %v1430 = vadd.f32 %v1429, %v1235
      %v1431 = vadd.f32 %v1430, %v1236
      %v1432 = vadd.f32 %v1431, %v1237
      %v1433 = vadd.f32 %v1432, %v1238
      %v1434 = vadd.f32 %v1433, %v1239
      %v1435 = vadd.f32 %v1434, %v1240
      %v1436 = vadd.f32 %v1435, %v1241
      %v1437 = vadd.f32 %v1436, %v1242
      %v1438 = vadd.f32 %v1437, %v1243
      %v1439 = vadd.f32 %v1438, %v1244
      %v1440 = vadd.f32 %v1439, %v1245
      %v1441 = vadd.f32 %v1440, %v1246
      %v1442 = vadd.f32 %v1441, %v1247
      %v1443 = vadd.f32 %v1442, %v1248
      %v1444 = vadd.f32 %v1443, %v1249
      %v1445 = vadd.f32 %v1444, %v1250
      %v1446 = vadd.f32 %v1445, %v1251
      %v1447 = vadd.f32 %v1446, %v1252
      %v1448 = vadd.f32 %v1447, %v1253
      %v1449 = vadd.f32 %v1448, %v1254
      %v1450 = vadd.f32 %v1449, %v1255
      %v1451 = vadd.f32 %v1450, %v1256
      %v1452 = vadd.f32 %v1451, %v1257
      %v1453 = vadd.f32 %v1452, %v1258
      %v1454 = vadd.f32 %v1453, %v1259
      %v1455 = vadd.f32 %v1454, %v1260
      %v1456 = vadd.f32 %v1455, %v1261
      %v1457 = vadd.f32 %v1456, %v1262
      %v1458 = vadd.f32 %v1457, %v1263
      %v1459 = vadd.f32 %v1458, %v1264
      %v1460 = vadd.f32 %v1459, %v1265
      %v1461 = vadd.f32 %v1460, %v1266
      %v1462 = vadd.f32 %v1461, %v1267
      %v1463 = vadd.f32 %v1462, %v1268
      %v1464 = vadd.f32 %v1463, %v1269
      %v1465 = vadd.f32 %v1464, %v1270
      %v1466 = vadd.f32 %v1465, %v1271
      %v1467 = vadd.f32 %v1466, %v1272
      %v1468 = vadd.f32 %v1467, %v1273
      %v1469 = vadd.f32 %v1468, %v1274
      %v1470 = vadd.f32 %v1469, %v1275
      %v1471 = vadd.f32 %v1470, %v1276
      %v1472 = vadd.f32 %v1471, %v1277
      %v1473 = vadd.f32 %v1472, %v1278
      %v1474 = vadd.f32 %v1473, %v1279
      %v1475 = vadd.f32 %v1474, %v1280
      %v1476 = vadd.f32 %v1475, %v1281
      %v1477 = vadd.f32 %v1476, %v1282
      %v1478 = vadd.f32 %v1477, %v1283
      %v1479 = vadd.f32 %v1478, %v1284
      %v1480 = vadd.f32 %v1479, %v1285
      %v1481 = vadd.f32 %v1480, %v1286
      %v1482 = vadd.f32 %v1481, %v1287
      %v1483 = vadd.f32 %v1482, %v1288
      %v1484 = vadd.f32 %v1483, %v1289
      %v1485 = vadd.f32 %v1484, %v1290
      %v1486 = vadd.f32 %v1485, %v1291
      %v1487 = vadd.f32 %v1486, %v1292
      %v1488 = vadd.f32 %v1487, %v1293
      %v1489 = vadd.f32 %v1488, %v1294
      %v1490 = vadd.f32 %v1489, %v1295
      %v1491 = vadd.f32 %v1490, %v1296
      %v1492 = vadd.f32 %v1491, %v1297
      %v1493 = vadd.f32 %v1492, %v1298
      %v1494 = vadd.f32 %v1493, %v1299
      %v1495 = vadd.f32 %v1494, %v1300
      %v1496 = vadd.f32 %v1495, %v1301
      %v1497 = vadd.f32 %v1496, %v1302
      %v1498 = vadd.f32 %v1497, %v1303
      %v1499 = vadd.f32 %v1498, %v1304
      %v1500 = vadd.f32 %v1499, %v1305
      %v1501 = vadd.f32 %v1500, %v1306
      %v1502 = vadd.f32 %v1501, %v1307
      %v1503 = vadd.f32 %v1502, %v1308
      %v1504 = vadd.f32 %v1503, %v1309
      %v1505 = vadd.f32 %v1504, %v1310
      %v1506 = vadd.f32 %v1505, %v1311
      %v1507 = vadd.f32 %v1506, %v1312
      %v1508 = vadd.f32 %v1507, %v1313
      %v1509 = vadd.f32 %v1508, %v1314
      %v1510 = vadd.f32 %v1509, %v1315
      %v1511 = vadd.f32 %v1510, %v1316
      %v1512 = vadd.f32 %v1511, %v1317
      %v1513 = vadd.f32 %v1512, %v1318
      %v1514 = vadd.f32 %v1513, %v1319
      %v1515 = vadd.f32 %v1514, %v1320
      %v1516 = vadd.f32 %v1515, %v1321
      %v1517 = vadd.f32 %v1516, %v1322
      %v1518 = vadd.f32 %v1517, %v1323
      %v1519 = vadd.f32 %v1518, %v1324
      %v1520 = vadd.f32 %v1519, %v1325
      %v1521 = vadd.f32 %v1520, %v1326
      %v1522 = vadd.f32 %v1521, %v1327
      %v1523 = vadd.f32 %v1522, %v1328
      %v1524 = vadd.f32 %v1523, %v1329
      %v1525 = vadd.f32 %v1524, %v1330
      %v1526 = vadd.f32 %v1525, %v1331
      %v1527 = vadd.f32 %v1526, %v1332
      %v1528 = vadd.f32 %v1527, %v1333
      %v1529 = vadd.f32 %v1528, %v1334
      %v1530 = vadd.f32 %v1529, %v1335
      %v1531 = vadd.f32 %v1530, %v1336
      %v1532 = vadd.f32 %v1531, %v1337
      %v1533 = vadd.f32 %v1532, %v1338
      %v1534 = vadd.f32 %v1533, %v1339
      %v1535 = vadd.f32 %v1534, %v1340
      %v1536 = vadd.f32 %v1535, %v1341
      %v1537 = vadd.f32 %v1536, %v1342
      %v1538 = vadd.f32 %v1537, %v1343
      %v1539 = vadd.f32 %v1538, %v1344
      %v1540 = vadd.f32 %v1539, %v1345
      %v1541 = vadd.f32 %v1540, %v1346
      %v1542 = vadd.f32 %v1541, %v1347
      %v1543 = vadd.f32 %v1542, %v1348
      %v1544 = vadd.f32 %v1543, %v1349
      %v1545 = vadd.f32 %v1544, %v1350
      %v1546 = vadd.f32 %v1545, %v1351
      %v1547 = vadd.f32 %v1546, %v1352
      %v1548 = vadd.f32 %v1547, %v1353
      %v1549 = vadd.f32 %v1548, %v1354
      %v1550 = vadd.f32 %v1549, %v1355
      %v1551 = vadd.f32 %v1550, %v1356
      %v1552 = vadd.f32 %v1551, %v1357
      %v1553 = vadd.f32 %v1552, %v1358
      %v1554 = vadd.f32 %v1553, %v1359
      %v1555 = vadd.f32 %v1554, %v1360
      %v1556 = vadd.f32 %v1555, %v1361
      %v1557 = vadd.f32 %v1556, %v1362
      %v1558 = vadd.f32 %v1557, %v1363
      %v1559 = vadd.f32 %v1558, %v1364
      %v1560 = vadd.f32 %v1559, %v1365
      %v1561 = vadd.f32 %v1560, %v1366
      %v1562 = vadd.f32 %v1561, %v1367
      %v1563 = vadd.f32 %v1562, %v1368
      %v1564 = vadd.f32 %v1563, %v1369
      %v1565 = vadd.f32 %v1564, %v1370
      %v1566 = vadd.f32 %v1565, %v1371
      %v1567 = vadd.f32 %v1566, %v1372
      %v1568 = vadd.f32 %v1567, %v1373
      %v1569 = vadd.f32 %v1568, %v1374
      %v1570 = vadd.f32 %v1569, %v1375
      %v1571 = vadd.f32 %v1570, %v1376
      %v1572 = vadd.f32 %v1571, %v1377
      %v1573 = vadd.f32 %v1572, %v1378
      %v1574 = vadd.f32 %v1573, %v1379
      %v1575 = vadd.f32 %v1574, %v1380
      %v1576 = vadd.f32 %v1575, %v1381
      %v1577 = vadd.f32 %v1576, %v1382
      %v1578 = vadd.f32 %v1577, %v1383
      %v1579 = vadd.f32 %v1578, %v1384
      %v1580 = vadd.f32 %v1579, %v1385
      %v1581 = vadd.f32 %v1580, %v1386
      %v1582 = vadd.f32 %v1581, %v1387
      %v1583 = vadd.f32 %v1582, %v1388
      %v1584 = vadd.f32 %v1583, %v1389
      %v1585 = vadd.f32 %v1584, %v1390
      %v1586 = vadd.f32 %v1585, %v1391
      %v1587 = vadd.f32 %v1586, %v1392
      %v1588 = vadd.f32 %v1587, %v1393
      %v1589 = vadd.f32 %v1588, %v1394
      %v1590 = vadd.f32 %v1589, %v1395
      %v1591 = vadd.f32 %v1590, %v1396
      %v1592 = vadd.f32 %v1591, %v1397
      %v1593 = vadd.f32 %v1592, %v1398
      %v1594 = vadd.f32 %v1593, %v1399
      %v1595 = vadd.f32 %v1594, %v1400
      %v1596 = vadd.f32 %v1595, %v1401
      %v1597 = vadd.f32 %v1596, %v1402
      %v1598 = vadd.f32 %v1597, %v1403
      %v1599 = vadd.f32 %v1598, %v1404
      %v1600 = vadd.f32 %v1599, %v1405
      %v1601 = vadd.f32 %v1600, %v1406
      %v1602 = vadd.f32 %v1601, %v1407
      %v1603 = vadd.f32 %v1602, %v1408
      %v1604 = vadd.f32 %v1603, %v1409
      %v1605 = vadd.f32 %v1604, %v1410
      %v1606 = vadd.f32 %v1605, %v1411
      %v1607 = vadd.f32 %v1606, %v1412
      %v1608 = vrot.slane %v1607, 4
      %v1609 = vadd.f32 %v1607, %v1608
      %v1610 = vrot.slane %v1609, 2
      %v1611 = vadd.f32 %v1609, %v1610
      %v1612 = vrot.slane %v1611, 1
      %v1613 = vadd.f32 %v1611, %v1612
      %v1614 = vmul.f32 %v1613, 0.0006377551
      %v1615 = vmul.f32 %v1216, %v1216
      %v1616 = vsub.f32 %v1614, %v1615
      %v1617 = vmax.f32 %v1616, 0.0
      %v1618 = vsub.f32 %v428, %v1216
      %v1619 = vsub.f32 %v431, %v1216
      %v1620 = vsub.f32 %v434, %v1216
      %v1621 = vsub.f32 %v437, %v1216
      %v1622 = vsub.f32 %v440, %v1216
      %v1623 = vsub.f32 %v443, %v1216
      %v1624 = vsub.f32 %v446, %v1216
      %v1625 = vsub.f32 %v449, %v1216
      %v1626 = vsub.f32 %v452, %v1216
      %v1627 = vsub.f32 %v455, %v1216
      %v1628 = vsub.f32 %v458, %v1216
      %v1629 = vsub.f32 %v461, %v1216
      %v1630 = vsub.f32 %v464, %v1216
      %v1631 = vsub.f32 %v467, %v1216
      %v1632 = vsub.f32 %v470, %v1216
      %v1633 = vsub.f32 %v473, %v1216
      %v1634 = vsub.f32 %v476, %v1216
      %v1635 = vsub.f32 %v479, %v1216
      %v1636 = vsub.f32 %v482, %v1216
      %v1637 = vsub.f32 %v485, %v1216
      %v1638 = vsub.f32 %v488, %v1216
      %v1639 = vsub.f32 %v491, %v1216
      %v1640 = vsub.f32 %v494, %v1216
      %v1641 = vsub.f32 %v497, %v1216
      %v1642 = vsub.f32 %v500, %v1216
      %v1643 = vsub.f32 %v503, %v1216
      %v1644 = vsub.f32 %v506, %v1216
      %v1645 = vsub.f32 %v509, %v1216
      %v1646 = vsub.f32 %v512, %v1216
      %v1647 = vsub.f32 %v515, %v1216
      %v1648 = vsub.f32 %v518, %v1216
      %v1649 = vsub.f32 %v521, %v1216
      %v1650 = vsub.f32 %v524, %v1216
      %v1651 = vsub.f32 %v527, %v1216
      %v1652 = vsub.f32 %v530, %v1216
      %v1653 = vsub.f32 %v533, %v1216
      %v1654 = vsub.f32 %v536, %v1216
      %v1655 = vsub.f32 %v539, %v1216
      %v1656 = vsub.f32 %v542, %v1216
      %v1657 = vsub.f32 %v545, %v1216
      %v1658 = vsub.f32 %v548, %v1216
      %v1659 = vsub.f32 %v551, %v1216
      %v1660 = vsub.f32 %v554, %v1216
      %v1661 = vsub.f32 %v557, %v1216
      %v1662 = vsub.f32 %v560, %v1216
      %v1663 = vsub.f32 %v563, %v1216
      %v1664 = vsub.f32 %v566, %v1216
      %v1665 = vsub.f32 %v569, %v1216
      %v1666 = vsub.f32 %v572, %v1216
      %v1667 = vsub.f32 %v575, %v1216
      %v1668 = vsub.f32 %v578, %v1216
      %v1669 = vsub.f32 %v581, %v1216
      %v1670 = vsub.f32 %v584, %v1216
      %v1671 = vsub.f32 %v587, %v1216
      %v1672 = vsub.f32 %v590, %v1216
      %v1673 = vsub.f32 %v593, %v1216
      %v1674 = vsub.f32 %v596, %v1216
      %v1675 = vsub.f32 %v599, %v1216
      %v1676 = vsub.f32 %v602, %v1216
      %v1677 = vsub.f32 %v605, %v1216
      %v1678 = vsub.f32 %v608, %v1216
      %v1679 = vsub.f32 %v611, %v1216
      %v1680 = vsub.f32 %v614, %v1216
      %v1681 = vsub.f32 %v617, %v1216
      %v1682 = vsub.f32 %v620, %v1216
      %v1683 = vsub.f32 %v623, %v1216
      %v1684 = vsub.f32 %v626, %v1216
      %v1685 = vsub.f32 %v629, %v1216
      %v1686 = vsub.f32 %v632, %v1216
      %v1687 = vsub.f32 %v635, %v1216
      %v1688 = vsub.f32 %v638, %v1216
      %v1689 = vsub.f32 %v641, %v1216
      %v1690 = vsub.f32 %v644, %v1216
      %v1691 = vsub.f32 %v647, %v1216
      %v1692 = vsub.f32 %v650, %v1216
      %v1693 = vsub.f32 %v653, %v1216
      %v1694 = vsub.f32 %v656, %v1216
      %v1695 = vsub.f32 %v659, %v1216
      %v1696 = vsub.f32 %v662, %v1216
      %v1697 = vsub.f32 %v665, %v1216
      %v1698 = vsub.f32 %v668, %v1216
      %v1699 = vsub.f32 %v671, %v1216
      %v1700 = vsub.f32 %v674, %v1216
      %v1701 = vsub.f32 %v677, %v1216
      %v1702 = vsub.f32 %v680, %v1216
      %v1703 = vsub.f32 %v683, %v1216
      %v1704 = vsub.f32 %v686, %v1216
      %v1705 = vsub.f32 %v689, %v1216
      %v1706 = vsub.f32 %v692, %v1216
      %v1707 = vsub.f32 %v695, %v1216
      %v1708 = vsub.f32 %v698, %v1216
      %v1709 = vsub.f32 %v701, %v1216
      %v1710 = vsub.f32 %v704, %v1216
      %v1711 = vsub.f32 %v707, %v1216
      %v1712 = vsub.f32 %v710, %v1216
      %v1713 = vsub.f32 %v713, %v1216
      %v1714 = vsub.f32 %v716, %v1216
      %v1715 = vsub.f32 %v719, %v1216
      %v1716 = vsub.f32 %v722, %v1216
      %v1717 = vsub.f32 %v725, %v1216
      %v1718 = vsub.f32 %v728, %v1216
      %v1719 = vsub.f32 %v731, %v1216
      %v1720 = vsub.f32 %v734, %v1216
      %v1721 = vsub.f32 %v737, %v1216
      %v1722 = vsub.f32 %v740, %v1216
      %v1723 = vsub.f32 %v743, %v1216
      %v1724 = vsub.f32 %v746, %v1216
      %v1725 = vsub.f32 %v749, %v1216
      %v1726 = vsub.f32 %v752, %v1216
      %v1727 = vsub.f32 %v755, %v1216
      %v1728 = vsub.f32 %v758, %v1216
      %v1729 = vsub.f32 %v761, %v1216
      %v1730 = vsub.f32 %v764, %v1216
      %v1731 = vsub.f32 %v767, %v1216
      %v1732 = vsub.f32 %v770, %v1216
      %v1733 = vsub.f32 %v773, %v1216
      %v1734 = vsub.f32 %v776, %v1216
      %v1735 = vsub.f32 %v779, %v1216
      %v1736 = vsub.f32 %v782, %v1216
      %v1737 = vsub.f32 %v785, %v1216
      %v1738 = vsub.f32 %v788, %v1216
      %v1739 = vsub.f32 %v791, %v1216
      %v1740 = vsub.f32 %v794, %v1216
      %v1741 = vsub.f32 %v797, %v1216
      %v1742 = vsub.f32 %v800, %v1216
      %v1743 = vsub.f32 %v803, %v1216
      %v1744 = vsub.f32 %v806, %v1216
      %v1745 = vsub.f32 %v809, %v1216
      %v1746 = vsub.f32 %v812, %v1216
      %v1747 = vsub.f32 %v815, %v1216
      %v1748 = vsub.f32 %v818, %v1216
      %v1749 = vsub.f32 %v821, %v1216
      %v1750 = vsub.f32 %v824, %v1216
      %v1751 = vsub.f32 %v827, %v1216
      %v1752 = vsub.f32 %v830, %v1216
      %v1753 = vsub.f32 %v833, %v1216
      %v1754 = vsub.f32 %v836, %v1216
      %v1755 = vsub.f32 %v839, %v1216
      %v1756 = vsub.f32 %v842, %v1216
      %v1757 = vsub.f32 %v845, %v1216
      %v1758 = vsub.f32 %v848, %v1216
      %v1759 = vsub.f32 %v851, %v1216
      %v1760 = vsub.f32 %v854, %v1216
      %v1761 = vsub.f32 %v857, %v1216
      %v1762 = vsub.f32 %v860, %v1216
      %v1763 = vsub.f32 %v863, %v1216
      %v1764 = vsub.f32 %v866, %v1216
      %v1765 = vsub.f32 %v869, %v1216
      %v1766 = vsub.f32 %v872, %v1216
      %v1767 = vsub.f32 %v875, %v1216
      %v1768 = vsub.f32 %v878, %v1216
      %v1769 = vsub.f32 %v881, %v1216
      %v1770 = vsub.f32 %v884, %v1216
      %v1771 = vsub.f32 %v887, %v1216
      %v1772 = vsub.f32 %v890, %v1216
      %v1773 = vsub.f32 %v893, %v1216
      %v1774 = vsub.f32 %v896, %v1216
      %v1775 = vsub.f32 %v899, %v1216
      %v1776 = vsub.f32 %v902, %v1216
      %v1777 = vsub.f32 %v905, %v1216
      %v1778 = vsub.f32 %v908, %v1216
      %v1779 = vsub.f32 %v911, %v1216
      %v1780 = vsub.f32 %v914, %v1216
      %v1781 = vsub.f32 %v917, %v1216
      %v1782 = vsub.f32 %v920, %v1216
      %v1783 = vsub.f32 %v923, %v1216
      %v1784 = vsub.f32 %v926, %v1216
      %v1785 = vsub.f32 %v929, %v1216
      %v1786 = vsub.f32 %v932, %v1216
      %v1787 = vsub.f32 %v935, %v1216
      %v1788 = vsub.f32 %v938, %v1216
      %v1789 = vsub.f32 %v941, %v1216
      %v1790 = vsub.f32 %v944, %v1216
      %v1791 = vsub.f32 %v947, %v1216
      %v1792 = vsub.f32 %v950, %v1216
      %v1793 = vsub.f32 %v953, %v1216
      %v1794 = vsub.f32 %v956, %v1216
      %v1795 = vsub.f32 %v959, %v1216
      %v1796 = vsub.f32 %v962, %v1216
      %v1797 = vsub.f32 %v965, %v1216
      %v1798 = vsub.f32 %v968, %v1216
      %v1799 = vsub.f32 %v971, %v1216
      %v1800 = vsub.f32 %v974, %v1216
      %v1801 = vsub.f32 %v977, %v1216
      %v1802 = vsub.f32 %v980, %v1216
      %v1803 = vsub.f32 %v983, %v1216
      %v1804 = vsub.f32 %v986, %v1216
      %v1805 = vsub.f32 %v989, %v1216
      %v1806 = vsub.f32 %v992, %v1216
      %v1807 = vsub.f32 %v995, %v1216
      %v1808 = vsub.f32 %v998, %v1216
      %v1809 = vsub.f32 %v1001, %v1216
      %v1810 = vsub.f32 %v1004, %v1216
      %v1811 = vsub.f32 %v1007, %v1216
      %v1812 = vsub.f32 %v1010, %v1216
      %v1813 = vsub.f32 %v1013, %v1216
      %v1814 = vadd.f32 %v1617, 1e-05
      %v1815 = vrsqrt.pop %v1814
      %v1816 = vmul.f32 %v1815, %v1814
      %v1817 = vmul.f32 %v1816, %v1815
      %v1818 = vmul.f32 0.5, %v1817
      %v1819 = vsub.f32 1.5, %v1818
      %v1820 = vmul.f32 %v1815, %v1819
      %vm1821 = vweird.f32 %v1814
      %vm1822 = vweird.f32 %v1815
      %vm1823 = vmor %vm1821, %vm1822
      %v1824 = vsel %vm1823, %v1815, %v1820
      %v1825 = vmul.f32 %v1618, %v1824
      %v1826 = vmul.f32 %v1619, %v1824
      %v1827 = vmul.f32 %v1620, %v1824
      %v1828 = vmul.f32 %v1621, %v1824
      %v1829 = vmul.f32 %v1622, %v1824
      %v1830 = vmul.f32 %v1623, %v1824
      %v1831 = vmul.f32 %v1624, %v1824
      %v1832 = vmul.f32 %v1625, %v1824
      %v1833 = vmul.f32 %v1626, %v1824
      %v1834 = vmul.f32 %v1627, %v1824
      %v1835 = vmul.f32 %v1628, %v1824
      %v1836 = vmul.f32 %v1629, %v1824
      %v1837 = vmul.f32 %v1630, %v1824
      %v1838 = vmul.f32 %v1631, %v1824
      %v1839 = vmul.f32 %v1632, %v1824
      %v1840 = vmul.f32 %v1633, %v1824
      %v1841 = vmul.f32 %v1634, %v1824
      %v1842 = vmul.f32 %v1635, %v1824
      %v1843 = vmul.f32 %v1636, %v1824
      %v1844 = vmul.f32 %v1637, %v1824
      %v1845 = vmul.f32 %v1638, %v1824
      %v1846 = vmul.f32 %v1639, %v1824
      %v1847 = vmul.f32 %v1640, %v1824
      %v1848 = vmul.f32 %v1641, %v1824
      %v1849 = vmul.f32 %v1642, %v1824
      %v1850 = vmul.f32 %v1643, %v1824
      %v1851 = vmul.f32 %v1644, %v1824
      %v1852 = vmul.f32 %v1645, %v1824
      %v1853 = vmul.f32 %v1646, %v1824
      %v1854 = vmul.f32 %v1647, %v1824
      %v1855 = vmul.f32 %v1648, %v1824
      %v1856 = vmul.f32 %v1649, %v1824
      %v1857 = vmul.f32 %v1650, %v1824
      %v1858 = vmul.f32 %v1651, %v1824
      %v1859 = vmul.f32 %v1652, %v1824
      %v1860 = vmul.f32 %v1653, %v1824
      %v1861 = vmul.f32 %v1654, %v1824
      %v1862 = vmul.f32 %v1655, %v1824
      %v1863 = vmul.f32 %v1656, %v1824
      %v1864 = vmul.f32 %v1657, %v1824
      %v1865 = vmul.f32 %v1658, %v1824
      %v1866 = vmul.f32 %v1659, %v1824
      %v1867 = vmul.f32 %v1660, %v1824
      %v1868 = vmul.f32 %v1661, %v1824
      %v1869 = vmul.f32 %v1662, %v1824
      %v1870 = vmul.f32 %v1663, %v1824
      %v1871 = vmul.f32 %v1664, %v1824
      %v1872 = vmul.f32 %v1665, %v1824
      %v1873 = vmul.f32 %v1666, %v1824
      %v1874 = vmul.f32 %v1667, %v1824
      %v1875 = vmul.f32 %v1668, %v1824
      %v1876 = vmul.f32 %v1669, %v1824
      %v1877 = vmul.f32 %v1670, %v1824
      %v1878 = vmul.f32 %v1671, %v1824
      %v1879 = vmul.f32 %v1672, %v1824
      %v1880 = vmul.f32 %v1673, %v1824
      %v1881 = vmul.f32 %v1674, %v1824
      %v1882 = vmul.f32 %v1675, %v1824
      %v1883 = vmul.f32 %v1676, %v1824
      %v1884 = vmul.f32 %v1677, %v1824
      %v1885 = vmul.f32 %v1678, %v1824
      %v1886 = vmul.f32 %v1679, %v1824
      %v1887 = vmul.f32 %v1680, %v1824
      %v1888 = vmul.f32 %v1681, %v1824
      %v1889 = vmul.f32 %v1682, %v1824
      %v1890 = vmul.f32 %v1683, %v1824
      %v1891 = vmul.f32 %v1684, %v1824
      %v1892 = vmul.f32 %v1685, %v1824
      %v1893 = vmul.f32 %v1686, %v1824
      %v1894 = vmul.f32 %v1687, %v1824
      %v1895 = vmul.f32 %v1688, %v1824
      %v1896 = vmul.f32 %v1689, %v1824
      %v1897 = vmul.f32 %v1690, %v1824
      %v1898 = vmul.f32 %v1691, %v1824
      %v1899 = vmul.f32 %v1692, %v1824
      %v1900 = vmul.f32 %v1693, %v1824
      %v1901 = vmul.f32 %v1694, %v1824
      %v1902 = vmul.f32 %v1695, %v1824
      %v1903 = vmul.f32 %v1696, %v1824
      %v1904 = vmul.f32 %v1697, %v1824
      %v1905 = vmul.f32 %v1698, %v1824
      %v1906 = vmul.f32 %v1699, %v1824
      %v1907 = vmul.f32 %v1700, %v1824
      %v1908 = vmul.f32 %v1701, %v1824
      %v1909 = vmul.f32 %v1702, %v1824
      %v1910 = vmul.f32 %v1703, %v1824
      %v1911 = vmul.f32 %v1704, %v1824
      %v1912 = vmul.f32 %v1705, %v1824
      %v1913 = vmul.f32 %v1706, %v1824
      %v1914 = vmul.f32 %v1707, %v1824
      %v1915 = vmul.f32 %v1708, %v1824
      %v1916 = vmul.f32 %v1709, %v1824
      %v1917 = vmul.f32 %v1710, %v1824
      %v1918 = vmul.f32 %v1711, %v1824
      %v1919 = vmul.f32 %v1712, %v1824
      %v1920 = vmul.f32 %v1713, %v1824
      %v1921 = vmul.f32 %v1714, %v1824
      %v1922 = vmul.f32 %v1715, %v1824
      %v1923 = vmul.f32 %v1716, %v1824
      %v1924 = vmul.f32 %v1717, %v1824
      %v1925 = vmul.f32 %v1718, %v1824
      %v1926 = vmul.f32 %v1719, %v1824
      %v1927 = vmul.f32 %v1720, %v1824
      %v1928 = vmul.f32 %v1721, %v1824
      %v1929 = vmul.f32 %v1722, %v1824
      %v1930 = vmul.f32 %v1723, %v1824
      %v1931 = vmul.f32 %v1724, %v1824
      %v1932 = vmul.f32 %v1725, %v1824
      %v1933 = vmul.f32 %v1726, %v1824
      %v1934 = vmul.f32 %v1727, %v1824
      %v1935 = vmul.f32 %v1728, %v1824
      %v1936 = vmul.f32 %v1729, %v1824
      %v1937 = vmul.f32 %v1730, %v1824
      %v1938 = vmul.f32 %v1731, %v1824
      %v1939 = vmul.f32 %v1732, %v1824
      %v1940 = vmul.f32 %v1733, %v1824
      %v1941 = vmul.f32 %v1734, %v1824
      %v1942 = vmul.f32 %v1735, %v1824
      %v1943 = vmul.f32 %v1736, %v1824
      %v1944 = vmul.f32 %v1737, %v1824
      %v1945 = vmul.f32 %v1738, %v1824
      %v1946 = vmul.f32 %v1739, %v1824
      %v1947 = vmul.f32 %v1740, %v1824
      %v1948 = vmul.f32 %v1741, %v1824
      %v1949 = vmul.f32 %v1742, %v1824
      %v1950 = vmul.f32 %v1743, %v1824
      %v1951 = vmul.f32 %v1744, %v1824
      %v1952 = vmul.f32 %v1745, %v1824
      %v1953 = vmul.f32 %v1746, %v1824
      %v1954 = vmul.f32 %v1747, %v1824
      %v1955 = vmul.f32 %v1748, %v1824
      %v1956 = vmul.f32 %v1749, %v1824
      %v1957 = vmul.f32 %v1750, %v1824
      %v1958 = vmul.f32 %v1751, %v1824
      %v1959 = vmul.f32 %v1752, %v1824
      %v1960 = vmul.f32 %v1753, %v1824
      %v1961 = vmul.f32 %v1754, %v1824
      %v1962 = vmul.f32 %v1755, %v1824
      %v1963 = vmul.f32 %v1756, %v1824
      %v1964 = vmul.f32 %v1757, %v1824
      %v1965 = vmul.f32 %v1758, %v1824
      %v1966 = vmul.f32 %v1759, %v1824
      %v1967 = vmul.f32 %v1760, %v1824
      %v1968 = vmul.f32 %v1761, %v1824
      %v1969 = vmul.f32 %v1762, %v1824
      %v1970 = vmul.f32 %v1763, %v1824
      %v1971 = vmul.f32 %v1764, %v1824
      %v1972 = vmul.f32 %v1765, %v1824
      %v1973 = vmul.f32 %v1766, %v1824
      %v1974 = vmul.f32 %v1767, %v1824
      %v1975 = vmul.f32 %v1768, %v1824
      %v1976 = vmul.f32 %v1769, %v1824
      %v1977 = vmul.f32 %v1770, %v1824
      %v1978 = vmul.f32 %v1771, %v1824
      %v1979 = vmul.f32 %v1772, %v1824
      %v1980 = vmul.f32 %v1773, %v1824
      %v1981 = vmul.f32 %v1774, %v1824
      %v1982 = vmul.f32 %v1775, %v1824
      %v1983 = vmul.f32 %v1776, %v1824
      %v1984 = vmul.f32 %v1777, %v1824
      %v1985 = vmul.f32 %v1778, %v1824
      %v1986 = vmul.f32 %v1779, %v1824
      %v1987 = vmul.f32 %v1780, %v1824
      %v1988 = vmul.f32 %v1781, %v1824
      %v1989 = vmul.f32 %v1782, %v1824
      %v1990 = vmul.f32 %v1783, %v1824
      %v1991 = vmul.f32 %v1784, %v1824
      %v1992 = vmul.f32 %v1785, %v1824
      %v1993 = vmul.f32 %v1786, %v1824
      %v1994 = vmul.f32 %v1787, %v1824
      %v1995 = vmul.f32 %v1788, %v1824
      %v1996 = vmul.f32 %v1789, %v1824
      %v1997 = vmul.f32 %v1790, %v1824
      %v1998 = vmul.f32 %v1791, %v1824
      %v1999 = vmul.f32 %v1792, %v1824
      %v2000 = vmul.f32 %v1793, %v1824
      %v2001 = vmul.f32 %v1794, %v1824
      %v2002 = vmul.f32 %v1795, %v1824
      %v2003 = vmul.f32 %v1796, %v1824
      %v2004 = vmul.f32 %v1797, %v1824
      %v2005 = vmul.f32 %v1798, %v1824
      %v2006 = vmul.f32 %v1799, %v1824
      %v2007 = vmul.f32 %v1800, %v1824
      %v2008 = vmul.f32 %v1801, %v1824
      %v2009 = vmul.f32 %v1802, %v1824
      %v2010 = vmul.f32 %v1803, %v1824
      %v2011 = vmul.f32 %v1804, %v1824
      %v2012 = vmul.f32 %v1805, %v1824
      %v2013 = vmul.f32 %v1806, %v1824
      %v2014 = vmul.f32 %v1807, %v1824
      %v2015 = vmul.f32 %v1808, %v1824
      %v2016 = vmul.f32 %v1809, %v1824
      %v2017 = vmul.f32 %v1810, %v1824
      %v2018 = vmul.f32 %v1811, %v1824
      %v2019 = vmul.f32 %v1812, %v1824
      %v2020 = vmul.f32 %v1813, %v1824
      %v2021 = vld [vmem:[%s2] sm:$0x1]
      %v2023 = vperm.slane %v2021, 0
      %v2025 = vmul.f32 %v1825, %v2023
      %v2026 = vmul.f32 %v1826, %v2023
      %v2027 = vmul.f32 %v1827, %v2023
      %v2028 = vmul.f32 %v1828, %v2023
      %v2029 = vmul.f32 %v1829, %v2023
      %v2030 = vmul.f32 %v1830, %v2023
      %v2031 = vmul.f32 %v1831, %v2023
      %v2032 = vmul.f32 %v1832, %v2023
      %v2033 = vmul.f32 %v1833, %v2023
      %v2034 = vmul.f32 %v1834, %v2023
      %v2035 = vmul.f32 %v1835, %v2023
      %v2036 = vmul.f32 %v1836, %v2023
      %v2037 = vmul.f32 %v1837, %v2023
      %v2038 = vmul.f32 %v1838, %v2023
      %v2039 = vmul.f32 %v1839, %v2023
      %v2040 = vmul.f32 %v1840, %v2023
      %v2041 = vmul.f32 %v1841, %v2023
      %v2042 = vmul.f32 %v1842, %v2023
      %v2043 = vmul.f32 %v1843, %v2023
      %v2044 = vmul.f32 %v1844, %v2023
      %v2045 = vmul.f32 %v1845, %v2023
      %v2046 = vmul.f32 %v1846, %v2023
      %v2047 = vmul.f32 %v1847, %v2023
      %v2048 = vmul.f32 %v1848, %v2023
      %v2049 = vmul.f32 %v1849, %v2023
      %v2050 = vmul.f32 %v1850, %v2023
      %v2051 = vmul.f32 %v1851, %v2023
      %v2052 = vmul.f32 %v1852, %v2023
      %v2053 = vmul.f32 %v1853, %v2023
      %v2054 = vmul.f32 %v1854, %v2023
      %v2055 = vmul.f32 %v1855, %v2023
      %v2056 = vmul.f32 %v1856, %v2023
      %v2057 = vmul.f32 %v1857, %v2023
      %v2058 = vmul.f32 %v1858, %v2023
      %v2059 = vmul.f32 %v1859, %v2023
      %v2060 = vmul.f32 %v1860, %v2023
      %v2061 = vmul.f32 %v1861, %v2023
      %v2062 = vmul.f32 %v1862, %v2023
      %v2063 = vmul.f32 %v1863, %v2023
      %v2064 = vmul.f32 %v1864, %v2023
      %v2065 = vmul.f32 %v1865, %v2023
      %v2066 = vmul.f32 %v1866, %v2023
      %v2067 = vmul.f32 %v1867, %v2023
      %v2068 = vmul.f32 %v1868, %v2023
      %v2069 = vmul.f32 %v1869, %v2023
      %v2070 = vmul.f32 %v1870, %v2023
      %v2071 = vmul.f32 %v1871, %v2023
      %v2072 = vmul.f32 %v1872, %v2023
      %v2073 = vmul.f32 %v1873, %v2023
      %v2074 = vmul.f32 %v1874, %v2023
      %v2075 = vmul.f32 %v1875, %v2023
      %v2076 = vmul.f32 %v1876, %v2023
      %v2077 = vmul.f32 %v1877, %v2023
      %v2078 = vmul.f32 %v1878, %v2023
      %v2079 = vmul.f32 %v1879, %v2023
      %v2080 = vmul.f32 %v1880, %v2023
      %v2081 = vmul.f32 %v1881, %v2023
      %v2082 = vmul.f32 %v1882, %v2023
      %v2083 = vmul.f32 %v1883, %v2023
      %v2084 = vmul.f32 %v1884, %v2023
      %v2085 = vmul.f32 %v1885, %v2023
      %v2086 = vmul.f32 %v1886, %v2023
      %v2087 = vmul.f32 %v1887, %v2023
      %v2088 = vmul.f32 %v1888, %v2023
      %v2089 = vmul.f32 %v1889, %v2023
      %v2090 = vmul.f32 %v1890, %v2023
      %v2091 = vmul.f32 %v1891, %v2023
      %v2092 = vmul.f32 %v1892, %v2023
      %v2093 = vmul.f32 %v1893, %v2023
      %v2094 = vmul.f32 %v1894, %v2023
      %v2095 = vmul.f32 %v1895, %v2023
      %v2096 = vmul.f32 %v1896, %v2023
      %v2097 = vmul.f32 %v1897, %v2023
      %v2098 = vmul.f32 %v1898, %v2023
      %v2099 = vmul.f32 %v1899, %v2023
      %v2100 = vmul.f32 %v1900, %v2023
      %v2101 = vmul.f32 %v1901, %v2023
      %v2102 = vmul.f32 %v1902, %v2023
      %v2103 = vmul.f32 %v1903, %v2023
      %v2104 = vmul.f32 %v1904, %v2023
      %v2105 = vmul.f32 %v1905, %v2023
      %v2106 = vmul.f32 %v1906, %v2023
      %v2107 = vmul.f32 %v1907, %v2023
      %v2108 = vmul.f32 %v1908, %v2023
      %v2109 = vmul.f32 %v1909, %v2023
      %v2110 = vmul.f32 %v1910, %v2023
      %v2111 = vmul.f32 %v1911, %v2023
      %v2112 = vmul.f32 %v1912, %v2023
      %v2113 = vmul.f32 %v1913, %v2023
      %v2114 = vmul.f32 %v1914, %v2023
      %v2115 = vmul.f32 %v1915, %v2023
      %v2116 = vmul.f32 %v1916, %v2023
      %v2117 = vmul.f32 %v1917, %v2023
      %v2118 = vmul.f32 %v1918, %v2023
      %v2119 = vmul.f32 %v1919, %v2023
      %v2120 = vmul.f32 %v1920, %v2023
      %v2121 = vmul.f32 %v1921, %v2023
      %v2122 = vmul.f32 %v1922, %v2023
      %v2123 = vmul.f32 %v1923, %v2023
      %v2124 = vmul.f32 %v1924, %v2023
      %v2125 = vmul.f32 %v1925, %v2023
      %v2126 = vmul.f32 %v1926, %v2023
      %v2127 = vmul.f32 %v1927, %v2023
      %v2128 = vmul.f32 %v1928, %v2023
      %v2129 = vmul.f32 %v1929, %v2023
      %v2130 = vmul.f32 %v1930, %v2023
      %v2131 = vmul.f32 %v1931, %v2023
      %v2132 = vmul.f32 %v1932, %v2023
      %v2133 = vmul.f32 %v1933, %v2023
      %v2134 = vmul.f32 %v1934, %v2023
      %v2135 = vmul.f32 %v1935, %v2023
      %v2136 = vmul.f32 %v1936, %v2023
      %v2137 = vmul.f32 %v1937, %v2023
      %v2138 = vmul.f32 %v1938, %v2023
      %v2139 = vmul.f32 %v1939, %v2023
      %v2140 = vmul.f32 %v1940, %v2023
      %v2141 = vmul.f32 %v1941, %v2023
      %v2142 = vmul.f32 %v1942, %v2023
      %v2143 = vmul.f32 %v1943, %v2023
      %v2144 = vmul.f32 %v1944, %v2023
      %v2145 = vmul.f32 %v1945, %v2023
      %v2146 = vmul.f32 %v1946, %v2023
      %v2147 = vmul.f32 %v1947, %v2023
      %v2148 = vmul.f32 %v1948, %v2023
      %v2149 = vmul.f32 %v1949, %v2023
      %v2150 = vmul.f32 %v1950, %v2023
      %v2151 = vmul.f32 %v1951, %v2023
      %v2152 = vmul.f32 %v1952, %v2023
      %v2153 = vmul.f32 %v1953, %v2023
      %v2154 = vmul.f32 %v1954, %v2023
      %v2155 = vmul.f32 %v1955, %v2023
      %v2156 = vmul.f32 %v1956, %v2023
      %v2157 = vmul.f32 %v1957, %v2023
      %v2158 = vmul.f32 %v1958, %v2023
      %v2159 = vmul.f32 %v1959, %v2023
      %v2160 = vmul.f32 %v1960, %v2023
      %v2161 = vmul.f32 %v1961, %v2023
      %v2162 = vmul.f32 %v1962, %v2023
      %v2163 = vmul.f32 %v1963, %v2023
      %v2164 = vmul.f32 %v1964, %v2023
      %v2165 = vmul.f32 %v1965, %v2023
      %v2166 = vmul.f32 %v1966, %v2023
      %v2167 = vmul.f32 %v1967, %v2023
      %v2168 = vmul.f32 %v1968, %v2023
      %v2169 = vmul.f32 %v1969, %v2023
      %v2170 = vmul.f32 %v1970, %v2023
      %v2171 = vmul.f32 %v1971, %v2023
      %v2172 = vmul.f32 %v1972, %v2023
      %v2173 = vmul.f32 %v1973, %v2023
      %v2174 = vmul.f32 %v1974, %v2023
      %v2175 = vmul.f32 %v1975, %v2023
      %v2176 = vmul.f32 %v1976, %v2023
      %v2177 = vmul.f32 %v1977, %v2023
      %v2178 = vmul.f32 %v1978, %v2023
      %v2179 = vmul.f32 %v1979, %v2023
      %v2180 = vmul.f32 %v1980, %v2023
      %v2181 = vmul.f32 %v1981, %v2023
      %v2182 = vmul.f32 %v1982, %v2023
      %v2183 = vmul.f32 %v1983, %v2023
      %v2184 = vmul.f32 %v1984, %v2023
      %v2185 = vmul.f32 %v1985, %v2023
      %v2186 = vmul.f32 %v1986, %v2023
      %v2187 = vmul.f32 %v1987, %v2023
      %v2188 = vmul.f32 %v1988, %v2023
      %v2189 = vmul.f32 %v1989, %v2023
      %v2190 = vmul.f32 %v1990, %v2023
      %v2191 = vmul.f32 %v1991, %v2023
      %v2192 = vmul.f32 %v1992, %v2023
      %v2193 = vmul.f32 %v1993, %v2023
      %v2194 = vmul.f32 %v1994, %v2023
      %v2195 = vmul.f32 %v1995, %v2023
      %v2196 = vmul.f32 %v1996, %v2023
      %v2197 = vmul.f32 %v1997, %v2023
      %v2198 = vmul.f32 %v1998, %v2023
      %v2199 = vmul.f32 %v1999, %v2023
      %v2200 = vmul.f32 %v2000, %v2023
      %v2201 = vmul.f32 %v2001, %v2023
      %v2202 = vmul.f32 %v2002, %v2023
      %v2203 = vmul.f32 %v2003, %v2023
      %v2204 = vmul.f32 %v2004, %v2023
      %v2205 = vmul.f32 %v2005, %v2023
      %v2206 = vmul.f32 %v2006, %v2023
      %v2207 = vmul.f32 %v2007, %v2023
      %v2208 = vmul.f32 %v2008, %v2023
      %v2209 = vmul.f32 %v2009, %v2023
      %v2210 = vmul.f32 %v2010, %v2023
      %v2211 = vmul.f32 %v2011, %v2023
      %v2212 = vmul.f32 %v2012, %v2023
      %v2213 = vmul.f32 %v2013, %v2023
      %v2214 = vmul.f32 %v2014, %v2023
      %v2215 = vmul.f32 %v2015, %v2023
      %v2216 = vmul.f32 %v2016, %v2023
      %v2217 = vmul.f32 %v2017, %v2023
      %v2218 = vmul.f32 %v2018, %v2023
      %v2219 = vmul.f32 %v2019, %v2023
      %v2220 = vmul.f32 %v2020, %v2023
      %v2221 = vld [vmem:[%s3] sm:$0x1]
      %v2223 = vperm.slane %v2221, 0
      %v2225 = vadd.f32 %v2025, %v2223
      %v2226 = vadd.f32 %v2026, %v2223
      %v2227 = vadd.f32 %v2027, %v2223
      %v2228 = vadd.f32 %v2028, %v2223
      %v2229 = vadd.f32 %v2029, %v2223
      %v2230 = vadd.f32 %v2030, %v2223
      %v2231 = vadd.f32 %v2031, %v2223
      %v2232 = vadd.f32 %v2032, %v2223
      %v2233 = vadd.f32 %v2033, %v2223
      %v2234 = vadd.f32 %v2034, %v2223
      %v2235 = vadd.f32 %v2035, %v2223
      %v2236 = vadd.f32 %v2036, %v2223
      %v2237 = vadd.f32 %v2037, %v2223
      %v2238 = vadd.f32 %v2038, %v2223
      %v2239 = vadd.f32 %v2039, %v2223
      %v2240 = vadd.f32 %v2040, %v2223
      %v2241 = vadd.f32 %v2041, %v2223
      %v2242 = vadd.f32 %v2042, %v2223
      %v2243 = vadd.f32 %v2043, %v2223
      %v2244 = vadd.f32 %v2044, %v2223
      %v2245 = vadd.f32 %v2045, %v2223
      %v2246 = vadd.f32 %v2046, %v2223
      %v2247 = vadd.f32 %v2047, %v2223
      %v2248 = vadd.f32 %v2048, %v2223
      %v2249 = vadd.f32 %v2049, %v2223
      %v2250 = vadd.f32 %v2050, %v2223
      %v2251 = vadd.f32 %v2051, %v2223
      %v2252 = vadd.f32 %v2052, %v2223
      %v2253 = vadd.f32 %v2053, %v2223
      %v2254 = vadd.f32 %v2054, %v2223
      %v2255 = vadd.f32 %v2055, %v2223
      %v2256 = vadd.f32 %v2056, %v2223
      %v2257 = vadd.f32 %v2057, %v2223
      %v2258 = vadd.f32 %v2058, %v2223
      %v2259 = vadd.f32 %v2059, %v2223
      %v2260 = vadd.f32 %v2060, %v2223
      %v2261 = vadd.f32 %v2061, %v2223
      %v2262 = vadd.f32 %v2062, %v2223
      %v2263 = vadd.f32 %v2063, %v2223
      %v2264 = vadd.f32 %v2064, %v2223
      %v2265 = vadd.f32 %v2065, %v2223
      %v2266 = vadd.f32 %v2066, %v2223
      %v2267 = vadd.f32 %v2067, %v2223
      %v2268 = vadd.f32 %v2068, %v2223
      %v2269 = vadd.f32 %v2069, %v2223
      %v2270 = vadd.f32 %v2070, %v2223
      %v2271 = vadd.f32 %v2071, %v2223
      %v2272 = vadd.f32 %v2072, %v2223
      %v2273 = vadd.f32 %v2073, %v2223
      %v2274 = vadd.f32 %v2074, %v2223
      %v2275 = vadd.f32 %v2075, %v2223
      %v2276 = vadd.f32 %v2076, %v2223
      %v2277 = vadd.f32 %v2077, %v2223
      %v2278 = vadd.f32 %v2078, %v2223
      %v2279 = vadd.f32 %v2079, %v2223
      %v2280 = vadd.f32 %v2080, %v2223
      %v2281 = vadd.f32 %v2081, %v2223
      %v2282 = vadd.f32 %v2082, %v2223
      %v2283 = vadd.f32 %v2083, %v2223
      %v2284 = vadd.f32 %v2084, %v2223
      %v2285 = vadd.f32 %v2085, %v2223
      %v2286 = vadd.f32 %v2086, %v2223
      %v2287 = vadd.f32 %v2087, %v2223
      %v2288 = vadd.f32 %v2088, %v2223
      %v2289 = vadd.f32 %v2089, %v2223
      %v2290 = vadd.f32 %v2090, %v2223
      %v2291 = vadd.f32 %v2091, %v2223
      %v2292 = vadd.f32 %v2092, %v2223
      %v2293 = vadd.f32 %v2093, %v2223
      %v2294 = vadd.f32 %v2094, %v2223
      %v2295 = vadd.f32 %v2095, %v2223
      %v2296 = vadd.f32 %v2096, %v2223
      %v2297 = vadd.f32 %v2097, %v2223
      %v2298 = vadd.f32 %v2098, %v2223
      %v2299 = vadd.f32 %v2099, %v2223
      %v2300 = vadd.f32 %v2100, %v2223
      %v2301 = vadd.f32 %v2101, %v2223
      %v2302 = vadd.f32 %v2102, %v2223
      %v2303 = vadd.f32 %v2103, %v2223
      %v2304 = vadd.f32 %v2104, %v2223
      %v2305 = vadd.f32 %v2105, %v2223
      %v2306 = vadd.f32 %v2106, %v2223
      %v2307 = vadd.f32 %v2107, %v2223
      %v2308 = vadd.f32 %v2108, %v2223
      %v2309 = vadd.f32 %v2109, %v2223
      %v2310 = vadd.f32 %v2110, %v2223
      %v2311 = vadd.f32 %v2111, %v2223
      %v2312 = vadd.f32 %v2112, %v2223
      %v2313 = vadd.f32 %v2113, %v2223
      %v2314 = vadd.f32 %v2114, %v2223
      %v2315 = vadd.f32 %v2115, %v2223
      %v2316 = vadd.f32 %v2116, %v2223
      %v2317 = vadd.f32 %v2117, %v2223
      %v2318 = vadd.f32 %v2118, %v2223
      %v2319 = vadd.f32 %v2119, %v2223
      %v2320 = vadd.f32 %v2120, %v2223
      %v2321 = vadd.f32 %v2121, %v2223
      %v2322 = vadd.f32 %v2122, %v2223
      %v2323 = vadd.f32 %v2123, %v2223
      %v2324 = vadd.f32 %v2124, %v2223
      %v2325 = vadd.f32 %v2125, %v2223
      %v2326 = vadd.f32 %v2126, %v2223
      %v2327 = vadd.f32 %v2127, %v2223
      %v2328 = vadd.f32 %v2128, %v2223
      %v2329 = vadd.f32 %v2129, %v2223
      %v2330 = vadd.f32 %v2130, %v2223
      %v2331 = vadd.f32 %v2131, %v2223
      %v2332 = vadd.f32 %v2132, %v2223
      %v2333 = vadd.f32 %v2133, %v2223
      %v2334 = vadd.f32 %v2134, %v2223
      %v2335 = vadd.f32 %v2135, %v2223
      %v2336 = vadd.f32 %v2136, %v2223
      %v2337 = vadd.f32 %v2137, %v2223
      %v2338 = vadd.f32 %v2138, %v2223
      %v2339 = vadd.f32 %v2139, %v2223
      %v2340 = vadd.f32 %v2140, %v2223
      %v2341 = vadd.f32 %v2141, %v2223
      %v2342 = vadd.f32 %v2142, %v2223
      %v2343 = vadd.f32 %v2143, %v2223
      %v2344 = vadd.f32 %v2144, %v2223
      %v2345 = vadd.f32 %v2145, %v2223
      %v2346 = vadd.f32 %v2146, %v2223
      %v2347 = vadd.f32 %v2147, %v2223
      %v2348 = vadd.f32 %v2148, %v2223
      %v2349 = vadd.f32 %v2149, %v2223
      %v2350 = vadd.f32 %v2150, %v2223
      %v2351 = vadd.f32 %v2151, %v2223
      %v2352 = vadd.f32 %v2152, %v2223
      %v2353 = vadd.f32 %v2153, %v2223
      %v2354 = vadd.f32 %v2154, %v2223
      %v2355 = vadd.f32 %v2155, %v2223
      %v2356 = vadd.f32 %v2156, %v2223
      %v2357 = vadd.f32 %v2157, %v2223
      %v2358 = vadd.f32 %v2158, %v2223
      %v2359 = vadd.f32 %v2159, %v2223
      %v2360 = vadd.f32 %v2160, %v2223
      %v2361 = vadd.f32 %v2161, %v2223
      %v2362 = vadd.f32 %v2162, %v2223
      %v2363 = vadd.f32 %v2163, %v2223
      %v2364 = vadd.f32 %v2164, %v2223
      %v2365 = vadd.f32 %v2165, %v2223
      %v2366 = vadd.f32 %v2166, %v2223
      %v2367 = vadd.f32 %v2167, %v2223
      %v2368 = vadd.f32 %v2168, %v2223
      %v2369 = vadd.f32 %v2169, %v2223
      %v2370 = vadd.f32 %v2170, %v2223
      %v2371 = vadd.f32 %v2171, %v2223
      %v2372 = vadd.f32 %v2172, %v2223
      %v2373 = vadd.f32 %v2173, %v2223
      %v2374 = vadd.f32 %v2174, %v2223
      %v2375 = vadd.f32 %v2175, %v2223
      %v2376 = vadd.f32 %v2176, %v2223
      %v2377 = vadd.f32 %v2177, %v2223
      %v2378 = vadd.f32 %v2178, %v2223
      %v2379 = vadd.f32 %v2179, %v2223
      %v2380 = vadd.f32 %v2180, %v2223
      %v2381 = vadd.f32 %v2181, %v2223
      %v2382 = vadd.f32 %v2182, %v2223
      %v2383 = vadd.f32 %v2183, %v2223
      %v2384 = vadd.f32 %v2184, %v2223
      %v2385 = vadd.f32 %v2185, %v2223
      %v2386 = vadd.f32 %v2186, %v2223
      %v2387 = vadd.f32 %v2187, %v2223
      %v2388 = vadd.f32 %v2188, %v2223
      %v2389 = vadd.f32 %v2189, %v2223
      %v2390 = vadd.f32 %v2190, %v2223
      %v2391 = vadd.f32 %v2191, %v2223
      %v2392 = vadd.f32 %v2192, %v2223
      %v2393 = vadd.f32 %v2193, %v2223
      %v2394 = vadd.f32 %v2194, %v2223
      %v2395 = vadd.f32 %v2195, %v2223
      %v2396 = vadd.f32 %v2196, %v2223
      %v2397 = vadd.f32 %v2197, %v2223
      %v2398 = vadd.f32 %v2198, %v2223
      %v2399 = vadd.f32 %v2199, %v2223
      %v2400 = vadd.f32 %v2200, %v2223
      %v2401 = vadd.f32 %v2201, %v2223
      %v2402 = vadd.f32 %v2202, %v2223
      %v2403 = vadd.f32 %v2203, %v2223
      %v2404 = vadd.f32 %v2204, %v2223
      %v2405 = vadd.f32 %v2205, %v2223
      %v2406 = vadd.f32 %v2206, %v2223
      %v2407 = vadd.f32 %v2207, %v2223
      %v2408 = vadd.f32 %v2208, %v2223
      %v2409 = vadd.f32 %v2209, %v2223
      %v2410 = vadd.f32 %v2210, %v2223
      %v2411 = vadd.f32 %v2211, %v2223
      %v2412 = vadd.f32 %v2212, %v2223
      %v2413 = vadd.f32 %v2213, %v2223
      %v2414 = vadd.f32 %v2214, %v2223
      %v2415 = vadd.f32 %v2215, %v2223
      %v2416 = vadd.f32 %v2216, %v2223
      %v2417 = vadd.f32 %v2217, %v2223
      %v2418 = vadd.f32 %v2218, %v2223
      %v2419 = vadd.f32 %v2219, %v2223
      %v2420 = vadd.f32 %v2220, %v2223
      %v2421 = vmax.f32 %v2225, 0.0
      %v2422 = vmax.f32 %v2226, 0.0
      %v2423 = vmax.f32 %v2227, 0.0
      %v2424 = vmax.f32 %v2228, 0.0
      %v2425 = vmax.f32 %v2229, 0.0
      %v2426 = vmax.f32 %v2230, 0.0
      %v2427 = vmax.f32 %v2231, 0.0
      %v2428 = vmax.f32 %v2232, 0.0
      %v2429 = vmax.f32 %v2233, 0.0
      %v2430 = vmax.f32 %v2234, 0.0
      %v2431 = vmax.f32 %v2235, 0.0
      %v2432 = vmax.f32 %v2236, 0.0
      %v2433 = vmax.f32 %v2237, 0.0
      %v2434 = vmax.f32 %v2238, 0.0
      %v2435 = vmax.f32 %v2239, 0.0
      %v2436 = vmax.f32 %v2240, 0.0
      %v2437 = vmax.f32 %v2241, 0.0
      %v2438 = vmax.f32 %v2242, 0.0
      %v2439 = vmax.f32 %v2243, 0.0
      %v2440 = vmax.f32 %v2244, 0.0
      %v2441 = vmax.f32 %v2245, 0.0
      %v2442 = vmax.f32 %v2246, 0.0
      %v2443 = vmax.f32 %v2247, 0.0
      %v2444 = vmax.f32 %v2248, 0.0
      %v2445 = vmax.f32 %v2249, 0.0
      %v2446 = vmax.f32 %v2250, 0.0
      %v2447 = vmax.f32 %v2251, 0.0
      %v2448 = vmax.f32 %v2252, 0.0
      %v2449 = vmax.f32 %v2253, 0.0
      %v2450 = vmax.f32 %v2254, 0.0
      %v2451 = vmax.f32 %v2255, 0.0
      %v2452 = vmax.f32 %v2256, 0.0
      %v2453 = vmax.f32 %v2257, 0.0
      %v2454 = vmax.f32 %v2258, 0.0
      %v2455 = vmax.f32 %v2259, 0.0
      %v2456 = vmax.f32 %v2260, 0.0
      %v2457 = vmax.f32 %v2261, 0.0
      %v2458 = vmax.f32 %v2262, 0.0
      %v2459 = vmax.f32 %v2263, 0.0
      %v2460 = vmax.f32 %v2264, 0.0
      %v2461 = vmax.f32 %v2265, 0.0
      %v2462 = vmax.f32 %v2266, 0.0
      %v2463 = vmax.f32 %v2267, 0.0
      %v2464 = vmax.f32 %v2268, 0.0
      %v2465 = vmax.f32 %v2269, 0.0
      %v2466 = vmax.f32 %v2270, 0.0
      %v2467 = vmax.f32 %v2271, 0.0
      %v2468 = vmax.f32 %v2272, 0.0
      %v2469 = vmax.f32 %v2273, 0.0
      %v2470 = vmax.f32 %v2274, 0.0
      %v2471 = vmax.f32 %v2275, 0.0
      %v2472 = vmax.f32 %v2276, 0.0
      %v2473 = vmax.f32 %v2277, 0.0
      %v2474 = vmax.f32 %v2278, 0.0
      %v2475 = vmax.f32 %v2279, 0.0
      %v2476 = vmax.f32 %v2280, 0.0
      %v2477 = vmax.f32 %v2281, 0.0
      %v2478 = vmax.f32 %v2282, 0.0
      %v2479 = vmax.f32 %v2283, 0.0
      %v2480 = vmax.f32 %v2284, 0.0
      %v2481 = vmax.f32 %v2285, 0.0
      %v2482 = vmax.f32 %v2286, 0.0
      %v2483 = vmax.f32 %v2287, 0.0
      %v2484 = vmax.f32 %v2288, 0.0
      %v2485 = vmax.f32 %v2289, 0.0
      %v2486 = vmax.f32 %v2290, 0.0
      %v2487 = vmax.f32 %v2291, 0.0
      %v2488 = vmax.f32 %v2292, 0.0
      %v2489 = vmax.f32 %v2293, 0.0
      %v2490 = vmax.f32 %v2294, 0.0
      %v2491 = vmax.f32 %v2295, 0.0
      %v2492 = vmax.f32 %v2296, 0.0
      %v2493 = vmax.f32 %v2297, 0.0
      %v2494 = vmax.f32 %v2298, 0.0
      %v2495 = vmax.f32 %v2299, 0.0
      %v2496 = vmax.f32 %v2300, 0.0
      %v2497 = vmax.f32 %v2301, 0.0
      %v2498 = vmax.f32 %v2302, 0.0
      %v2499 = vmax.f32 %v2303, 0.0
      %v2500 = vmax.f32 %v2304, 0.0
      %v2501 = vmax.f32 %v2305, 0.0
      %v2502 = vmax.f32 %v2306, 0.0
      %v2503 = vmax.f32 %v2307, 0.0
      %v2504 = vmax.f32 %v2308, 0.0
      %v2505 = vmax.f32 %v2309, 0.0
      %v2506 = vmax.f32 %v2310, 0.0
      %v2507 = vmax.f32 %v2311, 0.0
      %v2508 = vmax.f32 %v2312, 0.0
      %v2509 = vmax.f32 %v2313, 0.0
      %v2510 = vmax.f32 %v2314, 0.0
      %v2511 = vmax.f32 %v2315, 0.0
      %v2512 = vmax.f32 %v2316, 0.0
      %v2513 = vmax.f32 %v2317, 0.0
      %v2514 = vmax.f32 %v2318, 0.0
      %v2515 = vmax.f32 %v2319, 0.0
      %v2516 = vmax.f32 %v2320, 0.0
      %v2517 = vmax.f32 %v2321, 0.0
      %v2518 = vmax.f32 %v2322, 0.0
      %v2519 = vmax.f32 %v2323, 0.0
      %v2520 = vmax.f32 %v2324, 0.0
      %v2521 = vmax.f32 %v2325, 0.0
      %v2522 = vmax.f32 %v2326, 0.0
      %v2523 = vmax.f32 %v2327, 0.0
      %v2524 = vmax.f32 %v2328, 0.0
      %v2525 = vmax.f32 %v2329, 0.0
      %v2526 = vmax.f32 %v2330, 0.0
      %v2527 = vmax.f32 %v2331, 0.0
      %v2528 = vmax.f32 %v2332, 0.0
      %v2529 = vmax.f32 %v2333, 0.0
      %v2530 = vmax.f32 %v2334, 0.0
      %v2531 = vmax.f32 %v2335, 0.0
      %v2532 = vmax.f32 %v2336, 0.0
      %v2533 = vmax.f32 %v2337, 0.0
      %v2534 = vmax.f32 %v2338, 0.0
      %v2535 = vmax.f32 %v2339, 0.0
      %v2536 = vmax.f32 %v2340, 0.0
      %v2537 = vmax.f32 %v2341, 0.0
      %v2538 = vmax.f32 %v2342, 0.0
      %v2539 = vmax.f32 %v2343, 0.0
      %v2540 = vmax.f32 %v2344, 0.0
      %v2541 = vmax.f32 %v2345, 0.0
      %v2542 = vmax.f32 %v2346, 0.0
      %v2543 = vmax.f32 %v2347, 0.0
      %v2544 = vmax.f32 %v2348, 0.0
      %v2545 = vmax.f32 %v2349, 0.0
      %v2546 = vmax.f32 %v2350, 0.0
      %v2547 = vmax.f32 %v2351, 0.0
      %v2548 = vmax.f32 %v2352, 0.0
      %v2549 = vmax.f32 %v2353, 0.0
      %v2550 = vmax.f32 %v2354, 0.0
      %v2551 = vmax.f32 %v2355, 0.0
      %v2552 = vmax.f32 %v2356, 0.0
      %v2553 = vmax.f32 %v2357, 0.0
      %v2554 = vmax.f32 %v2358, 0.0
      %v2555 = vmax.f32 %v2359, 0.0
      %v2556 = vmax.f32 %v2360, 0.0
      %v2557 = vmax.f32 %v2361, 0.0
      %v2558 = vmax.f32 %v2362, 0.0
      %v2559 = vmax.f32 %v2363, 0.0
      %v2560 = vmax.f32 %v2364, 0.0
      %v2561 = vmax.f32 %v2365, 0.0
      %v2562 = vmax.f32 %v2366, 0.0
      %v2563 = vmax.f32 %v2367, 0.0
      %v2564 = vmax.f32 %v2368, 0.0
      %v2565 = vmax.f32 %v2369, 0.0
      %v2566 = vmax.f32 %v2370, 0.0
      %v2567 = vmax.f32 %v2371, 0.0
      %v2568 = vmax.f32 %v2372, 0.0
      %v2569 = vmax.f32 %v2373, 0.0
      %v2570 = vmax.f32 %v2374, 0.0
      %v2571 = vmax.f32 %v2375, 0.0
      %v2572 = vmax.f32 %v2376, 0.0
      %v2573 = vmax.f32 %v2377, 0.0
      %v2574 = vmax.f32 %v2378, 0.0
      %v2575 = vmax.f32 %v2379, 0.0
      %v2576 = vmax.f32 %v2380, 0.0
      %v2577 = vmax.f32 %v2381, 0.0
      %v2578 = vmax.f32 %v2382, 0.0
      %v2579 = vmax.f32 %v2383, 0.0
      %v2580 = vmax.f32 %v2384, 0.0
      %v2581 = vmax.f32 %v2385, 0.0
      %v2582 = vmax.f32 %v2386, 0.0
      %v2583 = vmax.f32 %v2387, 0.0
      %v2584 = vmax.f32 %v2388, 0.0
      %v2585 = vmax.f32 %v2389, 0.0
      %v2586 = vmax.f32 %v2390, 0.0
      %v2587 = vmax.f32 %v2391, 0.0
      %v2588 = vmax.f32 %v2392, 0.0
      %v2589 = vmax.f32 %v2393, 0.0
      %v2590 = vmax.f32 %v2394, 0.0
      %v2591 = vmax.f32 %v2395, 0.0
      %v2592 = vmax.f32 %v2396, 0.0
      %v2593 = vmax.f32 %v2397, 0.0
      %v2594 = vmax.f32 %v2398, 0.0
      %v2595 = vmax.f32 %v2399, 0.0
      %v2596 = vmax.f32 %v2400, 0.0
      %v2597 = vmax.f32 %v2401, 0.0
      %v2598 = vmax.f32 %v2402, 0.0
      %v2599 = vmax.f32 %v2403, 0.0
      %v2600 = vmax.f32 %v2404, 0.0
      %v2601 = vmax.f32 %v2405, 0.0
      %v2602 = vmax.f32 %v2406, 0.0
      %v2603 = vmax.f32 %v2407, 0.0
      %v2604 = vmax.f32 %v2408, 0.0
      %v2605 = vmax.f32 %v2409, 0.0
      %v2606 = vmax.f32 %v2410, 0.0
      %v2607 = vmax.f32 %v2411, 0.0
      %v2608 = vmax.f32 %v2412, 0.0
      %v2609 = vmax.f32 %v2413, 0.0
      %v2610 = vmax.f32 %v2414, 0.0
      %v2611 = vmax.f32 %v2415, 0.0
      %v2612 = vmax.f32 %v2416, 0.0
      %v2613 = vmax.f32 %v2417, 0.0
      %v2614 = vmax.f32 %v2418, 0.0
      %v2615 = vmax.f32 %v2419, 0.0
      %v2616 = vmax.f32 %v2420, 0.0
      %2617 = vst [vmem:[%s197] sm:$0xff] %v2421
      %2618 = vst [vmem:[%s197 + $0x8] sm:$0xff] %v2422
      %2619 = vst [vmem:[%s197 + $0x10] sm:$0xff] %v2423
      %2620 = vst [vmem:[%s197 + $0x18] sm:$0xff] %v2424
      %2621 = vst [vmem:[%s197 + $0x20] sm:$0xff] %v2425
      %2622 = vst [vmem:[%s197 + $0x28] sm:$0xff] %v2426
      %2623 = vst [vmem:[%s197 + $0x30] sm:$0xff] %v2427
      %2624 = vst [vmem:[%s197 + $0x38] sm:$0xff] %v2428
      %2625 = vst [vmem:[%s197 + $0x40] sm:$0xff] %v2429
      %2626 = vst [vmem:[%s197 + $0x48] sm:$0xff] %v2430
      %2627 = vst [vmem:[%s197 + $0x50] sm:$0xff] %v2431
      %2628 = vst [vmem:[%s197 + $0x58] sm:$0xff] %v2432
      %2629 = vst [vmem:[%s197 + $0x60] sm:$0xff] %v2433
      %2630 = vst [vmem:[%s197 + $0x68] sm:$0xff] %v2434
      %2631 = vst [vmem:[%s197 + $0x70] sm:$0xff] %v2435
      %2632 = vst [vmem:[%s197 + $0x78] sm:$0xff] %v2436
      %2633 = vst [vmem:[%s197 + $0x80] sm:$0xff] %v2437
      %2634 = vst [vmem:[%s197 + $0x88] sm:$0xff] %v2438
      %2635 = vst [vmem:[%s197 + $0x90] sm:$0xff] %v2439
      %2636 = vst [vmem:[%s197 + $0x98] sm:$0xff] %v2440
      %2637 = vst [vmem:[%s197 + $0xa0] sm:$0xff] %v2441
      %2638 = vst [vmem:[%s197 + $0xa8] sm:$0xff] %v2442
      %2639 = vst [vmem:[%s197 + $0xb0] sm:$0xff] %v2443
      %2640 = vst [vmem:[%s197 + $0xb8] sm:$0xff] %v2444
      %2641 = vst [vmem:[%s197 + $0xc0] sm:$0xff] %v2445
      %2642 = vst [vmem:[%s197 + $0xc8] sm:$0xff] %v2446
      %2643 = vst [vmem:[%s197 + $0xd0] sm:$0xff] %v2447
      %2644 = vst [vmem:[%s197 + $0xd8] sm:$0xff] %v2448
      %2645 = vst [vmem:[%s197 + $0xe0] sm:$0xff] %v2449
      %2646 = vst [vmem:[%s197 + $0xe8] sm:$0xff] %v2450
      %2647 = vst [vmem:[%s197 + $0xf0] sm:$0xff] %v2451
      %2648 = vst [vmem:[%s197 + $0xf8] sm:$0xff] %v2452
      %2649 = vst [vmem:[%s197 + $0x100] sm:$0xff] %v2453
      %2650 = vst [vmem:[%s197 + $0x108] sm:$0xff] %v2454
      %2651 = vst [vmem:[%s197 + $0x110] sm:$0xff] %v2455
      %2652 = vst [vmem:[%s197 + $0x118] sm:$0xff] %v2456
      %2653 = vst [vmem:[%s197 + $0x120] sm:$0xff] %v2457
      %2654 = vst [vmem:[%s197 + $0x128] sm:$0xff] %v2458
      %2655 = vst [vmem:[%s197 + $0x130] sm:$0xff] %v2459
      %2656 = vst [vmem:[%s197 + $0x138] sm:$0xff] %v2460
      %2657 = vst [vmem:[%s197 + $0x140] sm:$0xff] %v2461
      %2658 = vst [vmem:[%s197 + $0x148] sm:$0xff] %v2462
      %2659 = vst [vmem:[%s197 + $0x150] sm:$0xff] %v2463
      %2660 = vst [vmem:[%s197 + $0x158] sm:$0xff] %v2464
      %2661 = vst [vmem:[%s197 + $0x160] sm:$0xff] %v2465
      %2662 = vst [vmem:[%s197 + $0x168] sm:$0xff] %v2466
      %2663 = vst [vmem:[%s197 + $0x170] sm:$0xff] %v2467
      %2664 = vst [vmem:[%s197 + $0x178] sm:$0xff] %v2468
      %2665 = vst [vmem:[%s197 + $0x180] sm:$0xff] %v2469
      %2666 = vst [vmem:[%s197 + $0x188] sm:$0xff] %v2470
      %2667 = vst [vmem:[%s197 + $0x190] sm:$0xff] %v2471
      %2668 = vst [vmem:[%s197 + $0x198] sm:$0xff] %v2472
      %2669 = vst [vmem:[%s197 + $0x1a0] sm:$0xff] %v2473
      %2670 = vst [vmem:[%s197 + $0x1a8] sm:$0xff] %v2474
      %2671 = vst [vmem:[%s197 + $0x1b0] sm:$0xff] %v2475
      %2672 = vst [vmem:[%s197 + $0x1b8] sm:$0xff] %v2476
      %2673 = vst [vmem:[%s197 + $0x1c0] sm:$0xff] %v2477
      %2674 = vst [vmem:[%s197 + $0x1c8] sm:$0xff] %v2478
      %2675 = vst [vmem:[%s197 + $0x1d0] sm:$0xff] %v2479
      %2676 = vst [vmem:[%s197 + $0x1d8] sm:$0xff] %v2480
      %2677 = vst [vmem:[%s197 + $0x1e0] sm:$0xff] %v2481
      %2678 = vst [vmem:[%s197 + $0x1e8] sm:$0xff] %v2482
      %2679 = vst [vmem:[%s197 + $0x1f0] sm:$0xff] %v2483
      %2680 = vst [vmem:[%s197 + $0x1f8] sm:$0xff] %v2484
      %2681 = vst [vmem:[%s197 + $0x200] sm:$0xff] %v2485
      %2682 = vst [vmem:[%s197 + $0x208] sm:$0xff] %v2486
      %2683 = vst [vmem:[%s197 + $0x210] sm:$0xff] %v2487
      %2684 = vst [vmem:[%s197 + $0x218] sm:$0xff] %v2488
      %2685 = vst [vmem:[%s197 + $0x220] sm:$0xff] %v2489
      %2686 = vst [vmem:[%s197 + $0x228] sm:$0xff] %v2490
      %2687 = vst [vmem:[%s197 + $0x230] sm:$0xff] %v2491
      %2688 = vst [vmem:[%s197 + $0x238] sm:$0xff] %v2492
      %2689 = vst [vmem:[%s197 + $0x240] sm:$0xff] %v2493
      %2690 = vst [vmem:[%s197 + $0x248] sm:$0xff] %v2494
      %2691 = vst [vmem:[%s197 + $0x250] sm:$0xff] %v2495
      %2692 = vst [vmem:[%s197 + $0x258] sm:$0xff] %v2496
      %2693 = vst [vmem:[%s197 + $0x260] sm:$0xff] %v2497
      %2694 = vst [vmem:[%s197 + $0x268] sm:$0xff] %v2498
      %2695 = vst [vmem:[%s197 + $0x270] sm:$0xff] %v2499
      %2696 = vst [vmem:[%s197 + $0x278] sm:$0xff] %v2500
      %2697 = vst [vmem:[%s197 + $0x280] sm:$0xff] %v2501
      %2698 = vst [vmem:[%s197 + $0x288] sm:$0xff] %v2502
      %2699 = vst [vmem:[%s197 + $0x290] sm:$0xff] %v2503
      %2700 = vst [vmem:[%s197 + $0x298] sm:$0xff] %v2504
      %2701 = vst [vmem:[%s197 + $0x2a0] sm:$0xff] %v2505
      %2702 = vst [vmem:[%s197 + $0x2a8] sm:$0xff] %v2506
      %2703 = vst [vmem:[%s197 + $0x2b0] sm:$0xff] %v2507
      %2704 = vst [vmem:[%s197 + $0x2b8] sm:$0xff] %v2508
      %2705 = vst [vmem:[%s197 + $0x2c0] sm:$0xff] %v2509
      %2706 = vst [vmem:[%s197 + $0x2c8] sm:$0xff] %v2510
      %2707 = vst [vmem:[%s197 + $0x2d0] sm:$0xff] %v2511
      %2708 = vst [vmem:[%s197 + $0x2d8] sm:$0xff] %v2512
      %2709 = vst [vmem:[%s197 + $0x2e0] sm:$0xff] %v2513
      %2710 = vst [vmem:[%s197 + $0x2e8] sm:$0xff] %v2514
      %2711 = vst [vmem:[%s197 + $0x2f0] sm:$0xff] %v2515
      %2712 = vst [vmem:[%s197 + $0x2f8] sm:$0xff] %v2516
      %2713 = vst [vmem:[%s197 + $0x300] sm:$0xff] %v2517
      %2714 = vst [vmem:[%s197 + $0x308] sm:$0xff] %v2518
      %2715 = vst [vmem:[%s197 + $0x310] sm:$0xff] %v2519
      %2716 = vst [vmem:[%s197 + $0x318] sm:$0xff] %v2520
      %2717 = vst [vmem:[%s197 + $0x320] sm:$0xff] %v2521
      %2718 = vst [vmem:[%s197 + $0x328] sm:$0xff] %v2522
      %2719 = vst [vmem:[%s197 + $0x330] sm:$0xff] %v2523
      %2720 = vst [vmem:[%s197 + $0x338] sm:$0xff] %v2524
      %2721 = vst [vmem:[%s197 + $0x340] sm:$0xff] %v2525
      %2722 = vst [vmem:[%s197 + $0x348] sm:$0xff] %v2526
      %2723 = vst [vmem:[%s197 + $0x350] sm:$0xff] %v2527
      %2724 = vst [vmem:[%s197 + $0x358] sm:$0xff] %v2528
      %2725 = vst [vmem:[%s197 + $0x360] sm:$0xff] %v2529
      %2726 = vst [vmem:[%s197 + $0x368] sm:$0xff] %v2530
      %2727 = vst [vmem:[%s197 + $0x370] sm:$0xff] %v2531
      %2728 = vst [vmem:[%s197 + $0x378] sm:$0xff] %v2532
      %2729 = vst [vmem:[%s197 + $0x380] sm:$0xff] %v2533
      %2730 = vst [vmem:[%s197 + $0x388] sm:$0xff] %v2534
      %2731 = vst [vmem:[%s197 + $0x390] sm:$0xff] %v2535
      %2732 = vst [vmem:[%s197 + $0x398] sm:$0xff] %v2536
      %2733 = vst [vmem:[%s197 + $0x3a0] sm:$0xff] %v2537
      %2734 = vst [vmem:[%s197 + $0x3a8] sm:$0xff] %v2538
      %2735 = vst [vmem:[%s197 + $0x3b0] sm:$0xff] %v2539
      %2736 = vst [vmem:[%s197 + $0x3b8] sm:$0xff] %v2540
      %2737 = vst [vmem:[%s197 + $0x3c0] sm:$0xff] %v2541
      %2738 = vst [vmem:[%s197 + $0x3c8] sm:$0xff] %v2542
      %2739 = vst [vmem:[%s197 + $0x3d0] sm:$0xff] %v2543
      %2740 = vst [vmem:[%s197 + $0x3d8] sm:$0xff] %v2544
      %2741 = vst [vmem:[%s197 + $0x3e0] sm:$0xff] %v2545
      %2742 = vst [vmem:[%s197 + $0x3e8] sm:$0xff] %v2546
      %2743 = vst [vmem:[%s197 + $0x3f0] sm:$0xff] %v2547
      %2744 = vst [vmem:[%s197 + $0x3f8] sm:$0xff] %v2548
      %2745 = vst [vmem:[%s197 + $0x400] sm:$0xff] %v2549
      %2746 = vst [vmem:[%s197 + $0x408] sm:$0xff] %v2550
      %2747 = vst [vmem:[%s197 + $0x410] sm:$0xff] %v2551
      %2748 = vst [vmem:[%s197 + $0x418] sm:$0xff] %v2552
      %2749 = vst [vmem:[%s197 + $0x420] sm:$0xff] %v2553
      %2750 = vst [vmem:[%s197 + $0x428] sm:$0xff] %v2554
      %2751 = vst [vmem:[%s197 + $0x430] sm:$0xff] %v2555
      %2752 = vst [vmem:[%s197 + $0x438] sm:$0xff] %v2556
      %2753 = vst [vmem:[%s197 + $0x440] sm:$0xff] %v2557
      %2754 = vst [vmem:[%s197 + $0x448] sm:$0xff] %v2558
      %2755 = vst [vmem:[%s197 + $0x450] sm:$0xff] %v2559
      %2756 = vst [vmem:[%s197 + $0x458] sm:$0xff] %v2560
      %2757 = vst [vmem:[%s197 + $0x460] sm:$0xff] %v2561
      %2758 = vst [vmem:[%s197 + $0x468] sm:$0xff] %v2562
      %2759 = vst [vmem:[%s197 + $0x470] sm:$0xff] %v2563
      %2760 = vst [vmem:[%s197 + $0x478] sm:$0xff] %v2564
      %2761 = vst [vmem:[%s197 + $0x480] sm:$0xff] %v2565
      %2762 = vst [vmem:[%s197 + $0x488] sm:$0xff] %v2566
      %2763 = vst [vmem:[%s197 + $0x490] sm:$0xff] %v2567
      %2764 = vst [vmem:[%s197 + $0x498] sm:$0xff] %v2568
      %2765 = vst [vmem:[%s197 + $0x4a0] sm:$0xff] %v2569
      %2766 = vst [vmem:[%s197 + $0x4a8] sm:$0xff] %v2570
      %2767 = vst [vmem:[%s197 + $0x4b0] sm:$0xff] %v2571
      %2768 = vst [vmem:[%s197 + $0x4b8] sm:$0xff] %v2572
      %2769 = vst [vmem:[%s197 + $0x4c0] sm:$0xff] %v2573
      %2770 = vst [vmem:[%s197 + $0x4c8] sm:$0xff] %v2574
      %2771 = vst [vmem:[%s197 + $0x4d0] sm:$0xff] %v2575
      %2772 = vst [vmem:[%s197 + $0x4d8] sm:$0xff] %v2576
      %2773 = vst [vmem:[%s197 + $0x4e0] sm:$0xff] %v2577
      %2774 = vst [vmem:[%s197 + $0x4e8] sm:$0xff] %v2578
      %2775 = vst [vmem:[%s197 + $0x4f0] sm:$0xff] %v2579
      %2776 = vst [vmem:[%s197 + $0x4f8] sm:$0xff] %v2580
      %2777 = vst [vmem:[%s197 + $0x500] sm:$0xff] %v2581
      %2778 = vst [vmem:[%s197 + $0x508] sm:$0xff] %v2582
      %2779 = vst [vmem:[%s197 + $0x510] sm:$0xff] %v2583
      %2780 = vst [vmem:[%s197 + $0x518] sm:$0xff] %v2584
      %2781 = vst [vmem:[%s197 + $0x520] sm:$0xff] %v2585
      %2782 = vst [vmem:[%s197 + $0x528] sm:$0xff] %v2586
      %2783 = vst [vmem:[%s197 + $0x530] sm:$0xff] %v2587
      %2784 = vst [vmem:[%s197 + $0x538] sm:$0xff] %v2588
      %2785 = vst [vmem:[%s197 + $0x540] sm:$0xff] %v2589
      %2786 = vst [vmem:[%s197 + $0x548] sm:$0xff] %v2590
      %2787 = vst [vmem:[%s197 + $0x550] sm:$0xff] %v2591
      %2788 = vst [vmem:[%s197 + $0x558] sm:$0xff] %v2592
      %2789 = vst [vmem:[%s197 + $0x560] sm:$0xff] %v2593
      %2790 = vst [vmem:[%s197 + $0x568] sm:$0xff] %v2594
      %2791 = vst [vmem:[%s197 + $0x570] sm:$0xff] %v2595
      %2792 = vst [vmem:[%s197 + $0x578] sm:$0xff] %v2596
      %2793 = vst [vmem:[%s197 + $0x580] sm:$0xff] %v2597
      %2794 = vst [vmem:[%s197 + $0x588] sm:$0xff] %v2598
      %2795 = vst [vmem:[%s197 + $0x590] sm:$0xff] %v2599
      %2796 = vst [vmem:[%s197 + $0x598] sm:$0xff] %v2600
      %2797 = vst [vmem:[%s197 + $0x5a0] sm:$0xff] %v2601
      %2798 = vst [vmem:[%s197 + $0x5a8] sm:$0xff] %v2602
      %2799 = vst [vmem:[%s197 + $0x5b0] sm:$0xff] %v2603
      %2800 = vst [vmem:[%s197 + $0x5b8] sm:$0xff] %v2604
      %2801 = vst [vmem:[%s197 + $0x5c0] sm:$0xff] %v2605
      %2802 = vst [vmem:[%s197 + $0x5c8] sm:$0xff] %v2606
      %2803 = vst [vmem:[%s197 + $0x5d0] sm:$0xff] %v2607
      %2804 = vst [vmem:[%s197 + $0x5d8] sm:$0xff] %v2608
      %2805 = vst [vmem:[%s197 + $0x5e0] sm:$0xff] %v2609
      %2806 = vst [vmem:[%s197 + $0x5e8] sm:$0xff] %v2610
      %2807 = vst [vmem:[%s197 + $0x5f0] sm:$0xff] %v2611
      %2808 = vst [vmem:[%s197 + $0x5f8] sm:$0xff] %v2612
      %2809 = vst [vmem:[%s197 + $0x600] sm:$0xff] %v2613
      %2810 = vst [vmem:[%s197 + $0x608] sm:$0xff] %v2614
      %2811 = vst [vmem:[%s197 + $0x610] sm:$0xff] %v2615
      %2812 = vst [vmem:[%s197 + $0x618] sm:$0xff] %v2616
      %p2813 = scmp.lt.s32.totalorder %s15, 1
      %s2814 = scalar_select %p2813, %s15, 1
      %s2815 = smul.addr %s2814, 196
      %s2816 = smul.addr %s2815, 8
      %s2817 = scalar_lea.vmem %s4, %s2816
      // Predicated region
      $region37: #{siamese_forward.4} parent=35 // pred_check
        %p2818 = pneg %p122
      $region38: #{siamese_forward.4} parent=35 // pred_check_branch
        %2820 = sbr.rel (%p2818) target = $region40
      $region39: #{siamese_forward.4} parent=35 // pred_region
        _
      $region40: #{siamese_forward.4} parent=35 // pred_fallthru
        _
    $region36: #{siamese_forward.4} parent=5 // pred_fallthru
      _
    %p2821 = scmp.le.s32.totalorder 2, %s10
    // Predicated region
    $region41: #{siamese_forward.4} parent=5 // pred_check
      %p2822 = pneg %p2821
    $region42: #{siamese_forward.4} parent=5 // pred_check_branch
      %2824 = sbr.rel (%p2822) target = $region44
    $region43: #{siamese_forward.4} parent=5 // pred_region
      %s2825 = ssub.s32 %s10, 2
      // Predicated region
      $region45: #{siamese_forward.4} parent=43 // pred_check
        %p2826 = pneg %p128
      $region46: #{siamese_forward.4} parent=43 // pred_check_branch
        %2828 = sbr.rel (%p2826) target = $region48
      $region47: #{siamese_forward.4} parent=43 // pred_region
        %p2829 = scmp.lt.s32.totalorder %s16, 1
        %s2830 = scalar_select %p2829, %s16, 1
        %s2831 = smul.addr %s2830, 196
        %s2832 = smul.addr %s2831, 8
        %s2833 = scalar_lea.vmem %s4, %s2832
      $region48: #{siamese_forward.4} parent=43 // pred_fallthru
        _
    $region44: #{siamese_forward.4} parent=5 // pred_fallthru
      _
  $region6: #{siamese_forward.4} parent=0 // loop_footer
    %s14 = sadd.s32 1, %s10
  $region7: #{siamese_forward.4} parent=0 // loop_footer_branch
    %9 = sbr.rel target = $region3
  $region8: #{siamese_forward.4} parent=0 // loop_exit
    _

// kernel: siamese_forward.5
$region0: #{siamese_forward.5}
  #allocation0 [shape = 'u32[]', space=smem, size = 0x4, offset = 0x4, fixed_abs, tag = 'smem constant byte address 0x4 - core index']
  #allocation1 [shape = 'u32[72,128]{1,0:T(1,128)}', space=vmem, size = 0x9000, scoped, tag = 'internal scratch']
  %s0 = inlined_call_operand.vmem [shape: f32[2,288,1152], index: 0, kind: input, shape index: {}]
  %s1 = inlined_call_operand.vmem [shape: f32[1152,128], index: 1, kind: input, shape index: {}]
  %s2 = inlined_call_operand.vmem [shape: f32[1,128], index: 2, kind: input, shape index: {}]
  %s3 = inlined_call_operand.vmem [shape: f32[1,128], index: 3, kind: input, shape index: {}]
  %s4 = inlined_call_operand.vmem [shape: f32[2,288,128], index: 4, kind: output, shape index: {}]
  %s5 = sld [smem:[#allocation0]]
  $region49: #{siamese_forward.5} parent=0
    _
  %s7 = ssub.s32 1, %s5
  %s8 = scalar_select 0, %s7, %s5
  loop: start=0, step=1, limit=4
  $region2: #{siamese_forward.5} parent=0 // loop_pre_header
    _
  $region3: #{siamese_forward.5} parent=0 // loop_header
    %s10 = sphi 0, %s14
    %p11 = scmp.ge.s32.totalorder %s10, 4
    %s20 = sphi 0, %s22
    %s23 = sphi 0, %s20
    %s24 = sphi 0, %s23
    %s40 = sphi 0, %s24
    %s44 = sphi 0, %s44
    %s46 = sphi 0, %s44
    %s47 = sphi 0, %s46
    %s61 = sphi 0, %s47
    %s65 = sphi 0, %s65
    %s67 = sphi 0, %s65
    %s68 = sphi 0, %s67
    %s82 = sphi 0, %s68
    %s86 = sphi 0, %s86
    %s88 = sphi 0, %s86
    %s89 = sphi 0, %s88
    %s103 = sphi 0, %s89
    %s109 = sphi 0, %s111
    %s112 = sphi 0, %s109
    %s113 = sphi 0, %s112
    %s129 = sphi 0, %s113
  $region4: #{siamese_forward.5} parent=0 // loop_header_branch
    %13 = sbr.rel (%p11) target = $region8
  $region5: #{siamese_forward.5} parent=0 // loop_body
    %s15 = ssub.s32 %s10, 1
    %s16 = ssub.s32 %s10, 2
    %s17 = sadd.s32 %s10, 1
    %s18 = ssub.s32 %s10, %s17
    %p19 = scmp.eq.s32.totalorder %s18, 0
    %s21 = sadd.s32 %s20, 1
    %s22 = scalar_select %p19, %s20, %s21
    %p25 = pneg %p19
    %p26 = scmp.eq.s32.totalorder %s10, 1
    %p27 = por %p25, %p26
    %p28 = scmp.ne.s32.totalorder %s20, %s23
    %p29 = scmp.eq.s32.totalorder %s10, 0
    %p30 = por %p28, %p29
    %p31 = scmp.ne.s32.totalorder %s20, %s23
    %p32 = scmp.eq.s32.totalorder %s15, 1
    %p33 = por %p31, %p32
    %p34 = scmp.ne.s32.totalorder %s23, %s24
    %p35 = scmp.eq.s32.totalorder %s15, 0
    %p36 = por %p34, %p35
    %p37 = scmp.ne.s32.totalorder %s23, %s24
    %p38 = scmp.eq.s32.totalorder %s16, 1
    %p39 = por %p37, %p38
    %p41 = scmp.ne.s32.totalorder %s24, %s40
    %p42 = scmp.eq.s32.totalorder %s16, 0
    %p43 = por %p41, %p42
    %s45 = sadd.s32 %s44, 1
    %p48 = scmp.eq.s32.totalorder %s10, 1
    %p49 = scmp.ne.s32.totalorder %s44, %s46
    %p50 = scmp.eq.s32.totalorder %s10, 0
    %p51 = por %p49, %p50
    %p52 = scmp.ne.s32.totalorder %s44, %s46
    %p53 = scmp.eq.s32.totalorder %s15, 1
    %p54 = por %p52, %p53
    %p55 = scmp.ne.s32.totalorder %s46, %s47
    %p56 = scmp.eq.s32.totalorder %s15, 0
    %p57 = por %p55, %p56
    %p58 = scmp.ne.s32.totalorder %s46, %s47
    %p59 = scmp.eq.s32.totalorder %s16, 1
    %p60 = por %p58, %p59
    %p62 = scmp.ne.s32.totalorder %s47, %s61
    %p63 = scmp.eq.s32.totalorder %s16, 0
    %p64 = por %p62, %p63
    %s66 = sadd.s32 %s65, 1
    %p69 = scmp.eq.s32.totalorder %s10, 1
    %p70 = scmp.ne.s32.totalorder %s65, %s67
    %p71 = scmp.eq.s32.totalorder %s10, 0
    %p72 = por %p70, %p71
    %p73 = scmp.ne.s32.totalorder %s65, %s67
    %p74 = scmp.eq.s32.totalorder %s15, 1
    %p75 = por %p73, %p74
    %p76 = scmp.ne.s32.totalorder %s67, %s68
    %p77 = scmp.eq.s32.totalorder %s15, 0
    %p78 = por %p76, %p77
    %p79 = scmp.ne.s32.totalorder %s67, %s68
    %p80 = scmp.eq.s32.totalorder %s16, 1
    %p81 = por %p79, %p80
    %p83 = scmp.ne.s32.totalorder %s68, %s82
    %p84 = scmp.eq.s32.totalorder %s16, 0
    %p85 = por %p83, %p84
    %s87 = sadd.s32 %s86, 1
    %p90 = scmp.eq.s32.totalorder %s10, 1
    %p91 = scmp.ne.s32.totalorder %s86, %s88
    %p92 = scmp.eq.s32.totalorder %s10, 0
    %p93 = por %p91, %p92
    %p94 = scmp.ne.s32.totalorder %s86, %s88
    %p95 = scmp.eq.s32.totalorder %s15, 1
    %p96 = por %p94, %p95
    %p97 = scmp.ne.s32.totalorder %s88, %s89
    %p98 = scmp.eq.s32.totalorder %s15, 0
    %p99 = por %p97, %p98
    %p100 = scmp.ne.s32.totalorder %s88, %s89
    %p101 = scmp.eq.s32.totalorder %s16, 1
    %p102 = por %p100, %p101
    %p104 = scmp.ne.s32.totalorder %s89, %s103
    %p105 = scmp.eq.s32.totalorder %s16, 0
    %p106 = por %p104, %p105
    %s107 = ssub.s32 %s10, %s17
    %p108 = scmp.eq.s32.totalorder %s107, 0
    %s110 = sadd.s32 %s109, 1
    %s111 = scalar_select %p108, %s109, %s110
    %p114 = pneg %p108
    %p115 = scmp.eq.s32.totalorder %s10, 1
    %p116 = por %p114, %p115
    %p117 = scmp.ne.s32.totalorder %s109, %s112
    %p118 = scmp.eq.s32.totalorder %s10, 0
    %p119 = por %p117, %p118
    %p120 = scmp.ne.s32.totalorder %s109, %s112
    %p121 = scmp.eq.s32.totalorder %s15, 1
    %p122 = por %p120, %p121
    %p123 = scmp.ne.s32.totalorder %s112, %s113
    %p124 = scmp.eq.s32.totalorder %s15, 0
    %p125 = por %p123, %p124
    %p126 = scmp.ne.s32.totalorder %s112, %s113
    %p127 = scmp.eq.s32.totalorder %s16, 1
    %p128 = por %p126, %p127
    %p130 = scmp.ne.s32.totalorder %s113, %s129
    %p131 = scmp.eq.s32.totalorder %s16, 0
    %p132 = por %p130, %p131
    %p133 = scmp.le.s32.totalorder 1, %s10
    %p134 = scmp.lt.s32.totalorder %s10, 3
    %p135 = pnand %p133, %p134
    %p136 = pneg %p135
    // Predicated region
    $region9: #{siamese_forward.5} parent=5 // pred_check
      _
    $region10: #{siamese_forward.5} parent=5 // pred_check_branch
      %138 = sbr.rel (%p135) target = $region12
    $region11: #{siamese_forward.5} parent=5 // pred_region
      %s139 = ssub.s32 %s10, 1
      // Predicated region
      $region13: #{siamese_forward.5} parent=11 // pred_check
        %p140 = pneg %p57
      $region14: #{siamese_forward.5} parent=11 // pred_check_branch
        %142 = sbr.rel (%p140) target = $region16
      $region15: #{siamese_forward.5} parent=11 // pred_region
        _
      $region16: #{siamese_forward.5} parent=11 // pred_fallthru
        _
      // Predicated region
      $region17: #{siamese_forward.5} parent=11 // pred_check
        %p143 = pneg %p78
      $region18: #{siamese_forward.5} parent=11 // pred_check_branch
        %145 = sbr.rel (%p143) target = $region20
      $region19: #{siamese_forward.5} parent=11 // pred_region
        _
      $region20: #{siamese_forward.5} parent=11 // pred_fallthru
        _
      // Predicated region
      $region21: #{siamese_forward.5} parent=11 // pred_check
        %p146 = pneg %p99
      $region22: #{siamese_forward.5} parent=11 // pred_check_branch
        %148 = sbr.rel (%p146) target = $region24
      $region23: #{siamese_forward.5} parent=11 // pred_region
        _
      $region24: #{siamese_forward.5} parent=11 // pred_fallthru
        _
    $region12: #{siamese_forward.5} parent=5 // pred_fallthru
      _
    %p149 = scmp.lt.s32.totalorder %s10, 2
    // Predicated region
    $region25: #{siamese_forward.5} parent=5 // pred_check
      %p150 = pneg %p149
    $region26: #{siamese_forward.5} parent=5 // pred_check_branch
      %152 = sbr.rel (%p150) target = $region28
    $region27: #{siamese_forward.5} parent=5 // pred_region
      // Predicated region
      $region29: #{siamese_forward.5} parent=27 // pred_check
        %p153 = pneg %p30
      $region30: #{siamese_forward.5} parent=27 // pred_check_branch
        %155 = sbr.rel (%p153) target = $region32
      $region31: #{siamese_forward.5} parent=27 // pred_region
        %p156 = scmp.lt.s32.totalorder %s10, 1
        %s157 = scalar_select %p156, %s10, 1
        %s158 = smul.addr %s157, 324
        %s159 = smul.addr %s158, 8
        %s160 = scalar_lea.vmem %s0, %s159
      $region32: #{siamese_forward.5} parent=27 // pred_fallthru
        _
    $region28: #{siamese_forward.5} parent=5 // pred_fallthru
      _
    %p161 = scmp.le.s32.totalorder 1, %s10
    %p162 = scmp.lt.s32.totalorder %s10, 3
    %p163 = pnand %p161, %p162
    %p164 = pneg %p163
    // Predicated region
    $region33: #{siamese_forward.5} parent=5 // pred_check
      _
    $region34: #{siamese_forward.5} parent=5 // pred_check_branch
      %166 = sbr.rel (%p163) target = $region36
    $region35: #{siamese_forward.5} parent=5 // pred_region
      %s167 = ssub.s32 %s10, 1
      %p168 = scmp.lt.s32.totalorder %s15, 1
      %s169 = scalar_select %p168, %s15, 1
      %s170 = smul.addr %s169, 324
      %s171 = smul.addr %s170, 8
      %s172 = scalar_lea.vmem %s0, %s171
      %p173 = pneg %p36
      %p174 = pneg %p33
      %p175 = pneg %p57
      %p176 = pneg %p54
      %p177 = pneg %p78
      %p178 = pneg %p75
      %p179 = pneg %p99
      %p180 = pneg %p96
      %p181 = pneg %p125
      %p182 = pneg %p122
      %p183 = scmp.lt.s32.totalorder %s15, 1
      %s184 = scalar_select %p183, %s15, 1
      %s185 = smul.addr %s184, 36
      %s186 = smul.addr %s185, 8
      %s187 = scalar_lea.vmem %s4, %s186
      %p188 = scmp.lt.s32.totalorder %s15, 1
      %s189 = scalar_select %p188, %s15, 1
      %s190 = smul.addr %s189, 324
      %s191 = smul.addr %s190, 8
      %s192 = scalar_lea.vmem %s0, %s191
      %p193 = scmp.lt.s32.totalorder %s15, 1
      %s194 = scalar_select %p193, %s15, 1
      %s195 = smul.addr %s194, 36
      %s196 = smul.addr %s195, 8
      %s197 = scalar_lea.vmem %s4, %s196
      %v198 = vld [vmem:[%s192] sm:$0xff]
      %v199 = vld [vmem:[%s192 + $0x8] sm:$0xff]
      %v200 = vld [vmem:[%s192 + $0x10] sm:$0xff]
      %v201 = vld [vmem:[%s192 + $0x18] sm:$0xff]
      %v202 = vld [vmem:[%s192 + $0x20] sm:$0xff]
      %v203 = vld [vmem:[%s192 + $0x28] sm:$0xff]
      %v204 = vld [vmem:[%s192 + $0x30] sm:$0xff]
      %v205 = vld [vmem:[%s192 + $0x38] sm:$0xff]
      %v206 = vld [vmem:[%s192 + $0x40] sm:$0xff]
      %v207 = vld [vmem:[%s192 + $0x48] sm:$0xff]
      %v208 = vld [vmem:[%s192 + $0x50] sm:$0xff]
      %v209 = vld [vmem:[%s192 + $0x58] sm:$0xff]
      %v210 = vld [vmem:[%s192 + $0x60] sm:$0xff]
      %v211 = vld [vmem:[%s192 + $0x68] sm:$0xff]
      %v212 = vld [vmem:[%s192 + $0x70] sm:$0xff]
      %v213 = vld [vmem:[%s192 + $0x78] sm:$0xff]
      %v214 = vld [vmem:[%s192 + $0x80] sm:$0xff]
      %v215 = vld [vmem:[%s192 + $0x88] sm:$0xff]
      %v216 = vld [vmem:[%s192 + $0x90] sm:$0xff]
      %v217 = vld [vmem:[%s192 + $0x98] sm:$0xff]
      %v218 = vld [vmem:[%s192 + $0xa0] sm:$0xff]
      %v219 = vld [vmem:[%s192 + $0xa8] sm:$0xff]
      %v220 = vld [vmem:[%s192 + $0xb0] sm:$0xff]
      %v221 = vld [vmem:[%s192 + $0xb8] sm:$0xff]
      %v222 = vld [vmem:[%s192 + $0xc0] sm:$0xff]
      %v223 = vld [vmem:[%s192 + $0xc8] sm:$0xff]
      %v224 = vld [vmem:[%s192 + $0xd0] sm:$0xff]
      %v225 = vld [vmem:[%s192 + $0xd8] sm:$0xff]
      %v226 = vld [vmem:[%s192 + $0xe0] sm:$0xff]
      %v227 = vld [vmem:[%s192 + $0xe8] sm:$0xff]
      %v228 = vld [vmem:[%s192 + $0xf0] sm:$0xff]
      %v229 = vld [vmem:[%s192 + $0xf8] sm:$0xff]
      %v230 = vld [vmem:[%s192 + $0x100] sm:$0xff]
      %v231 = vld [vmem:[%s192 + $0x108] sm:$0xff]
      %v232 = vld [vmem:[%s192 + $0x110] sm:$0xff]
      %v233 = vld [vmem:[%s192 + $0x118] sm:$0xff]
      %v234 = vld [vmem:[%s192 + $0x120] sm:$0xff]
      %v235 = vld [vmem:[%s192 + $0x128] sm:$0xff]
      %v236 = vld [vmem:[%s192 + $0x130] sm:$0xff]
      %v237 = vld [vmem:[%s192 + $0x138] sm:$0xff]
      %v238 = vld [vmem:[%s192 + $0x140] sm:$0xff]
      %v239 = vld [vmem:[%s192 + $0x148] sm:$0xff]
      %v240 = vld [vmem:[%s192 + $0x150] sm:$0xff]
      %v241 = vld [vmem:[%s192 + $0x158] sm:$0xff]
      %v242 = vld [vmem:[%s192 + $0x160] sm:$0xff]
      %v243 = vld [vmem:[%s192 + $0x168] sm:$0xff]
      %v244 = vld [vmem:[%s192 + $0x170] sm:$0xff]
      %v245 = vld [vmem:[%s192 + $0x178] sm:$0xff]
      %v246 = vld [vmem:[%s192 + $0x180] sm:$0xff]
      %v247 = vld [vmem:[%s192 + $0x188] sm:$0xff]
      %v248 = vld [vmem:[%s192 + $0x190] sm:$0xff]
      %v249 = vld [vmem:[%s192 + $0x198] sm:$0xff]
      %v250 = vld [vmem:[%s192 + $0x1a0] sm:$0xff]
      %v251 = vld [vmem:[%s192 + $0x1a8] sm:$0xff]
      %v252 = vld [vmem:[%s192 + $0x1b0] sm:$0xff]
      %v253 = vld [vmem:[%s192 + $0x1b8] sm:$0xff]
      %v254 = vld [vmem:[%s192 + $0x1c0] sm:$0xff]
      %v255 = vld [vmem:[%s192 + $0x1c8] sm:$0xff]
      %v256 = vld [vmem:[%s192 + $0x1d0] sm:$0xff]
      %v257 = vld [vmem:[%s192 + $0x1d8] sm:$0xff]
      %v258 = vld [vmem:[%s192 + $0x1e0] sm:$0xff]
      %v259 = vld [vmem:[%s192 + $0x1e8] sm:$0xff]
      %v260 = vld [vmem:[%s192 + $0x1f0] sm:$0xff]
      %v261 = vld [vmem:[%s192 + $0x1f8] sm:$0xff]
      %v262 = vld [vmem:[%s192 + $0x200] sm:$0xff]
      %v263 = vld [vmem:[%s192 + $0x208] sm:$0xff]
      %v264 = vld [vmem:[%s192 + $0x210] sm:$0xff]
      %v265 = vld [vmem:[%s192 + $0x218] sm:$0xff]
      %v266 = vld [vmem:[%s192 + $0x220] sm:$0xff]
      %v267 = vld [vmem:[%s192 + $0x228] sm:$0xff]
      %v268 = vld [vmem:[%s192 + $0x230] sm:$0xff]
      %v269 = vld [vmem:[%s192 + $0x238] sm:$0xff]
      %v270 = vld [vmem:[%s192 + $0x240] sm:$0xff]
      %v271 = vld [vmem:[%s192 + $0x248] sm:$0xff]
      %v272 = vld [vmem:[%s192 + $0x250] sm:$0xff]
      %v273 = vld [vmem:[%s192 + $0x258] sm:$0xff]
      %v274 = vld [vmem:[%s192 + $0x260] sm:$0xff]
      %v275 = vld [vmem:[%s192 + $0x268] sm:$0xff]
      %v276 = vld [vmem:[%s192 + $0x270] sm:$0xff]
      %v277 = vld [vmem:[%s192 + $0x278] sm:$0xff]
      %v278 = vld [vmem:[%s192 + $0x280] sm:$0xff]
      %v279 = vld [vmem:[%s192 + $0x288] sm:$0xff]
      %v280 = vld [vmem:[%s192 + $0x290] sm:$0xff]
      %v281 = vld [vmem:[%s192 + $0x298] sm:$0xff]
      %v282 = vld [vmem:[%s192 + $0x2a0] sm:$0xff]
      %v283 = vld [vmem:[%s192 + $0x2a8] sm:$0xff]
      %v284 = vld [vmem:[%s192 + $0x2b0] sm:$0xff]
      %v285 = vld [vmem:[%s192 + $0x2b8] sm:$0xff]
      %v286 = vld [vmem:[%s192 + $0x2c0] sm:$0xff]
      %v287 = vld [vmem:[%s192 + $0x2c8] sm:$0xff]
      %v288 = vld [vmem:[%s192 + $0x2d0] sm:$0xff]
      %v289 = vld [vmem:[%s192 + $0x2d8] sm:$0xff]
      %v290 = vld [vmem:[%s192 + $0x2e0] sm:$0xff]
      %v291 = vld [vmem:[%s192 + $0x2e8] sm:$0xff]
      %v292 = vld [vmem:[%s192 + $0x2f0] sm:$0xff]
      %v293 = vld [vmem:[%s192 + $0x2f8] sm:$0xff]
      %v294 = vld [vmem:[%s192 + $0x300] sm:$0xff]
      %v295 = vld [vmem:[%s192 + $0x308] sm:$0xff]
      %v296 = vld [vmem:[%s192 + $0x310] sm:$0xff]
      %v297 = vld [vmem:[%s192 + $0x318] sm:$0xff]
      %v298 = vld [vmem:[%s192 + $0x320] sm:$0xff]
      %v299 = vld [vmem:[%s192 + $0x328] sm:$0xff]
      %v300 = vld [vmem:[%s192 + $0x330] sm:$0xff]
      %v301 = vld [vmem:[%s192 + $0x338] sm:$0xff]
      %v302 = vld [vmem:[%s192 + $0x340] sm:$0xff]
      %v303 = vld [vmem:[%s192 + $0x348] sm:$0xff]
      %v304 = vld [vmem:[%s192 + $0x350] sm:$0xff]
      %v305 = vld [vmem:[%s192 + $0x358] sm:$0xff]
      %v306 = vld [vmem:[%s192 + $0x360] sm:$0xff]
      %v307 = vld [vmem:[%s192 + $0x368] sm:$0xff]
      %v308 = vld [vmem:[%s192 + $0x370] sm:$0xff]
      %v309 = vld [vmem:[%s192 + $0x378] sm:$0xff]
      %v310 = vld [vmem:[%s192 + $0x380] sm:$0xff]
      %v311 = vld [vmem:[%s192 + $0x388] sm:$0xff]
      %v312 = vld [vmem:[%s192 + $0x390] sm:$0xff]
      %v313 = vld [vmem:[%s192 + $0x398] sm:$0xff]
      %v314 = vld [vmem:[%s192 + $0x3a0] sm:$0xff]
      %v315 = vld [vmem:[%s192 + $0x3a8] sm:$0xff]
      %v316 = vld [vmem:[%s192 + $0x3b0] sm:$0xff]
      %v317 = vld [vmem:[%s192 + $0x3b8] sm:$0xff]
      %v318 = vld [vmem:[%s192 + $0x3c0] sm:$0xff]
      %v319 = vld [vmem:[%s192 + $0x3c8] sm:$0xff]
      %v320 = vld [vmem:[%s192 + $0x3d0] sm:$0xff]
      %v321 = vld [vmem:[%s192 + $0x3d8] sm:$0xff]
      %v322 = vld [vmem:[%s192 + $0x3e0] sm:$0xff]
      %v323 = vld [vmem:[%s192 + $0x3e8] sm:$0xff]
      %v324 = vld [vmem:[%s192 + $0x3f0] sm:$0xff]
      %v325 = vld [vmem:[%s192 + $0x3f8] sm:$0xff]
      %v326 = vld [vmem:[%s192 + $0x400] sm:$0xff]
      %v327 = vld [vmem:[%s192 + $0x408] sm:$0xff]
      %v328 = vld [vmem:[%s192 + $0x410] sm:$0xff]
      %v329 = vld [vmem:[%s192 + $0x418] sm:$0xff]
      %v330 = vld [vmem:[%s192 + $0x420] sm:$0xff]
      %v331 = vld [vmem:[%s192 + $0x428] sm:$0xff]
      %v332 = vld [vmem:[%s192 + $0x430] sm:$0xff]
      %v333 = vld [vmem:[%s192 + $0x438] sm:$0xff]
      %v334 = vld [vmem:[%s192 + $0x440] sm:$0xff]
      %v335 = vld [vmem:[%s192 + $0x448] sm:$0xff]
      %v336 = vld [vmem:[%s192 + $0x450] sm:$0xff]
      %v337 = vld [vmem:[%s192 + $0x458] sm:$0xff]
      %v338 = vld [vmem:[%s192 + $0x460] sm:$0xff]
      %v339 = vld [vmem:[%s192 + $0x468] sm:$0xff]
      %v340 = vld [vmem:[%s192 + $0x470] sm:$0xff]
      %v341 = vld [vmem:[%s192 + $0x478] sm:$0xff]
      %v342 = vld [vmem:[%s192 + $0x480] sm:$0xff]
      %v343 = vld [vmem:[%s192 + $0x488] sm:$0xff]
      %v344 = vld [vmem:[%s192 + $0x490] sm:$0xff]
      %v345 = vld [vmem:[%s192 + $0x498] sm:$0xff]
      %v346 = vld [vmem:[%s192 + $0x4a0] sm:$0xff]
      %v347 = vld [vmem:[%s192 + $0x4a8] sm:$0xff]
      %v348 = vld [vmem:[%s192 + $0x4b0] sm:$0xff]
      %v349 = vld [vmem:[%s192 + $0x4b8] sm:$0xff]
      %v350 = vld [vmem:[%s192 + $0x4c0] sm:$0xff]
      %v351 = vld [vmem:[%s192 + $0x4c8] sm:$0xff]
      %v352 = vld [vmem:[%s192 + $0x4d0] sm:$0xff]
      %v353 = vld [vmem:[%s192 + $0x4d8] sm:$0xff]
      %v354 = vld [vmem:[%s192 + $0x4e0] sm:$0xff]
      %v355 = vld [vmem:[%s192 + $0x4e8] sm:$0xff]
      %v356 = vld [vmem:[%s192 + $0x4f0] sm:$0xff]
      %v357 = vld [vmem:[%s192 + $0x4f8] sm:$0xff]
      %v358 = vld [vmem:[%s192 + $0x500] sm:$0xff]
      %v359 = vld [vmem:[%s192 + $0x508] sm:$0xff]
      %v360 = vld [vmem:[%s192 + $0x510] sm:$0xff]
      %v361 = vld [vmem:[%s192 + $0x518] sm:$0xff]
      %v362 = vld [vmem:[%s192 + $0x520] sm:$0xff]
      %v363 = vld [vmem:[%s192 + $0x528] sm:$0xff]
      %v364 = vld [vmem:[%s192 + $0x530] sm:$0xff]
      %v365 = vld [vmem:[%s192 + $0x538] sm:$0xff]
      %v366 = vld [vmem:[%s192 + $0x540] sm:$0xff]
      %v367 = vld [vmem:[%s192 + $0x548] sm:$0xff]
      %v368 = vld [vmem:[%s192 + $0x550] sm:$0xff]
      %v369 = vld [vmem:[%s192 + $0x558] sm:$0xff]
      %v370 = vld [vmem:[%s192 + $0x560] sm:$0xff]
      %v371 = vld [vmem:[%s192 + $0x568] sm:$0xff]
      %v372 = vld [vmem:[%s192 + $0x570] sm:$0xff]
      %v373 = vld [vmem:[%s192 + $0x578] sm:$0xff]
      %v374 = vld [vmem:[%s192 + $0x580] sm:$0xff]
      %v375 = vld [vmem:[%s192 + $0x588] sm:$0xff]
      %v376 = vld [vmem:[%s192 + $0x590] sm:$0xff]
      %v377 = vld [vmem:[%s192 + $0x598] sm:$0xff]
      %v378 = vld [vmem:[%s192 + $0x5a0] sm:$0xff]
      %v379 = vld [vmem:[%s192 + $0x5a8] sm:$0xff]
      %v380 = vld [vmem:[%s192 + $0x5b0] sm:$0xff]
      %v381 = vld [vmem:[%s192 + $0x5b8] sm:$0xff]
      %v382 = vld [vmem:[%s192 + $0x5c0] sm:$0xff]
      %v383 = vld [vmem:[%s192 + $0x5c8] sm:$0xff]
      %v384 = vld [vmem:[%s192 + $0x5d0] sm:$0xff]
      %v385 = vld [vmem:[%s192 + $0x5d8] sm:$0xff]
      %v386 = vld [vmem:[%s192 + $0x5e0] sm:$0xff]
      %v387 = vld [vmem:[%s192 + $0x5e8] sm:$0xff]
      %v388 = vld [vmem:[%s192 + $0x5f0] sm:$0xff]
      %v389 = vld [vmem:[%s192 + $0x5f8] sm:$0xff]
      %v390 = vld [vmem:[%s192 + $0x600] sm:$0xff]
      %v391 = vld [vmem:[%s192 + $0x608] sm:$0xff]
      %v392 = vld [vmem:[%s192 + $0x610] sm:$0xff]
      %v393 = vld [vmem:[%s192 + $0x618] sm:$0xff]
      %v394 = vld [vmem:[%s192 + $0x620] sm:$0xff]
      %v395 = vld [vmem:[%s192 + $0x628] sm:$0xff]
      %v396 = vld [vmem:[%s192 + $0x630] sm:$0xff]
      %v397 = vld [vmem:[%s192 + $0x638] sm:$0xff]
      %v398 = vld [vmem:[%s192 + $0x640] sm:$0xff]
      %v399 = vld [vmem:[%s192 + $0x648] sm:$0xff]
      %v400 = vld [vmem:[%s192 + $0x650] sm:$0xff]
      %v401 = vld [vmem:[%s192 + $0x658] sm:$0xff]
      %v402 = vld [vmem:[%s192 + $0x660] sm:$0xff]
      %v403 = vld [vmem:[%s192 + $0x668] sm:$0xff]
      %v404 = vld [vmem:[%s192 + $0x670] sm:$0xff]
      %v405 = vld [vmem:[%s192 + $0x678] sm:$0xff]
      %v406 = vld [vmem:[%s192 + $0x680] sm:$0xff]
      %v407 = vld [vmem:[%s192 + $0x688] sm:$0xff]
      %v408 = vld [vmem:[%s192 + $0x690] sm:$0xff]
      %v409 = vld [vmem:[%s192 + $0x698] sm:$0xff]
      %v410 = vld [vmem:[%s192 + $0x6a0] sm:$0xff]
      %v411 = vld [vmem:[%s192 + $0x6a8] sm:$0xff]
      %v412 = vld [vmem:[%s192 + $0x6b0] sm:$0xff]
      %v413 = vld [vmem:[%s192 + $0x6b8] sm:$0xff]
      %v414 = vld [vmem:[%s192 + $0x6c0] sm:$0xff]
      %v415 = vld [vmem:[%s192 + $0x6c8] sm:$0xff]
      %v416 = vld [vmem:[%s192 + $0x6d0] sm:$0xff]
      %v417 = vld [vmem:[%s192 + $0x6d8] sm:$0xff]
      %v418 = vld [vmem:[%s192 + $0x6e0] sm:$0xff]
      %v419 = vld [vmem:[%s192 + $0x6e8] sm:$0xff]
      %v420 = vld [vmem:[%s192 + $0x6f0] sm:$0xff]
      %v421 = vld [vmem:[%s192 + $0x6f8] sm:$0xff]
      %v422 = vld [vmem:[%s192 + $0x700] sm:$0xff]
      %v423 = vld [vmem:[%s192 + $0x708] sm:$0xff]
      %v424 = vld [vmem:[%s192 + $0x710] sm:$0xff]
      %v425 = vld [vmem:[%s192 + $0x718] sm:$0xff]
      %v426 = vld [vmem:[%s192 + $0x720] sm:$0xff]
      %v427 = vld [vmem:[%s192 + $0x728] sm:$0xff]
      %v428 = vld [vmem:[%s192 + $0x730] sm:$0xff]
      %v429 = vld [vmem:[%s192 + $0x738] sm:$0xff]
      %v430 = vld [vmem:[%s192 + $0x740] sm:$0xff]
      %v431 = vld [vmem:[%s192 + $0x748] sm:$0xff]
      %v432 = vld [vmem:[%s192 + $0x750] sm:$0xff]
      %v433 = vld [vmem:[%s192 + $0x758] sm:$0xff]
      %v434 = vld [vmem:[%s192 + $0x760] sm:$0xff]
      %v435 = vld [vmem:[%s192 + $0x768] sm:$0xff]
      %v436 = vld [vmem:[%s192 + $0x770] sm:$0xff]
      %v437 = vld [vmem:[%s192 + $0x778] sm:$0xff]
      %v438 = vld [vmem:[%s192 + $0x780] sm:$0xff]
      %v439 = vld [vmem:[%s192 + $0x788] sm:$0xff]
      %v440 = vld [vmem:[%s192 + $0x790] sm:$0xff]
      %v441 = vld [vmem:[%s192 + $0x798] sm:$0xff]
      %v442 = vld [vmem:[%s192 + $0x7a0] sm:$0xff]
      %v443 = vld [vmem:[%s192 + $0x7a8] sm:$0xff]
      %v444 = vld [vmem:[%s192 + $0x7b0] sm:$0xff]
      %v445 = vld [vmem:[%s192 + $0x7b8] sm:$0xff]
      %v446 = vld [vmem:[%s192 + $0x7c0] sm:$0xff]
      %v447 = vld [vmem:[%s192 + $0x7c8] sm:$0xff]
      %v448 = vld [vmem:[%s192 + $0x7d0] sm:$0xff]
      %v449 = vld [vmem:[%s192 + $0x7d8] sm:$0xff]
      %v450 = vld [vmem:[%s192 + $0x7e0] sm:$0xff]
      %v451 = vld [vmem:[%s192 + $0x7e8] sm:$0xff]
      %v452 = vld [vmem:[%s192 + $0x7f0] sm:$0xff]
      %v453 = vld [vmem:[%s192 + $0x7f8] sm:$0xff]
      %v454 = vld [vmem:[%s192 + $0x800] sm:$0xff]
      %v455 = vld [vmem:[%s192 + $0x808] sm:$0xff]
      %v456 = vld [vmem:[%s192 + $0x810] sm:$0xff]
      %v457 = vld [vmem:[%s192 + $0x818] sm:$0xff]
      %v458 = vld [vmem:[%s192 + $0x820] sm:$0xff]
      %v459 = vld [vmem:[%s192 + $0x828] sm:$0xff]
      %v460 = vld [vmem:[%s192 + $0x830] sm:$0xff]
      %v461 = vld [vmem:[%s192 + $0x838] sm:$0xff]
      %v462 = vld [vmem:[%s192 + $0x840] sm:$0xff]
      %v463 = vld [vmem:[%s192 + $0x848] sm:$0xff]
      %v464 = vld [vmem:[%s192 + $0x850] sm:$0xff]
      %v465 = vld [vmem:[%s192 + $0x858] sm:$0xff]
      %v466 = vld [vmem:[%s192 + $0x860] sm:$0xff]
      %v467 = vld [vmem:[%s192 + $0x868] sm:$0xff]
      %v468 = vld [vmem:[%s192 + $0x870] sm:$0xff]
      %v469 = vld [vmem:[%s192 + $0x878] sm:$0xff]
      %v470 = vld [vmem:[%s192 + $0x880] sm:$0xff]
      %v471 = vld [vmem:[%s192 + $0x888] sm:$0xff]
      %v472 = vld [vmem:[%s192 + $0x890] sm:$0xff]
      %v473 = vld [vmem:[%s192 + $0x898] sm:$0xff]
      %v474 = vld [vmem:[%s192 + $0x8a0] sm:$0xff]
      %v475 = vld [vmem:[%s192 + $0x8a8] sm:$0xff]
      %v476 = vld [vmem:[%s192 + $0x8b0] sm:$0xff]
      %v477 = vld [vmem:[%s192 + $0x8b8] sm:$0xff]
      %v478 = vld [vmem:[%s192 + $0x8c0] sm:$0xff]
      %v479 = vld [vmem:[%s192 + $0x8c8] sm:$0xff]
      %v480 = vld [vmem:[%s192 + $0x8d0] sm:$0xff]
      %v481 = vld [vmem:[%s192 + $0x8d8] sm:$0xff]
      %v482 = vld [vmem:[%s192 + $0x8e0] sm:$0xff]
      %v483 = vld [vmem:[%s192 + $0x8e8] sm:$0xff]
      %v484 = vld [vmem:[%s192 + $0x8f0] sm:$0xff]
      %v485 = vld [vmem:[%s192 + $0x8f8] sm:$0xff]
      %v486 = vld [vmem:[%s192 + $0x900] sm:$0xff]
      %v487 = vld [vmem:[%s192 + $0x908] sm:$0xff]
      %v488 = vld [vmem:[%s192 + $0x910] sm:$0xff]
      %v489 = vld [vmem:[%s192 + $0x918] sm:$0xff]
      %v490 = vld [vmem:[%s192 + $0x920] sm:$0xff]
      %v491 = vld [vmem:[%s192 + $0x928] sm:$0xff]
      %v492 = vld [vmem:[%s192 + $0x930] sm:$0xff]
      %v493 = vld [vmem:[%s192 + $0x938] sm:$0xff]
      %v494 = vld [vmem:[%s192 + $0x940] sm:$0xff]
      %v495 = vld [vmem:[%s192 + $0x948] sm:$0xff]
      %v496 = vld [vmem:[%s192 + $0x950] sm:$0xff]
      %v497 = vld [vmem:[%s192 + $0x958] sm:$0xff]
      %v498 = vld [vmem:[%s192 + $0x960] sm:$0xff]
      %v499 = vld [vmem:[%s192 + $0x968] sm:$0xff]
      %v500 = vld [vmem:[%s192 + $0x970] sm:$0xff]
      %v501 = vld [vmem:[%s192 + $0x978] sm:$0xff]
      %v502 = vld [vmem:[%s192 + $0x980] sm:$0xff]
      %v503 = vld [vmem:[%s192 + $0x988] sm:$0xff]
      %v504 = vld [vmem:[%s192 + $0x990] sm:$0xff]
      %v505 = vld [vmem:[%s192 + $0x998] sm:$0xff]
      %v506 = vld [vmem:[%s192 + $0x9a0] sm:$0xff]
      %v507 = vld [vmem:[%s192 + $0x9a8] sm:$0xff]
      %v508 = vld [vmem:[%s192 + $0x9b0] sm:$0xff]
      %v509 = vld [vmem:[%s192 + $0x9b8] sm:$0xff]
      %v510 = vld [vmem:[%s192 + $0x9c0] sm:$0xff]
      %v511 = vld [vmem:[%s192 + $0x9c8] sm:$0xff]
      %v512 = vld [vmem:[%s192 + $0x9d0] sm:$0xff]
      %v513 = vld [vmem:[%s192 + $0x9d8] sm:$0xff]
      %v514 = vld [vmem:[%s192 + $0x9e0] sm:$0xff]
      %v515 = vld [vmem:[%s192 + $0x9e8] sm:$0xff]
      %v516 = vld [vmem:[%s192 + $0x9f0] sm:$0xff]
      %v517 = vld [vmem:[%s192 + $0x9f8] sm:$0xff]
      %v518 = vld [vmem:[%s192 + $0xa00] sm:$0xff]
      %v519 = vld [vmem:[%s192 + $0xa08] sm:$0xff]
      %v520 = vld [vmem:[%s192 + $0xa10] sm:$0xff]
      %v521 = vld [vmem:[%s192 + $0xa18] sm:$0xff]
      %v522 = vld [vmem:[%s1] sm:$0xff]
      %v523 = vld [vmem:[%s1 + $0x8] sm:$0xff]
      %v524 = vld [vmem:[%s1 + $0x10] sm:$0xff]
      %v525 = vld [vmem:[%s1 + $0x18] sm:$0xff]
      %v526 = vld [vmem:[%s1 + $0x20] sm:$0xff]
      %v527 = vld [vmem:[%s1 + $0x28] sm:$0xff]
      %v528 = vld [vmem:[%s1 + $0x30] sm:$0xff]
      %v529 = vld [vmem:[%s1 + $0x38] sm:$0xff]
      %v530 = vld [vmem:[%s1 + $0x40] sm:$0xff]
      %v531 = vld [vmem:[%s1 + $0x48] sm:$0xff]
      %v532 = vld [vmem:[%s1 + $0x50] sm:$0xff]
      %v533 = vld [vmem:[%s1 + $0x58] sm:$0xff]
      %v534 = vld [vmem:[%s1 + $0x60] sm:$0xff]
      %v535 = vld [vmem:[%s1 + $0x68] sm:$0xff]
      %v536 = vld [vmem:[%s1 + $0x70] sm:$0xff]
      %v537 = vld [vmem:[%s1 + $0x78] sm:$0xff]
      %v538 = vld [vmem:[%s1 + $0x80] sm:$0xff]
      %v539 = vld [vmem:[%s1 + $0x88] sm:$0xff]
      %v540 = vld [vmem:[%s1 + $0x90] sm:$0xff]
      %v541 = vld [vmem:[%s1 + $0x98] sm:$0xff]
      %v542 = vld [vmem:[%s1 + $0xa0] sm:$0xff]
      %v543 = vld [vmem:[%s1 + $0xa8] sm:$0xff]
      %v544 = vld [vmem:[%s1 + $0xb0] sm:$0xff]
      %v545 = vld [vmem:[%s1 + $0xb8] sm:$0xff]
      %v546 = vld [vmem:[%s1 + $0xc0] sm:$0xff]
      %v547 = vld [vmem:[%s1 + $0xc8] sm:$0xff]
      %v548 = vld [vmem:[%s1 + $0xd0] sm:$0xff]
      %v549 = vld [vmem:[%s1 + $0xd8] sm:$0xff]
      %v550 = vld [vmem:[%s1 + $0xe0] sm:$0xff]
      %v551 = vld [vmem:[%s1 + $0xe8] sm:$0xff]
      %v552 = vld [vmem:[%s1 + $0xf0] sm:$0xff]
      %v553 = vld [vmem:[%s1 + $0xf8] sm:$0xff]
      %v554 = vld [vmem:[%s1 + $0x100] sm:$0xff]
      %v555 = vld [vmem:[%s1 + $0x108] sm:$0xff]
      %v556 = vld [vmem:[%s1 + $0x110] sm:$0xff]
      %v557 = vld [vmem:[%s1 + $0x118] sm:$0xff]
      %v558 = vld [vmem:[%s1 + $0x120] sm:$0xff]
      %v559 = vld [vmem:[%s1 + $0x128] sm:$0xff]
      %v560 = vld [vmem:[%s1 + $0x130] sm:$0xff]
      %v561 = vld [vmem:[%s1 + $0x138] sm:$0xff]
      %v562 = vld [vmem:[%s1 + $0x140] sm:$0xff]
      %v563 = vld [vmem:[%s1 + $0x148] sm:$0xff]
      %v564 = vld [vmem:[%s1 + $0x150] sm:$0xff]
      %v565 = vld [vmem:[%s1 + $0x158] sm:$0xff]
      %v566 = vld [vmem:[%s1 + $0x160] sm:$0xff]
      %v567 = vld [vmem:[%s1 + $0x168] sm:$0xff]
      %v568 = vld [vmem:[%s1 + $0x170] sm:$0xff]
      %v569 = vld [vmem:[%s1 + $0x178] sm:$0xff]
      %v570 = vld [vmem:[%s1 + $0x180] sm:$0xff]
      %v571 = vld [vmem:[%s1 + $0x188] sm:$0xff]
      %v572 = vld [vmem:[%s1 + $0x190] sm:$0xff]
      %v573 = vld [vmem:[%s1 + $0x198] sm:$0xff]
      %v574 = vld [vmem:[%s1 + $0x1a0] sm:$0xff]
      %v575 = vld [vmem:[%s1 + $0x1a8] sm:$0xff]
      %v576 = vld [vmem:[%s1 + $0x1b0] sm:$0xff]
      %v577 = vld [vmem:[%s1 + $0x1b8] sm:$0xff]
      %v578 = vld [vmem:[%s1 + $0x1c0] sm:$0xff]
      %v579 = vld [vmem:[%s1 + $0x1c8] sm:$0xff]
      %v580 = vld [vmem:[%s1 + $0x1d0] sm:$0xff]
      %v581 = vld [vmem:[%s1 + $0x1d8] sm:$0xff]
      %v582 = vld [vmem:[%s1 + $0x1e0] sm:$0xff]
      %v583 = vld [vmem:[%s1 + $0x1e8] sm:$0xff]
      %v584 = vld [vmem:[%s1 + $0x1f0] sm:$0xff]
      %v585 = vld [vmem:[%s1 + $0x1f8] sm:$0xff]
      %v586 = vld [vmem:[%s1 + $0x200] sm:$0xff]
      %v587 = vld [vmem:[%s1 + $0x208] sm:$0xff]
      %v588 = vld [vmem:[%s1 + $0x210] sm:$0xff]
      %v589 = vld [vmem:[%s1 + $0x218] sm:$0xff]
      %v590 = vld [vmem:[%s1 + $0x220] sm:$0xff]
      %v591 = vld [vmem:[%s1 + $0x228] sm:$0xff]
      %v592 = vld [vmem:[%s1 + $0x230] sm:$0xff]
      %v593 = vld [vmem:[%s1 + $0x238] sm:$0xff]
      %v594 = vld [vmem:[%s1 + $0x240] sm:$0xff]
      %v595 = vld [vmem:[%s1 + $0x248] sm:$0xff]
      %v596 = vld [vmem:[%s1 + $0x250] sm:$0xff]
      %v597 = vld [vmem:[%s1 + $0x258] sm:$0xff]
      %v598 = vld [vmem:[%s1 + $0x260] sm:$0xff]
      %v599 = vld [vmem:[%s1 + $0x268] sm:$0xff]
      %v600 = vld [vmem:[%s1 + $0x270] sm:$0xff]
      %v601 = vld [vmem:[%s1 + $0x278] sm:$0xff]
      %v602 = vld [vmem:[%s1 + $0x280] sm:$0xff]
      %v603 = vld [vmem:[%s1 + $0x288] sm:$0xff]
      %v604 = vld [vmem:[%s1 + $0x290] sm:$0xff]
      %v605 = vld [vmem:[%s1 + $0x298] sm:$0xff]
      %v606 = vld [vmem:[%s1 + $0x2a0] sm:$0xff]
      %v607 = vld [vmem:[%s1 + $0x2a8] sm:$0xff]
      %v608 = vld [vmem:[%s1 + $0x2b0] sm:$0xff]
      %v609 = vld [vmem:[%s1 + $0x2b8] sm:$0xff]
      %v610 = vld [vmem:[%s1 + $0x2c0] sm:$0xff]
      %v611 = vld [vmem:[%s1 + $0x2c8] sm:$0xff]
      %v612 = vld [vmem:[%s1 + $0x2d0] sm:$0xff]
      %v613 = vld [vmem:[%s1 + $0x2d8] sm:$0xff]
      %v614 = vld [vmem:[%s1 + $0x2e0] sm:$0xff]
      %v615 = vld [vmem:[%s1 + $0x2e8] sm:$0xff]
      %v616 = vld [vmem:[%s1 + $0x2f0] sm:$0xff]
      %v617 = vld [vmem:[%s1 + $0x2f8] sm:$0xff]
      %v618 = vld [vmem:[%s1 + $0x300] sm:$0xff]
      %v619 = vld [vmem:[%s1 + $0x308] sm:$0xff]
      %v620 = vld [vmem:[%s1 + $0x310] sm:$0xff]
      %v621 = vld [vmem:[%s1 + $0x318] sm:$0xff]
      %v622 = vld [vmem:[%s1 + $0x320] sm:$0xff]
      %v623 = vld [vmem:[%s1 + $0x328] sm:$0xff]
      %v624 = vld [vmem:[%s1 + $0x330] sm:$0xff]
      %v625 = vld [vmem:[%s1 + $0x338] sm:$0xff]
      %v626 = vld [vmem:[%s1 + $0x340] sm:$0xff]
      %v627 = vld [vmem:[%s1 + $0x348] sm:$0xff]
      %v628 = vld [vmem:[%s1 + $0x350] sm:$0xff]
      %v629 = vld [vmem:[%s1 + $0x358] sm:$0xff]
      %v630 = vld [vmem:[%s1 + $0x360] sm:$0xff]
      %v631 = vld [vmem:[%s1 + $0x368] sm:$0xff]
      %v632 = vld [vmem:[%s1 + $0x370] sm:$0xff]
      %v633 = vld [vmem:[%s1 + $0x378] sm:$0xff]
      %v634 = vld [vmem:[%s1 + $0x380] sm:$0xff]
      %v635 = vld [vmem:[%s1 + $0x388] sm:$0xff]
      %v636 = vld [vmem:[%s1 + $0x390] sm:$0xff]
      %v637 = vld [vmem:[%s1 + $0x398] sm:$0xff]
      %v638 = vld [vmem:[%s1 + $0x3a0] sm:$0xff]
      %v639 = vld [vmem:[%s1 + $0x3a8] sm:$0xff]
      %v640 = vld [vmem:[%s1 + $0x3b0] sm:$0xff]
      %v641 = vld [vmem:[%s1 + $0x3b8] sm:$0xff]
      %v642 = vld [vmem:[%s1 + $0x3c0] sm:$0xff]
      %v643 = vld [vmem:[%s1 + $0x3c8] sm:$0xff]
      %v644 = vld [vmem:[%s1 + $0x3d0] sm:$0xff]
      %v645 = vld [vmem:[%s1 + $0x3d8] sm:$0xff]
      %v646 = vld [vmem:[%s1 + $0x3e0] sm:$0xff]
      %v647 = vld [vmem:[%s1 + $0x3e8] sm:$0xff]
      %v648 = vld [vmem:[%s1 + $0x3f0] sm:$0xff]
      %v649 = vld [vmem:[%s1 + $0x3f8] sm:$0xff]
      %v650 = vld [vmem:[%s1 + $0x400] sm:$0xff]
      %v651 = vld [vmem:[%s1 + $0x408] sm:$0xff]
      %v652 = vld [vmem:[%s1 + $0x410] sm:$0xff]
      %v653 = vld [vmem:[%s1 + $0x418] sm:$0xff]
      %v654 = vld [vmem:[%s1 + $0x420] sm:$0xff]
      %v655 = vld [vmem:[%s1 + $0x428] sm:$0xff]
      %v656 = vld [vmem:[%s1 + $0x430] sm:$0xff]
      %v657 = vld [vmem:[%s1 + $0x438] sm:$0xff]
      %v658 = vld [vmem:[%s1 + $0x440] sm:$0xff]
      %v659 = vld [vmem:[%s1 + $0x448] sm:$0xff]
      %v660 = vld [vmem:[%s1 + $0x450] sm:$0xff]
      %v661 = vld [vmem:[%s1 + $0x458] sm:$0xff]
      %v662 = vld [vmem:[%s1 + $0x460] sm:$0xff]
      %v663 = vld [vmem:[%s1 + $0x468] sm:$0xff]
      %v664 = vld [vmem:[%s1 + $0x470] sm:$0xff]
      %v665 = vld [vmem:[%s1 + $0x478] sm:$0xff]
      %666 = vmatpush.msra.mxu0 %v537
      %667 = vmatpush.msra.mxu0 %v536
      %668 = vmatpush.msra.mxu0 %v535
      %669 = vmatpush.msra.mxu0 %v534
      %670 = vmatpush.msra.mxu0 %v533
      %671 = vmatpush.msra.mxu0 %v532
      %672 = vmatpush.msra.mxu0 %v531
      %673 = vmatpush.msra.mxu0 %v530
      %674 = vmatpush.msra.mxu0 %v529
      %675 = vmatpush.msra.mxu0 %v528
      %676 = vmatpush.msra.mxu0 %v527
      %677 = vmatpush.msra.mxu0 %v526
      %678 = vmatpush.msra.mxu0 %v525
      %679 = vmatpush.msra.mxu0 %v524
      %680 = vmatpush.msra.mxu0 %v523
      %681 = vmatpush.msra.mxu0 %v522
      %682 = vmatmul.f32.gmra.mxu0 %v198
      %v683 = vpop.f32.mrf.mxu0
      %v684 = vadd.f32 0.0, %v683
      %685 = vmatmul.f32.gmra.mxu0 %v207
      %v686 = vpop.f32.mrf.mxu0
      %v687 = vadd.f32 0.0, %v686
      %688 = vmatmul.f32.gmra.mxu0 %v216
      %v689 = vpop.f32.mrf.mxu0
      %v690 = vadd.f32 0.0, %v689
      %691 = vmatmul.f32.gmra.mxu0 %v225
      %v692 = vpop.f32.mrf.mxu0
      %v693 = vadd.f32 0.0, %v692
      %694 = vmatmul.f32.gmra.mxu0 %v234
      %v695 = vpop.f32.mrf.mxu0
      %v696 = vadd.f32 0.0, %v695
      %697 = vmatmul.f32.gmra.mxu0 %v243
      %v698 = vpop.f32.mrf.mxu0
      %v699 = vadd.f32 0.0, %v698
      %700 = vmatmul.f32.gmra.mxu0 %v252
      %v701 = vpop.f32.mrf.mxu0
      %v702 = vadd.f32 0.0, %v701
      %703 = vmatmul.f32.gmra.mxu0 %v261
      %v704 = vpop.f32.mrf.mxu0
      %v705 = vadd.f32 0.0, %v704
      %706 = vmatmul.f32.gmra.mxu0 %v270
      %v707 = vpop.f32.mrf.mxu0
      %v708 = vadd.f32 0.0, %v707
      %709 = vmatmul.f32.gmra.mxu0 %v279
      %v710 = vpop.f32.mrf.mxu0
      %v711 = vadd.f32 0.0, %v710
      %712 = vmatmul.f32.gmra.mxu0 %v288
      %v713 = vpop.f32.mrf.mxu0
      %v714 = vadd.f32 0.0, %v713
      %715 = vmatmul.f32.gmra.mxu0 %v297
      %v716 = vpop.f32.mrf.mxu0
      %v717 = vadd.f32 0.0, %v716
      %718 = vmatmul.f32.gmra.mxu0 %v306
      %v719 = vpop.f32.mrf.mxu0
      %v720 = vadd.f32 0.0, %v719
      %721 = vmatmul.f32.gmra.mxu0 %v315
      %v722 = vpop.f32.mrf.mxu0
      %v723 = vadd.f32 0.0, %v722
      %724 = vmatmul.f32.gmra.mxu0 %v324
      %v725 = vpop.f32.mrf.mxu0
      %v726 = vadd.f32 0.0, %v725
      %727 = vmatmul.f32.gmra.mxu0 %v333
      %v728 = vpop.f32.mrf.mxu0
      %v729 = vadd.f32 0.0, %v728
      %730 = vmatmul.f32.gmra.mxu0 %v342
      %v731 = vpop.f32.mrf.mxu0
      %v732 = vadd.f32 0.0, %v731
      %733 = vmatmul.f32.gmra.mxu0 %v351
      %v734 = vpop.f32.mrf.mxu0
      %v735 = vadd.f32 0.0, %v734
      %736 = vmatmul.f32.gmra.mxu0 %v360
      %v737 = vpop.f32.mrf.mxu0
      %v738 = vadd.f32 0.0, %v737
      %739 = vmatmul.f32.gmra.mxu0 %v369
      %v740 = vpop.f32.mrf.mxu0
      %v741 = vadd.f32 0.0, %v740
      %742 = vmatmul.f32.gmra.mxu0 %v378
      %v743 = vpop.f32.mrf.mxu0
      %v744 = vadd.f32 0.0, %v743
      %745 = vmatmul.f32.gmra.mxu0 %v387
      %v746 = vpop.f32.mrf.mxu0
      %v747 = vadd.f32 0.0, %v746
      %748 = vmatmul.f32.gmra.mxu0 %v396
      %v749 = vpop.f32.mrf.mxu0
      %v750 = vadd.f32 0.0, %v749
      %751 = vmatmul.f32.gmra.mxu0 %v405
      %v752 = vpop.f32.mrf.mxu0
      %v753 = vadd.f32 0.0, %v752
      %754 = vmatmul.f32.gmra.mxu0 %v414
      %v755 = vpop.f32.mrf.mxu0
      %v756 = vadd.f32 0.0, %v755
      %757 = vmatmul.f32.gmra.mxu0 %v423
      %v758 = vpop.f32.mrf.mxu0
      %v759 = vadd.f32 0.0, %v758
      %760 = vmatmul.f32.gmra.mxu0 %v432
      %v761 = vpop.f32.mrf.mxu0
      %v762 = vadd.f32 0.0, %v761
      %763 = vmatmul.f32.gmra.mxu0 %v441
      %v764 = vpop.f32.mrf.mxu0
      %v765 = vadd.f32 0.0, %v764
      %766 = vmatmul.f32.gmra.mxu0 %v450
      %v767 = vpop.f32.mrf.mxu0
      %v768 = vadd.f32 0.0, %v767
      %769 = vmatmul.f32.gmra.mxu0 %v459
      %v770 = vpop.f32.mrf.mxu0
      %v771 = vadd.f32 0.0, %v770
      %772 = vmatmul.f32.gmra.mxu0 %v468
      %v773 = vpop.f32.mrf.mxu0
      %v774 = vadd.f32 0.0, %v773
      %775 = vmatmul.f32.gmra.mxu0 %v477
      %v776 = vpop.f32.mrf.mxu0
      %v777 = vadd.f32 0.0, %v776
      %778 = vmatmul.f32.gmra.mxu0 %v486
      %v779 = vpop.f32.mrf.mxu0
      %v780 = vadd.f32 0.0, %v779
      %781 = vmatmul.f32.gmra.mxu0 %v495
      %v782 = vpop.f32.mrf.mxu0
      %v783 = vadd.f32 0.0, %v782
      %784 = vmatmul.f32.gmra.mxu0 %v504
      %v785 = vpop.f32.mrf.mxu0
      %v786 = vadd.f32 0.0, %v785
      %787 = vmatmul.f32.gmra.mxu0 %v513
      %v788 = vpop.f32.mrf.mxu0
      %v789 = vadd.f32 0.0, %v788
      %790 = vdwg.mxu0
      %791 = vmatpush.msra.mxu0 %v553
      %792 = vmatpush.msra.mxu0 %v552
      %793 = vmatpush.msra.mxu0 %v551
      %794 = vmatpush.msra.mxu0 %v550
      %795 = vmatpush.msra.mxu0 %v549
      %796 = vmatpush.msra.mxu0 %v548
      %797 = vmatpush.msra.mxu0 %v547
      %798 = vmatpush.msra.mxu0 %v546
      %799 = vmatpush.msra.mxu0 %v545
      %800 = vmatpush.msra.mxu0 %v544
      %801 = vmatpush.msra.mxu0 %v543
      %802 = vmatpush.msra.mxu0 %v542
      %803 = vmatpush.msra.mxu0 %v541
      %804 = vmatpush.msra.mxu0 %v540
      %805 = vmatpush.msra.mxu0 %v539
      %806 = vmatpush.msra.mxu0 %v538
      %807 = vmatmul.f32.gmra.mxu0 %v199
      %v808 = vpop.f32.mrf.mxu0
      %v809 = vadd.f32 %v684, %v808
      %810 = vmatmul.f32.gmra.mxu0 %v208
      %v811 = vpop.f32.mrf.mxu0
      %v812 = vadd.f32 %v687, %v811
      %813 = vmatmul.f32.gmra.mxu0 %v217
      %v814 = vpop.f32.mrf.mxu0
      %v815 = vadd.f32 %v690, %v814
      %816 = vmatmul.f32.gmra.mxu0 %v226
      %v817 = vpop.f32.mrf.mxu0
      %v818 = vadd.f32 %v693, %v817
      %819 = vmatmul.f32.gmra.mxu0 %v235
      %v820 = vpop.f32.mrf.mxu0
      %v821 = vadd.f32 %v696, %v820
      %822 = vmatmul.f32.gmra.mxu0 %v244
      %v823 = vpop.f32.mrf.mxu0
      %v824 = vadd.f32 %v699, %v823
      %825 = vmatmul.f32.gmra.mxu0 %v253
      %v826 = vpop.f32.mrf.mxu0
      %v827 = vadd.f32 %v702, %v826
      %828 = vmatmul.f32.gmra.mxu0 %v262
      %v829 = vpop.f32.mrf.mxu0
      %v830 = vadd.f32 %v705, %v829
      %831 = vmatmul.f32.gmra.mxu0 %v271
      %v832 = vpop.f32.mrf.mxu0
      %v833 = vadd.f32 %v708, %v832
      %834 = vmatmul.f32.gmra.mxu0 %v280
      %v835 = vpop.f32.mrf.mxu0
      %v836 = vadd.f32 %v711, %v835
      %837 = vmatmul.f32.gmra.mxu0 %v289
      %v838 = vpop.f32.mrf.mxu0
      %v839 = vadd.f32 %v714, %v838
      %840 = vmatmul.f32.gmra.mxu0 %v298
      %v841 = vpop.f32.mrf.mxu0
      %v842 = vadd.f32 %v717, %v841
      %843 = vmatmul.f32.gmra.mxu0 %v307
      %v844 = vpop.f32.mrf.mxu0
      %v845 = vadd.f32 %v720, %v844
      %846 = vmatmul.f32.gmra.mxu0 %v316
      %v847 = vpop.f32.mrf.mxu0
      %v848 = vadd.f32 %v723, %v847
      %849 = vmatmul.f32.gmra.mxu0 %v325
      %v850 = vpop.f32.mrf.mxu0
      %v851 = vadd.f32 %v726, %v850
      %852 = vmatmul.f32.gmra.mxu0 %v334
      %v853 = vpop.f32.mrf.mxu0
      %v854 = vadd.f32 %v729, %v853
      %855 = vmatmul.f32.gmra.mxu0 %v343
      %v856 = vpop.f32.mrf.mxu0
      %v857 = vadd.f32 %v732, %v856
      %858 = vmatmul.f32.gmra.mxu0 %v352
      %v859 = vpop.f32.mrf.mxu0
      %v860 = vadd.f32 %v735, %v859
      %861 = vmatmul.f32.gmra.mxu0 %v361
      %v862 = vpop.f32.mrf.mxu0
      %v863 = vadd.f32 %v738, %v862
      %864 = vmatmul.f32.gmra.mxu0 %v370
      %v865 = vpop.f32.mrf.mxu0
      %v866 = vadd.f32 %v741, %v865
      %867 = vmatmul.f32.gmra.mxu0 %v379
      %v868 = vpop.f32.mrf.mxu0
      %v869 = vadd.f32 %v744, %v868
      %870 = vmatmul.f32.gmra.mxu0 %v388
      %v871 = vpop.f32.mrf.mxu0
      %v872 = vadd.f32 %v747, %v871
      %873 = vmatmul.f32.gmra.mxu0 %v397
      %v874 = vpop.f32.mrf.mxu0
      %v875 = vadd.f32 %v750, %v874
      %876 = vmatmul.f32.gmra.mxu0 %v406
      %v877 = vpop.f32.mrf.mxu0
      %v878 = vadd.f32 %v753, %v877
      %879 = vmatmul.f32.gmra.mxu0 %v415
      %v880 = vpop.f32.mrf.mxu0
      %v881 = vadd.f32 %v756, %v880
      %882 = vmatmul.f32.gmra.mxu0 %v424
      %v883 = vpop.f32.mrf.mxu0
      %v884 = vadd.f32 %v759, %v883
      %885 = vmatmul.f32.gmra.mxu0 %v433
      %v886 = vpop.f32.mrf.mxu0
      %v887 = vadd.f32 %v762, %v886
      %888 = vmatmul.f32.gmra.mxu0 %v442
      %v889 = vpop.f32.mrf.mxu0
      %v890 = vadd.f32 %v765, %v889
      %891 = vmatmul.f32.gmra.mxu0 %v451
      %v892 = vpop.f32.mrf.mxu0
      %v893 = vadd.f32 %v768, %v892
      %894 = vmatmul.f32.gmra.mxu0 %v460
      %v895 = vpop.f32.mrf.mxu0
      %v896 = vadd.f32 %v771, %v895
      %897 = vmatmul.f32.gmra.mxu0 %v469
      %v898 = vpop.f32.mrf.mxu0
      %v899 = vadd.f32 %v774, %v898
      %900 = vmatmul.f32.gmra.mxu0 %v478
      %v901 = vpop.f32.mrf.mxu0
      %v902 = vadd.f32 %v777, %v901
      %903 = vmatmul.f32.gmra.mxu0 %v487
      %v904 = vpop.f32.mrf.mxu0
      %v905 = vadd.f32 %v780, %v904
      %906 = vmatmul.f32.gmra.mxu0 %v496
      %v907 = vpop.f32.mrf.mxu0
      %v908 = vadd.f32 %v783, %v907
      %909 = vmatmul.f32.gmra.mxu0 %v505
      %v910 = vpop.f32.mrf.mxu0
      %v911 = vadd.f32 %v786, %v910
      %912 = vmatmul.f32.gmra.mxu0 %v514
      %v913 = vpop.f32.mrf.mxu0
      %v914 = vadd.f32 %v789, %v913
      %915 = vdwg.mxu0
      %916 = vmatpush.msra.mxu0 %v569
      %917 = vmatpush.msra.mxu0 %v568
      %918 = vmatpush.msra.mxu0 %v567
      %919 = vmatpush.msra.mxu0 %v566
      %920 = vmatpush.msra.mxu0 %v565
      %921 = vmatpush.msra.mxu0 %v564
      %922 = vmatpush.msra.mxu0 %v563
      %923 = vmatpush.msra.mxu0 %v562
      %924 = vmatpush.msra.mxu0 %v561
      %925 = vmatpush.msra.mxu0 %v560
      %926 = vmatpush.msra.mxu0 %v559
      %927 = vmatpush.msra.mxu0 %v558
      %928 = vmatpush.msra.mxu0 %v557
      %929 = vmatpush.msra.mxu0 %v556
      %930 = vmatpush.msra.mxu0 %v555
      %931 = vmatpush.msra.mxu0 %v554
      %932 = vmatmul.f32.gmra.mxu0 %v200
      %v933 = vpop.f32.mrf.mxu0
      %v934 = vadd.f32 %v809, %v933
      %935 = vmatmul.f32.gmra.mxu0 %v209
      %v936 = vpop.f32.mrf.mxu0
      %v937 = vadd.f32 %v812, %v936
      %938 = vmatmul.f32.gmra.mxu0 %v218
      %v939 = vpop.f32.mrf.mxu0
      %v940 = vadd.f32 %v815, %v939
      %941 = vmatmul.f32.gmra.mxu0 %v227
      %v942 = vpop.f32.mrf.mxu0
      %v943 = vadd.f32 %v818, %v942
      %944 = vmatmul.f32.gmra.mxu0 %v236
      %v945 = vpop.f32.mrf.mxu0
      %v946 = vadd.f32 %v821, %v945
      %947 = vmatmul.f32.gmra.mxu0 %v245
      %v948 = vpop.f32.mrf.mxu0
      %v949 = vadd.f32 %v824, %v948
      %950 = vmatmul.f32.gmra.mxu0 %v254
      %v951 = vpop.f32.mrf.mxu0
      %v952 = vadd.f32 %v827, %v951
      %953 = vmatmul.f32.gmra.mxu0 %v263
      %v954 = vpop.f32.mrf.mxu0
      %v955 = vadd.f32 %v830, %v954
      %956 = vmatmul.f32.gmra.mxu0 %v272
      %v957 = vpop.f32.mrf.mxu0
      %v958 = vadd.f32 %v833, %v957
      %959 = vmatmul.f32.gmra.mxu0 %v281
      %v960 = vpop.f32.mrf.mxu0
      %v961 = vadd.f32 %v836, %v960
      %962 = vmatmul.f32.gmra.mxu0 %v290
      %v963 = vpop.f32.mrf.mxu0
      %v964 = vadd.f32 %v839, %v963
      %965 = vmatmul.f32.gmra.mxu0 %v299
      %v966 = vpop.f32.mrf.mxu0
      %v967 = vadd.f32 %v842, %v966
      %968 = vmatmul.f32.gmra.mxu0 %v308
      %v969 = vpop.f32.mrf.mxu0
      %v970 = vadd.f32 %v845, %v969
      %971 = vmatmul.f32.gmra.mxu0 %v317
      %v972 = vpop.f32.mrf.mxu0
      %v973 = vadd.f32 %v848, %v972
      %974 = vmatmul.f32.gmra.mxu0 %v326
      %v975 = vpop.f32.mrf.mxu0
      %v976 = vadd.f32 %v851, %v975
      %977 = vmatmul.f32.gmra.mxu0 %v335
      %v978 = vpop.f32.mrf.mxu0
      %v979 = vadd.f32 %v854, %v978
      %980 = vmatmul.f32.gmra.mxu0 %v344
      %v981 = vpop.f32.mrf.mxu0
      %v982 = vadd.f32 %v857, %v981
      %983 = vmatmul.f32.gmra.mxu0 %v353
      %v984 = vpop.f32.mrf.mxu0
      %v985 = vadd.f32 %v860, %v984
      %986 = vmatmul.f32.gmra.mxu0 %v362
      %v987 = vpop.f32.mrf.mxu0
      %v988 = vadd.f32 %v863, %v987
      %989 = vmatmul.f32.gmra.mxu0 %v371
      %v990 = vpop.f32.mrf.mxu0
      %v991 = vadd.f32 %v866, %v990
      %992 = vmatmul.f32.gmra.mxu0 %v380
      %v993 = vpop.f32.mrf.mxu0
      %v994 = vadd.f32 %v869, %v993
      %995 = vmatmul.f32.gmra.mxu0 %v389
      %v996 = vpop.f32.mrf.mxu0
      %v997 = vadd.f32 %v872, %v996
      %998 = vmatmul.f32.gmra.mxu0 %v398
      %v999 = vpop.f32.mrf.mxu0
      %v1000 = vadd.f32 %v875, %v999
      %1001 = vmatmul.f32.gmra.mxu0 %v407
      %v1002 = vpop.f32.mrf.mxu0
      %v1003 = vadd.f32 %v878, %v1002
      %1004 = vmatmul.f32.gmra.mxu0 %v416
      %v1005 = vpop.f32.mrf.mxu0
      %v1006 = vadd.f32 %v881, %v1005
      %1007 = vmatmul.f32.gmra.mxu0 %v425
      %v1008 = vpop.f32.mrf.mxu0
      %v1009 = vadd.f32 %v884, %v1008
      %1010 = vmatmul.f32.gmra.mxu0 %v434
      %v1011 = vpop.f32.mrf.mxu0
      %v1012 = vadd.f32 %v887, %v1011
      %1013 = vmatmul.f32.gmra.mxu0 %v443
      %v1014 = vpop.f32.mrf.mxu0
      %v1015 = vadd.f32 %v890, %v1014
      %1016 = vmatmul.f32.gmra.mxu0 %v452
      %v1017 = vpop.f32.mrf.mxu0
      %v1018 = vadd.f32 %v893, %v1017
      %1019 = vmatmul.f32.gmra.mxu0 %v461
      %v1020 = vpop.f32.mrf.mxu0
      %v1021 = vadd.f32 %v896, %v1020
      %1022 = vmatmul.f32.gmra.mxu0 %v470
      %v1023 = vpop.f32.mrf.mxu0
      %v1024 = vadd.f32 %v899, %v1023
      %1025 = vmatmul.f32.gmra.mxu0 %v479
      %v1026 = vpop.f32.mrf.mxu0
      %v1027 = vadd.f32 %v902, %v1026
      %1028 = vmatmul.f32.gmra.mxu0 %v488
      %v1029 = vpop.f32.mrf.mxu0
      %v1030 = vadd.f32 %v905, %v1029
      %1031 = vmatmul.f32.gmra.mxu0 %v497
      %v1032 = vpop.f32.mrf.mxu0
      %v1033 = vadd.f32 %v908, %v1032
      %1034 = vmatmul.f32.gmra.mxu0 %v506
      %v1035 = vpop.f32.mrf.mxu0
      %v1036 = vadd.f32 %v911, %v1035
      %1037 = vmatmul.f32.gmra.mxu0 %v515
      %v1038 = vpop.f32.mrf.mxu0
      %v1039 = vadd.f32 %v914, %v1038
      %1040 = vdwg.mxu0
      %1041 = vmatpush.msra.mxu0 %v585
      %1042 = vmatpush.msra.mxu0 %v584
      %1043 = vmatpush.msra.mxu0 %v583
      %1044 = vmatpush.msra.mxu0 %v582
      %1045 = vmatpush.msra.mxu0 %v581
      %1046 = vmatpush.msra.mxu0 %v580
      %1047 = vmatpush.msra.mxu0 %v579
      %1048 = vmatpush.msra.mxu0 %v578
      %1049 = vmatpush.msra.mxu0 %v577
      %1050 = vmatpush.msra.mxu0 %v576
      %1051 = vmatpush.msra.mxu0 %v575
      %1052 = vmatpush.msra.mxu0 %v574
      %1053 = vmatpush.msra.mxu0 %v573
      %1054 = vmatpush.msra.mxu0 %v572
      %1055 = vmatpush.msra.mxu0 %v571
      %1056 = vmatpush.msra.mxu0 %v570
      %1057 = vmatmul.f32.gmra.mxu0 %v201
      %v1058 = vpop.f32.mrf.mxu0
      %v1059 = vadd.f32 %v934, %v1058
      %1060 = vmatmul.f32.gmra.mxu0 %v210
      %v1061 = vpop.f32.mrf.mxu0
      %v1062 = vadd.f32 %v937, %v1061
      %1063 = vmatmul.f32.gmra.mxu0 %v219
      %v1064 = vpop.f32.mrf.mxu0
      %v1065 = vadd.f32 %v940, %v1064
      %1066 = vmatmul.f32.gmra.mxu0 %v228
      %v1067 = vpop.f32.mrf.mxu0
      %v1068 = vadd.f32 %v943, %v1067
      %1069 = vmatmul.f32.gmra.mxu0 %v237
      %v1070 = vpop.f32.mrf.mxu0
      %v1071 = vadd.f32 %v946, %v1070
      %1072 = vmatmul.f32.gmra.mxu0 %v246
      %v1073 = vpop.f32.mrf.mxu0
      %v1074 = vadd.f32 %v949, %v1073
      %1075 = vmatmul.f32.gmra.mxu0 %v255
      %v1076 = vpop.f32.mrf.mxu0
      %v1077 = vadd.f32 %v952, %v1076
      %1078 = vmatmul.f32.gmra.mxu0 %v264
      %v1079 = vpop.f32.mrf.mxu0
      %v1080 = vadd.f32 %v955, %v1079
      %1081 = vmatmul.f32.gmra.mxu0 %v273
      %v1082 = vpop.f32.mrf.mxu0
      %v1083 = vadd.f32 %v958, %v1082
      %1084 = vmatmul.f32.gmra.mxu0 %v282
      %v1085 = vpop.f32.mrf.mxu0
      %v1086 = vadd.f32 %v961, %v1085
      %1087 = vmatmul.f32.gmra.mxu0 %v291
      %v1088 = vpop.f32.mrf.mxu0
      %v1089 = vadd.f32 %v964, %v1088
      %1090 = vmatmul.f32.gmra.mxu0 %v300
      %v1091 = vpop.f32.mrf.mxu0
      %v1092 = vadd.f32 %v967, %v1091
      %1093 = vmatmul.f32.gmra.mxu0 %v309
      %v1094 = vpop.f32.mrf.mxu0
      %v1095 = vadd.f32 %v970, %v1094
      %1096 = vmatmul.f32.gmra.mxu0 %v318
      %v1097 = vpop.f32.mrf.mxu0
      %v1098 = vadd.f32 %v973, %v1097
      %1099 = vmatmul.f32.gmra.mxu0 %v327
      %v1100 = vpop.f32.mrf.mxu0
      %v1101 = vadd.f32 %v976, %v1100
      %1102 = vmatmul.f32.gmra.mxu0 %v336
      %v1103 = vpop.f32.mrf.mxu0
      %v1104 = vadd.f32 %v979, %v1103
      %1105 = vmatmul.f32.gmra.mxu0 %v345
      %v1106 = vpop.f32.mrf.mxu0
      %v1107 = vadd.f32 %v982, %v1106
      %1108 = vmatmul.f32.gmra.mxu0 %v354
      %v1109 = vpop.f32.mrf.mxu0
      %v1110 = vadd.f32 %v985, %v1109
      %1111 = vmatmul.f32.gmra.mxu0 %v363
      %v1112 = vpop.f32.mrf.mxu0
      %v1113 = vadd.f32 %v988, %v1112
      %1114 = vmatmul.f32.gmra.mxu0 %v372
      %v1115 = vpop.f32.mrf.mxu0
      %v1116 = vadd.f32 %v991, %v1115
      %1117 = vmatmul.f32.gmra.mxu0 %v381
      %v1118 = vpop.f32.mrf.mxu0
      %v1119 = vadd.f32 %v994, %v1118
      %1120 = vmatmul.f32.gmra.mxu0 %v390
      %v1121 = vpop.f32.mrf.mxu0
      %v1122 = vadd.f32 %v997, %v1121
      %1123 = vmatmul.f32.gmra.mxu0 %v399
      %v1124 = vpop.f32.mrf.mxu0
      %v1125 = vadd.f32 %v1000, %v1124
      %1126 = vmatmul.f32.gmra.mxu0 %v408
      %v1127 = vpop.f32.mrf.mxu0
      %v1128 = vadd.f32 %v1003, %v1127
      %1129 = vmatmul.f32.gmra.mxu0 %v417
      %v1130 = vpop.f32.mrf.mxu0
      %v1131 = vadd.f32 %v1006, %v1130
      %1132 = vmatmul.f32.gmra.mxu0 %v426
      %v1133 = vpop.f32.mrf.mxu0
      %v1134 = vadd.f32 %v1009, %v1133
      %1135 = vmatmul.f32.gmra.mxu0 %v435
      %v1136 = vpop.f32.mrf.mxu0
      %v1137 = vadd.f32 %v1012, %v1136
      %1138 = vmatmul.f32.gmra.mxu0 %v444
      %v1139 = vpop.f32.mrf.mxu0
      %v1140 = vadd.f32 %v1015, %v1139
      %1141 = vmatmul.f32.gmra.mxu0 %v453
      %v1142 = vpop.f32.mrf.mxu0
      %v1143 = vadd.f32 %v1018, %v1142
      %1144 = vmatmul.f32.gmra.mxu0 %v462
      %v1145 = vpop.f32.mrf.mxu0
      %v1146 = vadd.f32 %v1021, %v1145
      %1147 = vmatmul.f32.gmra.mxu0 %v471
      %v1148 = vpop.f32.mrf.mxu0
      %v1149 = vadd.f32 %v1024, %v1148
      %1150 = vmatmul.f32.gmra.mxu0 %v480
      %v1151 = vpop.f32.mrf.mxu0
      %v1152 = vadd.f32 %v1027, %v1151
      %1153 = vmatmul.f32.gmra.mxu0 %v489
      %v1154 = vpop.f32.mrf.mxu0
      %v1155 = vadd.f32 %v1030, %v1154
      %1156 = vmatmul.f32.gmra.mxu0 %v498
      %v1157 = vpop.f32.mrf.mxu0
      %v1158 = vadd.f32 %v1033, %v1157
      %1159 = vmatmul.f32.gmra.mxu0 %v507
      %v1160 = vpop.f32.mrf.mxu0
      %v1161 = vadd.f32 %v1036, %v1160
      %1162 = vmatmul.f32.gmra.mxu0 %v516
      %v1163 = vpop.f32.mrf.mxu0
      %v1164 = vadd.f32 %v1039, %v1163
      %1165 = vdwg.mxu0
      %1166 = vmatpush.msra.mxu0 %v601
      %1167 = vmatpush.msra.mxu0 %v600
      %1168 = vmatpush.msra.mxu0 %v599
      %1169 = vmatpush.msra.mxu0 %v598
      %1170 = vmatpush.msra.mxu0 %v597
      %1171 = vmatpush.msra.mxu0 %v596
      %1172 = vmatpush.msra.mxu0 %v595
      %1173 = vmatpush.msra.mxu0 %v594
      %1174 = vmatpush.msra.mxu0 %v593
      %1175 = vmatpush.msra.mxu0 %v592
      %1176 = vmatpush.msra.mxu0 %v591
      %1177 = vmatpush.msra.mxu0 %v590
      %1178 = vmatpush.msra.mxu0 %v589
      %1179 = vmatpush.msra.mxu0 %v588
      %1180 = vmatpush.msra.mxu0 %v587
      %1181 = vmatpush.msra.mxu0 %v586
      %1182 = vmatmul.f32.gmra.mxu0 %v202
      %v1183 = vpop.f32.mrf.mxu0
      %v1184 = vadd.f32 %v1059, %v1183
      %1185 = vmatmul.f32.gmra.mxu0 %v211
      %v1186 = vpop.f32.mrf.mxu0
      %v1187 = vadd.f32 %v1062, %v1186
      %1188 = vmatmul.f32.gmra.mxu0 %v220
      %v1189 = vpop.f32.mrf.mxu0
      %v1190 = vadd.f32 %v1065, %v1189
      %1191 = vmatmul.f32.gmra.mxu0 %v229
      %v1192 = vpop.f32.mrf.mxu0
      %v1193 = vadd.f32 %v1068, %v1192
      %1194 = vmatmul.f32.gmra.mxu0 %v238
      %v1195 = vpop.f32.mrf.mxu0
      %v1196 = vadd.f32 %v1071, %v1195
      %1197 = vmatmul.f32.gmra.mxu0 %v247
      %v1198 = vpop.f32.mrf.mxu0
      %v1199 = vadd.f32 %v1074, %v1198
      %1200 = vmatmul.f32.gmra.mxu0 %v256
      %v1201 = vpop.f32.mrf.mxu0
      %v1202 = vadd.f32 %v1077, %v1201
      %1203 = vmatmul.f32.gmra.mxu0 %v265
      %v1204 = vpop.f32.mrf.mxu0
      %v1205 = vadd.f32 %v1080, %v1204
      %1206 = vmatmul.f32.gmra.mxu0 %v274
      %v1207 = vpop.f32.mrf.mxu0
      %v1208 = vadd.f32 %v1083, %v1207
      %1209 = vmatmul.f32.gmra.mxu0 %v283
      %v1210 = vpop.f32.mrf.mxu0
      %v1211 = vadd.f32 %v1086, %v1210
      %1212 = vmatmul.f32.gmra.mxu0 %v292
      %v1213 = vpop.f32.mrf.mxu0
      %v1214 = vadd.f32 %v1089, %v1213
      %1215 = vmatmul.f32.gmra.mxu0 %v301
      %v1216 = vpop.f32.mrf.mxu0
      %v1217 = vadd.f32 %v1092, %v1216
      %1218 = vmatmul.f32.gmra.mxu0 %v310
      %v1219 = vpop.f32.mrf.mxu0
      %v1220 = vadd.f32 %v1095, %v1219
      %1221 = vmatmul.f32.gmra.mxu0 %v319
      %v1222 = vpop.f32.mrf.mxu0
      %v1223 = vadd.f32 %v1098, %v1222
      %1224 = vmatmul.f32.gmra.mxu0 %v328
      %v1225 = vpop.f32.mrf.mxu0
      %v1226 = vadd.f32 %v1101, %v1225
      %1227 = vmatmul.f32.gmra.mxu0 %v337
      %v1228 = vpop.f32.mrf.mxu0
      %v1229 = vadd.f32 %v1104, %v1228
      %1230 = vmatmul.f32.gmra.mxu0 %v346
      %v1231 = vpop.f32.mrf.mxu0
      %v1232 = vadd.f32 %v1107, %v1231
      %1233 = vmatmul.f32.gmra.mxu0 %v355
      %v1234 = vpop.f32.mrf.mxu0
      %v1235 = vadd.f32 %v1110, %v1234
      %1236 = vmatmul.f32.gmra.mxu0 %v364
      %v1237 = vpop.f32.mrf.mxu0
      %v1238 = vadd.f32 %v1113, %v1237
      %1239 = vmatmul.f32.gmra.mxu0 %v373
      %v1240 = vpop.f32.mrf.mxu0
      %v1241 = vadd.f32 %v1116, %v1240
      %1242 = vmatmul.f32.gmra.mxu0 %v382
      %v1243 = vpop.f32.mrf.mxu0
      %v1244 = vadd.f32 %v1119, %v1243
      %1245 = vmatmul.f32.gmra.mxu0 %v391
      %v1246 = vpop.f32.mrf.mxu0
      %v1247 = vadd.f32 %v1122, %v1246
      %1248 = vmatmul.f32.gmra.mxu0 %v400
      %v1249 = vpop.f32.mrf.mxu0
      %v1250 = vadd.f32 %v1125, %v1249
      %1251 = vmatmul.f32.gmra.mxu0 %v409
      %v1252 = vpop.f32.mrf.mxu0
      %v1253 = vadd.f32 %v1128, %v1252
      %1254 = vmatmul.f32.gmra.mxu0 %v418
      %v1255 = vpop.f32.mrf.mxu0
      %v1256 = vadd.f32 %v1131, %v1255
      %1257 = vmatmul.f32.gmra.mxu0 %v427
      %v1258 = vpop.f32.mrf.mxu0
      %v1259 = vadd.f32 %v1134, %v1258
      %1260 = vmatmul.f32.gmra.mxu0 %v436
      %v1261 = vpop.f32.mrf.mxu0
      %v1262 = vadd.f32 %v1137, %v1261
      %1263 = vmatmul.f32.gmra.mxu0 %v445
      %v1264 = vpop.f32.mrf.mxu0
      %v1265 = vadd.f32 %v1140, %v1264
      %1266 = vmatmul.f32.gmra.mxu0 %v454
      %v1267 = vpop.f32.mrf.mxu0
      %v1268 = vadd.f32 %v1143, %v1267
      %1269 = vmatmul.f32.gmra.mxu0 %v463
      %v1270 = vpop.f32.mrf.mxu0
      %v1271 = vadd.f32 %v1146, %v1270
      %1272 = vmatmul.f32.gmra.mxu0 %v472
      %v1273 = vpop.f32.mrf.mxu0
      %v1274 = vadd.f32 %v1149, %v1273
      %1275 = vmatmul.f32.gmra.mxu0 %v481
      %v1276 = vpop.f32.mrf.mxu0
      %v1277 = vadd.f32 %v1152, %v1276
      %1278 = vmatmul.f32.gmra.mxu0 %v490
      %v1279 = vpop.f32.mrf.mxu0
      %v1280 = vadd.f32 %v1155, %v1279
      %1281 = vmatmul.f32.gmra.mxu0 %v499
      %v1282 = vpop.f32.mrf.mxu0
      %v1283 = vadd.f32 %v1158, %v1282
      %1284 = vmatmul.f32.gmra.mxu0 %v508
      %v1285 = vpop.f32.mrf.mxu0
      %v1286 = vadd.f32 %v1161, %v1285
      %1287 = vmatmul.f32.gmra.mxu0 %v517
      %v1288 = vpop.f32.mrf.mxu0
      %v1289 = vadd.f32 %v1164, %v1288
      %1290 = vdwg.mxu0
      %1291 = vmatpush.msra.mxu0 %v617
      %1292 = vmatpush.msra.mxu0 %v616
      %1293 = vmatpush.msra.mxu0 %v615
      %1294 = vmatpush.msra.mxu0 %v614
      %1295 = vmatpush.msra.mxu0 %v613
      %1296 = vmatpush.msra.mxu0 %v612
      %1297 = vmatpush.msra.mxu0 %v611
      %1298 = vmatpush.msra.mxu0 %v610
      %1299 = vmatpush.msra.mxu0 %v609
      %1300 = vmatpush.msra.mxu0 %v608
      %1301 = vmatpush.msra.mxu0 %v607
      %1302 = vmatpush.msra.mxu0 %v606
      %1303 = vmatpush.msra.mxu0 %v605
      %1304 = vmatpush.msra.mxu0 %v604
      %1305 = vmatpush.msra.mxu0 %v603
      %1306 = vmatpush.msra.mxu0 %v602
      %1307 = vmatmul.f32.gmra.mxu0 %v203
      %v1308 = vpop.f32.mrf.mxu0
      %v1309 = vadd.f32 %v1184, %v1308
      %1310 = vmatmul.f32.gmra.mxu0 %v212
      %v1311 = vpop.f32.mrf.mxu0
      %v1312 = vadd.f32 %v1187, %v1311
      %1313 = vmatmul.f32.gmra.mxu0 %v221
      %v1314 = vpop.f32.mrf.mxu0
      %v1315 = vadd.f32 %v1190, %v1314
      %1316 = vmatmul.f32.gmra.mxu0 %v230
      %v1317 = vpop.f32.mrf.mxu0
      %v1318 = vadd.f32 %v1193, %v1317
      %1319 = vmatmul.f32.gmra.mxu0 %v239
      %v1320 = vpop.f32.mrf.mxu0
      %v1321 = vadd.f32 %v1196, %v1320
      %1322 = vmatmul.f32.gmra.mxu0 %v248
      %v1323 = vpop.f32.mrf.mxu0
      %v1324 = vadd.f32 %v1199, %v1323
      %1325 = vmatmul.f32.gmra.mxu0 %v257
      %v1326 = vpop.f32.mrf.mxu0
      %v1327 = vadd.f32 %v1202, %v1326
      %1328 = vmatmul.f32.gmra.mxu0 %v266
      %v1329 = vpop.f32.mrf.mxu0
      %v1330 = vadd.f32 %v1205, %v1329
      %1331 = vmatmul.f32.gmra.mxu0 %v275
      %v1332 = vpop.f32.mrf.mxu0
      %v1333 = vadd.f32 %v1208, %v1332
      %1334 = vmatmul.f32.gmra.mxu0 %v284
      %v1335 = vpop.f32.mrf.mxu0
      %v1336 = vadd.f32 %v1211, %v1335
      %1337 = vmatmul.f32.gmra.mxu0 %v293
      %v1338 = vpop.f32.mrf.mxu0
      %v1339 = vadd.f32 %v1214, %v1338
      %1340 = vmatmul.f32.gmra.mxu0 %v302
      %v1341 = vpop.f32.mrf.mxu0
      %v1342 = vadd.f32 %v1217, %v1341
      %1343 = vmatmul.f32.gmra.mxu0 %v311
      %v1344 = vpop.f32.mrf.mxu0
      %v1345 = vadd.f32 %v1220, %v1344
      %1346 = vmatmul.f32.gmra.mxu0 %v320
      %v1347 = vpop.f32.mrf.mxu0
      %v1348 = vadd.f32 %v1223, %v1347
      %1349 = vmatmul.f32.gmra.mxu0 %v329
      %v1350 = vpop.f32.mrf.mxu0
      %v1351 = vadd.f32 %v1226, %v1350
      %1352 = vmatmul.f32.gmra.mxu0 %v338
      %v1353 = vpop.f32.mrf.mxu0
      %v1354 = vadd.f32 %v1229, %v1353
      %1355 = vmatmul.f32.gmra.mxu0 %v347
      %v1356 = vpop.f32.mrf.mxu0
      %v1357 = vadd.f32 %v1232, %v1356
      %1358 = vmatmul.f32.gmra.mxu0 %v356
      %v1359 = vpop.f32.mrf.mxu0
      %v1360 = vadd.f32 %v1235, %v1359
      %1361 = vmatmul.f32.gmra.mxu0 %v365
      %v1362 = vpop.f32.mrf.mxu0
      %v1363 = vadd.f32 %v1238, %v1362
      %1364 = vmatmul.f32.gmra.mxu0 %v374
      %v1365 = vpop.f32.mrf.mxu0
      %v1366 = vadd.f32 %v1241, %v1365
      %1367 = vmatmul.f32.gmra.mxu0 %v383
      %v1368 = vpop.f32.mrf.mxu0
      %v1369 = vadd.f32 %v1244, %v1368
      %1370 = vmatmul.f32.gmra.mxu0 %v392
      %v1371 = vpop.f32.mrf.mxu0
      %v1372 = vadd.f32 %v1247, %v1371
      %1373 = vmatmul.f32.gmra.mxu0 %v401
      %v1374 = vpop.f32.mrf.mxu0
      %v1375 = vadd.f32 %v1250, %v1374
      %1376 = vmatmul.f32.gmra.mxu0 %v410
      %v1377 = vpop.f32.mrf.mxu0
      %v1378 = vadd.f32 %v1253, %v1377
      %1379 = vmatmul.f32.gmra.mxu0 %v419
      %v1380 = vpop.f32.mrf.mxu0
      %v1381 = vadd.f32 %v1256, %v1380
      %1382 = vmatmul.f32.gmra.mxu0 %v428
      %v1383 = vpop.f32.mrf.mxu0
      %v1384 = vadd.f32 %v1259, %v1383
      %1385 = vmatmul.f32.gmra.mxu0 %v437
      %v1386 = vpop.f32.mrf.mxu0
      %v1387 = vadd.f32 %v1262, %v1386
      %1388 = vmatmul.f32.gmra.mxu0 %v446
      %v1389 = vpop.f32.mrf.mxu0
      %v1390 = vadd.f32 %v1265, %v1389
      %1391 = vmatmul.f32.gmra.mxu0 %v455
      %v1392 = vpop.f32.mrf.mxu0
      %v1393 = vadd.f32 %v1268, %v1392
      %1394 = vmatmul.f32.gmra.mxu0 %v464
      %v1395 = vpop.f32.mrf.mxu0
      %v1396 = vadd.f32 %v1271, %v1395
      %1397 = vmatmul.f32.gmra.mxu0 %v473
      %v1398 = vpop.f32.mrf.mxu0
      %v1399 = vadd.f32 %v1274, %v1398
      %1400 = vmatmul.f32.gmra.mxu0 %v482
      %v1401 = vpop.f32.mrf.mxu0
      %v1402 = vadd.f32 %v1277, %v1401
      %1403 = vmatmul.f32.gmra.mxu0 %v491
      %v1404 = vpop.f32.mrf.mxu0
      %v1405 = vadd.f32 %v1280, %v1404
      %1406 = vmatmul.f32.gmra.mxu0 %v500
      %v1407 = vpop.f32.mrf.mxu0
      %v1408 = vadd.f32 %v1283, %v1407
      %1409 = vmatmul.f32.gmra.mxu0 %v509
      %v1410 = vpop.f32.mrf.mxu0
      %v1411 = vadd.f32 %v1286, %v1410
      %1412 = vmatmul.f32.gmra.mxu0 %v518
      %v1413 = vpop.f32.mrf.mxu0
      %v1414 = vadd.f32 %v1289, %v1413
      %1415 = vdwg.mxu0
      %1416 = vmatpush.msra.mxu0 %v633
      %1417 = vmatpush.msra.mxu0 %v632
      %1418 = vmatpush.msra.mxu0 %v631
      %1419 = vmatpush.msra.mxu0 %v630
      %1420 = vmatpush.msra.mxu0 %v629
      %1421 = vmatpush.msra.mxu0 %v628
      %1422 = vmatpush.msra.mxu0 %v627
      %1423 = vmatpush.msra.mxu0 %v626
      %1424 = vmatpush.msra.mxu0 %v625
      %1425 = vmatpush.msra.mxu0 %v624
      %1426 = vmatpush.msra.mxu0 %v623
      %1427 = vmatpush.msra.mxu0 %v622
      %1428 = vmatpush.msra.mxu0 %v621
      %1429 = vmatpush.msra.mxu0 %v620
      %1430 = vmatpush.msra.mxu0 %v619
      %1431 = vmatpush.msra.mxu0 %v618
      %1432 = vmatmul.f32.gmra.mxu0 %v204
      %v1433 = vpop.f32.mrf.mxu0
      %v1434 = vadd.f32 %v1309, %v1433
      %1435 = vmatmul.f32.gmra.mxu0 %v213
      %v1436 = vpop.f32.mrf.mxu0
      %v1437 = vadd.f32 %v1312, %v1436
      %1438 = vmatmul.f32.gmra.mxu0 %v222
      %v1439 = vpop.f32.mrf.mxu0
      %v1440 = vadd.f32 %v1315, %v1439
      %1441 = vmatmul.f32.gmra.mxu0 %v231
      %v1442 = vpop.f32.mrf.mxu0
      %v1443 = vadd.f32 %v1318, %v1442
      %1444 = vmatmul.f32.gmra.mxu0 %v240
      %v1445 = vpop.f32.mrf.mxu0
      %v1446 = vadd.f32 %v1321, %v1445
      %1447 = vmatmul.f32.gmra.mxu0 %v249
      %v1448 = vpop.f32.mrf.mxu0
      %v1449 = vadd.f32 %v1324, %v1448
      %1450 = vmatmul.f32.gmra.mxu0 %v258
      %v1451 = vpop.f32.mrf.mxu0
      %v1452 = vadd.f32 %v1327, %v1451
      %1453 = vmatmul.f32.gmra.mxu0 %v267
      %v1454 = vpop.f32.mrf.mxu0
      %v1455 = vadd.f32 %v1330, %v1454
      %1456 = vmatmul.f32.gmra.mxu0 %v276
      %v1457 = vpop.f32.mrf.mxu0
      %v1458 = vadd.f32 %v1333, %v1457
      %1459 = vmatmul.f32.gmra.mxu0 %v285
      %v1460 = vpop.f32.mrf.mxu0
      %v1461 = vadd.f32 %v1336, %v1460
      %1462 = vmatmul.f32.gmra.mxu0 %v294
      %v1463 = vpop.f32.mrf.mxu0
      %v1464 = vadd.f32 %v1339, %v1463
      %1465 = vmatmul.f32.gmra.mxu0 %v303
      %v1466 = vpop.f32.mrf.mxu0
      %v1467 = vadd.f32 %v1342, %v1466
      %1468 = vmatmul.f32.gmra.mxu0 %v312
      %v1469 = vpop.f32.mrf.mxu0
      %v1470 = vadd.f32 %v1345, %v1469
      %1471 = vmatmul.f32.gmra.mxu0 %v321
      %v1472 = vpop.f32.mrf.mxu0
      %v1473 = vadd.f32 %v1348, %v1472
      %1474 = vmatmul.f32.gmra.mxu0 %v330
      %v1475 = vpop.f32.mrf.mxu0
      %v1476 = vadd.f32 %v1351, %v1475
      %1477 = vmatmul.f32.gmra.mxu0 %v339
      %v1478 = vpop.f32.mrf.mxu0
      %v1479 = vadd.f32 %v1354, %v1478
      %1480 = vmatmul.f32.gmra.mxu0 %v348
      %v1481 = vpop.f32.mrf.mxu0
      %v1482 = vadd.f32 %v1357, %v1481
      %1483 = vmatmul.f32.gmra.mxu0 %v357
      %v1484 = vpop.f32.mrf.mxu0
      %v1485 = vadd.f32 %v1360, %v1484
      %1486 = vmatmul.f32.gmra.mxu0 %v366
      %v1487 = vpop.f32.mrf.mxu0
      %v1488 = vadd.f32 %v1363, %v1487
      %1489 = vmatmul.f32.gmra.mxu0 %v375
      %v1490 = vpop.f32.mrf.mxu0
      %v1491 = vadd.f32 %v1366, %v1490
      %1492 = vmatmul.f32.gmra.mxu0 %v384
      %v1493 = vpop.f32.mrf.mxu0
      %v1494 = vadd.f32 %v1369, %v1493
      %1495 = vmatmul.f32.gmra.mxu0 %v393
      %v1496 = vpop.f32.mrf.mxu0
      %v1497 = vadd.f32 %v1372, %v1496
      %1498 = vmatmul.f32.gmra.mxu0 %v402
      %v1499 = vpop.f32.mrf.mxu0
      %v1500 = vadd.f32 %v1375, %v1499
      %1501 = vmatmul.f32.gmra.mxu0 %v411
      %v1502 = vpop.f32.mrf.mxu0
      %v1503 = vadd.f32 %v1378, %v1502
      %1504 = vmatmul.f32.gmra.mxu0 %v420
      %v1505 = vpop.f32.mrf.mxu0
      %v1506 = vadd.f32 %v1381, %v1505
      %1507 = vmatmul.f32.gmra.mxu0 %v429
      %v1508 = vpop.f32.mrf.mxu0
      %v1509 = vadd.f32 %v1384, %v1508
      %1510 = vmatmul.f32.gmra.mxu0 %v438
      %v1511 = vpop.f32.mrf.mxu0
      %v1512 = vadd.f32 %v1387, %v1511
      %1513 = vmatmul.f32.gmra.mxu0 %v447
      %v1514 = vpop.f32.mrf.mxu0
      %v1515 = vadd.f32 %v1390, %v1514
      %1516 = vmatmul.f32.gmra.mxu0 %v456
      %v1517 = vpop.f32.mrf.mxu0
      %v1518 = vadd.f32 %v1393, %v1517
      %1519 = vmatmul.f32.gmra.mxu0 %v465
      %v1520 = vpop.f32.mrf.mxu0
      %v1521 = vadd.f32 %v1396, %v1520
      %1522 = vmatmul.f32.gmra.mxu0 %v474
      %v1523 = vpop.f32.mrf.mxu0
      %v1524 = vadd.f32 %v1399, %v1523
      %1525 = vmatmul.f32.gmra.mxu0 %v483
      %v1526 = vpop.f32.mrf.mxu0
      %v1527 = vadd.f32 %v1402, %v1526
      %1528 = vmatmul.f32.gmra.mxu0 %v492
      %v1529 = vpop.f32.mrf.mxu0
      %v1530 = vadd.f32 %v1405, %v1529
      %1531 = vmatmul.f32.gmra.mxu0 %v501
      %v1532 = vpop.f32.mrf.mxu0
      %v1533 = vadd.f32 %v1408, %v1532
      %1534 = vmatmul.f32.gmra.mxu0 %v510
      %v1535 = vpop.f32.mrf.mxu0
      %v1536 = vadd.f32 %v1411, %v1535
      %1537 = vmatmul.f32.gmra.mxu0 %v519
      %v1538 = vpop.f32.mrf.mxu0
      %v1539 = vadd.f32 %v1414, %v1538
      %1540 = vdwg.mxu0
      %1541 = vmatpush.msra.mxu0 %v649
      %1542 = vmatpush.msra.mxu0 %v648
      %1543 = vmatpush.msra.mxu0 %v647
      %1544 = vmatpush.msra.mxu0 %v646
      %1545 = vmatpush.msra.mxu0 %v645
      %1546 = vmatpush.msra.mxu0 %v644
      %1547 = vmatpush.msra.mxu0 %v643
      %1548 = vmatpush.msra.mxu0 %v642
      %1549 = vmatpush.msra.mxu0 %v641
      %1550 = vmatpush.msra.mxu0 %v640
      %1551 = vmatpush.msra.mxu0 %v639
      %1552 = vmatpush.msra.mxu0 %v638
      %1553 = vmatpush.msra.mxu0 %v637
      %1554 = vmatpush.msra.mxu0 %v636
      %1555 = vmatpush.msra.mxu0 %v635
      %1556 = vmatpush.msra.mxu0 %v634
      %1557 = vmatmul.f32.gmra.mxu0 %v205
      %v1558 = vpop.f32.mrf.mxu0
      %v1559 = vadd.f32 %v1434, %v1558
      %1560 = vmatmul.f32.gmra.mxu0 %v214
      %v1561 = vpop.f32.mrf.mxu0
      %v1562 = vadd.f32 %v1437, %v1561
      %1563 = vmatmul.f32.gmra.mxu0 %v223
      %v1564 = vpop.f32.mrf.mxu0
      %v1565 = vadd.f32 %v1440, %v1564
      %1566 = vmatmul.f32.gmra.mxu0 %v232
      %v1567 = vpop.f32.mrf.mxu0
      %v1568 = vadd.f32 %v1443, %v1567
      %1569 = vmatmul.f32.gmra.mxu0 %v241
      %v1570 = vpop.f32.mrf.mxu0
      %v1571 = vadd.f32 %v1446, %v1570
      %1572 = vmatmul.f32.gmra.mxu0 %v250
      %v1573 = vpop.f32.mrf.mxu0
      %v1574 = vadd.f32 %v1449, %v1573
      %1575 = vmatmul.f32.gmra.mxu0 %v259
      %v1576 = vpop.f32.mrf.mxu0
      %v1577 = vadd.f32 %v1452, %v1576
      %1578 = vmatmul.f32.gmra.mxu0 %v268
      %v1579 = vpop.f32.mrf.mxu0
      %v1580 = vadd.f32 %v1455, %v1579
      %1581 = vmatmul.f32.gmra.mxu0 %v277
      %v1582 = vpop.f32.mrf.mxu0
      %v1583 = vadd.f32 %v1458, %v1582
      %1584 = vmatmul.f32.gmra.mxu0 %v286
      %v1585 = vpop.f32.mrf.mxu0
      %v1586 = vadd.f32 %v1461, %v1585
      %1587 = vmatmul.f32.gmra.mxu0 %v295
      %v1588 = vpop.f32.mrf.mxu0
      %v1589 = vadd.f32 %v1464, %v1588
      %1590 = vmatmul.f32.gmra.mxu0 %v304
      %v1591 = vpop.f32.mrf.mxu0
      %v1592 = vadd.f32 %v1467, %v1591
      %1593 = vmatmul.f32.gmra.mxu0 %v313
      %v1594 = vpop.f32.mrf.mxu0
      %v1595 = vadd.f32 %v1470, %v1594
      %1596 = vmatmul.f32.gmra.mxu0 %v322
      %v1597 = vpop.f32.mrf.mxu0
      %v1598 = vadd.f32 %v1473, %v1597
      %1599 = vmatmul.f32.gmra.mxu0 %v331
      %v1600 = vpop.f32.mrf.mxu0
      %v1601 = vadd.f32 %v1476, %v1600
      %1602 = vmatmul.f32.gmra.mxu0 %v340
      %v1603 = vpop.f32.mrf.mxu0
      %v1604 = vadd.f32 %v1479, %v1603
      %1605 = vmatmul.f32.gmra.mxu0 %v349
      %v1606 = vpop.f32.mrf.mxu0
      %v1607 = vadd.f32 %v1482, %v1606
      %1608 = vmatmul.f32.gmra.mxu0 %v358
      %v1609 = vpop.f32.mrf.mxu0
      %v1610 = vadd.f32 %v1485, %v1609
      %1611 = vmatmul.f32.gmra.mxu0 %v367
      %v1612 = vpop.f32.mrf.mxu0
      %v1613 = vadd.f32 %v1488, %v1612
      %1614 = vmatmul.f32.gmra.mxu0 %v376
      %v1615 = vpop.f32.mrf.mxu0
      %v1616 = vadd.f32 %v1491, %v1615
      %1617 = vmatmul.f32.gmra.mxu0 %v385
      %v1618 = vpop.f32.mrf.mxu0
      %v1619 = vadd.f32 %v1494, %v1618
      %1620 = vmatmul.f32.gmra.mxu0 %v394
      %v1621 = vpop.f32.mrf.mxu0
      %v1622 = vadd.f32 %v1497, %v1621
      %1623 = vmatmul.f32.gmra.mxu0 %v403
      %v1624 = vpop.f32.mrf.mxu0
      %v1625 = vadd.f32 %v1500, %v1624
      %1626 = vmatmul.f32.gmra.mxu0 %v412
      %v1627 = vpop.f32.mrf.mxu0
      %v1628 = vadd.f32 %v1503, %v1627
      %1629 = vmatmul.f32.gmra.mxu0 %v421
      %v1630 = vpop.f32.mrf.mxu0
      %v1631 = vadd.f32 %v1506, %v1630
      %1632 = vmatmul.f32.gmra.mxu0 %v430
      %v1633 = vpop.f32.mrf.mxu0
      %v1634 = vadd.f32 %v1509, %v1633
      %1635 = vmatmul.f32.gmra.mxu0 %v439
      %v1636 = vpop.f32.mrf.mxu0
      %v1637 = vadd.f32 %v1512, %v1636
      %1638 = vmatmul.f32.gmra.mxu0 %v448
      %v1639 = vpop.f32.mrf.mxu0
      %v1640 = vadd.f32 %v1515, %v1639
      %1641 = vmatmul.f32.gmra.mxu0 %v457
      %v1642 = vpop.f32.mrf.mxu0
      %v1643 = vadd.f32 %v1518, %v1642
      %1644 = vmatmul.f32.gmra.mxu0 %v466
      %v1645 = vpop.f32.mrf.mxu0
      %v1646 = vadd.f32 %v1521, %v1645
      %1647 = vmatmul.f32.gmra.mxu0 %v475
      %v1648 = vpop.f32.mrf.mxu0
      %v1649 = vadd.f32 %v1524, %v1648
      %1650 = vmatmul.f32.gmra.mxu0 %v484
      %v1651 = vpop.f32.mrf.mxu0
      %v1652 = vadd.f32 %v1527, %v1651
      %1653 = vmatmul.f32.gmra.mxu0 %v493
      %v1654 = vpop.f32.mrf.mxu0
      %v1655 = vadd.f32 %v1530, %v1654
      %1656 = vmatmul.f32.gmra.mxu0 %v502
      %v1657 = vpop.f32.mrf.mxu0
      %v1658 = vadd.f32 %v1533, %v1657
      %1659 = vmatmul.f32.gmra.mxu0 %v511
      %v1660 = vpop.f32.mrf.mxu0
      %v1661 = vadd.f32 %v1536, %v1660
      %1662 = vmatmul.f32.gmra.mxu0 %v520
      %v1663 = vpop.f32.mrf.mxu0
      %v1664 = vadd.f32 %v1539, %v1663
      %1665 = vdwg.mxu0
      %1666 = vmatpush.msra.mxu0 %v665
      %1667 = vmatpush.msra.mxu0 %v664
      %1668 = vmatpush.msra.mxu0 %v663
      %1669 = vmatpush.msra.mxu0 %v662
      %1670 = vmatpush.msra.mxu0 %v661
      %1671 = vmatpush.msra.mxu0 %v660
      %1672 = vmatpush.msra.mxu0 %v659
      %1673 = vmatpush.msra.mxu0 %v658
      %1674 = vmatpush.msra.mxu0 %v657
      %1675 = vmatpush.msra.mxu0 %v656
      %1676 = vmatpush.msra.mxu0 %v655
      %1677 = vmatpush.msra.mxu0 %v654
      %1678 = vmatpush.msra.mxu0 %v653
      %1679 = vmatpush.msra.mxu0 %v652
      %1680 = vmatpush.msra.mxu0 %v651
      %1681 = vmatpush.msra.mxu0 %v650
      %1682 = vmatmul.f32.gmra.mxu0 %v206
      %v1683 = vpop.f32.mrf.mxu0
      %v1684 = vadd.f32 %v1559, %v1683
      %1685 = vmatmul.f32.gmra.mxu0 %v215
      %v1686 = vpop.f32.mrf.mxu0
      %v1687 = vadd.f32 %v1562, %v1686
      %1688 = vmatmul.f32.gmra.mxu0 %v224
      %v1689 = vpop.f32.mrf.mxu0
      %v1690 = vadd.f32 %v1565, %v1689
      %1691 = vmatmul.f32.gmra.mxu0 %v233
      %v1692 = vpop.f32.mrf.mxu0
      %v1693 = vadd.f32 %v1568, %v1692
      %1694 = vmatmul.f32.gmra.mxu0 %v242
      %v1695 = vpop.f32.mrf.mxu0
      %v1696 = vadd.f32 %v1571, %v1695
      %1697 = vmatmul.f32.gmra.mxu0 %v251
      %v1698 = vpop.f32.mrf.mxu0
      %v1699 = vadd.f32 %v1574, %v1698
      %1700 = vmatmul.f32.gmra.mxu0 %v260
      %v1701 = vpop.f32.mrf.mxu0
      %v1702 = vadd.f32 %v1577, %v1701
      %1703 = vmatmul.f32.gmra.mxu0 %v269
      %v1704 = vpop.f32.mrf.mxu0
      %v1705 = vadd.f32 %v1580, %v1704
      %1706 = vmatmul.f32.gmra.mxu0 %v278
      %v1707 = vpop.f32.mrf.mxu0
      %v1708 = vadd.f32 %v1583, %v1707
      %1709 = vmatmul.f32.gmra.mxu0 %v287
      %v1710 = vpop.f32.mrf.mxu0
      %v1711 = vadd.f32 %v1586, %v1710
      %1712 = vmatmul.f32.gmra.mxu0 %v296
      %v1713 = vpop.f32.mrf.mxu0
      %v1714 = vadd.f32 %v1589, %v1713
      %1715 = vmatmul.f32.gmra.mxu0 %v305
      %v1716 = vpop.f32.mrf.mxu0
      %v1717 = vadd.f32 %v1592, %v1716
      %1718 = vmatmul.f32.gmra.mxu0 %v314
      %v1719 = vpop.f32.mrf.mxu0
      %v1720 = vadd.f32 %v1595, %v1719
      %1721 = vmatmul.f32.gmra.mxu0 %v323
      %v1722 = vpop.f32.mrf.mxu0
      %v1723 = vadd.f32 %v1598, %v1722
      %1724 = vmatmul.f32.gmra.mxu0 %v332
      %v1725 = vpop.f32.mrf.mxu0
      %v1726 = vadd.f32 %v1601, %v1725
      %1727 = vmatmul.f32.gmra.mxu0 %v341
      %v1728 = vpop.f32.mrf.mxu0
      %v1729 = vadd.f32 %v1604, %v1728
      %1730 = vmatmul.f32.gmra.mxu0 %v350
      %v1731 = vpop.f32.mrf.mxu0
      %v1732 = vadd.f32 %v1607, %v1731
      %1733 = vmatmul.f32.gmra.mxu0 %v359
      %v1734 = vpop.f32.mrf.mxu0
      %v1735 = vadd.f32 %v1610, %v1734
      %1736 = vmatmul.f32.gmra.mxu0 %v368
      %v1737 = vpop.f32.mrf.mxu0
      %v1738 = vadd.f32 %v1613, %v1737
      %1739 = vmatmul.f32.gmra.mxu0 %v377
      %v1740 = vpop.f32.mrf.mxu0
      %v1741 = vadd.f32 %v1616, %v1740
      %1742 = vmatmul.f32.gmra.mxu0 %v386
      %v1743 = vpop.f32.mrf.mxu0
      %v1744 = vadd.f32 %v1619, %v1743
      %1745 = vmatmul.f32.gmra.mxu0 %v395
      %v1746 = vpop.f32.mrf.mxu0
      %v1747 = vadd.f32 %v1622, %v1746
      %1748 = vmatmul.f32.gmra.mxu0 %v404
      %v1749 = vpop.f32.mrf.mxu0
      %v1750 = vadd.f32 %v1625, %v1749
      %1751 = vmatmul.f32.gmra.mxu0 %v413
      %v1752 = vpop.f32.mrf.mxu0
      %v1753 = vadd.f32 %v1628, %v1752
      %1754 = vmatmul.f32.gmra.mxu0 %v422
      %v1755 = vpop.f32.mrf.mxu0
      %v1756 = vadd.f32 %v1631, %v1755
      %1757 = vmatmul.f32.gmra.mxu0 %v431
      %v1758 = vpop.f32.mrf.mxu0
      %v1759 = vadd.f32 %v1634, %v1758
      %1760 = vmatmul.f32.gmra.mxu0 %v440
      %v1761 = vpop.f32.mrf.mxu0
      %v1762 = vadd.f32 %v1637, %v1761
      %1763 = vmatmul.f32.gmra.mxu0 %v449
      %v1764 = vpop.f32.mrf.mxu0
      %v1765 = vadd.f32 %v1640, %v1764
      %1766 = vmatmul.f32.gmra.mxu0 %v458
      %v1767 = vpop.f32.mrf.mxu0
      %v1768 = vadd.f32 %v1643, %v1767
      %1769 = vmatmul.f32.gmra.mxu0 %v467
      %v1770 = vpop.f32.mrf.mxu0
      %v1771 = vadd.f32 %v1646, %v1770
      %1772 = vmatmul.f32.gmra.mxu0 %v476
      %v1773 = vpop.f32.mrf.mxu0
      %v1774 = vadd.f32 %v1649, %v1773
      %1775 = vmatmul.f32.gmra.mxu0 %v485
      %v1776 = vpop.f32.mrf.mxu0
      %v1777 = vadd.f32 %v1652, %v1776
      %1778 = vmatmul.f32.gmra.mxu0 %v494
      %v1779 = vpop.f32.mrf.mxu0
      %v1780 = vadd.f32 %v1655, %v1779
      %1781 = vmatmul.f32.gmra.mxu0 %v503
      %v1782 = vpop.f32.mrf.mxu0
      %v1783 = vadd.f32 %v1658, %v1782
      %1784 = vmatmul.f32.gmra.mxu0 %v512
      %v1785 = vpop.f32.mrf.mxu0
      %v1786 = vadd.f32 %v1661, %v1785
      %1787 = vmatmul.f32.gmra.mxu0 %v521
      %v1788 = vpop.f32.mrf.mxu0
      %v1789 = vadd.f32 %v1664, %v1788
      %1790 = vdwg.mxu0
      %v1791 = vadd.f32 %v1684, %v1687
      %v1792 = vadd.f32 %v1791, %v1690
      %v1793 = vadd.f32 %v1792, %v1693
      %v1794 = vadd.f32 %v1793, %v1696
      %v1795 = vadd.f32 %v1794, %v1699
      %v1796 = vadd.f32 %v1795, %v1702
      %v1797 = vadd.f32 %v1796, %v1705
      %v1798 = vadd.f32 %v1797, %v1708
      %v1799 = vadd.f32 %v1798, %v1711
      %v1800 = vadd.f32 %v1799, %v1714
      %v1801 = vadd.f32 %v1800, %v1717
      %v1802 = vadd.f32 %v1801, %v1720
      %v1803 = vadd.f32 %v1802, %v1723
      %v1804 = vadd.f32 %v1803, %v1726
      %v1805 = vadd.f32 %v1804, %v1729
      %v1806 = vadd.f32 %v1805, %v1732
      %v1807 = vadd.f32 %v1806, %v1735
      %v1808 = vadd.f32 %v1807, %v1738
      %v1809 = vadd.f32 %v1808, %v1741
      %v1810 = vadd.f32 %v1809, %v1744
      %v1811 = vadd.f32 %v1810, %v1747
      %v1812 = vadd.f32 %v1811, %v1750
      %v1813 = vadd.f32 %v1812, %v1753
      %v1814 = vadd.f32 %v1813, %v1756
      %v1815 = vadd.f32 %v1814, %v1759
      %v1816 = vadd.f32 %v1815, %v1762
      %v1817 = vadd.f32 %v1816, %v1765
      %v1818 = vadd.f32 %v1817, %v1768
      %v1819 = vadd.f32 %v1818, %v1771
      %v1820 = vadd.f32 %v1819, %v1774
      %v1821 = vadd.f32 %v1820, %v1777
      %v1822 = vadd.f32 %v1821, %v1780
      %v1823 = vadd.f32 %v1822, %v1783
      %v1824 = vadd.f32 %v1823, %v1786
      %v1825 = vadd.f32 %v1824, %v1789
      %v1826 = vrot.slane %v1825, 4
      %v1827 = vadd.f32 %v1825, %v1826
      %v1828 = vrot.slane %v1827, 2
      %v1829 = vadd.f32 %v1827, %v1828
      %v1830 = vrot.slane %v1829, 1
      %v1831 = vadd.f32 %v1829, %v1830
      %v1832 = vmul.f32 %v1831, 0.0034722222
      %v1833 = vmul.f32 %v1684, %v1684
      %v1834 = vmul.f32 %v1687, %v1687
      %v1835 = vmul.f32 %v1690, %v1690
      %v1836 = vmul.f32 %v1693, %v1693
      %v1837 = vmul.f32 %v1696, %v1696
      %v1838 = vmul.f32 %v1699, %v1699
      %v1839 = vmul.f32 %v1702, %v1702
      %v1840 = vmul.f32 %v1705, %v1705
      %v1841 = vmul.f32 %v1708, %v1708
      %v1842 = vmul.f32 %v1711, %v1711
      %v1843 = vmul.f32 %v1714, %v1714
      %v1844 = vmul.f32 %v1717, %v1717
      %v1845 = vmul.f32 %v1720, %v1720
      %v1846 = vmul.f32 %v1723, %v1723
      %v1847 = vmul.f32 %v1726, %v1726
      %v1848 = vmul.f32 %v1729, %v1729
      %v1849 = vmul.f32 %v1732, %v1732
      %v1850 = vmul.f32 %v1735, %v1735
      %v1851 = vmul.f32 %v1738, %v1738
      %v1852 = vmul.f32 %v1741, %v1741
      %v1853 = vmul.f32 %v1744, %v1744
      %v1854 = vmul.f32 %v1747, %v1747
      %v1855 = vmul.f32 %v1750, %v1750
      %v1856 = vmul.f32 %v1753, %v1753
      %v1857 = vmul.f32 %v1756, %v1756
      %v1858 = vmul.f32 %v1759, %v1759
      %v1859 = vmul.f32 %v1762, %v1762
      %v1860 = vmul.f32 %v1765, %v1765
      %v1861 = vmul.f32 %v1768, %v1768
      %v1862 = vmul.f32 %v1771, %v1771
      %v1863 = vmul.f32 %v1774, %v1774
      %v1864 = vmul.f32 %v1777, %v1777
      %v1865 = vmul.f32 %v1780, %v1780
      %v1866 = vmul.f32 %v1783, %v1783
      %v1867 = vmul.f32 %v1786, %v1786
      %v1868 = vmul.f32 %v1789, %v1789
      %v1869 = vadd.f32 %v1833, %v1834
      %v1870 = vadd.f32 %v1869, %v1835
      %v1871 = vadd.f32 %v1870, %v1836
      %v1872 = vadd.f32 %v1871, %v1837
      %v1873 = vadd.f32 %v1872, %v1838
      %v1874 = vadd.f32 %v1873, %v1839
      %v1875 = vadd.f32 %v1874, %v1840
      %v1876 = vadd.f32 %v1875, %v1841
      %v1877 = vadd.f32 %v1876, %v1842
      %v1878 = vadd.f32 %v1877, %v1843
      %v1879 = vadd.f32 %v1878, %v1844
      %v1880 = vadd.f32 %v1879, %v1845
      %v1881 = vadd.f32 %v1880, %v1846
      %v1882 = vadd.f32 %v1881, %v1847
      %v1883 = vadd.f32 %v1882, %v1848
      %v1884 = vadd.f32 %v1883, %v1849
      %v1885 = vadd.f32 %v1884, %v1850
      %v1886 = vadd.f32 %v1885, %v1851
      %v1887 = vadd.f32 %v1886, %v1852
      %v1888 = vadd.f32 %v1887, %v1853
      %v1889 = vadd.f32 %v1888, %v1854
      %v1890 = vadd.f32 %v1889, %v1855
      %v1891 = vadd.f32 %v1890, %v1856
      %v1892 = vadd.f32 %v1891, %v1857
      %v1893 = vadd.f32 %v1892, %v1858
      %v1894 = vadd.f32 %v1893, %v1859
      %v1895 = vadd.f32 %v1894, %v1860
      %v1896 = vadd.f32 %v1895, %v1861
      %v1897 = vadd.f32 %v1896, %v1862
      %v1898 = vadd.f32 %v1897, %v1863
      %v1899 = vadd.f32 %v1898, %v1864
      %v1900 = vadd.f32 %v1899, %v1865
      %v1901 = vadd.f32 %v1900, %v1866
      %v1902 = vadd.f32 %v1901, %v1867
      %v1903 = vadd.f32 %v1902, %v1868
      %v1904 = vrot.slane %v1903, 4
      %v1905 = vadd.f32 %v1903, %v1904
      %v1906 = vrot.slane %v1905, 2
      %v1907 = vadd.f32 %v1905, %v1906
      %v1908 = vrot.slane %v1907, 1
      %v1909 = vadd.f32 %v1907, %v1908
      %v1910 = vmul.f32 %v1909, 0.0034722222
      %v1911 = vmul.f32 %v1832, %v1832
      %v1912 = vsub.f32 %v1910, %v1911
      %v1913 = vmax.f32 %v1912, 0.0
      %v1914 = vsub.f32 %v1684, %v1832
      %v1915 = vsub.f32 %v1687, %v1832
      %v1916 = vsub.f32 %v1690, %v1832
      %v1917 = vsub.f32 %v1693, %v1832
      %v1918 = vsub.f32 %v1696, %v1832
      %v1919 = vsub.f32 %v1699, %v1832
      %v1920 = vsub.f32 %v1702, %v1832
      %v1921 = vsub.f32 %v1705, %v1832
      %v1922 = vsub.f32 %v1708, %v1832
      %v1923 = vsub.f32 %v1711, %v1832
      %v1924 = vsub.f32 %v1714, %v1832
      %v1925 = vsub.f32 %v1717, %v1832
      %v1926 = vsub.f32 %v1720, %v1832
      %v1927 = vsub.f32 %v1723, %v1832
      %v1928 = vsub.f32 %v1726, %v1832
      %v1929 = vsub.f32 %v1729, %v1832
      %v1930 = vsub.f32 %v1732, %v1832
      %v1931 = vsub.f32 %v1735, %v1832
      %v1932 = vsub.f32 %v1738, %v1832
      %v1933 = vsub.f32 %v1741, %v1832
      %v1934 = vsub.f32 %v1744, %v1832
      %v1935 = vsub.f32 %v1747, %v1832
      %v1936 = vsub.f32 %v1750, %v1832
      %v1937 = vsub.f32 %v1753, %v1832
      %v1938 = vsub.f32 %v1756, %v1832
      %v1939 = vsub.f32 %v1759, %v1832
      %v1940 = vsub.f32 %v1762, %v1832
      %v1941 = vsub.f32 %v1765, %v1832
      %v1942 = vsub.f32 %v1768, %v1832
      %v1943 = vsub.f32 %v1771, %v1832
      %v1944 = vsub.f32 %v1774, %v1832
      %v1945 = vsub.f32 %v1777, %v1832
      %v1946 = vsub.f32 %v1780, %v1832
      %v1947 = vsub.f32 %v1783, %v1832
      %v1948 = vsub.f32 %v1786, %v1832
      %v1949 = vsub.f32 %v1789, %v1832
      %v1950 = vadd.f32 %v1913, 1e-05
      %v1951 = vrsqrt.pop %v1950
      %v1952 = vmul.f32 %v1951, %v1950
      %v1953 = vmul.f32 %v1952, %v1951
      %v1954 = vmul.f32 0.5, %v1953
      %v1955 = vsub.f32 1.5, %v1954
      %v1956 = vmul.f32 %v1951, %v1955
      %vm1957 = vweird.f32 %v1950
      %vm1958 = vweird.f32 %v1951
      %vm1959 = vmor %vm1957, %vm1958
      %v1960 = vsel %vm1959, %v1951, %v1956
      %v1961 = vmul.f32 %v1914, %v1960
      %v1962 = vmul.f32 %v1915, %v1960
      %v1963 = vmul.f32 %v1916, %v1960
      %v1964 = vmul.f32 %v1917, %v1960
      %v1965 = vmul.f32 %v1918, %v1960
      %v1966 = vmul.f32 %v1919, %v1960
      %v1967 = vmul.f32 %v1920, %v1960
      %v1968 = vmul.f32 %v1921, %v1960
      %v1969 = vmul.f32 %v1922, %v1960
      %v1970 = vmul.f32 %v1923, %v1960
      %v1971 = vmul.f32 %v1924, %v1960
      %v1972 = vmul.f32 %v1925, %v1960
      %v1973 = vmul.f32 %v1926, %v1960
      %v1974 = vmul.f32 %v1927, %v1960
      %v1975 = vmul.f32 %v1928, %v1960
      %v1976 = vmul.f32 %v1929, %v1960
      %v1977 = vmul.f32 %v1930, %v1960
      %v1978 = vmul.f32 %v1931, %v1960
      %v1979 = vmul.f32 %v1932, %v1960
      %v1980 = vmul.f32 %v1933, %v1960
      %v1981 = vmul.f32 %v1934, %v1960
      %v1982 = vmul.f32 %v1935, %v1960
      %v1983 = vmul.f32 %v1936, %v1960
      %v1984 = vmul.f32 %v1937, %v1960
      %v1985 = vmul.f32 %v1938, %v1960
      %v1986 = vmul.f32 %v1939, %v1960
      %v1987 = vmul.f32 %v1940, %v1960
      %v1988 = vmul.f32 %v1941, %v1960
      %v1989 = vmul.f32 %v1942, %v1960
      %v1990 = vmul.f32 %v1943, %v1960
      %v1991 = vmul.f32 %v1944, %v1960
      %v1992 = vmul.f32 %v1945, %v1960
      %v1993 = vmul.f32 %v1946, %v1960
      %v1994 = vmul.f32 %v1947, %v1960
      %v1995 = vmul.f32 %v1948, %v1960
      %v1996 = vmul.f32 %v1949, %v1960
      %v1997 = vld [vmem:[%s2] sm:$0x1]
      %v1999 = vperm.slane %v1997, 0
      %v2001 = vmul.f32 %v1961, %v1999
      %v2002 = vmul.f32 %v1962, %v1999
      %v2003 = vmul.f32 %v1963, %v1999
      %v2004 = vmul.f32 %v1964, %v1999
      %v2005 = vmul.f32 %v1965, %v1999
      %v2006 = vmul.f32 %v1966, %v1999
      %v2007 = vmul.f32 %v1967, %v1999
      %v2008 = vmul.f32 %v1968, %v1999
      %v2009 = vmul.f32 %v1969, %v1999
      %v2010 = vmul.f32 %v1970, %v1999
      %v2011 = vmul.f32 %v1971, %v1999
      %v2012 = vmul.f32 %v1972, %v1999
      %v2013 = vmul.f32 %v1973, %v1999
      %v2014 = vmul.f32 %v1974, %v1999
      %v2015 = vmul.f32 %v1975, %v1999
      %v2016 = vmul.f32 %v1976, %v1999
      %v2017 = vmul.f32 %v1977, %v1999
      %v2018 = vmul.f32 %v1978, %v1999
      %v2019 = vmul.f32 %v1979, %v1999
      %v2020 = vmul.f32 %v1980, %v1999
      %v2021 = vmul.f32 %v1981, %v1999
      %v2022 = vmul.f32 %v1982, %v1999
      %v2023 = vmul.f32 %v1983, %v1999
      %v2024 = vmul.f32 %v1984, %v1999
      %v2025 = vmul.f32 %v1985, %v1999
      %v2026 = vmul.f32 %v1986, %v1999
      %v2027 = vmul.f32 %v1987, %v1999
      %v2028 = vmul.f32 %v1988, %v1999
      %v2029 = vmul.f32 %v1989, %v1999
      %v2030 = vmul.f32 %v1990, %v1999
      %v2031 = vmul.f32 %v1991, %v1999
      %v2032 = vmul.f32 %v1992, %v1999
      %v2033 = vmul.f32 %v1993, %v1999
      %v2034 = vmul.f32 %v1994, %v1999
      %v2035 = vmul.f32 %v1995, %v1999
      %v2036 = vmul.f32 %v1996, %v1999
      %v2037 = vld [vmem:[%s3] sm:$0x1]
      %v2039 = vperm.slane %v2037, 0
      %v2041 = vadd.f32 %v2001, %v2039
      %v2042 = vadd.f32 %v2002, %v2039
      %v2043 = vadd.f32 %v2003, %v2039
      %v2044 = vadd.f32 %v2004, %v2039
      %v2045 = vadd.f32 %v2005, %v2039
      %v2046 = vadd.f32 %v2006, %v2039
      %v2047 = vadd.f32 %v2007, %v2039
      %v2048 = vadd.f32 %v2008, %v2039
      %v2049 = vadd.f32 %v2009, %v2039
      %v2050 = vadd.f32 %v2010, %v2039
      %v2051 = vadd.f32 %v2011, %v2039
      %v2052 = vadd.f32 %v2012, %v2039
      %v2053 = vadd.f32 %v2013, %v2039
      %v2054 = vadd.f32 %v2014, %v2039
      %v2055 = vadd.f32 %v2015, %v2039
      %v2056 = vadd.f32 %v2016, %v2039
      %v2057 = vadd.f32 %v2017, %v2039
      %v2058 = vadd.f32 %v2018, %v2039
      %v2059 = vadd.f32 %v2019, %v2039
      %v2060 = vadd.f32 %v2020, %v2039
      %v2061 = vadd.f32 %v2021, %v2039
      %v2062 = vadd.f32 %v2022, %v2039
      %v2063 = vadd.f32 %v2023, %v2039
      %v2064 = vadd.f32 %v2024, %v2039
      %v2065 = vadd.f32 %v2025, %v2039
      %v2066 = vadd.f32 %v2026, %v2039
      %v2067 = vadd.f32 %v2027, %v2039
      %v2068 = vadd.f32 %v2028, %v2039
      %v2069 = vadd.f32 %v2029, %v2039
      %v2070 = vadd.f32 %v2030, %v2039
      %v2071 = vadd.f32 %v2031, %v2039
      %v2072 = vadd.f32 %v2032, %v2039
      %v2073 = vadd.f32 %v2033, %v2039
      %v2074 = vadd.f32 %v2034, %v2039
      %v2075 = vadd.f32 %v2035, %v2039
      %v2076 = vadd.f32 %v2036, %v2039
      %v2077 = vmax.f32 %v2041, 0.0
      %v2078 = vmax.f32 %v2042, 0.0
      %v2079 = vmax.f32 %v2043, 0.0
      %v2080 = vmax.f32 %v2044, 0.0
      %v2081 = vmax.f32 %v2045, 0.0
      %v2082 = vmax.f32 %v2046, 0.0
      %v2083 = vmax.f32 %v2047, 0.0
      %v2084 = vmax.f32 %v2048, 0.0
      %v2085 = vmax.f32 %v2049, 0.0
      %v2086 = vmax.f32 %v2050, 0.0
      %v2087 = vmax.f32 %v2051, 0.0
      %v2088 = vmax.f32 %v2052, 0.0
      %v2089 = vmax.f32 %v2053, 0.0
      %v2090 = vmax.f32 %v2054, 0.0
      %v2091 = vmax.f32 %v2055, 0.0
      %v2092 = vmax.f32 %v2056, 0.0
      %v2093 = vmax.f32 %v2057, 0.0
      %v2094 = vmax.f32 %v2058, 0.0
      %v2095 = vmax.f32 %v2059, 0.0
      %v2096 = vmax.f32 %v2060, 0.0
      %v2097 = vmax.f32 %v2061, 0.0
      %v2098 = vmax.f32 %v2062, 0.0
      %v2099 = vmax.f32 %v2063, 0.0
      %v2100 = vmax.f32 %v2064, 0.0
      %v2101 = vmax.f32 %v2065, 0.0
      %v2102 = vmax.f32 %v2066, 0.0
      %v2103 = vmax.f32 %v2067, 0.0
      %v2104 = vmax.f32 %v2068, 0.0
      %v2105 = vmax.f32 %v2069, 0.0
      %v2106 = vmax.f32 %v2070, 0.0
      %v2107 = vmax.f32 %v2071, 0.0
      %v2108 = vmax.f32 %v2072, 0.0
      %v2109 = vmax.f32 %v2073, 0.0
      %v2110 = vmax.f32 %v2074, 0.0
      %v2111 = vmax.f32 %v2075, 0.0
      %v2112 = vmax.f32 %v2076, 0.0
      %2113 = vst [vmem:[%s197] sm:$0xff] %v2077
      %2114 = vst [vmem:[%s197 + $0x8] sm:$0xff] %v2078
      %2115 = vst [vmem:[%s197 + $0x10] sm:$0xff] %v2079
      %2116 = vst [vmem:[%s197 + $0x18] sm:$0xff] %v2080
      %2117 = vst [vmem:[%s197 + $0x20] sm:$0xff] %v2081
      %2118 = vst [vmem:[%s197 + $0x28] sm:$0xff] %v2082
      %2119 = vst [vmem:[%s197 + $0x30] sm:$0xff] %v2083
      %2120 = vst [vmem:[%s197 + $0x38] sm:$0xff] %v2084
      %2121 = vst [vmem:[%s197 + $0x40] sm:$0xff] %v2085
      %2122 = vst [vmem:[%s197 + $0x48] sm:$0xff] %v2086
      %2123 = vst [vmem:[%s197 + $0x50] sm:$0xff] %v2087
      %2124 = vst [vmem:[%s197 + $0x58] sm:$0xff] %v2088
      %2125 = vst [vmem:[%s197 + $0x60] sm:$0xff] %v2089
      %2126 = vst [vmem:[%s197 + $0x68] sm:$0xff] %v2090
      %2127 = vst [vmem:[%s197 + $0x70] sm:$0xff] %v2091
      %2128 = vst [vmem:[%s197 + $0x78] sm:$0xff] %v2092
      %2129 = vst [vmem:[%s197 + $0x80] sm:$0xff] %v2093
      %2130 = vst [vmem:[%s197 + $0x88] sm:$0xff] %v2094
      %2131 = vst [vmem:[%s197 + $0x90] sm:$0xff] %v2095
      %2132 = vst [vmem:[%s197 + $0x98] sm:$0xff] %v2096
      %2133 = vst [vmem:[%s197 + $0xa0] sm:$0xff] %v2097
      %2134 = vst [vmem:[%s197 + $0xa8] sm:$0xff] %v2098
      %2135 = vst [vmem:[%s197 + $0xb0] sm:$0xff] %v2099
      %2136 = vst [vmem:[%s197 + $0xb8] sm:$0xff] %v2100
      %2137 = vst [vmem:[%s197 + $0xc0] sm:$0xff] %v2101
      %2138 = vst [vmem:[%s197 + $0xc8] sm:$0xff] %v2102
      %2139 = vst [vmem:[%s197 + $0xd0] sm:$0xff] %v2103
      %2140 = vst [vmem:[%s197 + $0xd8] sm:$0xff] %v2104
      %2141 = vst [vmem:[%s197 + $0xe0] sm:$0xff] %v2105
      %2142 = vst [vmem:[%s197 + $0xe8] sm:$0xff] %v2106
      %2143 = vst [vmem:[%s197 + $0xf0] sm:$0xff] %v2107
      %2144 = vst [vmem:[%s197 + $0xf8] sm:$0xff] %v2108
      %2145 = vst [vmem:[%s197 + $0x100] sm:$0xff] %v2109
      %2146 = vst [vmem:[%s197 + $0x108] sm:$0xff] %v2110
      %2147 = vst [vmem:[%s197 + $0x110] sm:$0xff] %v2111
      %2148 = vst [vmem:[%s197 + $0x118] sm:$0xff] %v2112
      %p2149 = scmp.lt.s32.totalorder %s15, 1
      %s2150 = scalar_select %p2149, %s15, 1
      %s2151 = smul.addr %s2150, 36
      %s2152 = smul.addr %s2151, 8
      %s2153 = scalar_lea.vmem %s4, %s2152
      // Predicated region
      $region37: #{siamese_forward.5} parent=35 // pred_check
        %p2154 = pneg %p122
      $region38: #{siamese_forward.5} parent=35 // pred_check_branch
        %2156 = sbr.rel (%p2154) target = $region40
      $region39: #{siamese_forward.5} parent=35 // pred_region
        _
      $region40: #{siamese_forward.5} parent=35 // pred_fallthru
        _
    $region36: #{siamese_forward.5} parent=5 // pred_fallthru
      _
    %p2157 = scmp.le.s32.totalorder 2, %s10
    // Predicated region
    $region41: #{siamese_forward.5} parent=5 // pred_check
      %p2158 = pneg %p2157
    $region42: #{siamese_forward.5} parent=5 // pred_check_branch
      %2160 = sbr.rel (%p2158) target = $region44
    $region43: #{siamese_forward.5} parent=5 // pred_region
      %s2161 = ssub.s32 %s10, 2
      // Predicated region
      $region45: #{siamese_forward.5} parent=43 // pred_check
        %p2162 = pneg %p128
      $region46: #{siamese_forward.5} parent=43 // pred_check_branch
        %2164 = sbr.rel (%p2162) target = $region48
      $region47: #{siamese_forward.5} parent=43 // pred_region
        %p2165 = scmp.lt.s32.totalorder %s16, 1
        %s2166 = scalar_select %p2165, %s16, 1
        %s2167 = smul.addr %s2166, 36
        %s2168 = smul.addr %s2167, 8
        %s2169 = scalar_lea.vmem %s4, %s2168
      $region48: #{siamese_forward.5} parent=43 // pred_fallthru
        _
    $region44: #{siamese_forward.5} parent=5 // pred_fallthru
      _
  $region6: #{siamese_forward.5} parent=0 // loop_footer
    %s14 = sadd.s32 1, %s10
  $region7: #{siamese_forward.5} parent=0 // loop_footer_branch
    %9 = sbr.rel target = $region3
  $region8: #{siamese_forward.5} parent=0 // loop_exit
    _

// kernel: siamese_forward.6
$region0: #{siamese_forward.6}
  #allocation0 [shape = 'u32[]', space=smem, size = 0x4, offset = 0x4, fixed_abs, tag = 'smem constant byte address 0x4 - core index']
  #allocation1 [shape = 'u32[72,128]{1,0:T(1,128)}', space=vmem, size = 0x9000, scoped, tag = 'internal scratch']
  %s0 = inlined_call_operand.vmem [shape: f32[2,162,1152], index: 0, kind: input, shape index: {}]
  %s1 = inlined_call_operand.vmem [shape: f32[1152,128], index: 1, kind: input, shape index: {}]
  %s2 = inlined_call_operand.vmem [shape: f32[1,128], index: 2, kind: input, shape index: {}]
  %s3 = inlined_call_operand.vmem [shape: f32[1,128], index: 3, kind: input, shape index: {}]
  %s4 = inlined_call_operand.vmem [shape: f32[2,162,128], index: 4, kind: output, shape index: {}]
  %s5 = sld [smem:[#allocation0]]
  $region49: #{siamese_forward.6} parent=0
    _
  %s7 = ssub.s32 1, %s5
  %s8 = scalar_select 0, %s7, %s5
  loop: start=0, step=1, limit=4
  $region2: #{siamese_forward.6} parent=0 // loop_pre_header
    _
  $region3: #{siamese_forward.6} parent=0 // loop_header
    %s10 = sphi 0, %s14
    %p11 = scmp.ge.s32.totalorder %s10, 4
    %s20 = sphi 0, %s22
    %s23 = sphi 0, %s20
    %s24 = sphi 0, %s23
    %s40 = sphi 0, %s24
    %s44 = sphi 0, %s44
    %s46 = sphi 0, %s44
    %s47 = sphi 0, %s46
    %s61 = sphi 0, %s47
    %s65 = sphi 0, %s65
    %s67 = sphi 0, %s65
    %s68 = sphi 0, %s67
    %s82 = sphi 0, %s68
    %s86 = sphi 0, %s86
    %s88 = sphi 0, %s86
    %s89 = sphi 0, %s88
    %s103 = sphi 0, %s89
    %s109 = sphi 0, %s111
    %s112 = sphi 0, %s109
    %s113 = sphi 0, %s112
    %s129 = sphi 0, %s113
  $region4: #{siamese_forward.6} parent=0 // loop_header_branch
    %13 = sbr.rel (%p11) target = $region8
  $region5: #{siamese_forward.6} parent=0 // loop_body
    %s15 = ssub.s32 %s10, 1
    %s16 = ssub.s32 %s10, 2
    %s17 = sadd.s32 %s10, 1
    %s18 = ssub.s32 %s10, %s17
    %p19 = scmp.eq.s32.totalorder %s18, 0
    %s21 = sadd.s32 %s20, 1
    %s22 = scalar_select %p19, %s20, %s21
    %p25 = pneg %p19
    %p26 = scmp.eq.s32.totalorder %s10, 1
    %p27 = por %p25, %p26
    %p28 = scmp.ne.s32.totalorder %s20, %s23
    %p29 = scmp.eq.s32.totalorder %s10, 0
    %p30 = por %p28, %p29
    %p31 = scmp.ne.s32.totalorder %s20, %s23
    %p32 = scmp.eq.s32.totalorder %s15, 1
    %p33 = por %p31, %p32
    %p34 = scmp.ne.s32.totalorder %s23, %s24
    %p35 = scmp.eq.s32.totalorder %s15, 0
    %p36 = por %p34, %p35
    %p37 = scmp.ne.s32.totalorder %s23, %s24
    %p38 = scmp.eq.s32.totalorder %s16, 1
    %p39 = por %p37, %p38
    %p41 = scmp.ne.s32.totalorder %s24, %s40
    %p42 = scmp.eq.s32.totalorder %s16, 0
    %p43 = por %p41, %p42
    %s45 = sadd.s32 %s44, 1
    %p48 = scmp.eq.s32.totalorder %s10, 1
    %p49 = scmp.ne.s32.totalorder %s44, %s46
    %p50 = scmp.eq.s32.totalorder %s10, 0
    %p51 = por %p49, %p50
    %p52 = scmp.ne.s32.totalorder %s44, %s46
    %p53 = scmp.eq.s32.totalorder %s15, 1
    %p54 = por %p52, %p53
    %p55 = scmp.ne.s32.totalorder %s46, %s47
    %p56 = scmp.eq.s32.totalorder %s15, 0
    %p57 = por %p55, %p56
    %p58 = scmp.ne.s32.totalorder %s46, %s47
    %p59 = scmp.eq.s32.totalorder %s16, 1
    %p60 = por %p58, %p59
    %p62 = scmp.ne.s32.totalorder %s47, %s61
    %p63 = scmp.eq.s32.totalorder %s16, 0
    %p64 = por %p62, %p63
    %s66 = sadd.s32 %s65, 1
    %p69 = scmp.eq.s32.totalorder %s10, 1
    %p70 = scmp.ne.s32.totalorder %s65, %s67
    %p71 = scmp.eq.s32.totalorder %s10, 0
    %p72 = por %p70, %p71
    %p73 = scmp.ne.s32.totalorder %s65, %s67
    %p74 = scmp.eq.s32.totalorder %s15, 1
    %p75 = por %p73, %p74
    %p76 = scmp.ne.s32.totalorder %s67, %s68
    %p77 = scmp.eq.s32.totalorder %s15, 0
    %p78 = por %p76, %p77
    %p79 = scmp.ne.s32.totalorder %s67, %s68
    %p80 = scmp.eq.s32.totalorder %s16, 1
    %p81 = por %p79, %p80
    %p83 = scmp.ne.s32.totalorder %s68, %s82
    %p84 = scmp.eq.s32.totalorder %s16, 0
    %p85 = por %p83, %p84
    %s87 = sadd.s32 %s86, 1
    %p90 = scmp.eq.s32.totalorder %s10, 1
    %p91 = scmp.ne.s32.totalorder %s86, %s88
    %p92 = scmp.eq.s32.totalorder %s10, 0
    %p93 = por %p91, %p92
    %p94 = scmp.ne.s32.totalorder %s86, %s88
    %p95 = scmp.eq.s32.totalorder %s15, 1
    %p96 = por %p94, %p95
    %p97 = scmp.ne.s32.totalorder %s88, %s89
    %p98 = scmp.eq.s32.totalorder %s15, 0
    %p99 = por %p97, %p98
    %p100 = scmp.ne.s32.totalorder %s88, %s89
    %p101 = scmp.eq.s32.totalorder %s16, 1
    %p102 = por %p100, %p101
    %p104 = scmp.ne.s32.totalorder %s89, %s103
    %p105 = scmp.eq.s32.totalorder %s16, 0
    %p106 = por %p104, %p105
    %s107 = ssub.s32 %s10, %s17
    %p108 = scmp.eq.s32.totalorder %s107, 0
    %s110 = sadd.s32 %s109, 1
    %s111 = scalar_select %p108, %s109, %s110
    %p114 = pneg %p108
    %p115 = scmp.eq.s32.totalorder %s10, 1
    %p116 = por %p114, %p115
    %p117 = scmp.ne.s32.totalorder %s109, %s112
    %p118 = scmp.eq.s32.totalorder %s10, 0
    %p119 = por %p117, %p118
    %p120 = scmp.ne.s32.totalorder %s109, %s112
    %p121 = scmp.eq.s32.totalorder %s15, 1
    %p122 = por %p120, %p121
    %p123 = scmp.ne.s32.totalorder %s112, %s113
    %p124 = scmp.eq.s32.totalorder %s15, 0
    %p125 = por %p123, %p124
    %p126 = scmp.ne.s32.totalorder %s112, %s113
    %p127 = scmp.eq.s32.totalorder %s16, 1
    %p128 = por %p126, %p127
    %p130 = scmp.ne.s32.totalorder %s113, %s129
    %p131 = scmp.eq.s32.totalorder %s16, 0
    %p132 = por %p130, %p131
    %p133 = scmp.le.s32.totalorder 1, %s10
    %p134 = scmp.lt.s32.totalorder %s10, 3
    %p135 = pnand %p133, %p134
    %p136 = pneg %p135
    // Predicated region
    $region9: #{siamese_forward.6} parent=5 // pred_check
      _
    $region10: #{siamese_forward.6} parent=5 // pred_check_branch
      %138 = sbr.rel (%p135) target = $region12
    $region11: #{siamese_forward.6} parent=5 // pred_region
      %s139 = ssub.s32 %s10, 1
      // Predicated region
      $region13: #{siamese_forward.6} parent=11 // pred_check
        %p140 = pneg %p57
      $region14: #{siamese_forward.6} parent=11 // pred_check_branch
        %142 = sbr.rel (%p140) target = $region16
      $region15: #{siamese_forward.6} parent=11 // pred_region
        _
      $region16: #{siamese_forward.6} parent=11 // pred_fallthru
        _
      // Predicated region
      $region17: #{siamese_forward.6} parent=11 // pred_check
        %p143 = pneg %p78
      $region18: #{siamese_forward.6} parent=11 // pred_check_branch
        %145 = sbr.rel (%p143) target = $region20
      $region19: #{siamese_forward.6} parent=11 // pred_region
        _
      $region20: #{siamese_forward.6} parent=11 // pred_fallthru
        _
      // Predicated region
      $region21: #{siamese_forward.6} parent=11 // pred_check
        %p146 = pneg %p99
      $region22: #{siamese_forward.6} parent=11 // pred_check_branch
        %148 = sbr.rel (%p146) target = $region24
      $region23: #{siamese_forward.6} parent=11 // pred_region
        _
      $region24: #{siamese_forward.6} parent=11 // pred_fallthru
        _
    $region12: #{siamese_forward.6} parent=5 // pred_fallthru
      _
    %p149 = scmp.lt.s32.totalorder %s10, 2
    // Predicated region
    $region25: #{siamese_forward.6} parent=5 // pred_check
      %p150 = pneg %p149
    $region26: #{siamese_forward.6} parent=5 // pred_check_branch
      %152 = sbr.rel (%p150) target = $region28
    $region27: #{siamese_forward.6} parent=5 // pred_region
      // Predicated region
      $region29: #{siamese_forward.6} parent=27 // pred_check
        %p153 = pneg %p30
      $region30: #{siamese_forward.6} parent=27 // pred_check_branch
        %155 = sbr.rel (%p153) target = $region32
      $region31: #{siamese_forward.6} parent=27 // pred_region
        %p156 = scmp.lt.s32.totalorder %s10, 1
        %s157 = scalar_select %p156, %s10, 1
        %s158 = smul.addr %s157, 189
        %s159 = smul.addr %s158, 8
        %s160 = scalar_lea.vmem %s0, %s159
      $region32: #{siamese_forward.6} parent=27 // pred_fallthru
        _
    $region28: #{siamese_forward.6} parent=5 // pred_fallthru
      _
    %p161 = scmp.le.s32.totalorder 1, %s10
    %p162 = scmp.lt.s32.totalorder %s10, 3
    %p163 = pnand %p161, %p162
    %p164 = pneg %p163
    // Predicated region
    $region33: #{siamese_forward.6} parent=5 // pred_check
      _
    $region34: #{siamese_forward.6} parent=5 // pred_check_branch
      %166 = sbr.rel (%p163) target = $region36
    $region35: #{siamese_forward.6} parent=5 // pred_region
      %s167 = ssub.s32 %s10, 1
      %p168 = scmp.lt.s32.totalorder %s15, 1
      %s169 = scalar_select %p168, %s15, 1
      %s170 = smul.addr %s169, 189
      %s171 = smul.addr %s170, 8
      %s172 = scalar_lea.vmem %s0, %s171
      %p173 = pneg %p36
      %p174 = pneg %p33
      %p175 = pneg %p57
      %p176 = pneg %p54
      %p177 = pneg %p78
      %p178 = pneg %p75
      %p179 = pneg %p99
      %p180 = pneg %p96
      %p181 = pneg %p125
      %p182 = pneg %p122
      %p183 = scmp.lt.s32.totalorder %s15, 1
      %s184 = scalar_select %p183, %s15, 1
      %s185 = smul.addr %s184, 21
      %s186 = smul.addr %s185, 8
      %s187 = scalar_lea.vmem %s4, %s186
      %p188 = scmp.lt.s32.totalorder %s15, 1
      %s189 = scalar_select %p188, %s15, 1
      %s190 = smul.addr %s189, 189
      %s191 = smul.addr %s190, 8
      %s192 = scalar_lea.vmem %s0, %s191
      %p193 = scmp.lt.s32.totalorder %s15, 1
      %s194 = scalar_select %p193, %s15, 1
      %s195 = smul.addr %s194, 21
      %s196 = smul.addr %s195, 8
      %s197 = scalar_lea.vmem %s4, %s196
      %v198 = vld [vmem:[%s192] sm:$0xff]
      %v199 = vld [vmem:[%s192 + $0x8] sm:$0xff]
      %v200 = vld [vmem:[%s192 + $0x10] sm:$0xff]
      %v201 = vld [vmem:[%s192 + $0x18] sm:$0xff]
      %v202 = vld [vmem:[%s192 + $0x20] sm:$0xff]
      %v203 = vld [vmem:[%s192 + $0x28] sm:$0xff]
      %v204 = vld [vmem:[%s192 + $0x30] sm:$0xff]
      %v205 = vld [vmem:[%s192 + $0x38] sm:$0xff]
      %v206 = vld [vmem:[%s192 + $0x40] sm:$0xff]
      %v207 = vld [vmem:[%s192 + $0x48] sm:$0xff]
      %v208 = vld [vmem:[%s192 + $0x50] sm:$0xff]
      %v209 = vld [vmem:[%s192 + $0x58] sm:$0xff]
      %v210 = vld [vmem:[%s192 + $0x60] sm:$0xff]
      %v211 = vld [vmem:[%s192 + $0x68] sm:$0xff]
      %v212 = vld [vmem:[%s192 + $0x70] sm:$0xff]
      %v213 = vld [vmem:[%s192 + $0x78] sm:$0xff]
      %v214 = vld [vmem:[%s192 + $0x80] sm:$0xff]
      %v215 = vld [vmem:[%s192 + $0x88] sm:$0xff]
      %v216 = vld [vmem:[%s192 + $0x90] sm:$0xff]
      %v217 = vld [vmem:[%s192 + $0x98] sm:$0xff]
      %v218 = vld [vmem:[%s192 + $0xa0] sm:$0xff]
      %v219 = vld [vmem:[%s192 + $0xa8] sm:$0xff]
      %v220 = vld [vmem:[%s192 + $0xb0] sm:$0xff]
      %v221 = vld [vmem:[%s192 + $0xb8] sm:$0xff]
      %v222 = vld [vmem:[%s192 + $0xc0] sm:$0xff]
      %v223 = vld [vmem:[%s192 + $0xc8] sm:$0xff]
      %v224 = vld [vmem:[%s192 + $0xd0] sm:$0xff]
      %v225 = vld [vmem:[%s192 + $0xd8] sm:$0xff]
      %v226 = vld [vmem:[%s192 + $0xe0] sm:$0xff]
      %v227 = vld [vmem:[%s192 + $0xe8] sm:$0xff]
      %v228 = vld [vmem:[%s192 + $0xf0] sm:$0xff]
      %v229 = vld [vmem:[%s192 + $0xf8] sm:$0xff]
      %v230 = vld [vmem:[%s192 + $0x100] sm:$0xff]
      %v231 = vld [vmem:[%s192 + $0x108] sm:$0xff]
      %v232 = vld [vmem:[%s192 + $0x110] sm:$0xff]
      %v233 = vld [vmem:[%s192 + $0x118] sm:$0xff]
      %v234 = vld [vmem:[%s192 + $0x120] sm:$0xff]
      %v235 = vld [vmem:[%s192 + $0x128] sm:$0xff]
      %v236 = vld [vmem:[%s192 + $0x130] sm:$0xff]
      %v237 = vld [vmem:[%s192 + $0x138] sm:$0xff]
      %v238 = vld [vmem:[%s192 + $0x140] sm:$0xff]
      %v239 = vld [vmem:[%s192 + $0x148] sm:$0xff]
      %v240 = vld [vmem:[%s192 + $0x150] sm:$0xff]
      %v241 = vld [vmem:[%s192 + $0x158] sm:$0xff]
      %v242 = vld [vmem:[%s192 + $0x160] sm:$0xff]
      %v243 = vld [vmem:[%s192 + $0x168] sm:$0xff]
      %v244 = vld [vmem:[%s192 + $0x170] sm:$0xff]
      %v245 = vld [vmem:[%s192 + $0x178] sm:$0xff]
      %v246 = vld [vmem:[%s192 + $0x180] sm:$0xff]
      %v247 = vld [vmem:[%s192 + $0x188] sm:$0xff]
      %v248 = vld [vmem:[%s192 + $0x190] sm:$0xff]
      %v249 = vld [vmem:[%s192 + $0x198] sm:$0xff]
      %v250 = vld [vmem:[%s192 + $0x1a0] sm:$0xff]
      %v251 = vld [vmem:[%s192 + $0x1a8] sm:$0xff]
      %v252 = vld [vmem:[%s192 + $0x1b0] sm:$0xff]
      %v253 = vld [vmem:[%s192 + $0x1b8] sm:$0xff]
      %v254 = vld [vmem:[%s192 + $0x1c0] sm:$0xff]
      %v255 = vld [vmem:[%s192 + $0x1c8] sm:$0xff]
      %v256 = vld [vmem:[%s192 + $0x1d0] sm:$0xff]
      %v257 = vld [vmem:[%s192 + $0x1d8] sm:$0xff]
      %v258 = vld [vmem:[%s192 + $0x1e0] sm:$0xff]
      %v259 = vld [vmem:[%s192 + $0x1e8] sm:$0xff]
      %v260 = vld [vmem:[%s192 + $0x1f0] sm:$0xff]
      %v261 = vld [vmem:[%s192 + $0x1f8] sm:$0xff]
      %v262 = vld [vmem:[%s192 + $0x200] sm:$0xff]
      %v263 = vld [vmem:[%s192 + $0x208] sm:$0xff]
      %v264 = vld [vmem:[%s192 + $0x210] sm:$0xff]
      %v265 = vld [vmem:[%s192 + $0x218] sm:$0xff]
      %v266 = vld [vmem:[%s192 + $0x220] sm:$0xff]
      %v267 = vld [vmem:[%s192 + $0x228] sm:$0xff]
      %v268 = vld [vmem:[%s192 + $0x230] sm:$0xff]
      %v269 = vld [vmem:[%s192 + $0x238] sm:$0xff]
      %v270 = vld [vmem:[%s192 + $0x240] sm:$0xff]
      %v271 = vld [vmem:[%s192 + $0x248] sm:$0xff]
      %v272 = vld [vmem:[%s192 + $0x250] sm:$0xff]
      %v273 = vld [vmem:[%s192 + $0x258] sm:$0xff]
      %v274 = vld [vmem:[%s192 + $0x260] sm:$0xff]
      %v275 = vld [vmem:[%s192 + $0x268] sm:$0xff]
      %v276 = vld [vmem:[%s192 + $0x270] sm:$0xff]
      %v277 = vld [vmem:[%s192 + $0x278] sm:$0xff]
      %v278 = vld [vmem:[%s192 + $0x280] sm:$0xff]
      %v279 = vld [vmem:[%s192 + $0x288] sm:$0xff]
      %v280 = vld [vmem:[%s192 + $0x290] sm:$0xff]
      %v281 = vld [vmem:[%s192 + $0x298] sm:$0xff]
      %v282 = vld [vmem:[%s192 + $0x2a0] sm:$0xff]
      %v283 = vld [vmem:[%s192 + $0x2a8] sm:$0xff]
      %v284 = vld [vmem:[%s192 + $0x2b0] sm:$0xff]
      %v285 = vld [vmem:[%s192 + $0x2b8] sm:$0xff]
      %v286 = vld [vmem:[%s192 + $0x2c0] sm:$0xff]
      %v287 = vld [vmem:[%s192 + $0x2c8] sm:$0xff]
      %v288 = vld [vmem:[%s192 + $0x2d0] sm:$0xff]
      %v289 = vld [vmem:[%s192 + $0x2d8] sm:$0xff]
      %v290 = vld [vmem:[%s192 + $0x2e0] sm:$0xff]
      %v291 = vld [vmem:[%s192 + $0x2e8] sm:$0xff]
      %v292 = vld [vmem:[%s192 + $0x2f0] sm:$0xff]
      %v293 = vld [vmem:[%s192 + $0x2f8] sm:$0xff]
      %v294 = vld [vmem:[%s192 + $0x300] sm:$0xff]
      %v295 = vld [vmem:[%s192 + $0x308] sm:$0xff]
      %v296 = vld [vmem:[%s192 + $0x310] sm:$0xff]
      %v297 = vld [vmem:[%s192 + $0x318] sm:$0xff]
      %v298 = vld [vmem:[%s192 + $0x320] sm:$0xff]
      %v299 = vld [vmem:[%s192 + $0x328] sm:$0xff]
      %v300 = vld [vmem:[%s192 + $0x330] sm:$0xff]
      %v301 = vld [vmem:[%s192 + $0x338] sm:$0xff]
      %v302 = vld [vmem:[%s192 + $0x340] sm:$0xff]
      %v303 = vld [vmem:[%s192 + $0x348] sm:$0xff]
      %v304 = vld [vmem:[%s192 + $0x350] sm:$0xff]
      %v305 = vld [vmem:[%s192 + $0x358] sm:$0xff]
      %v306 = vld [vmem:[%s192 + $0x360] sm:$0xff]
      %v307 = vld [vmem:[%s192 + $0x368] sm:$0xff]
      %v308 = vld [vmem:[%s192 + $0x370] sm:$0xff]
      %v309 = vld [vmem:[%s192 + $0x378] sm:$0xff]
      %v310 = vld [vmem:[%s192 + $0x380] sm:$0xff]
      %v311 = vld [vmem:[%s192 + $0x388] sm:$0xff]
      %v312 = vld [vmem:[%s192 + $0x390] sm:$0xff]
      %v313 = vld [vmem:[%s192 + $0x398] sm:$0xff]
      %v314 = vld [vmem:[%s192 + $0x3a0] sm:$0xff]
      %v315 = vld [vmem:[%s192 + $0x3a8] sm:$0xff]
      %v316 = vld [vmem:[%s192 + $0x3b0] sm:$0xff]
      %v317 = vld [vmem:[%s192 + $0x3b8] sm:$0xff]
      %v318 = vld [vmem:[%s192 + $0x3c0] sm:$0xff]
      %v319 = vld [vmem:[%s192 + $0x3c8] sm:$0xff]
      %v320 = vld [vmem:[%s192 + $0x3d0] sm:$0xff]
      %v321 = vld [vmem:[%s192 + $0x3d8] sm:$0xff]
      %v322 = vld [vmem:[%s192 + $0x3e0] sm:$0xff]
      %v323 = vld [vmem:[%s192 + $0x3e8] sm:$0xff]
      %v324 = vld [vmem:[%s192 + $0x3f0] sm:$0xff]
      %v325 = vld [vmem:[%s192 + $0x3f8] sm:$0xff]
      %v326 = vld [vmem:[%s192 + $0x400] sm:$0xff]
      %v327 = vld [vmem:[%s192 + $0x408] sm:$0xff]
      %v328 = vld [vmem:[%s192 + $0x410] sm:$0xff]
      %v329 = vld [vmem:[%s192 + $0x418] sm:$0xff]
      %v330 = vld [vmem:[%s192 + $0x420] sm:$0xff]
      %v331 = vld [vmem:[%s192 + $0x428] sm:$0xff]
      %v332 = vld [vmem:[%s192 + $0x430] sm:$0xff]
      %v333 = vld [vmem:[%s192 + $0x438] sm:$0xff]
      %v334 = vld [vmem:[%s192 + $0x440] sm:$0xff]
      %v335 = vld [vmem:[%s192 + $0x448] sm:$0xff]
      %v336 = vld [vmem:[%s192 + $0x450] sm:$0xff]
      %v337 = vld [vmem:[%s192 + $0x458] sm:$0xff]
      %v338 = vld [vmem:[%s192 + $0x460] sm:$0xff]
      %v339 = vld [vmem:[%s192 + $0x468] sm:$0xff]
      %v340 = vld [vmem:[%s192 + $0x470] sm:$0xff]
      %v341 = vld [vmem:[%s192 + $0x478] sm:$0xff]
      %v342 = vld [vmem:[%s192 + $0x480] sm:$0xff]
      %v343 = vld [vmem:[%s192 + $0x488] sm:$0xff]
      %v344 = vld [vmem:[%s192 + $0x490] sm:$0xff]
      %v345 = vld [vmem:[%s192 + $0x498] sm:$0xff]
      %v346 = vld [vmem:[%s192 + $0x4a0] sm:$0xff]
      %v347 = vld [vmem:[%s192 + $0x4a8] sm:$0xff]
      %v348 = vld [vmem:[%s192 + $0x4b0] sm:$0xff]
      %v349 = vld [vmem:[%s192 + $0x4b8] sm:$0xff]
      %v350 = vld [vmem:[%s192 + $0x4c0] sm:$0xff]
      %v351 = vld [vmem:[%s192 + $0x4c8] sm:$0xff]
      %v352 = vld [vmem:[%s192 + $0x4d0] sm:$0xff]
      %v353 = vld [vmem:[%s192 + $0x4d8] sm:$0xff]
      %v354 = vld [vmem:[%s192 + $0x4e0] sm:$0xff]
      %v355 = vld [vmem:[%s192 + $0x4e8] sm:$0xff]
      %v356 = vld [vmem:[%s192 + $0x4f0] sm:$0xff]
      %v357 = vld [vmem:[%s192 + $0x4f8] sm:$0xff]
      %v358 = vld [vmem:[%s192 + $0x500] sm:$0xff]
      %v359 = vld [vmem:[%s192 + $0x508] sm:$0xff]
      %v360 = vld [vmem:[%s192 + $0x510] sm:$0xff]
      %v361 = vld [vmem:[%s192 + $0x518] sm:$0xff]
      %v362 = vld [vmem:[%s192 + $0x520] sm:$0xff]
      %v363 = vld [vmem:[%s192 + $0x528] sm:$0xff]
      %v364 = vld [vmem:[%s192 + $0x530] sm:$0xff]
      %v365 = vld [vmem:[%s192 + $0x538] sm:$0xff]
      %v366 = vld [vmem:[%s192 + $0x540] sm:$0xff]
      %v367 = vld [vmem:[%s192 + $0x548] sm:$0xff]
      %v368 = vld [vmem:[%s192 + $0x550] sm:$0xff]
      %v369 = vld [vmem:[%s192 + $0x558] sm:$0xff]
      %v370 = vld [vmem:[%s192 + $0x560] sm:$0xff]
      %v371 = vld [vmem:[%s192 + $0x568] sm:$0xff]
      %v372 = vld [vmem:[%s192 + $0x570] sm:$0xff]
      %v373 = vld [vmem:[%s192 + $0x578] sm:$0xff]
      %v374 = vld [vmem:[%s192 + $0x580] sm:$0xff]
      %v375 = vld [vmem:[%s192 + $0x588] sm:$0xff]
      %v376 = vld [vmem:[%s192 + $0x590] sm:$0xff]
      %v377 = vld [vmem:[%s192 + $0x598] sm:$0xff]
      %v378 = vld [vmem:[%s192 + $0x5a0] sm:$0x3]
      %v379 = vld [vmem:[%s192 + $0x5a8] sm:$0x3]
      %v380 = vld [vmem:[%s192 + $0x5b0] sm:$0x3]
      %v381 = vld [vmem:[%s192 + $0x5b8] sm:$0x3]
      %v382 = vld [vmem:[%s192 + $0x5c0] sm:$0x3]
      %v383 = vld [vmem:[%s192 + $0x5c8] sm:$0x3]
      %v384 = vld [vmem:[%s192 + $0x5d0] sm:$0x3]
      %v385 = vld [vmem:[%s192 + $0x5d8] sm:$0x3]
      %v386 = vld [vmem:[%s192 + $0x5e0] sm:$0x3]
      %v387 = vld [vmem:[%s1] sm:$0xff]
      %v388 = vld [vmem:[%s1 + $0x8] sm:$0xff]
      %v389 = vld [vmem:[%s1 + $0x10] sm:$0xff]
      %v390 = vld [vmem:[%s1 + $0x18] sm:$0xff]
      %v391 = vld [vmem:[%s1 + $0x20] sm:$0xff]
      %v392 = vld [vmem:[%s1 + $0x28] sm:$0xff]
      %v393 = vld [vmem:[%s1 + $0x30] sm:$0xff]
      %v394 = vld [vmem:[%s1 + $0x38] sm:$0xff]
      %v395 = vld [vmem:[%s1 + $0x40] sm:$0xff]
      %v396 = vld [vmem:[%s1 + $0x48] sm:$0xff]
      %v397 = vld [vmem:[%s1 + $0x50] sm:$0xff]
      %v398 = vld [vmem:[%s1 + $0x58] sm:$0xff]
      %v399 = vld [vmem:[%s1 + $0x60] sm:$0xff]
      %v400 = vld [vmem:[%s1 + $0x68] sm:$0xff]
      %v401 = vld [vmem:[%s1 + $0x70] sm:$0xff]
      %v402 = vld [vmem:[%s1 + $0x78] sm:$0xff]
      %v403 = vld [vmem:[%s1 + $0x80] sm:$0xff]
      %v404 = vld [vmem:[%s1 + $0x88] sm:$0xff]
      %v405 = vld [vmem:[%s1 + $0x90] sm:$0xff]
      %v406 = vld [vmem:[%s1 + $0x98] sm:$0xff]
      %v407 = vld [vmem:[%s1 + $0xa0] sm:$0xff]
      %v408 = vld [vmem:[%s1 + $0xa8] sm:$0xff]
      %v409 = vld [vmem:[%s1 + $0xb0] sm:$0xff]
      %v410 = vld [vmem:[%s1 + $0xb8] sm:$0xff]
      %v411 = vld [vmem:[%s1 + $0xc0] sm:$0xff]
      %v412 = vld [vmem:[%s1 + $0xc8] sm:$0xff]
      %v413 = vld [vmem:[%s1 + $0xd0] sm:$0xff]
      %v414 = vld [vmem:[%s1 + $0xd8] sm:$0xff]
      %v415 = vld [vmem:[%s1 + $0xe0] sm:$0xff]
      %v416 = vld [vmem:[%s1 + $0xe8] sm:$0xff]
      %v417 = vld [vmem:[%s1 + $0xf0] sm:$0xff]
      %v418 = vld [vmem:[%s1 + $0xf8] sm:$0xff]
      %v419 = vld [vmem:[%s1 + $0x100] sm:$0xff]
      %v420 = vld [vmem:[%s1 + $0x108] sm:$0xff]
      %v421 = vld [vmem:[%s1 + $0x110] sm:$0xff]
      %v422 = vld [vmem:[%s1 + $0x118] sm:$0xff]
      %v423 = vld [vmem:[%s1 + $0x120] sm:$0xff]
      %v424 = vld [vmem:[%s1 + $0x128] sm:$0xff]
      %v425 = vld [vmem:[%s1 + $0x130] sm:$0xff]
      %v426 = vld [vmem:[%s1 + $0x138] sm:$0xff]
      %v427 = vld [vmem:[%s1 + $0x140] sm:$0xff]
      %v428 = vld [vmem:[%s1 + $0x148] sm:$0xff]
      %v429 = vld [vmem:[%s1 + $0x150] sm:$0xff]
      %v430 = vld [vmem:[%s1 + $0x158] sm:$0xff]
      %v431 = vld [vmem:[%s1 + $0x160] sm:$0xff]
      %v432 = vld [vmem:[%s1 + $0x168] sm:$0xff]
      %v433 = vld [vmem:[%s1 + $0x170] sm:$0xff]
      %v434 = vld [vmem:[%s1 + $0x178] sm:$0xff]
      %v435 = vld [vmem:[%s1 + $0x180] sm:$0xff]
      %v436 = vld [vmem:[%s1 + $0x188] sm:$0xff]
      %v437 = vld [vmem:[%s1 + $0x190] sm:$0xff]
      %v438 = vld [vmem:[%s1 + $0x198] sm:$0xff]
      %v439 = vld [vmem:[%s1 + $0x1a0] sm:$0xff]
      %v440 = vld [vmem:[%s1 + $0x1a8] sm:$0xff]
      %v441 = vld [vmem:[%s1 + $0x1b0] sm:$0xff]
      %v442 = vld [vmem:[%s1 + $0x1b8] sm:$0xff]
      %v443 = vld [vmem:[%s1 + $0x1c0] sm:$0xff]
      %v444 = vld [vmem:[%s1 + $0x1c8] sm:$0xff]
      %v445 = vld [vmem:[%s1 + $0x1d0] sm:$0xff]
      %v446 = vld [vmem:[%s1 + $0x1d8] sm:$0xff]
      %v447 = vld [vmem:[%s1 + $0x1e0] sm:$0xff]
      %v448 = vld [vmem:[%s1 + $0x1e8] sm:$0xff]
      %v449 = vld [vmem:[%s1 + $0x1f0] sm:$0xff]
      %v450 = vld [vmem:[%s1 + $0x1f8] sm:$0xff]
      %v451 = vld [vmem:[%s1 + $0x200] sm:$0xff]
      %v452 = vld [vmem:[%s1 + $0x208] sm:$0xff]
      %v453 = vld [vmem:[%s1 + $0x210] sm:$0xff]
      %v454 = vld [vmem:[%s1 + $0x218] sm:$0xff]
      %v455 = vld [vmem:[%s1 + $0x220] sm:$0xff]
      %v456 = vld [vmem:[%s1 + $0x228] sm:$0xff]
      %v457 = vld [vmem:[%s1 + $0x230] sm:$0xff]
      %v458 = vld [vmem:[%s1 + $0x238] sm:$0xff]
      %v459 = vld [vmem:[%s1 + $0x240] sm:$0xff]
      %v460 = vld [vmem:[%s1 + $0x248] sm:$0xff]
      %v461 = vld [vmem:[%s1 + $0x250] sm:$0xff]
      %v462 = vld [vmem:[%s1 + $0x258] sm:$0xff]
      %v463 = vld [vmem:[%s1 + $0x260] sm:$0xff]
      %v464 = vld [vmem:[%s1 + $0x268] sm:$0xff]
      %v465 = vld [vmem:[%s1 + $0x270] sm:$0xff]
      %v466 = vld [vmem:[%s1 + $0x278] sm:$0xff]
      %v467 = vld [vmem:[%s1 + $0x280] sm:$0xff]
      %v468 = vld [vmem:[%s1 + $0x288] sm:$0xff]
      %v469 = vld [vmem:[%s1 + $0x290] sm:$0xff]
      %v470 = vld [vmem:[%s1 + $0x298] sm:$0xff]
      %v471 = vld [vmem:[%s1 + $0x2a0] sm:$0xff]
      %v472 = vld [vmem:[%s1 + $0x2a8] sm:$0xff]
      %v473 = vld [vmem:[%s1 + $0x2b0] sm:$0xff]
      %v474 = vld [vmem:[%s1 + $0x2b8] sm:$0xff]
      %v475 = vld [vmem:[%s1 + $0x2c0] sm:$0xff]
      %v476 = vld [vmem:[%s1 + $0x2c8] sm:$0xff]
      %v477 = vld [vmem:[%s1 + $0x2d0] sm:$0xff]
      %v478 = vld [vmem:[%s1 + $0x2d8] sm:$0xff]
      %v479 = vld [vmem:[%s1 + $0x2e0] sm:$0xff]
      %v480 = vld [vmem:[%s1 + $0x2e8] sm:$0xff]
      %v481 = vld [vmem:[%s1 + $0x2f0] sm:$0xff]
      %v482 = vld [vmem:[%s1 + $0x2f8] sm:$0xff]
      %v483 = vld [vmem:[%s1 + $0x300] sm:$0xff]
      %v484 = vld [vmem:[%s1 + $0x308] sm:$0xff]
      %v485 = vld [vmem:[%s1 + $0x310] sm:$0xff]
      %v486 = vld [vmem:[%s1 + $0x318] sm:$0xff]
      %v487 = vld [vmem:[%s1 + $0x320] sm:$0xff]
      %v488 = vld [vmem:[%s1 + $0x328] sm:$0xff]
      %v489 = vld [vmem:[%s1 + $0x330] sm:$0xff]
      %v490 = vld [vmem:[%s1 + $0x338] sm:$0xff]
      %v491 = vld [vmem:[%s1 + $0x340] sm:$0xff]
      %v492 = vld [vmem:[%s1 + $0x348] sm:$0xff]
      %v493 = vld [vmem:[%s1 + $0x350] sm:$0xff]
      %v494 = vld [vmem:[%s1 + $0x358] sm:$0xff]
      %v495 = vld [vmem:[%s1 + $0x360] sm:$0xff]
      %v496 = vld [vmem:[%s1 + $0x368] sm:$0xff]
      %v497 = vld [vmem:[%s1 + $0x370] sm:$0xff]
      %v498 = vld [vmem:[%s1 + $0x378] sm:$0xff]
      %v499 = vld [vmem:[%s1 + $0x380] sm:$0xff]
      %v500 = vld [vmem:[%s1 + $0x388] sm:$0xff]
      %v501 = vld [vmem:[%s1 + $0x390] sm:$0xff]
      %v502 = vld [vmem:[%s1 + $0x398] sm:$0xff]
      %v503 = vld [vmem:[%s1 + $0x3a0] sm:$0xff]
      %v504 = vld [vmem:[%s1 + $0x3a8] sm:$0xff]
      %v505 = vld [vmem:[%s1 + $0x3b0] sm:$0xff]
      %v506 = vld [vmem:[%s1 + $0x3b8] sm:$0xff]
      %v507 = vld [vmem:[%s1 + $0x3c0] sm:$0xff]
      %v508 = vld [vmem:[%s1 + $0x3c8] sm:$0xff]
      %v509 = vld [vmem:[%s1 + $0x3d0] sm:$0xff]
      %v510 = vld [vmem:[%s1 + $0x3d8] sm:$0xff]
      %v511 = vld [vmem:[%s1 + $0x3e0] sm:$0xff]
      %v512 = vld [vmem:[%s1 + $0x3e8] sm:$0xff]
      %v513 = vld [vmem:[%s1 + $0x3f0] sm:$0xff]
      %v514 = vld [vmem:[%s1 + $0x3f8] sm:$0xff]
      %v515 = vld [vmem:[%s1 + $0x400] sm:$0xff]
      %v516 = vld [vmem:[%s1 + $0x408] sm:$0xff]
      %v517 = vld [vmem:[%s1 + $0x410] sm:$0xff]
      %v518 = vld [vmem:[%s1 + $0x418] sm:$0xff]
      %v519 = vld [vmem:[%s1 + $0x420] sm:$0xff]
      %v520 = vld [vmem:[%s1 + $0x428] sm:$0xff]
      %v521 = vld [vmem:[%s1 + $0x430] sm:$0xff]
      %v522 = vld [vmem:[%s1 + $0x438] sm:$0xff]
      %v523 = vld [vmem:[%s1 + $0x440] sm:$0xff]
      %v524 = vld [vmem:[%s1 + $0x448] sm:$0xff]
      %v525 = vld [vmem:[%s1 + $0x450] sm:$0xff]
      %v526 = vld [vmem:[%s1 + $0x458] sm:$0xff]
      %v527 = vld [vmem:[%s1 + $0x460] sm:$0xff]
      %v528 = vld [vmem:[%s1 + $0x468] sm:$0xff]
      %v529 = vld [vmem:[%s1 + $0x470] sm:$0xff]
      %v530 = vld [vmem:[%s1 + $0x478] sm:$0xff]
      %531 = vmatpush.msra.mxu0 %v402
      %532 = vmatpush.msra.mxu0 %v401
      %533 = vmatpush.msra.mxu0 %v400
      %534 = vmatpush.msra.mxu0 %v399
      %535 = vmatpush.msra.mxu0 %v398
      %536 = vmatpush.msra.mxu0 %v397
      %537 = vmatpush.msra.mxu0 %v396
      %538 = vmatpush.msra.mxu0 %v395
      %539 = vmatpush.msra.mxu0 %v394
      %540 = vmatpush.msra.mxu0 %v393
      %541 = vmatpush.msra.mxu0 %v392
      %542 = vmatpush.msra.mxu0 %v391
      %543 = vmatpush.msra.mxu0 %v390
      %544 = vmatpush.msra.mxu0 %v389
      %545 = vmatpush.msra.mxu0 %v388
      %546 = vmatpush.msra.mxu0 %v387
      %547 = vmatmul.f32.gmra.mxu0 %v198
      %v548 = vpop.f32.mrf.mxu0
      %v549 = vadd.f32 0.0, %v548
      %550 = vmatmul.f32.gmra.mxu0 %v207
      %v551 = vpop.f32.mrf.mxu0
      %v552 = vadd.f32 0.0, %v551
      %553 = vmatmul.f32.gmra.mxu0 %v216
      %v554 = vpop.f32.mrf.mxu0
      %v555 = vadd.f32 0.0, %v554
      %556 = vmatmul.f32.gmra.mxu0 %v225
      %v557 = vpop.f32.mrf.mxu0
      %v558 = vadd.f32 0.0, %v557
      %559 = vmatmul.f32.gmra.mxu0 %v234
      %v560 = vpop.f32.mrf.mxu0
      %v561 = vadd.f32 0.0, %v560
      %562 = vmatmul.f32.gmra.mxu0 %v243
      %v563 = vpop.f32.mrf.mxu0
      %v564 = vadd.f32 0.0, %v563
      %565 = vmatmul.f32.gmra.mxu0 %v252
      %v566 = vpop.f32.mrf.mxu0
      %v567 = vadd.f32 0.0, %v566
      %568 = vmatmul.f32.gmra.mxu0 %v261
      %v569 = vpop.f32.mrf.mxu0
      %v570 = vadd.f32 0.0, %v569
      %571 = vmatmul.f32.gmra.mxu0 %v270
      %v572 = vpop.f32.mrf.mxu0
      %v573 = vadd.f32 0.0, %v572
      %574 = vmatmul.f32.gmra.mxu0 %v279
      %v575 = vpop.f32.mrf.mxu0
      %v576 = vadd.f32 0.0, %v575
      %577 = vmatmul.f32.gmra.mxu0 %v288
      %v578 = vpop.f32.mrf.mxu0
      %v579 = vadd.f32 0.0, %v578
      %580 = vmatmul.f32.gmra.mxu0 %v297
      %v581 = vpop.f32.mrf.mxu0
      %v582 = vadd.f32 0.0, %v581
      %583 = vmatmul.f32.gmra.mxu0 %v306
      %v584 = vpop.f32.mrf.mxu0
      %v585 = vadd.f32 0.0, %v584
      %586 = vmatmul.f32.gmra.mxu0 %v315
      %v587 = vpop.f32.mrf.mxu0
      %v588 = vadd.f32 0.0, %v587
      %589 = vmatmul.f32.gmra.mxu0 %v324
      %v590 = vpop.f32.mrf.mxu0
      %v591 = vadd.f32 0.0, %v590
      %592 = vmatmul.f32.gmra.mxu0 %v333
      %v593 = vpop.f32.mrf.mxu0
      %v594 = vadd.f32 0.0, %v593
      %595 = vmatmul.f32.gmra.mxu0 %v342
      %v596 = vpop.f32.mrf.mxu0
      %v597 = vadd.f32 0.0, %v596
      %598 = vmatmul.f32.gmra.mxu0 %v351
      %v599 = vpop.f32.mrf.mxu0
      %v600 = vadd.f32 0.0, %v599
      %601 = vmatmul.f32.gmra.mxu0 %v360
      %v602 = vpop.f32.mrf.mxu0
      %v603 = vadd.f32 0.0, %v602
      %604 = vmatmul.f32.gmra.mxu0 %v369
      %v605 = vpop.f32.mrf.mxu0
      %v606 = vadd.f32 0.0, %v605
      %607 = vmatmul.f32.gmra.mxu0 %v378
      %v608 = vpop.f32.mrf.mxu0
      %v609 = vadd.f32 0.0, %v608
      %610 = vdwg.mxu0
      %611 = vmatpush.msra.mxu0 %v418
      %612 = vmatpush.msra.mxu0 %v417
      %613 = vmatpush.msra.mxu0 %v416
      %614 = vmatpush.msra.mxu0 %v415
      %615 = vmatpush.msra.mxu0 %v414
      %616 = vmatpush.msra.mxu0 %v413
      %617 = vmatpush.msra.mxu0 %v412
      %618 = vmatpush.msra.mxu0 %v411
      %619 = vmatpush.msra.mxu0 %v410
      %620 = vmatpush.msra.mxu0 %v409
      %621 = vmatpush.msra.mxu0 %v408
      %622 = vmatpush.msra.mxu0 %v407
      %623 = vmatpush.msra.mxu0 %v406
      %624 = vmatpush.msra.mxu0 %v405
      %625 = vmatpush.msra.mxu0 %v404
      %626 = vmatpush.msra.mxu0 %v403
      %627 = vmatmul.f32.gmra.mxu0 %v199
      %v628 = vpop.f32.mrf.mxu0
      %v629 = vadd.f32 %v549, %v628
      %630 = vmatmul.f32.gmra.mxu0 %v208
      %v631 = vpop.f32.mrf.mxu0
      %v632 = vadd.f32 %v552, %v631
      %633 = vmatmul.f32.gmra.mxu0 %v217
      %v634 = vpop.f32.mrf.mxu0
      %v635 = vadd.f32 %v555, %v634
      %636 = vmatmul.f32.gmra.mxu0 %v226
      %v637 = vpop.f32.mrf.mxu0
      %v638 = vadd.f32 %v558, %v637
      %639 = vmatmul.f32.gmra.mxu0 %v235
      %v640 = vpop.f32.mrf.mxu0
      %v641 = vadd.f32 %v561, %v640
      %642 = vmatmul.f32.gmra.mxu0 %v244
      %v643 = vpop.f32.mrf.mxu0
      %v644 = vadd.f32 %v564, %v643
      %645 = vmatmul.f32.gmra.mxu0 %v253
      %v646 = vpop.f32.mrf.mxu0
      %v647 = vadd.f32 %v567, %v646
      %648 = vmatmul.f32.gmra.mxu0 %v262
      %v649 = vpop.f32.mrf.mxu0
      %v650 = vadd.f32 %v570, %v649
      %651 = vmatmul.f32.gmra.mxu0 %v271
      %v652 = vpop.f32.mrf.mxu0
      %v653 = vadd.f32 %v573, %v652
      %654 = vmatmul.f32.gmra.mxu0 %v280
      %v655 = vpop.f32.mrf.mxu0
      %v656 = vadd.f32 %v576, %v655
      %657 = vmatmul.f32.gmra.mxu0 %v289
      %v658 = vpop.f32.mrf.mxu0
      %v659 = vadd.f32 %v579, %v658
      %660 = vmatmul.f32.gmra.mxu0 %v298
      %v661 = vpop.f32.mrf.mxu0
      %v662 = vadd.f32 %v582, %v661
      %663 = vmatmul.f32.gmra.mxu0 %v307
      %v664 = vpop.f32.mrf.mxu0
      %v665 = vadd.f32 %v585, %v664
      %666 = vmatmul.f32.gmra.mxu0 %v316
      %v667 = vpop.f32.mrf.mxu0
      %v668 = vadd.f32 %v588, %v667
      %669 = vmatmul.f32.gmra.mxu0 %v325
      %v670 = vpop.f32.mrf.mxu0
      %v671 = vadd.f32 %v591, %v670
      %672 = vmatmul.f32.gmra.mxu0 %v334
      %v673 = vpop.f32.mrf.mxu0
      %v674 = vadd.f32 %v594, %v673
      %675 = vmatmul.f32.gmra.mxu0 %v343
      %v676 = vpop.f32.mrf.mxu0
      %v677 = vadd.f32 %v597, %v676
      %678 = vmatmul.f32.gmra.mxu0 %v352
      %v679 = vpop.f32.mrf.mxu0
      %v680 = vadd.f32 %v600, %v679
      %681 = vmatmul.f32.gmra.mxu0 %v361
      %v682 = vpop.f32.mrf.mxu0
      %v683 = vadd.f32 %v603, %v682
      %684 = vmatmul.f32.gmra.mxu0 %v370
      %v685 = vpop.f32.mrf.mxu0
      %v686 = vadd.f32 %v606, %v685
      %687 = vmatmul.f32.gmra.mxu0 %v379
      %v688 = vpop.f32.mrf.mxu0
      %v689 = vadd.f32 %v609, %v688
      %690 = vdwg.mxu0
      %691 = vmatpush.msra.mxu0 %v434
      %692 = vmatpush.msra.mxu0 %v433
      %693 = vmatpush.msra.mxu0 %v432
      %694 = vmatpush.msra.mxu0 %v431
      %695 = vmatpush.msra.mxu0 %v430
      %696 = vmatpush.msra.mxu0 %v429
      %697 = vmatpush.msra.mxu0 %v428
      %698 = vmatpush.msra.mxu0 %v427
      %699 = vmatpush.msra.mxu0 %v426
      %700 = vmatpush.msra.mxu0 %v425
      %701 = vmatpush.msra.mxu0 %v424
      %702 = vmatpush.msra.mxu0 %v423
      %703 = vmatpush.msra.mxu0 %v422
      %704 = vmatpush.msra.mxu0 %v421
      %705 = vmatpush.msra.mxu0 %v420
      %706 = vmatpush.msra.mxu0 %v419
      %707 = vmatmul.f32.gmra.mxu0 %v200
      %v708 = vpop.f32.mrf.mxu0
      %v709 = vadd.f32 %v629, %v708
      %710 = vmatmul.f32.gmra.mxu0 %v209
      %v711 = vpop.f32.mrf.mxu0
      %v712 = vadd.f32 %v632, %v711
      %713 = vmatmul.f32.gmra.mxu0 %v218
      %v714 = vpop.f32.mrf.mxu0
      %v715 = vadd.f32 %v635, %v714
      %716 = vmatmul.f32.gmra.mxu0 %v227
      %v717 = vpop.f32.mrf.mxu0
      %v718 = vadd.f32 %v638, %v717
      %719 = vmatmul.f32.gmra.mxu0 %v236
      %v720 = vpop.f32.mrf.mxu0
      %v721 = vadd.f32 %v641, %v720
      %722 = vmatmul.f32.gmra.mxu0 %v245
      %v723 = vpop.f32.mrf.mxu0
      %v724 = vadd.f32 %v644, %v723
      %725 = vmatmul.f32.gmra.mxu0 %v254
      %v726 = vpop.f32.mrf.mxu0
      %v727 = vadd.f32 %v647, %v726
      %728 = vmatmul.f32.gmra.mxu0 %v263
      %v729 = vpop.f32.mrf.mxu0
      %v730 = vadd.f32 %v650, %v729
      %731 = vmatmul.f32.gmra.mxu0 %v272
      %v732 = vpop.f32.mrf.mxu0
      %v733 = vadd.f32 %v653, %v732
      %734 = vmatmul.f32.gmra.mxu0 %v281
      %v735 = vpop.f32.mrf.mxu0
      %v736 = vadd.f32 %v656, %v735
      %737 = vmatmul.f32.gmra.mxu0 %v290
      %v738 = vpop.f32.mrf.mxu0
      %v739 = vadd.f32 %v659, %v738
      %740 = vmatmul.f32.gmra.mxu0 %v299
      %v741 = vpop.f32.mrf.mxu0
      %v742 = vadd.f32 %v662, %v741
      %743 = vmatmul.f32.gmra.mxu0 %v308
      %v744 = vpop.f32.mrf.mxu0
      %v745 = vadd.f32 %v665, %v744
      %746 = vmatmul.f32.gmra.mxu0 %v317
      %v747 = vpop.f32.mrf.mxu0
      %v748 = vadd.f32 %v668, %v747
      %749 = vmatmul.f32.gmra.mxu0 %v326
      %v750 = vpop.f32.mrf.mxu0
      %v751 = vadd.f32 %v671, %v750
      %752 = vmatmul.f32.gmra.mxu0 %v335
      %v753 = vpop.f32.mrf.mxu0
      %v754 = vadd.f32 %v674, %v753
      %755 = vmatmul.f32.gmra.mxu0 %v344
      %v756 = vpop.f32.mrf.mxu0
      %v757 = vadd.f32 %v677, %v756
      %758 = vmatmul.f32.gmra.mxu0 %v353
      %v759 = vpop.f32.mrf.mxu0
      %v760 = vadd.f32 %v680, %v759
      %761 = vmatmul.f32.gmra.mxu0 %v362
      %v762 = vpop.f32.mrf.mxu0
      %v763 = vadd.f32 %v683, %v762
      %764 = vmatmul.f32.gmra.mxu0 %v371
      %v765 = vpop.f32.mrf.mxu0
      %v766 = vadd.f32 %v686, %v765
      %767 = vmatmul.f32.gmra.mxu0 %v380
      %v768 = vpop.f32.mrf.mxu0
      %v769 = vadd.f32 %v689, %v768
      %770 = vdwg.mxu0
      %771 = vmatpush.msra.mxu0 %v450
      %772 = vmatpush.msra.mxu0 %v449
      %773 = vmatpush.msra.mxu0 %v448
      %774 = vmatpush.msra.mxu0 %v447
      %775 = vmatpush.msra.mxu0 %v446
      %776 = vmatpush.msra.mxu0 %v445
      %777 = vmatpush.msra.mxu0 %v444
      %778 = vmatpush.msra.mxu0 %v443
      %779 = vmatpush.msra.mxu0 %v442
      %780 = vmatpush.msra.mxu0 %v441
      %781 = vmatpush.msra.mxu0 %v440
      %782 = vmatpush.msra.mxu0 %v439
      %783 = vmatpush.msra.mxu0 %v438
      %784 = vmatpush.msra.mxu0 %v437
      %785 = vmatpush.msra.mxu0 %v436
      %786 = vmatpush.msra.mxu0 %v435
      %787 = vmatmul.f32.gmra.mxu0 %v201
      %v788 = vpop.f32.mrf.mxu0
      %v789 = vadd.f32 %v709, %v788
      %790 = vmatmul.f32.gmra.mxu0 %v210
      %v791 = vpop.f32.mrf.mxu0
      %v792 = vadd.f32 %v712, %v791
      %793 = vmatmul.f32.gmra.mxu0 %v219
      %v794 = vpop.f32.mrf.mxu0
      %v795 = vadd.f32 %v715, %v794
      %796 = vmatmul.f32.gmra.mxu0 %v228
      %v797 = vpop.f32.mrf.mxu0
      %v798 = vadd.f32 %v718, %v797
      %799 = vmatmul.f32.gmra.mxu0 %v237
      %v800 = vpop.f32.mrf.mxu0
      %v801 = vadd.f32 %v721, %v800
      %802 = vmatmul.f32.gmra.mxu0 %v246
      %v803 = vpop.f32.mrf.mxu0
      %v804 = vadd.f32 %v724, %v803
      %805 = vmatmul.f32.gmra.mxu0 %v255
      %v806 = vpop.f32.mrf.mxu0
      %v807 = vadd.f32 %v727, %v806
      %808 = vmatmul.f32.gmra.mxu0 %v264
      %v809 = vpop.f32.mrf.mxu0
      %v810 = vadd.f32 %v730, %v809
      %811 = vmatmul.f32.gmra.mxu0 %v273
      %v812 = vpop.f32.mrf.mxu0
      %v813 = vadd.f32 %v733, %v812
      %814 = vmatmul.f32.gmra.mxu0 %v282
      %v815 = vpop.f32.mrf.mxu0
      %v816 = vadd.f32 %v736, %v815
      %817 = vmatmul.f32.gmra.mxu0 %v291
      %v818 = vpop.f32.mrf.mxu0
      %v819 = vadd.f32 %v739, %v818
      %820 = vmatmul.f32.gmra.mxu0 %v300
      %v821 = vpop.f32.mrf.mxu0
      %v822 = vadd.f32 %v742, %v821
      %823 = vmatmul.f32.gmra.mxu0 %v309
      %v824 = vpop.f32.mrf.mxu0
      %v825 = vadd.f32 %v745, %v824
      %826 = vmatmul.f32.gmra.mxu0 %v318
      %v827 = vpop.f32.mrf.mxu0
      %v828 = vadd.f32 %v748, %v827
      %829 = vmatmul.f32.gmra.mxu0 %v327
      %v830 = vpop.f32.mrf.mxu0
      %v831 = vadd.f32 %v751, %v830
      %832 = vmatmul.f32.gmra.mxu0 %v336
      %v833 = vpop.f32.mrf.mxu0
      %v834 = vadd.f32 %v754, %v833
      %835 = vmatmul.f32.gmra.mxu0 %v345
      %v836 = vpop.f32.mrf.mxu0
      %v837 = vadd.f32 %v757, %v836
      %838 = vmatmul.f32.gmra.mxu0 %v354
      %v839 = vpop.f32.mrf.mxu0
      %v840 = vadd.f32 %v760, %v839
      %841 = vmatmul.f32.gmra.mxu0 %v363
      %v842 = vpop.f32.mrf.mxu0
      %v843 = vadd.f32 %v763, %v842
      %844 = vmatmul.f32.gmra.mxu0 %v372
      %v845 = vpop.f32.mrf.mxu0
      %v846 = vadd.f32 %v766, %v845
      %847 = vmatmul.f32.gmra.mxu0 %v381
      %v848 = vpop.f32.mrf.mxu0
      %v849 = vadd.f32 %v769, %v848
      %850 = vdwg.mxu0
      %851 = vmatpush.msra.mxu0 %v466
      %852 = vmatpush.msra.mxu0 %v465
      %853 = vmatpush.msra.mxu0 %v464
      %854 = vmatpush.msra.mxu0 %v463
      %855 = vmatpush.msra.mxu0 %v462
      %856 = vmatpush.msra.mxu0 %v461
      %857 = vmatpush.msra.mxu0 %v460
      %858 = vmatpush.msra.mxu0 %v459
      %859 = vmatpush.msra.mxu0 %v458
      %860 = vmatpush.msra.mxu0 %v457
      %861 = vmatpush.msra.mxu0 %v456
      %862 = vmatpush.msra.mxu0 %v455
      %863 = vmatpush.msra.mxu0 %v454
      %864 = vmatpush.msra.mxu0 %v453
      %865 = vmatpush.msra.mxu0 %v452
      %866 = vmatpush.msra.mxu0 %v451
      %867 = vmatmul.f32.gmra.mxu0 %v202
      %v868 = vpop.f32.mrf.mxu0
      %v869 = vadd.f32 %v789, %v868
      %870 = vmatmul.f32.gmra.mxu0 %v211
      %v871 = vpop.f32.mrf.mxu0
      %v872 = vadd.f32 %v792, %v871
      %873 = vmatmul.f32.gmra.mxu0 %v220
      %v874 = vpop.f32.mrf.mxu0
      %v875 = vadd.f32 %v795, %v874
      %876 = vmatmul.f32.gmra.mxu0 %v229
      %v877 = vpop.f32.mrf.mxu0
      %v878 = vadd.f32 %v798, %v877
      %879 = vmatmul.f32.gmra.mxu0 %v238
      %v880 = vpop.f32.mrf.mxu0
      %v881 = vadd.f32 %v801, %v880
      %882 = vmatmul.f32.gmra.mxu0 %v247
      %v883 = vpop.f32.mrf.mxu0
      %v884 = vadd.f32 %v804, %v883
      %885 = vmatmul.f32.gmra.mxu0 %v256
      %v886 = vpop.f32.mrf.mxu0
      %v887 = vadd.f32 %v807, %v886
      %888 = vmatmul.f32.gmra.mxu0 %v265
      %v889 = vpop.f32.mrf.mxu0
      %v890 = vadd.f32 %v810, %v889
      %891 = vmatmul.f32.gmra.mxu0 %v274
      %v892 = vpop.f32.mrf.mxu0
      %v893 = vadd.f32 %v813, %v892
      %894 = vmatmul.f32.gmra.mxu0 %v283
      %v895 = vpop.f32.mrf.mxu0
      %v896 = vadd.f32 %v816, %v895
      %897 = vmatmul.f32.gmra.mxu0 %v292
      %v898 = vpop.f32.mrf.mxu0
      %v899 = vadd.f32 %v819, %v898
      %900 = vmatmul.f32.gmra.mxu0 %v301
      %v901 = vpop.f32.mrf.mxu0
      %v902 = vadd.f32 %v822, %v901
      %903 = vmatmul.f32.gmra.mxu0 %v310
      %v904 = vpop.f32.mrf.mxu0
      %v905 = vadd.f32 %v825, %v904
      %906 = vmatmul.f32.gmra.mxu0 %v319
      %v907 = vpop.f32.mrf.mxu0
      %v908 = vadd.f32 %v828, %v907
      %909 = vmatmul.f32.gmra.mxu0 %v328
      %v910 = vpop.f32.mrf.mxu0
      %v911 = vadd.f32 %v831, %v910
      %912 = vmatmul.f32.gmra.mxu0 %v337
      %v913 = vpop.f32.mrf.mxu0
      %v914 = vadd.f32 %v834, %v913
      %915 = vmatmul.f32.gmra.mxu0 %v346
      %v916 = vpop.f32.mrf.mxu0
      %v917 = vadd.f32 %v837, %v916
      %918 = vmatmul.f32.gmra.mxu0 %v355
      %v919 = vpop.f32.mrf.mxu0
      %v920 = vadd.f32 %v840, %v919
      %921 = vmatmul.f32.gmra.mxu0 %v364
      %v922 = vpop.f32.mrf.mxu0
      %v923 = vadd.f32 %v843, %v922
      %924 = vmatmul.f32.gmra.mxu0 %v373
      %v925 = vpop.f32.mrf.mxu0
      %v926 = vadd.f32 %v846, %v925
      %927 = vmatmul.f32.gmra.mxu0 %v382
      %v928 = vpop.f32.mrf.mxu0
      %v929 = vadd.f32 %v849, %v928
      %930 = vdwg.mxu0
      %931 = vmatpush.msra.mxu0 %v482
      %932 = vmatpush.msra.mxu0 %v481
      %933 = vmatpush.msra.mxu0 %v480
      %934 = vmatpush.msra.mxu0 %v479
      %935 = vmatpush.msra.mxu0 %v478
      %936 = vmatpush.msra.mxu0 %v477
      %937 = vmatpush.msra.mxu0 %v476
      %938 = vmatpush.msra.mxu0 %v475
      %939 = vmatpush.msra.mxu0 %v474
      %940 = vmatpush.msra.mxu0 %v473
      %941 = vmatpush.msra.mxu0 %v472
      %942 = vmatpush.msra.mxu0 %v471
      %943 = vmatpush.msra.mxu0 %v470
      %944 = vmatpush.msra.mxu0 %v469
      %945 = vmatpush.msra.mxu0 %v468
      %946 = vmatpush.msra.mxu0 %v467
      %947 = vmatmul.f32.gmra.mxu0 %v203
      %v948 = vpop.f32.mrf.mxu0
      %v949 = vadd.f32 %v869, %v948
      %950 = vmatmul.f32.gmra.mxu0 %v212
      %v951 = vpop.f32.mrf.mxu0
      %v952 = vadd.f32 %v872, %v951
      %953 = vmatmul.f32.gmra.mxu0 %v221
      %v954 = vpop.f32.mrf.mxu0
      %v955 = vadd.f32 %v875, %v954
      %956 = vmatmul.f32.gmra.mxu0 %v230
      %v957 = vpop.f32.mrf.mxu0
      %v958 = vadd.f32 %v878, %v957
      %959 = vmatmul.f32.gmra.mxu0 %v239
      %v960 = vpop.f32.mrf.mxu0
      %v961 = vadd.f32 %v881, %v960
      %962 = vmatmul.f32.gmra.mxu0 %v248
      %v963 = vpop.f32.mrf.mxu0
      %v964 = vadd.f32 %v884, %v963
      %965 = vmatmul.f32.gmra.mxu0 %v257
      %v966 = vpop.f32.mrf.mxu0
      %v967 = vadd.f32 %v887, %v966
      %968 = vmatmul.f32.gmra.mxu0 %v266
      %v969 = vpop.f32.mrf.mxu0
      %v970 = vadd.f32 %v890, %v969
      %971 = vmatmul.f32.gmra.mxu0 %v275
      %v972 = vpop.f32.mrf.mxu0
      %v973 = vadd.f32 %v893, %v972
      %974 = vmatmul.f32.gmra.mxu0 %v284
      %v975 = vpop.f32.mrf.mxu0
      %v976 = vadd.f32 %v896, %v975
      %977 = vmatmul.f32.gmra.mxu0 %v293
      %v978 = vpop.f32.mrf.mxu0
      %v979 = vadd.f32 %v899, %v978
      %980 = vmatmul.f32.gmra.mxu0 %v302
      %v981 = vpop.f32.mrf.mxu0
      %v982 = vadd.f32 %v902, %v981
      %983 = vmatmul.f32.gmra.mxu0 %v311
      %v984 = vpop.f32.mrf.mxu0
      %v985 = vadd.f32 %v905, %v984
      %986 = vmatmul.f32.gmra.mxu0 %v320
      %v987 = vpop.f32.mrf.mxu0
      %v988 = vadd.f32 %v908, %v987
      %989 = vmatmul.f32.gmra.mxu0 %v329
      %v990 = vpop.f32.mrf.mxu0
      %v991 = vadd.f32 %v911, %v990
      %992 = vmatmul.f32.gmra.mxu0 %v338
      %v993 = vpop.f32.mrf.mxu0
      %v994 = vadd.f32 %v914, %v993
      %995 = vmatmul.f32.gmra.mxu0 %v347
      %v996 = vpop.f32.mrf.mxu0
      %v997 = vadd.f32 %v917, %v996
      %998 = vmatmul.f32.gmra.mxu0 %v356
      %v999 = vpop.f32.mrf.mxu0
      %v1000 = vadd.f32 %v920, %v999
      %1001 = vmatmul.f32.gmra.mxu0 %v365
      %v1002 = vpop.f32.mrf.mxu0
      %v1003 = vadd.f32 %v923, %v1002
      %1004 = vmatmul.f32.gmra.mxu0 %v374
      %v1005 = vpop.f32.mrf.mxu0
      %v1006 = vadd.f32 %v926, %v1005
      %1007 = vmatmul.f32.gmra.mxu0 %v383
      %v1008 = vpop.f32.mrf.mxu0
      %v1009 = vadd.f32 %v929, %v1008
      %1010 = vdwg.mxu0
      %1011 = vmatpush.msra.mxu0 %v498
      %1012 = vmatpush.msra.mxu0 %v497
      %1013 = vmatpush.msra.mxu0 %v496
      %1014 = vmatpush.msra.mxu0 %v495
      %1015 = vmatpush.msra.mxu0 %v494
      %1016 = vmatpush.msra.mxu0 %v493
      %1017 = vmatpush.msra.mxu0 %v492
      %1018 = vmatpush.msra.mxu0 %v491
      %1019 = vmatpush.msra.mxu0 %v490
      %1020 = vmatpush.msra.mxu0 %v489
      %1021 = vmatpush.msra.mxu0 %v488
      %1022 = vmatpush.msra.mxu0 %v487
      %1023 = vmatpush.msra.mxu0 %v486
      %1024 = vmatpush.msra.mxu0 %v485
      %1025 = vmatpush.msra.mxu0 %v484
      %1026 = vmatpush.msra.mxu0 %v483
      %1027 = vmatmul.f32.gmra.mxu0 %v204
      %v1028 = vpop.f32.mrf.mxu0
      %v1029 = vadd.f32 %v949, %v1028
      %1030 = vmatmul.f32.gmra.mxu0 %v213
      %v1031 = vpop.f32.mrf.mxu0
      %v1032 = vadd.f32 %v952, %v1031
      %1033 = vmatmul.f32.gmra.mxu0 %v222
      %v1034 = vpop.f32.mrf.mxu0
      %v1035 = vadd.f32 %v955, %v1034
      %1036 = vmatmul.f32.gmra.mxu0 %v231
      %v1037 = vpop.f32.mrf.mxu0
      %v1038 = vadd.f32 %v958, %v1037
      %1039 = vmatmul.f32.gmra.mxu0 %v240
      %v1040 = vpop.f32.mrf.mxu0
      %v1041 = vadd.f32 %v961, %v1040
      %1042 = vmatmul.f32.gmra.mxu0 %v249
      %v1043 = vpop.f32.mrf.mxu0
      %v1044 = vadd.f32 %v964, %v1043
      %1045 = vmatmul.f32.gmra.mxu0 %v258
      %v1046 = vpop.f32.mrf.mxu0
      %v1047 = vadd.f32 %v967, %v1046
      %1048 = vmatmul.f32.gmra.mxu0 %v267
      %v1049 = vpop.f32.mrf.mxu0
      %v1050 = vadd.f32 %v970, %v1049
      %1051 = vmatmul.f32.gmra.mxu0 %v276
      %v1052 = vpop.f32.mrf.mxu0
      %v1053 = vadd.f32 %v973, %v1052
      %1054 = vmatmul.f32.gmra.mxu0 %v285
      %v1055 = vpop.f32.mrf.mxu0
      %v1056 = vadd.f32 %v976, %v1055
      %1057 = vmatmul.f32.gmra.mxu0 %v294
      %v1058 = vpop.f32.mrf.mxu0
      %v1059 = vadd.f32 %v979, %v1058
      %1060 = vmatmul.f32.gmra.mxu0 %v303
      %v1061 = vpop.f32.mrf.mxu0
      %v1062 = vadd.f32 %v982, %v1061
      %1063 = vmatmul.f32.gmra.mxu0 %v312
      %v1064 = vpop.f32.mrf.mxu0
      %v1065 = vadd.f32 %v985, %v1064
      %1066 = vmatmul.f32.gmra.mxu0 %v321
      %v1067 = vpop.f32.mrf.mxu0
      %v1068 = vadd.f32 %v988, %v1067
      %1069 = vmatmul.f32.gmra.mxu0 %v330
      %v1070 = vpop.f32.mrf.mxu0
      %v1071 = vadd.f32 %v991, %v1070
      %1072 = vmatmul.f32.gmra.mxu0 %v339
      %v1073 = vpop.f32.mrf.mxu0
      %v1074 = vadd.f32 %v994, %v1073
      %1075 = vmatmul.f32.gmra.mxu0 %v348
      %v1076 = vpop.f32.mrf.mxu0
      %v1077 = vadd.f32 %v997, %v1076
      %1078 = vmatmul.f32.gmra.mxu0 %v357
      %v1079 = vpop.f32.mrf.mxu0
      %v1080 = vadd.f32 %v1000, %v1079
      %1081 = vmatmul.f32.gmra.mxu0 %v366
      %v1082 = vpop.f32.mrf.mxu0
      %v1083 = vadd.f32 %v1003, %v1082
      %1084 = vmatmul.f32.gmra.mxu0 %v375
      %v1085 = vpop.f32.mrf.mxu0
      %v1086 = vadd.f32 %v1006, %v1085
      %1087 = vmatmul.f32.gmra.mxu0 %v384
      %v1088 = vpop.f32.mrf.mxu0
      %v1089 = vadd.f32 %v1009, %v1088
      %1090 = vdwg.mxu0
      %1091 = vmatpush.msra.mxu0 %v514
      %1092 = vmatpush.msra.mxu0 %v513
      %1093 = vmatpush.msra.mxu0 %v512
      %1094 = vmatpush.msra.mxu0 %v511
      %1095 = vmatpush.msra.mxu0 %v510
      %1096 = vmatpush.msra.mxu0 %v509
      %1097 = vmatpush.msra.mxu0 %v508
      %1098 = vmatpush.msra.mxu0 %v507
      %1099 = vmatpush.msra.mxu0 %v506
      %1100 = vmatpush.msra.mxu0 %v505
      %1101 = vmatpush.msra.mxu0 %v504
      %1102 = vmatpush.msra.mxu0 %v503
      %1103 = vmatpush.msra.mxu0 %v502
      %1104 = vmatpush.msra.mxu0 %v501
      %1105 = vmatpush.msra.mxu0 %v500
      %1106 = vmatpush.msra.mxu0 %v499
      %1107 = vmatmul.f32.gmra.mxu0 %v205
      %v1108 = vpop.f32.mrf.mxu0
      %v1109 = vadd.f32 %v1029, %v1108
      %1110 = vmatmul.f32.gmra.mxu0 %v214
      %v1111 = vpop.f32.mrf.mxu0
      %v1112 = vadd.f32 %v1032, %v1111
      %1113 = vmatmul.f32.gmra.mxu0 %v223
      %v1114 = vpop.f32.mrf.mxu0
      %v1115 = vadd.f32 %v1035, %v1114
      %1116 = vmatmul.f32.gmra.mxu0 %v232
      %v1117 = vpop.f32.mrf.mxu0
      %v1118 = vadd.f32 %v1038, %v1117
      %1119 = vmatmul.f32.gmra.mxu0 %v241
      %v1120 = vpop.f32.mrf.mxu0
      %v1121 = vadd.f32 %v1041, %v1120
      %1122 = vmatmul.f32.gmra.mxu0 %v250
      %v1123 = vpop.f32.mrf.mxu0
      %v1124 = vadd.f32 %v1044, %v1123
      %1125 = vmatmul.f32.gmra.mxu0 %v259
      %v1126 = vpop.f32.mrf.mxu0
      %v1127 = vadd.f32 %v1047, %v1126
      %1128 = vmatmul.f32.gmra.mxu0 %v268
      %v1129 = vpop.f32.mrf.mxu0
      %v1130 = vadd.f32 %v1050, %v1129
      %1131 = vmatmul.f32.gmra.mxu0 %v277
      %v1132 = vpop.f32.mrf.mxu0
      %v1133 = vadd.f32 %v1053, %v1132
      %1134 = vmatmul.f32.gmra.mxu0 %v286
      %v1135 = vpop.f32.mrf.mxu0
      %v1136 = vadd.f32 %v1056, %v1135
      %1137 = vmatmul.f32.gmra.mxu0 %v295
      %v1138 = vpop.f32.mrf.mxu0
      %v1139 = vadd.f32 %v1059, %v1138
      %1140 = vmatmul.f32.gmra.mxu0 %v304
      %v1141 = vpop.f32.mrf.mxu0
      %v1142 = vadd.f32 %v1062, %v1141
      %1143 = vmatmul.f32.gmra.mxu0 %v313
      %v1144 = vpop.f32.mrf.mxu0
      %v1145 = vadd.f32 %v1065, %v1144
      %1146 = vmatmul.f32.gmra.mxu0 %v322
      %v1147 = vpop.f32.mrf.mxu0
      %v1148 = vadd.f32 %v1068, %v1147
      %1149 = vmatmul.f32.gmra.mxu0 %v331
      %v1150 = vpop.f32.mrf.mxu0
      %v1151 = vadd.f32 %v1071, %v1150
      %1152 = vmatmul.f32.gmra.mxu0 %v340
      %v1153 = vpop.f32.mrf.mxu0
      %v1154 = vadd.f32 %v1074, %v1153
      %1155 = vmatmul.f32.gmra.mxu0 %v349
      %v1156 = vpop.f32.mrf.mxu0
      %v1157 = vadd.f32 %v1077, %v1156
      %1158 = vmatmul.f32.gmra.mxu0 %v358
      %v1159 = vpop.f32.mrf.mxu0
      %v1160 = vadd.f32 %v1080, %v1159
      %1161 = vmatmul.f32.gmra.mxu0 %v367
      %v1162 = vpop.f32.mrf.mxu0
      %v1163 = vadd.f32 %v1083, %v1162
      %1164 = vmatmul.f32.gmra.mxu0 %v376
      %v1165 = vpop.f32.mrf.mxu0
      %v1166 = vadd.f32 %v1086, %v1165
      %1167 = vmatmul.f32.gmra.mxu0 %v385
      %v1168 = vpop.f32.mrf.mxu0
      %v1169 = vadd.f32 %v1089, %v1168
      %1170 = vdwg.mxu0
      %1171 = vmatpush.msra.mxu0 %v530
      %1172 = vmatpush.msra.mxu0 %v529
      %1173 = vmatpush.msra.mxu0 %v528
      %1174 = vmatpush.msra.mxu0 %v527
      %1175 = vmatpush.msra.mxu0 %v526
      %1176 = vmatpush.msra.mxu0 %v525
      %1177 = vmatpush.msra.mxu0 %v524
      %1178 = vmatpush.msra.mxu0 %v523
      %1179 = vmatpush.msra.mxu0 %v522
      %1180 = vmatpush.msra.mxu0 %v521
      %1181 = vmatpush.msra.mxu0 %v520
      %1182 = vmatpush.msra.mxu0 %v519
      %1183 = vmatpush.msra.mxu0 %v518
      %1184 = vmatpush.msra.mxu0 %v517
      %1185 = vmatpush.msra.mxu0 %v516
      %1186 = vmatpush.msra.mxu0 %v515
      %1187 = vmatmul.f32.gmra.mxu0 %v206
      %v1188 = vpop.f32.mrf.mxu0
      %v1189 = vadd.f32 %v1109, %v1188
      %1190 = vmatmul.f32.gmra.mxu0 %v215
      %v1191 = vpop.f32.mrf.mxu0
      %v1192 = vadd.f32 %v1112, %v1191
      %1193 = vmatmul.f32.gmra.mxu0 %v224
      %v1194 = vpop.f32.mrf.mxu0
      %v1195 = vadd.f32 %v1115, %v1194
      %1196 = vmatmul.f32.gmra.mxu0 %v233
      %v1197 = vpop.f32.mrf.mxu0
      %v1198 = vadd.f32 %v1118, %v1197
      %1199 = vmatmul.f32.gmra.mxu0 %v242
      %v1200 = vpop.f32.mrf.mxu0
      %v1201 = vadd.f32 %v1121, %v1200
      %1202 = vmatmul.f32.gmra.mxu0 %v251
      %v1203 = vpop.f32.mrf.mxu0
      %v1204 = vadd.f32 %v1124, %v1203
      %1205 = vmatmul.f32.gmra.mxu0 %v260
      %v1206 = vpop.f32.mrf.mxu0
      %v1207 = vadd.f32 %v1127, %v1206
      %1208 = vmatmul.f32.gmra.mxu0 %v269
      %v1209 = vpop.f32.mrf.mxu0
      %v1210 = vadd.f32 %v1130, %v1209
      %1211 = vmatmul.f32.gmra.mxu0 %v278
      %v1212 = vpop.f32.mrf.mxu0
      %v1213 = vadd.f32 %v1133, %v1212
      %1214 = vmatmul.f32.gmra.mxu0 %v287
      %v1215 = vpop.f32.mrf.mxu0
      %v1216 = vadd.f32 %v1136, %v1215
      %1217 = vmatmul.f32.gmra.mxu0 %v296
      %v1218 = vpop.f32.mrf.mxu0
      %v1219 = vadd.f32 %v1139, %v1218
      %1220 = vmatmul.f32.gmra.mxu0 %v305
      %v1221 = vpop.f32.mrf.mxu0
      %v1222 = vadd.f32 %v1142, %v1221
      %1223 = vmatmul.f32.gmra.mxu0 %v314
      %v1224 = vpop.f32.mrf.mxu0
      %v1225 = vadd.f32 %v1145, %v1224
      %1226 = vmatmul.f32.gmra.mxu0 %v323
      %v1227 = vpop.f32.mrf.mxu0
      %v1228 = vadd.f32 %v1148, %v1227
      %1229 = vmatmul.f32.gmra.mxu0 %v332
      %v1230 = vpop.f32.mrf.mxu0
      %v1231 = vadd.f32 %v1151, %v1230
      %1232 = vmatmul.f32.gmra.mxu0 %v341
      %v1233 = vpop.f32.mrf.mxu0
      %v1234 = vadd.f32 %v1154, %v1233
      %1235 = vmatmul.f32.gmra.mxu0 %v350
      %v1236 = vpop.f32.mrf.mxu0
      %v1237 = vadd.f32 %v1157, %v1236
      %1238 = vmatmul.f32.gmra.mxu0 %v359
      %v1239 = vpop.f32.mrf.mxu0
      %v1240 = vadd.f32 %v1160, %v1239
      %1241 = vmatmul.f32.gmra.mxu0 %v368
      %v1242 = vpop.f32.mrf.mxu0
      %v1243 = vadd.f32 %v1163, %v1242
      %1244 = vmatmul.f32.gmra.mxu0 %v377
      %v1245 = vpop.f32.mrf.mxu0
      %v1246 = vadd.f32 %v1166, %v1245
      %1247 = vmatmul.f32.gmra.mxu0 %v386
      %v1248 = vpop.f32.mrf.mxu0
      %v1249 = vadd.f32 %v1169, %v1248
      %1250 = vdwg.mxu0
      %v1251 = vadd.f32 %v1189, %v1192
      %v1252 = vadd.f32 %v1251, %v1195
      %v1253 = vadd.f32 %v1252, %v1198
      %v1254 = vadd.f32 %v1253, %v1201
      %v1255 = vadd.f32 %v1254, %v1204
      %v1256 = vadd.f32 %v1255, %v1207
      %v1257 = vadd.f32 %v1256, %v1210
      %v1258 = vadd.f32 %v1257, %v1213
      %v1259 = vadd.f32 %v1258, %v1216
      %v1260 = vadd.f32 %v1259, %v1219
      %v1261 = vadd.f32 %v1260, %v1222
      %v1262 = vadd.f32 %v1261, %v1225
      %v1263 = vadd.f32 %v1262, %v1228
      %v1264 = vadd.f32 %v1263, %v1231
      %v1265 = vadd.f32 %v1264, %v1234
      %v1266 = vadd.f32 %v1265, %v1237
      %v1267 = vadd.f32 %v1266, %v1240
      %v1268 = vadd.f32 %v1267, %v1243
      %v1269 = vadd.f32 %v1268, %v1246
      %vm1270 = vcmask 1041408
      %v1271 = vsel %vm1270, %v1249, 0.0
      %v1272 = vadd.f32 %v1269, %v1271
      %v1273 = vrot.slane %v1272, 4
      %v1274 = vadd.f32 %v1272, %v1273
      %v1275 = vrot.slane %v1274, 2
      %v1276 = vadd.f32 %v1274, %v1275
      %v1277 = vrot.slane %v1276, 1
      %v1278 = vadd.f32 %v1276, %v1277
      %v1279 = vmul.f32 %v1278, 0.0061728396
      %v1280 = vmul.f32 %v1189, %v1189
      %v1281 = vmul.f32 %v1192, %v1192
      %v1282 = vmul.f32 %v1195, %v1195
      %v1283 = vmul.f32 %v1198, %v1198
      %v1284 = vmul.f32 %v1201, %v1201
      %v1285 = vmul.f32 %v1204, %v1204
      %v1286 = vmul.f32 %v1207, %v1207
      %v1287 = vmul.f32 %v1210, %v1210
      %v1288 = vmul.f32 %v1213, %v1213
      %v1289 = vmul.f32 %v1216, %v1216
      %v1290 = vmul.f32 %v1219, %v1219
      %v1291 = vmul.f32 %v1222, %v1222
      %v1292 = vmul.f32 %v1225, %v1225
      %v1293 = vmul.f32 %v1228, %v1228
      %v1294 = vmul.f32 %v1231, %v1231
      %v1295 = vmul.f32 %v1234, %v1234
      %v1296 = vmul.f32 %v1237, %v1237
      %v1297 = vmul.f32 %v1240, %v1240
      %v1298 = vmul.f32 %v1243, %v1243
      %v1299 = vmul.f32 %v1246, %v1246
      %v1300 = vmul.f32 %v1249, %v1249
      %v1301 = vadd.f32 %v1280, %v1281
      %v1302 = vadd.f32 %v1301, %v1282
      %v1303 = vadd.f32 %v1302, %v1283
      %v1304 = vadd.f32 %v1303, %v1284
      %v1305 = vadd.f32 %v1304, %v1285
      %v1306 = vadd.f32 %v1305, %v1286
      %v1307 = vadd.f32 %v1306, %v1287
      %v1308 = vadd.f32 %v1307, %v1288
      %v1309 = vadd.f32 %v1308, %v1289
      %v1310 = vadd.f32 %v1309, %v1290
      %v1311 = vadd.f32 %v1310, %v1291
      %v1312 = vadd.f32 %v1311, %v1292
      %v1313 = vadd.f32 %v1312, %v1293
      %v1314 = vadd.f32 %v1313, %v1294
      %v1315 = vadd.f32 %v1314, %v1295
      %v1316 = vadd.f32 %v1315, %v1296
      %v1317 = vadd.f32 %v1316, %v1297
      %v1318 = vadd.f32 %v1317, %v1298
      %v1319 = vadd.f32 %v1318, %v1299
      %v1320 = vsel %vm1270, %v1300, 0.0
      %v1321 = vadd.f32 %v1319, %v1320
      %v1322 = vrot.slane %v1321, 4
      %v1323 = vadd.f32 %v1321, %v1322
      %v1324 = vrot.slane %v1323, 2
      %v1325 = vadd.f32 %v1323, %v1324
      %v1326 = vrot.slane %v1325, 1
      %v1327 = vadd.f32 %v1325, %v1326
      %v1328 = vmul.f32 %v1327, 0.0061728396
      %v1329 = vmul.f32 %v1279, %v1279
      %v1330 = vsub.f32 %v1328, %v1329
      %v1331 = vmax.f32 %v1330, 0.0
      %v1332 = vsub.f32 %v1189, %v1279
      %v1333 = vsub.f32 %v1192, %v1279
      %v1334 = vsub.f32 %v1195, %v1279
      %v1335 = vsub.f32 %v1198, %v1279
      %v1336 = vsub.f32 %v1201, %v1279
      %v1337 = vsub.f32 %v1204, %v1279
      %v1338 = vsub.f32 %v1207, %v1279
      %v1339 = vsub.f32 %v1210, %v1279
      %v1340 = vsub.f32 %v1213, %v1279
      %v1341 = vsub.f32 %v1216, %v1279
      %v1342 = vsub.f32 %v1219, %v1279
      %v1343 = vsub.f32 %v1222, %v1279
      %v1344 = vsub.f32 %v1225, %v1279
      %v1345 = vsub.f32 %v1228, %v1279
      %v1346 = vsub.f32 %v1231, %v1279
      %v1347 = vsub.f32 %v1234, %v1279
      %v1348 = vsub.f32 %v1237, %v1279
      %v1349 = vsub.f32 %v1240, %v1279
      %v1350 = vsub.f32 %v1243, %v1279
      %v1351 = vsub.f32 %v1246, %v1279
      %v1352 = vsub.f32 %v1249, %v1279
      %v1353 = vadd.f32 %v1331, 1e-05
      %v1354 = vrsqrt.pop %v1353
      %v1355 = vmul.f32 %v1354, %v1353
      %v1356 = vmul.f32 %v1355, %v1354
      %v1357 = vmul.f32 0.5, %v1356
      %v1358 = vsub.f32 1.5, %v1357
      %v1359 = vmul.f32 %v1354, %v1358
      %vm1360 = vweird.f32 %v1353
      %vm1361 = vweird.f32 %v1354
      %vm1362 = vmor %vm1360, %vm1361
      %v1363 = vsel %vm1362, %v1354, %v1359
      %v1364 = vmul.f32 %v1332, %v1363
      %v1365 = vmul.f32 %v1333, %v1363
      %v1366 = vmul.f32 %v1334, %v1363
      %v1367 = vmul.f32 %v1335, %v1363
      %v1368 = vmul.f32 %v1336, %v1363
      %v1369 = vmul.f32 %v1337, %v1363
      %v1370 = vmul.f32 %v1338, %v1363
      %v1371 = vmul.f32 %v1339, %v1363
      %v1372 = vmul.f32 %v1340, %v1363
      %v1373 = vmul.f32 %v1341, %v1363
      %v1374 = vmul.f32 %v1342, %v1363
      %v1375 = vmul.f32 %v1343, %v1363
      %v1376 = vmul.f32 %v1344, %v1363
      %v1377 = vmul.f32 %v1345, %v1363
      %v1378 = vmul.f32 %v1346, %v1363
      %v1379 = vmul.f32 %v1347, %v1363
      %v1380 = vmul.f32 %v1348, %v1363
      %v1381 = vmul.f32 %v1349, %v1363
      %v1382 = vmul.f32 %v1350, %v1363
      %v1383 = vmul.f32 %v1351, %v1363
      %v1384 = vmul.f32 %v1352, %v1363
      %v1385 = vld [vmem:[%s2] sm:$0x1]
      %v1387 = vperm.slane %v1385, 0
      %v1389 = vmul.f32 %v1364, %v1387
      %v1390 = vmul.f32 %v1365, %v1387
      %v1391 = vmul.f32 %v1366, %v1387
      %v1392 = vmul.f32 %v1367, %v1387
      %v1393 = vmul.f32 %v1368, %v1387
      %v1394 = vmul.f32 %v1369, %v1387
      %v1395 = vmul.f32 %v1370, %v1387
      %v1396 = vmul.f32 %v1371, %v1387
      %v1397 = vmul.f32 %v1372, %v1387
      %v1398 = vmul.f32 %v1373, %v1387
      %v1399 = vmul.f32 %v1374, %v1387
      %v1400 = vmul.f32 %v1375, %v1387
      %v1401 = vmul.f32 %v1376, %v1387
      %v1402 = vmul.f32 %v1377, %v1387
      %v1403 = vmul.f32 %v1378, %v1387
      %v1404 = vmul.f32 %v1379, %v1387
      %v1405 = vmul.f32 %v1380, %v1387
      %v1406 = vmul.f32 %v1381, %v1387
      %v1407 = vmul.f32 %v1382, %v1387
      %v1408 = vmul.f32 %v1383, %v1387
      %v1409 = vmul.f32 %v1384, %v1387
      %v1410 = vld [vmem:[%s3] sm:$0x1]
      %v1412 = vperm.slane %v1410, 0
      %v1414 = vadd.f32 %v1389, %v1412
      %v1415 = vadd.f32 %v1390, %v1412
      %v1416 = vadd.f32 %v1391, %v1412
      %v1417 = vadd.f32 %v1392, %v1412
      %v1418 = vadd.f32 %v1393, %v1412
      %v1419 = vadd.f32 %v1394, %v1412
      %v1420 = vadd.f32 %v1395, %v1412
      %v1421 = vadd.f32 %v1396, %v1412
      %v1422 = vadd.f32 %v1397, %v1412
      %v1423 = vadd.f32 %v1398, %v1412
      %v1424 = vadd.f32 %v1399, %v1412
      %v1425 = vadd.f32 %v1400, %v1412
      %v1426 = vadd.f32 %v1401, %v1412
      %v1427 = vadd.f32 %v1402, %v1412
      %v1428 = vadd.f32 %v1403, %v1412
      %v1429 = vadd.f32 %v1404, %v1412
      %v1430 = vadd.f32 %v1405, %v1412
      %v1431 = vadd.f32 %v1406, %v1412
      %v1432 = vadd.f32 %v1407, %v1412
      %v1433 = vadd.f32 %v1408, %v1412
      %v1434 = vadd.f32 %v1409, %v1412
      %v1435 = vmax.f32 %v1414, 0.0
      %v1436 = vmax.f32 %v1415, 0.0
      %v1437 = vmax.f32 %v1416, 0.0
      %v1438 = vmax.f32 %v1417, 0.0
      %v1439 = vmax.f32 %v1418, 0.0
      %v1440 = vmax.f32 %v1419, 0.0
      %v1441 = vmax.f32 %v1420, 0.0
      %v1442 = vmax.f32 %v1421, 0.0
      %v1443 = vmax.f32 %v1422, 0.0
      %v1444 = vmax.f32 %v1423, 0.0
      %v1445 = vmax.f32 %v1424, 0.0
      %v1446 = vmax.f32 %v1425, 0.0
      %v1447 = vmax.f32 %v1426, 0.0
      %v1448 = vmax.f32 %v1427, 0.0
      %v1449 = vmax.f32 %v1428, 0.0
      %v1450 = vmax.f32 %v1429, 0.0
      %v1451 = vmax.f32 %v1430, 0.0
      %v1452 = vmax.f32 %v1431, 0.0
      %v1453 = vmax.f32 %v1432, 0.0
      %v1454 = vmax.f32 %v1433, 0.0
      %v1455 = vmax.f32 %v1434, 0.0
      %1456 = vst [vmem:[%s197] sm:$0xff] %v1435
      %1457 = vst [vmem:[%s197 + $0x8] sm:$0xff] %v1436
      %1458 = vst [vmem:[%s197 + $0x10] sm:$0xff] %v1437
      %1459 = vst [vmem:[%s197 + $0x18] sm:$0xff] %v1438
      %1460 = vst [vmem:[%s197 + $0x20] sm:$0xff] %v1439
      %1461 = vst [vmem:[%s197 + $0x28] sm:$0xff] %v1440
      %1462 = vst [vmem:[%s197 + $0x30] sm:$0xff] %v1441
      %1463 = vst [vmem:[%s197 + $0x38] sm:$0xff] %v1442
      %1464 = vst [vmem:[%s197 + $0x40] sm:$0xff] %v1443
      %1465 = vst [vmem:[%s197 + $0x48] sm:$0xff] %v1444
      %1466 = vst [vmem:[%s197 + $0x50] sm:$0xff] %v1445
      %1467 = vst [vmem:[%s197 + $0x58] sm:$0xff] %v1446
      %1468 = vst [vmem:[%s197 + $0x60] sm:$0xff] %v1447
      %1469 = vst [vmem:[%s197 + $0x68] sm:$0xff] %v1448
      %1470 = vst [vmem:[%s197 + $0x70] sm:$0xff] %v1449
      %1471 = vst [vmem:[%s197 + $0x78] sm:$0xff] %v1450
      %1472 = vst [vmem:[%s197 + $0x80] sm:$0xff] %v1451
      %1473 = vst [vmem:[%s197 + $0x88] sm:$0xff] %v1452
      %1474 = vst [vmem:[%s197 + $0x90] sm:$0xff] %v1453
      %1475 = vst [vmem:[%s197 + $0x98] sm:$0xff] %v1454
      %1476 = vst [vmem:[%s197 + $0xa0] sm:$0x3] %v1455
      %p1477 = scmp.lt.s32.totalorder %s15, 1
      %s1478 = scalar_select %p1477, %s15, 1
      %s1479 = smul.addr %s1478, 21
      %s1480 = smul.addr %s1479, 8
      %s1481 = scalar_lea.vmem %s4, %s1480
      // Predicated region
      $region37: #{siamese_forward.6} parent=35 // pred_check
        %p1482 = pneg %p122
      $region38: #{siamese_forward.6} parent=35 // pred_check_branch
        %1484 = sbr.rel (%p1482) target = $region40
      $region39: #{siamese_forward.6} parent=35 // pred_region
        _
      $region40: #{siamese_forward.6} parent=35 // pred_fallthru
        _
    $region36: #{siamese_forward.6} parent=5 // pred_fallthru
      _
    %p1485 = scmp.le.s32.totalorder 2, %s10
    // Predicated region
    $region41: #{siamese_forward.6} parent=5 // pred_check
      %p1486 = pneg %p1485
    $region42: #{siamese_forward.6} parent=5 // pred_check_branch
      %1488 = sbr.rel (%p1486) target = $region44
    $region43: #{siamese_forward.6} parent=5 // pred_region
      %s1489 = ssub.s32 %s10, 2
      // Predicated region
      $region45: #{siamese_forward.6} parent=43 // pred_check
        %p1490 = pneg %p128
      $region46: #{siamese_forward.6} parent=43 // pred_check_branch
        %1492 = sbr.rel (%p1490) target = $region48
      $region47: #{siamese_forward.6} parent=43 // pred_region
        %p1493 = scmp.lt.s32.totalorder %s16, 1
        %s1494 = scalar_select %p1493, %s16, 1
        %s1495 = smul.addr %s1494, 21
        %s1496 = smul.addr %s1495, 8
        %s1497 = scalar_lea.vmem %s4, %s1496
      $region48: #{siamese_forward.6} parent=43 // pred_fallthru
        _
    $region44: #{siamese_forward.6} parent=5 // pred_fallthru
      _
  $region6: #{siamese_forward.6} parent=0 // loop_footer
    %s14 = sadd.s32 1, %s10
  $region7: #{siamese_forward.6} parent=0 // loop_footer_branch
    %9 = sbr.rel target = $region3
  $region8: #{siamese_forward.6} parent=0 // loop_exit
    _

// kernel: siamese_forward.7
$region0: #{siamese_forward.7}
  #allocation0 [shape = 'u32[]', space=smem, size = 0x4, offset = 0x4, fixed_abs, tag = 'smem constant byte address 0x4 - core index']
  #allocation1 [shape = 'u32[72,128]{1,0:T(1,128)}', space=vmem, size = 0x9000, scoped, tag = 'internal scratch']
  %s0 = inlined_call_operand.vmem [shape: f32[2,8,1152], index: 0, kind: input, shape index: {}]
  %s1 = inlined_call_operand.vmem [shape: f32[1152,640], index: 1, kind: input, shape index: {}]
  %s2 = inlined_call_operand.vmem [shape: f32[1,640], index: 2, kind: input, shape index: {}]
  %s3 = inlined_call_operand.vmem [shape: f32[1,640], index: 3, kind: input, shape index: {}]
  %s4 = inlined_call_operand.vmem [shape: f32[640,128], index: 4, kind: input, shape index: {}]
  %s5 = inlined_call_operand.vmem [shape: f32[1,128], index: 5, kind: input, shape index: {}]
  %s6 = inlined_call_operand.vmem [shape: f32[2,2,128], index: 6, kind: output, shape index: {}]
  %s7 = sld [smem:[#allocation0]]
  $region57: #{siamese_forward.7} parent=0
    _
  %s9 = ssub.s32 1, %s7
  %s10 = scalar_select 0, %s9, %s7
  loop: start=0, step=1, limit=4
  $region2: #{siamese_forward.7} parent=0 // loop_pre_header
    _
  $region3: #{siamese_forward.7} parent=0 // loop_header
    %s12 = sphi 0, %s16
    %p13 = scmp.ge.s32.totalorder %s12, 4
    %s22 = sphi 0, %s24
    %s25 = sphi 0, %s22
    %s26 = sphi 0, %s25
    %s42 = sphi 0, %s26
    %s46 = sphi 0, %s46
    %s48 = sphi 0, %s46
    %s49 = sphi 0, %s48
    %s63 = sphi 0, %s49
    %s67 = sphi 0, %s67
    %s69 = sphi 0, %s67
    %s70 = sphi 0, %s69
    %s84 = sphi 0, %s70
    %s88 = sphi 0, %s88
    %s90 = sphi 0, %s88
    %s91 = sphi 0, %s90
    %s105 = sphi 0, %s91
    %s109 = sphi 0, %s109
    %s111 = sphi 0, %s109
    %s112 = sphi 0, %s111
    %s126 = sphi 0, %s112
    %s130 = sphi 0, %s130
    %s132 = sphi 0, %s130
    %s133 = sphi 0, %s132
    %s147 = sphi 0, %s133
    %s153 = sphi 0, %s155
    %s156 = sphi 0, %s153
    %s157 = sphi 0, %s156
    %s173 = sphi 0, %s157
  $region4: #{siamese_forward.7} parent=0 // loop_header_branch
    %15 = sbr.rel (%p13) target = $region8
  $region5: #{siamese_forward.7} parent=0 // loop_body
    %s17 = ssub.s32 %s12, 1
    %s18 = ssub.s32 %s12, 2
    %s19 = sadd.s32 %s12, 1
    %s20 = ssub.s32 %s12, %s19
    %p21 = scmp.eq.s32.totalorder %s20, 0
    %s23 = sadd.s32 %s22, 1
    %s24 = scalar_select %p21, %s22, %s23
    %p27 = pneg %p21
    %p28 = scmp.eq.s32.totalorder %s12, 1
    %p29 = por %p27, %p28
    %p30 = scmp.ne.s32.totalorder %s22, %s25
    %p31 = scmp.eq.s32.totalorder %s12, 0
    %p32 = por %p30, %p31
    %p33 = scmp.ne.s32.totalorder %s22, %s25
    %p34 = scmp.eq.s32.totalorder %s17, 1
    %p35 = por %p33, %p34
    %p36 = scmp.ne.s32.totalorder %s25, %s26
    %p37 = scmp.eq.s32.totalorder %s17, 0
    %p38 = por %p36, %p37
    %p39 = scmp.ne.s32.totalorder %s25, %s26
    %p40 = scmp.eq.s32.totalorder %s18, 1
    %p41 = por %p39, %p40
    %p43 = scmp.ne.s32.totalorder %s26, %s42
    %p44 = scmp.eq.s32.totalorder %s18, 0
    %p45 = por %p43, %p44
    %s47 = sadd.s32 %s46, 1
    %p50 = scmp.eq.s32.totalorder %s12, 1
    %p51 = scmp.ne.s32.totalorder %s46, %s48
    %p52 = scmp.eq.s32.totalorder %s12, 0
    %p53 = por %p51, %p52
    %p54 = scmp.ne.s32.totalorder %s46, %s48
    %p55 = scmp.eq.s32.totalorder %s17, 1
    %p56 = por %p54, %p55
    %p57 = scmp.ne.s32.totalorder %s48, %s49
    %p58 = scmp.eq.s32.totalorder %s17, 0
    %p59 = por %p57, %p58
    %p60 = scmp.ne.s32.totalorder %s48, %s49
    %p61 = scmp.eq.s32.totalorder %s18, 1
    %p62 = por %p60, %p61
    %p64 = scmp.ne.s32.totalorder %s49, %s63
    %p65 = scmp.eq.s32.totalorder %s18, 0
    %p66 = por %p64, %p65
    %s68 = sadd.s32 %s67, 1
    %p71 = scmp.eq.s32.totalorder %s12, 1
    %p72 = scmp.ne.s32.totalorder %s67, %s69
    %p73 = scmp.eq.s32.totalorder %s12, 0
    %p74 = por %p72, %p73
    %p75 = scmp.ne.s32.totalorder %s67, %s69
    %p76 = scmp.eq.s32.totalorder %s17, 1
    %p77 = por %p75, %p76
    %p78 = scmp.ne.s32.totalorder %s69, %s70
    %p79 = scmp.eq.s32.totalorder %s17, 0
    %p80 = por %p78, %p79
    %p81 = scmp.ne.s32.totalorder %s69, %s70
    %p82 = scmp.eq.s32.totalorder %s18, 1
    %p83 = por %p81, %p82
    %p85 = scmp.ne.s32.totalorder %s70, %s84
    %p86 = scmp.eq.s32.totalorder %s18, 0
    %p87 = por %p85, %p86
    %s89 = sadd.s32 %s88, 1
    %p92 = scmp.eq.s32.totalorder %s12, 1
    %p93 = scmp.ne.s32.totalorder %s88, %s90
    %p94 = scmp.eq.s32.totalorder %s12, 0
    %p95 = por %p93, %p94
    %p96 = scmp.ne.s32.totalorder %s88, %s90
    %p97 = scmp.eq.s32.totalorder %s17, 1
    %p98 = por %p96, %p97
    %p99 = scmp.ne.s32.totalorder %s90, %s91
    %p100 = scmp.eq.s32.totalorder %s17, 0
    %p101 = por %p99, %p100
    %p102 = scmp.ne.s32.totalorder %s90, %s91
    %p103 = scmp.eq.s32.totalorder %s18, 1
    %p104 = por %p102, %p103
    %p106 = scmp.ne.s32.totalorder %s91, %s105
    %p107 = scmp.eq.s32.totalorder %s18, 0
    %p108 = por %p106, %p107
    %s110 = sadd.s32 %s109, 1
    %p113 = scmp.eq.s32.totalorder %s12, 1
    %p114 = scmp.ne.s32.totalorder %s109, %s111
    %p115 = scmp.eq.s32.totalorder %s12, 0
    %p116 = por %p114, %p115
    %p117 = scmp.ne.s32.totalorder %s109, %s111
    %p118 = scmp.eq.s32.totalorder %s17, 1
    %p119 = por %p117, %p118
    %p120 = scmp.ne.s32.totalorder %s111, %s112
    %p121 = scmp.eq.s32.totalorder %s17, 0
    %p122 = por %p120, %p121
    %p123 = scmp.ne.s32.totalorder %s111, %s112
    %p124 = scmp.eq.s32.totalorder %s18, 1
    %p125 = por %p123, %p124
    %p127 = scmp.ne.s32.totalorder %s112, %s126
    %p128 = scmp.eq.s32.totalorder %s18, 0
    %p129 = por %p127, %p128
    %s131 = sadd.s32 %s130, 1
    %p134 = scmp.eq.s32.totalorder %s12, 1
    %p135 = scmp.ne.s32.totalorder %s130, %s132
    %p136 = scmp.eq.s32.totalorder %s12, 0
    %p137 = por %p135, %p136
    %p138 = scmp.ne.s32.totalorder %s130, %s132
    %p139 = scmp.eq.s32.totalorder %s17, 1
    %p140 = por %p138, %p139
    %p141 = scmp.ne.s32.totalorder %s132, %s133
    %p142 = scmp.eq.s32.totalorder %s17, 0
    %p143 = por %p141, %p142
    %p144 = scmp.ne.s32.totalorder %s132, %s133
    %p145 = scmp.eq.s32.totalorder %s18, 1
    %p146 = por %p144, %p145
    %p148 = scmp.ne.s32.totalorder %s133, %s147
    %p149 = scmp.eq.s32.totalorder %s18, 0
    %p150 = por %p148, %p149
    %s151 = ssub.s32 %s12, %s19
    %p152 = scmp.eq.s32.totalorder %s151, 0
    %s154 = sadd.s32 %s153, 1
    %s155 = scalar_select %p152, %s153, %s154
    %p158 = pneg %p152
    %p159 = scmp.eq.s32.totalorder %s12, 1
    %p160 = por %p158, %p159
    %p161 = scmp.ne.s32.totalorder %s153, %s156
    %p162 = scmp.eq.s32.totalorder %s12, 0
    %p163 = por %p161, %p162
    %p164 = scmp.ne.s32.totalorder %s153, %s156
    %p165 = scmp.eq.s32.totalorder %s17, 1
    %p166 = por %p164, %p165
    %p167 = scmp.ne.s32.totalorder %s156, %s157
    %p168 = scmp.eq.s32.totalorder %s17, 0
    %p169 = por %p167, %p168
    %p170 = scmp.ne.s32.totalorder %s156, %s157
    %p171 = scmp.eq.s32.totalorder %s18, 1
    %p172 = por %p170, %p171
    %p174 = scmp.ne.s32.totalorder %s157, %s173
    %p175 = scmp.eq.s32.totalorder %s18, 0
    %p176 = por %p174, %p175
    %p177 = scmp.le.s32.totalorder 1, %s12
    %p178 = scmp.lt.s32.totalorder %s12, 3
    %p179 = pnand %p177, %p178
    %p180 = pneg %p179
    // Predicated region
    $region9: #{siamese_forward.7} parent=5 // pred_check
      _
    $region10: #{siamese_forward.7} parent=5 // pred_check_branch
      %182 = sbr.rel (%p179) target = $region12
    $region11: #{siamese_forward.7} parent=5 // pred_region
      %s183 = ssub.s32 %s12, 1
      // Predicated region
      $region13: #{siamese_forward.7} parent=11 // pred_check
        %p184 = pneg %p59
      $region14: #{siamese_forward.7} parent=11 // pred_check_branch
        %186 = sbr.rel (%p184) target = $region16
      $region15: #{siamese_forward.7} parent=11 // pred_region
        _
      $region16: #{siamese_forward.7} parent=11 // pred_fallthru
        _
      // Predicated region
      $region17: #{siamese_forward.7} parent=11 // pred_check
        %p187 = pneg %p80
      $region18: #{siamese_forward.7} parent=11 // pred_check_branch
        %189 = sbr.rel (%p187) target = $region20
      $region19: #{siamese_forward.7} parent=11 // pred_region
        _
      $region20: #{siamese_forward.7} parent=11 // pred_fallthru
        _
      // Predicated region
      $region21: #{siamese_forward.7} parent=11 // pred_check
        %p190 = pneg %p101
      $region22: #{siamese_forward.7} parent=11 // pred_check_branch
        %192 = sbr.rel (%p190) target = $region24
      $region23: #{siamese_forward.7} parent=11 // pred_region
        _
      $region24: #{siamese_forward.7} parent=11 // pred_fallthru
        _
      // Predicated region
      $region25: #{siamese_forward.7} parent=11 // pred_check
        %p193 = pneg %p122
      $region26: #{siamese_forward.7} parent=11 // pred_check_branch
        %195 = sbr.rel (%p193) target = $region28
      $region27: #{siamese_forward.7} parent=11 // pred_region
        _
      $region28: #{siamese_forward.7} parent=11 // pred_fallthru
        _
      // Predicated region
      $region29: #{siamese_forward.7} parent=11 // pred_check
        %p196 = pneg %p143
      $region30: #{siamese_forward.7} parent=11 // pred_check_branch
        %198 = sbr.rel (%p196) target = $region32
      $region31: #{siamese_forward.7} parent=11 // pred_region
        _
      $region32: #{siamese_forward.7} parent=11 // pred_fallthru
        _
    $region12: #{siamese_forward.7} parent=5 // pred_fallthru
      _
    %p199 = scmp.lt.s32.totalorder %s12, 2
    // Predicated region
    $region33: #{siamese_forward.7} parent=5 // pred_check
      %p200 = pneg %p199
    $region34: #{siamese_forward.7} parent=5 // pred_check_branch
      %202 = sbr.rel (%p200) target = $region36
    $region35: #{siamese_forward.7} parent=5 // pred_region
      // Predicated region
      $region37: #{siamese_forward.7} parent=35 // pred_check
        %p203 = pneg %p32
      $region38: #{siamese_forward.7} parent=35 // pred_check_branch
        %205 = sbr.rel (%p203) target = $region40
      $region39: #{siamese_forward.7} parent=35 // pred_region
        %p206 = scmp.lt.s32.totalorder %s12, 1
        %s207 = scalar_select %p206, %s12, 1
        %s208 = smul.addr %s207, 9
        %s209 = smul.addr %s208, 8
        %s210 = scalar_lea.vmem %s0, %s209
      $region40: #{siamese_forward.7} parent=35 // pred_fallthru
        _
    $region36: #{siamese_forward.7} parent=5 // pred_fallthru
      _
    %p211 = scmp.le.s32.totalorder 1, %s12
    %p212 = scmp.lt.s32.totalorder %s12, 3
    %p213 = pnand %p211, %p212
    %p214 = pneg %p213
    // Predicated region
    $region41: #{siamese_forward.7} parent=5 // pred_check
      _
    $region42: #{siamese_forward.7} parent=5 // pred_check_branch
      %216 = sbr.rel (%p213) target = $region44
    $region43: #{siamese_forward.7} parent=5 // pred_region
      %s217 = ssub.s32 %s12, 1
      %p218 = scmp.lt.s32.totalorder %s17, 1
      %s219 = scalar_select %p218, %s17, 1
      %s220 = smul.addr %s219, 9
      %s221 = smul.addr %s220, 8
      %s222 = scalar_lea.vmem %s0, %s221
      %p223 = pneg %p38
      %p224 = pneg %p35
      %p225 = pneg %p59
      %p226 = pneg %p56
      %p227 = pneg %p80
      %p228 = pneg %p77
      %p229 = pneg %p101
      %p230 = pneg %p98
      %p231 = pneg %p122
      %p232 = pneg %p119
      %p233 = pneg %p143
      %p234 = pneg %p140
      %p235 = pneg %p169
      %p236 = pneg %p166
      %p237 = scmp.lt.s32.totalorder %s17, 1
      %s238 = scalar_select %p237, %s17, 1
      %s239 = smul.addr %s238, 2
      %s240 = scalar_lea.vmem %s6, %s239
      %p241 = scmp.lt.s32.totalorder %s17, 1
      %s242 = scalar_select %p241, %s17, 1
      %s243 = smul.addr %s242, 9
      %s244 = smul.addr %s243, 8
      %s245 = scalar_lea.vmem %s0, %s244
      %p246 = scmp.lt.s32.totalorder %s17, 1
      %s247 = scalar_select %p246, %s17, 1
      %s248 = smul.addr %s247, 2
      %s249 = scalar_lea.vmem %s6, %s248
      %v250 = vld [vmem:[%s245] sm:$0xff]
      %v251 = vld [vmem:[%s245 + $0x8] sm:$0xff]
      %v252 = vld [vmem:[%s245 + $0x10] sm:$0xff]
      %v253 = vld [vmem:[%s245 + $0x18] sm:$0xff]
      %v254 = vld [vmem:[%s245 + $0x20] sm:$0xff]
      %v255 = vld [vmem:[%s245 + $0x28] sm:$0xff]
      %v256 = vld [vmem:[%s245 + $0x30] sm:$0xff]
      %v257 = vld [vmem:[%s245 + $0x38] sm:$0xff]
      %v258 = vld [vmem:[%s245 + $0x40] sm:$0xff]
      %v259 = vld [vmem:[%s1] sm:$0xff]
      %v260 = vld [vmem:[%s1 + $0x8] sm:$0xff]
      %v261 = vld [vmem:[%s1 + $0x10] sm:$0xff]
      %v262 = vld [vmem:[%s1 + $0x18] sm:$0xff]
      %v263 = vld [vmem:[%s1 + $0x20] sm:$0xff]
      %v264 = vld [vmem:[%s1 + $0x28] sm:$0xff]
      %v265 = vld [vmem:[%s1 + $0x30] sm:$0xff]
      %v266 = vld [vmem:[%s1 + $0x38] sm:$0xff]
      %v267 = vld [vmem:[%s1 + $0x40] sm:$0xff]
      %v268 = vld [vmem:[%s1 + $0x48] sm:$0xff]
      %v269 = vld [vmem:[%s1 + $0x50] sm:$0xff]
      %v270 = vld [vmem:[%s1 + $0x58] sm:$0xff]
      %v271 = vld [vmem:[%s1 + $0x60] sm:$0xff]
      %v272 = vld [vmem:[%s1 + $0x68] sm:$0xff]
      %v273 = vld [vmem:[%s1 + $0x70] sm:$0xff]
      %v274 = vld [vmem:[%s1 + $0x78] sm:$0xff]
      %v275 = vld [vmem:[%s1 + $0x80] sm:$0xff]
      %v276 = vld [vmem:[%s1 + $0x88] sm:$0xff]
      %v277 = vld [vmem:[%s1 + $0x90] sm:$0xff]
      %v278 = vld [vmem:[%s1 + $0x98] sm:$0xff]
      %v279 = vld [vmem:[%s1 + $0xa0] sm:$0xff]
      %v280 = vld [vmem:[%s1 + $0xa8] sm:$0xff]
      %v281 = vld [vmem:[%s1 + $0xb0] sm:$0xff]
      %v282 = vld [vmem:[%s1 + $0xb8] sm:$0xff]
      %v283 = vld [vmem:[%s1 + $0xc0] sm:$0xff]
      %v284 = vld [vmem:[%s1 + $0xc8] sm:$0xff]
      %v285 = vld [vmem:[%s1 + $0xd0] sm:$0xff]
      %v286 = vld [vmem:[%s1 + $0xd8] sm:$0xff]
      %v287 = vld [vmem:[%s1 + $0xe0] sm:$0xff]
      %v288 = vld [vmem:[%s1 + $0xe8] sm:$0xff]
      %v289 = vld [vmem:[%s1 + $0xf0] sm:$0xff]
      %v290 = vld [vmem:[%s1 + $0xf8] sm:$0xff]
      %v291 = vld [vmem:[%s1 + $0x100] sm:$0xff]
      %v292 = vld [vmem:[%s1 + $0x108] sm:$0xff]
      %v293 = vld [vmem:[%s1 + $0x110] sm:$0xff]
      %v294 = vld [vmem:[%s1 + $0x118] sm:$0xff]
      %v295 = vld [vmem:[%s1 + $0x120] sm:$0xff]
      %v296 = vld [vmem:[%s1 + $0x128] sm:$0xff]
      %v297 = vld [vmem:[%s1 + $0x130] sm:$0xff]
      %v298 = vld [vmem:[%s1 + $0x138] sm:$0xff]
      %v299 = vld [vmem:[%s1 + $0x140] sm:$0xff]
      %v300 = vld [vmem:[%s1 + $0x148] sm:$0xff]
      %v301 = vld [vmem:[%s1 + $0x150] sm:$0xff]
      %v302 = vld [vmem:[%s1 + $0x158] sm:$0xff]
      %v303 = vld [vmem:[%s1 + $0x160] sm:$0xff]
      %v304 = vld [vmem:[%s1 + $0x168] sm:$0xff]
      %v305 = vld [vmem:[%s1 + $0x170] sm:$0xff]
      %v306 = vld [vmem:[%s1 + $0x178] sm:$0xff]
      %v307 = vld [vmem:[%s1 + $0x180] sm:$0xff]
      %v308 = vld [vmem:[%s1 + $0x188] sm:$0xff]
      %v309 = vld [vmem:[%s1 + $0x190] sm:$0xff]
      %v310 = vld [vmem:[%s1 + $0x198] sm:$0xff]
      %v311 = vld [vmem:[%s1 + $0x1a0] sm:$0xff]
      %v312 = vld [vmem:[%s1 + $0x1a8] sm:$0xff]
      %v313 = vld [vmem:[%s1 + $0x1b0] sm:$0xff]
      %v314 = vld [vmem:[%s1 + $0x1b8] sm:$0xff]
      %v315 = vld [vmem:[%s1 + $0x1c0] sm:$0xff]
      %v316 = vld [vmem:[%s1 + $0x1c8] sm:$0xff]
      %v317 = vld [vmem:[%s1 + $0x1d0] sm:$0xff]
      %v318 = vld [vmem:[%s1 + $0x1d8] sm:$0xff]
      %v319 = vld [vmem:[%s1 + $0x1e0] sm:$0xff]
      %v320 = vld [vmem:[%s1 + $0x1e8] sm:$0xff]
      %v321 = vld [vmem:[%s1 + $0x1f0] sm:$0xff]
      %v322 = vld [vmem:[%s1 + $0x1f8] sm:$0xff]
      %v323 = vld [vmem:[%s1 + $0x200] sm:$0xff]
      %v324 = vld [vmem:[%s1 + $0x208] sm:$0xff]
      %v325 = vld [vmem:[%s1 + $0x210] sm:$0xff]
      %v326 = vld [vmem:[%s1 + $0x218] sm:$0xff]
      %v327 = vld [vmem:[%s1 + $0x220] sm:$0xff]
      %v328 = vld [vmem:[%s1 + $0x228] sm:$0xff]
      %v329 = vld [vmem:[%s1 + $0x230] sm:$0xff]
      %v330 = vld [vmem:[%s1 + $0x238] sm:$0xff]
      %v331 = vld [vmem:[%s1 + $0x240] sm:$0xff]
      %v332 = vld [vmem:[%s1 + $0x248] sm:$0xff]
      %v333 = vld [vmem:[%s1 + $0x250] sm:$0xff]
      %v334 = vld [vmem:[%s1 + $0x258] sm:$0xff]
      %v335 = vld [vmem:[%s1 + $0x260] sm:$0xff]
      %v336 = vld [vmem:[%s1 + $0x268] sm:$0xff]
      %v337 = vld [vmem:[%s1 + $0x270] sm:$0xff]
      %v338 = vld [vmem:[%s1 + $0x278] sm:$0xff]
      %v339 = vld [vmem:[%s1 + $0x280] sm:$0xff]
      %v340 = vld [vmem:[%s1 + $0x288] sm:$0xff]
      %v341 = vld [vmem:[%s1 + $0x290] sm:$0xff]
      %v342 = vld [vmem:[%s1 + $0x298] sm:$0xff]
      %v343 = vld [vmem:[%s1 + $0x2a0] sm:$0xff]
      %v344 = vld [vmem:[%s1 + $0x2a8] sm:$0xff]
      %v345 = vld [vmem:[%s1 + $0x2b0] sm:$0xff]
      %v346 = vld [vmem:[%s1 + $0x2b8] sm:$0xff]
      %v347 = vld [vmem:[%s1 + $0x2c0] sm:$0xff]
      %v348 = vld [vmem:[%s1 + $0x2c8] sm:$0xff]
      %v349 = vld [vmem:[%s1 + $0x2d0] sm:$0xff]
      %v350 = vld [vmem:[%s1 + $0x2d8] sm:$0xff]
      %v351 = vld [vmem:[%s1 + $0x2e0] sm:$0xff]
      %v352 = vld [vmem:[%s1 + $0x2e8] sm:$0xff]
      %v353 = vld [vmem:[%s1 + $0x2f0] sm:$0xff]
      %v354 = vld [vmem:[%s1 + $0x2f8] sm:$0xff]
      %v355 = vld [vmem:[%s1 + $0x300] sm:$0xff]
      %v356 = vld [vmem:[%s1 + $0x308] sm:$0xff]
      %v357 = vld [vmem:[%s1 + $0x310] sm:$0xff]
      %v358 = vld [vmem:[%s1 + $0x318] sm:$0xff]
      %v359 = vld [vmem:[%s1 + $0x320] sm:$0xff]
      %v360 = vld [vmem:[%s1 + $0x328] sm:$0xff]
      %v361 = vld [vmem:[%s1 + $0x330] sm:$0xff]
      %v362 = vld [vmem:[%s1 + $0x338] sm:$0xff]
      %v363 = vld [vmem:[%s1 + $0x340] sm:$0xff]
      %v364 = vld [vmem:[%s1 + $0x348] sm:$0xff]
      %v365 = vld [vmem:[%s1 + $0x350] sm:$0xff]
      %v366 = vld [vmem:[%s1 + $0x358] sm:$0xff]
      %v367 = vld [vmem:[%s1 + $0x360] sm:$0xff]
      %v368 = vld [vmem:[%s1 + $0x368] sm:$0xff]
      %v369 = vld [vmem:[%s1 + $0x370] sm:$0xff]
      %v370 = vld [vmem:[%s1 + $0x378] sm:$0xff]
      %v371 = vld [vmem:[%s1 + $0x380] sm:$0xff]
      %v372 = vld [vmem:[%s1 + $0x388] sm:$0xff]
      %v373 = vld [vmem:[%s1 + $0x390] sm:$0xff]
      %v374 = vld [vmem:[%s1 + $0x398] sm:$0xff]
      %v375 = vld [vmem:[%s1 + $0x3a0] sm:$0xff]
      %v376 = vld [vmem:[%s1 + $0x3a8] sm:$0xff]
      %v377 = vld [vmem:[%s1 + $0x3b0] sm:$0xff]
      %v378 = vld [vmem:[%s1 + $0x3b8] sm:$0xff]
      %v379 = vld [vmem:[%s1 + $0x3c0] sm:$0xff]
      %v380 = vld [vmem:[%s1 + $0x3c8] sm:$0xff]
      %v381 = vld [vmem:[%s1 + $0x3d0] sm:$0xff]
      %v382 = vld [vmem:[%s1 + $0x3d8] sm:$0xff]
      %v383 = vld [vmem:[%s1 + $0x3e0] sm:$0xff]
      %v384 = vld [vmem:[%s1 + $0x3e8] sm:$0xff]
      %v385 = vld [vmem:[%s1 + $0x3f0] sm:$0xff]
      %v386 = vld [vmem:[%s1 + $0x3f8] sm:$0xff]
      %v387 = vld [vmem:[%s1 + $0x400] sm:$0xff]
      %v388 = vld [vmem:[%s1 + $0x408] sm:$0xff]
      %v389 = vld [vmem:[%s1 + $0x410] sm:$0xff]
      %v390 = vld [vmem:[%s1 + $0x418] sm:$0xff]
      %v391 = vld [vmem:[%s1 + $0x420] sm:$0xff]
      %v392 = vld [vmem:[%s1 + $0x428] sm:$0xff]
      %v393 = vld [vmem:[%s1 + $0x430] sm:$0xff]
      %v394 = vld [vmem:[%s1 + $0x438] sm:$0xff]
      %v395 = vld [vmem:[%s1 + $0x440] sm:$0xff]
      %v396 = vld [vmem:[%s1 + $0x448] sm:$0xff]
      %v397 = vld [vmem:[%s1 + $0x450] sm:$0xff]
      %v398 = vld [vmem:[%s1 + $0x458] sm:$0xff]
      %v399 = vld [vmem:[%s1 + $0x460] sm:$0xff]
      %v400 = vld [vmem:[%s1 + $0x468] sm:$0xff]
      %v401 = vld [vmem:[%s1 + $0x470] sm:$0xff]
      %v402 = vld [vmem:[%s1 + $0x478] sm:$0xff]
      %v403 = vld [vmem:[%s1 + $0x480] sm:$0xff]
      %v404 = vld [vmem:[%s1 + $0x488] sm:$0xff]
      %v405 = vld [vmem:[%s1 + $0x490] sm:$0xff]
      %v406 = vld [vmem:[%s1 + $0x498] sm:$0xff]
      %v407 = vld [vmem:[%s1 + $0x4a0] sm:$0xff]
      %v408 = vld [vmem:[%s1 + $0x4a8] sm:$0xff]
      %v409 = vld [vmem:[%s1 + $0x4b0] sm:$0xff]
      %v410 = vld [vmem:[%s1 + $0x4b8] sm:$0xff]
      %v411 = vld [vmem:[%s1 + $0x4c0] sm:$0xff]
      %v412 = vld [vmem:[%s1 + $0x4c8] sm:$0xff]
      %v413 = vld [vmem:[%s1 + $0x4d0] sm:$0xff]
      %v414 = vld [vmem:[%s1 + $0x4d8] sm:$0xff]
      %v415 = vld [vmem:[%s1 + $0x4e0] sm:$0xff]
      %v416 = vld [vmem:[%s1 + $0x4e8] sm:$0xff]
      %v417 = vld [vmem:[%s1 + $0x4f0] sm:$0xff]
      %v418 = vld [vmem:[%s1 + $0x4f8] sm:$0xff]
      %v419 = vld [vmem:[%s1 + $0x500] sm:$0xff]
      %v420 = vld [vmem:[%s1 + $0x508] sm:$0xff]
      %v421 = vld [vmem:[%s1 + $0x510] sm:$0xff]
      %v422 = vld [vmem:[%s1 + $0x518] sm:$0xff]
      %v423 = vld [vmem:[%s1 + $0x520] sm:$0xff]
      %v424 = vld [vmem:[%s1 + $0x528] sm:$0xff]
      %v425 = vld [vmem:[%s1 + $0x530] sm:$0xff]
      %v426 = vld [vmem:[%s1 + $0x538] sm:$0xff]
      %v427 = vld [vmem:[%s1 + $0x540] sm:$0xff]
      %v428 = vld [vmem:[%s1 + $0x548] sm:$0xff]
      %v429 = vld [vmem:[%s1 + $0x550] sm:$0xff]
      %v430 = vld [vmem:[%s1 + $0x558] sm:$0xff]
      %v431 = vld [vmem:[%s1 + $0x560] sm:$0xff]
      %v432 = vld [vmem:[%s1 + $0x568] sm:$0xff]
      %v433 = vld [vmem:[%s1 + $0x570] sm:$0xff]
      %v434 = vld [vmem:[%s1 + $0x578] sm:$0xff]
      %v435 = vld [vmem:[%s1 + $0x580] sm:$0xff]
      %v436 = vld [vmem:[%s1 + $0x588] sm:$0xff]
      %v437 = vld [vmem:[%s1 + $0x590] sm:$0xff]
      %v438 = vld [vmem:[%s1 + $0x598] sm:$0xff]
      %v439 = vld [vmem:[%s1 + $0x5a0] sm:$0xff]
      %v440 = vld [vmem:[%s1 + $0x5a8] sm:$0xff]
      %v441 = vld [vmem:[%s1 + $0x5b0] sm:$0xff]
      %v442 = vld [vmem:[%s1 + $0x5b8] sm:$0xff]
      %v443 = vld [vmem:[%s1 + $0x5c0] sm:$0xff]
      %v444 = vld [vmem:[%s1 + $0x5c8] sm:$0xff]
      %v445 = vld [vmem:[%s1 + $0x5d0] sm:$0xff]
      %v446 = vld [vmem:[%s1 + $0x5d8] sm:$0xff]
      %v447 = vld [vmem:[%s1 + $0x5e0] sm:$0xff]
      %v448 = vld [vmem:[%s1 + $0x5e8] sm:$0xff]
      %v449 = vld [vmem:[%s1 + $0x5f0] sm:$0xff]
      %v450 = vld [vmem:[%s1 + $0x5f8] sm:$0xff]
      %v451 = vld [vmem:[%s1 + $0x600] sm:$0xff]
      %v452 = vld [vmem:[%s1 + $0x608] sm:$0xff]
      %v453 = vld [vmem:[%s1 + $0x610] sm:$0xff]
      %v454 = vld [vmem:[%s1 + $0x618] sm:$0xff]
      %v455 = vld [vmem:[%s1 + $0x620] sm:$0xff]
      %v456 = vld [vmem:[%s1 + $0x628] sm:$0xff]
      %v457 = vld [vmem:[%s1 + $0x630] sm:$0xff]
      %v458 = vld [vmem:[%s1 + $0x638] sm:$0xff]
      %v459 = vld [vmem:[%s1 + $0x640] sm:$0xff]
      %v460 = vld [vmem:[%s1 + $0x648] sm:$0xff]
      %v461 = vld [vmem:[%s1 + $0x650] sm:$0xff]
      %v462 = vld [vmem:[%s1 + $0x658] sm:$0xff]
      %v463 = vld [vmem:[%s1 + $0x660] sm:$0xff]
      %v464 = vld [vmem:[%s1 + $0x668] sm:$0xff]
      %v465 = vld [vmem:[%s1 + $0x670] sm:$0xff]
      %v466 = vld [vmem:[%s1 + $0x678] sm:$0xff]
      %v467 = vld [vmem:[%s1 + $0x680] sm:$0xff]
      %v468 = vld [vmem:[%s1 + $0x688] sm:$0xff]
      %v469 = vld [vmem:[%s1 + $0x690] sm:$0xff]
      %v470 = vld [vmem:[%s1 + $0x698] sm:$0xff]
      %v471 = vld [vmem:[%s1 + $0x6a0] sm:$0xff]
      %v472 = vld [vmem:[%s1 + $0x6a8] sm:$0xff]
      %v473 = vld [vmem:[%s1 + $0x6b0] sm:$0xff]
      %v474 = vld [vmem:[%s1 + $0x6b8] sm:$0xff]
      %v475 = vld [vmem:[%s1 + $0x6c0] sm:$0xff]
      %v476 = vld [vmem:[%s1 + $0x6c8] sm:$0xff]
      %v477 = vld [vmem:[%s1 + $0x6d0] sm:$0xff]
      %v478 = vld [vmem:[%s1 + $0x6d8] sm:$0xff]
      %v479 = vld [vmem:[%s1 + $0x6e0] sm:$0xff]
      %v480 = vld [vmem:[%s1 + $0x6e8] sm:$0xff]
      %v481 = vld [vmem:[%s1 + $0x6f0] sm:$0xff]
      %v482 = vld [vmem:[%s1 + $0x6f8] sm:$0xff]
      %v483 = vld [vmem:[%s1 + $0x700] sm:$0xff]
      %v484 = vld [vmem:[%s1 + $0x708] sm:$0xff]
      %v485 = vld [vmem:[%s1 + $0x710] sm:$0xff]
      %v486 = vld [vmem:[%s1 + $0x718] sm:$0xff]
      %v487 = vld [vmem:[%s1 + $0x720] sm:$0xff]
      %v488 = vld [vmem:[%s1 + $0x728] sm:$0xff]
      %v489 = vld [vmem:[%s1 + $0x730] sm:$0xff]
      %v490 = vld [vmem:[%s1 + $0x738] sm:$0xff]
      %v491 = vld [vmem:[%s1 + $0x740] sm:$0xff]
      %v492 = vld [vmem:[%s1 + $0x748] sm:$0xff]
      %v493 = vld [vmem:[%s1 + $0x750] sm:$0xff]
      %v494 = vld [vmem:[%s1 + $0x758] sm:$0xff]
      %v495 = vld [vmem:[%s1 + $0x760] sm:$0xff]
      %v496 = vld [vmem:[%s1 + $0x768] sm:$0xff]
      %v497 = vld [vmem:[%s1 + $0x770] sm:$0xff]
      %v498 = vld [vmem:[%s1 + $0x778] sm:$0xff]
      %v499 = vld [vmem:[%s1 + $0x780] sm:$0xff]
      %v500 = vld [vmem:[%s1 + $0x788] sm:$0xff]
      %v501 = vld [vmem:[%s1 + $0x790] sm:$0xff]
      %v502 = vld [vmem:[%s1 + $0x798] sm:$0xff]
      %v503 = vld [vmem:[%s1 + $0x7a0] sm:$0xff]
      %v504 = vld [vmem:[%s1 + $0x7a8] sm:$0xff]
      %v505 = vld [vmem:[%s1 + $0x7b0] sm:$0xff]
      %v506 = vld [vmem:[%s1 + $0x7b8] sm:$0xff]
      %v507 = vld [vmem:[%s1 + $0x7c0] sm:$0xff]
      %v508 = vld [vmem:[%s1 + $0x7c8] sm:$0xff]
      %v509 = vld [vmem:[%s1 + $0x7d0] sm:$0xff]
      %v510 = vld [vmem:[%s1 + $0x7d8] sm:$0xff]
      %v511 = vld [vmem:[%s1 + $0x7e0] sm:$0xff]
      %v512 = vld [vmem:[%s1 + $0x7e8] sm:$0xff]
      %v513 = vld [vmem:[%s1 + $0x7f0] sm:$0xff]
      %v514 = vld [vmem:[%s1 + $0x7f8] sm:$0xff]
      %v515 = vld [vmem:[%s1 + $0x800] sm:$0xff]
      %v516 = vld [vmem:[%s1 + $0x808] sm:$0xff]
      %v517 = vld [vmem:[%s1 + $0x810] sm:$0xff]
      %v518 = vld [vmem:[%s1 + $0x818] sm:$0xff]
      %v519 = vld [vmem:[%s1 + $0x820] sm:$0xff]
      %v520 = vld [vmem:[%s1 + $0x828] sm:$0xff]
      %v521 = vld [vmem:[%s1 + $0x830] sm:$0xff]
      %v522 = vld [vmem:[%s1 + $0x838] sm:$0xff]
      %v523 = vld [vmem:[%s1 + $0x840] sm:$0xff]
      %v524 = vld [vmem:[%s1 + $0x848] sm:$0xff]
      %v525 = vld [vmem:[%s1 + $0x850] sm:$0xff]
      %v526 = vld [vmem:[%s1 + $0x858] sm:$0xff]
      %v527 = vld [vmem:[%s1 + $0x860] sm:$0xff]
      %v528 = vld [vmem:[%s1 + $0x868] sm:$0xff]
      %v529 = vld [vmem:[%s1 + $0x870] sm:$0xff]
      %v530 = vld [vmem:[%s1 + $0x878] sm:$0xff]
      %v531 = vld [vmem:[%s1 + $0x880] sm:$0xff]
      %v532 = vld [vmem:[%s1 + $0x888] sm:$0xff]
      %v533 = vld [vmem:[%s1 + $0x890] sm:$0xff]
      %v534 = vld [vmem:[%s1 + $0x898] sm:$0xff]
      %v535 = vld [vmem:[%s1 + $0x8a0] sm:$0xff]
      %v536 = vld [vmem:[%s1 + $0x8a8] sm:$0xff]
      %v537 = vld [vmem:[%s1 + $0x8b0] sm:$0xff]
      %v538 = vld [vmem:[%s1 + $0x8b8] sm:$0xff]
      %v539 = vld [vmem:[%s1 + $0x8c0] sm:$0xff]
      %v540 = vld [vmem:[%s1 + $0x8c8] sm:$0xff]
      %v541 = vld [vmem:[%s1 + $0x8d0] sm:$0xff]
      %v542 = vld [vmem:[%s1 + $0x8d8] sm:$0xff]
      %v543 = vld [vmem:[%s1 + $0x8e0] sm:$0xff]
      %v544 = vld [vmem:[%s1 + $0x8e8] sm:$0xff]
      %v545 = vld [vmem:[%s1 + $0x8f0] sm:$0xff]
      %v546 = vld [vmem:[%s1 + $0x8f8] sm:$0xff]
      %v547 = vld [vmem:[%s1 + $0x900] sm:$0xff]
      %v548 = vld [vmem:[%s1 + $0x908] sm:$0xff]
      %v549 = vld [vmem:[%s1 + $0x910] sm:$0xff]
      %v550 = vld [vmem:[%s1 + $0x918] sm:$0xff]
      %v551 = vld [vmem:[%s1 + $0x920] sm:$0xff]
      %v552 = vld [vmem:[%s1 + $0x928] sm:$0xff]
      %v553 = vld [vmem:[%s1 + $0x930] sm:$0xff]
      %v554 = vld [vmem:[%s1 + $0x938] sm:$0xff]
      %v555 = vld [vmem:[%s1 + $0x940] sm:$0xff]
      %v556 = vld [vmem:[%s1 + $0x948] sm:$0xff]
      %v557 = vld [vmem:[%s1 + $0x950] sm:$0xff]
      %v558 = vld [vmem:[%s1 + $0x958] sm:$0xff]
      %v559 = vld [vmem:[%s1 + $0x960] sm:$0xff]
      %v560 = vld [vmem:[%s1 + $0x968] sm:$0xff]
      %v561 = vld [vmem:[%s1 + $0x970] sm:$0xff]
      %v562 = vld [vmem:[%s1 + $0x978] sm:$0xff]
      %v563 = vld [vmem:[%s1 + $0x980] sm:$0xff]
      %v564 = vld [vmem:[%s1 + $0x988] sm:$0xff]
      %v565 = vld [vmem:[%s1 + $0x990] sm:$0xff]
      %v566 = vld [vmem:[%s1 + $0x998] sm:$0xff]
      %v567 = vld [vmem:[%s1 + $0x9a0] sm:$0xff]
      %v568 = vld [vmem:[%s1 + $0x9a8] sm:$0xff]
      %v569 = vld [vmem:[%s1 + $0x9b0] sm:$0xff]
      %v570 = vld [vmem:[%s1 + $0x9b8] sm:$0xff]
      %v571 = vld [vmem:[%s1 + $0x9c0] sm:$0xff]
      %v572 = vld [vmem:[%s1 + $0x9c8] sm:$0xff]
      %v573 = vld [vmem:[%s1 + $0x9d0] sm:$0xff]
      %v574 = vld [vmem:[%s1 + $0x9d8] sm:$0xff]
      %v575 = vld [vmem:[%s1 + $0x9e0] sm:$0xff]
      %v576 = vld [vmem:[%s1 + $0x9e8] sm:$0xff]
      %v577 = vld [vmem:[%s1 + $0x9f0] sm:$0xff]
      %v578 = vld [vmem:[%s1 + $0x9f8] sm:$0xff]
      %v579 = vld [vmem:[%s1 + $0xa00] sm:$0xff]
      %v580 = vld [vmem:[%s1 + $0xa08] sm:$0xff]
      %v581 = vld [vmem:[%s1 + $0xa10] sm:$0xff]
      %v582 = vld [vmem:[%s1 + $0xa18] sm:$0xff]
      %v583 = vld [vmem:[%s1 + $0xa20] sm:$0xff]
      %v584 = vld [vmem:[%s1 + $0xa28] sm:$0xff]
      %v585 = vld [vmem:[%s1 + $0xa30] sm:$0xff]
      %v586 = vld [vmem:[%s1 + $0xa38] sm:$0xff]
      %v587 = vld [vmem:[%s1 + $0xa40] sm:$0xff]
      %v588 = vld [vmem:[%s1 + $0xa48] sm:$0xff]
      %v589 = vld [vmem:[%s1 + $0xa50] sm:$0xff]
      %v590 = vld [vmem:[%s1 + $0xa58] sm:$0xff]
      %v591 = vld [vmem:[%s1 + $0xa60] sm:$0xff]
      %v592 = vld [vmem:[%s1 + $0xa68] sm:$0xff]
      %v593 = vld [vmem:[%s1 + $0xa70] sm:$0xff]
      %v594 = vld [vmem:[%s1 + $0xa78] sm:$0xff]
      %v595 = vld [vmem:[%s1 + $0xa80] sm:$0xff]
      %v596 = vld [vmem:[%s1 + $0xa88] sm:$0xff]
      %v597 = vld [vmem:[%s1 + $0xa90] sm:$0xff]
      %v598 = vld [vmem:[%s1 + $0xa98] sm:$0xff]
      %v599 = vld [vmem:[%s1 + $0xaa0] sm:$0xff]
      %v600 = vld [vmem:[%s1 + $0xaa8] sm:$0xff]
      %v601 = vld [vmem:[%s1 + $0xab0] sm:$0xff]
      %v602 = vld [vmem:[%s1 + $0xab8] sm:$0xff]
      %v603 = vld [vmem:[%s1 + $0xac0] sm:$0xff]
      %v604 = vld [vmem:[%s1 + $0xac8] sm:$0xff]
      %v605 = vld [vmem:[%s1 + $0xad0] sm:$0xff]
      %v606 = vld [vmem:[%s1 + $0xad8] sm:$0xff]
      %v607 = vld [vmem:[%s1 + $0xae0] sm:$0xff]
      %v608 = vld [vmem:[%s1 + $0xae8] sm:$0xff]
      %v609 = vld [vmem:[%s1 + $0xaf0] sm:$0xff]
      %v610 = vld [vmem:[%s1 + $0xaf8] sm:$0xff]
      %v611 = vld [vmem:[%s1 + $0xb00] sm:$0xff]
      %v612 = vld [vmem:[%s1 + $0xb08] sm:$0xff]
      %v613 = vld [vmem:[%s1 + $0xb10] sm:$0xff]
      %v614 = vld [vmem:[%s1 + $0xb18] sm:$0xff]
      %v615 = vld [vmem:[%s1 + $0xb20] sm:$0xff]
      %v616 = vld [vmem:[%s1 + $0xb28] sm:$0xff]
      %v617 = vld [vmem:[%s1 + $0xb30] sm:$0xff]
      %v618 = vld [vmem:[%s1 + $0xb38] sm:$0xff]
      %v619 = vld [vmem:[%s1 + $0xb40] sm:$0xff]
      %v620 = vld [vmem:[%s1 + $0xb48] sm:$0xff]
      %v621 = vld [vmem:[%s1 + $0xb50] sm:$0xff]
      %v622 = vld [vmem:[%s1 + $0xb58] sm:$0xff]
      %v623 = vld [vmem:[%s1 + $0xb60] sm:$0xff]
      %v624 = vld [vmem:[%s1 + $0xb68] sm:$0xff]
      %v625 = vld [vmem:[%s1 + $0xb70] sm:$0xff]
      %v626 = vld [vmem:[%s1 + $0xb78] sm:$0xff]
      %v627 = vld [vmem:[%s1 + $0xb80] sm:$0xff]
      %v628 = vld [vmem:[%s1 + $0xb88] sm:$0xff]
      %v629 = vld [vmem:[%s1 + $0xb90] sm:$0xff]
      %v630 = vld [vmem:[%s1 + $0xb98] sm:$0xff]
      %v631 = vld [vmem:[%s1 + $0xba0] sm:$0xff]
      %v632 = vld [vmem:[%s1 + $0xba8] sm:$0xff]
      %v633 = vld [vmem:[%s1 + $0xbb0] sm:$0xff]
      %v634 = vld [vmem:[%s1 + $0xbb8] sm:$0xff]
      %v635 = vld [vmem:[%s1 + $0xbc0] sm:$0xff]
      %v636 = vld [vmem:[%s1 + $0xbc8] sm:$0xff]
      %v637 = vld [vmem:[%s1 + $0xbd0] sm:$0xff]
      %v638 = vld [vmem:[%s1 + $0xbd8] sm:$0xff]
      %v639 = vld [vmem:[%s1 + $0xbe0] sm:$0xff]
      %v640 = vld [vmem:[%s1 + $0xbe8] sm:$0xff]
      %v641 = vld [vmem:[%s1 + $0xbf0] sm:$0xff]
      %v642 = vld [vmem:[%s1 + $0xbf8] sm:$0xff]
      %v643 = vld [vmem:[%s1 + $0xc00] sm:$0xff]
      %v644 = vld [vmem:[%s1 + $0xc08] sm:$0xff]
      %v645 = vld [vmem:[%s1 + $0xc10] sm:$0xff]
      %v646 = vld [vmem:[%s1 + $0xc18] sm:$0xff]
      %v647 = vld [vmem:[%s1 + $0xc20] sm:$0xff]
      %v648 = vld [vmem:[%s1 + $0xc28] sm:$0xff]
      %v649 = vld [vmem:[%s1 + $0xc30] sm:$0xff]
      %v650 = vld [vmem:[%s1 + $0xc38] sm:$0xff]
      %v651 = vld [vmem:[%s1 + $0xc40] sm:$0xff]
      %v652 = vld [vmem:[%s1 + $0xc48] sm:$0xff]
      %v653 = vld [vmem:[%s1 + $0xc50] sm:$0xff]
      %v654 = vld [vmem:[%s1 + $0xc58] sm:$0xff]
      %v655 = vld [vmem:[%s1 + $0xc60] sm:$0xff]
      %v656 = vld [vmem:[%s1 + $0xc68] sm:$0xff]
      %v657 = vld [vmem:[%s1 + $0xc70] sm:$0xff]
      %v658 = vld [vmem:[%s1 + $0xc78] sm:$0xff]
      %v659 = vld [vmem:[%s1 + $0xc80] sm:$0xff]
      %v660 = vld [vmem:[%s1 + $0xc88] sm:$0xff]
      %v661 = vld [vmem:[%s1 + $0xc90] sm:$0xff]
      %v662 = vld [vmem:[%s1 + $0xc98] sm:$0xff]
      %v663 = vld [vmem:[%s1 + $0xca0] sm:$0xff]
      %v664 = vld [vmem:[%s1 + $0xca8] sm:$0xff]
      %v665 = vld [vmem:[%s1 + $0xcb0] sm:$0xff]
      %v666 = vld [vmem:[%s1 + $0xcb8] sm:$0xff]
      %v667 = vld [vmem:[%s1 + $0xcc0] sm:$0xff]
      %v668 = vld [vmem:[%s1 + $0xcc8] sm:$0xff]
      %v669 = vld [vmem:[%s1 + $0xcd0] sm:$0xff]
      %v670 = vld [vmem:[%s1 + $0xcd8] sm:$0xff]
      %v671 = vld [vmem:[%s1 + $0xce0] sm:$0xff]
      %v672 = vld [vmem:[%s1 + $0xce8] sm:$0xff]
      %v673 = vld [vmem:[%s1 + $0xcf0] sm:$0xff]
      %v674 = vld [vmem:[%s1 + $0xcf8] sm:$0xff]
      %v675 = vld [vmem:[%s1 + $0xd00] sm:$0xff]
      %v676 = vld [vmem:[%s1 + $0xd08] sm:$0xff]
      %v677 = vld [vmem:[%s1 + $0xd10] sm:$0xff]
      %v678 = vld [vmem:[%s1 + $0xd18] sm:$0xff]
      %v679 = vld [vmem:[%s1 + $0xd20] sm:$0xff]
      %v680 = vld [vmem:[%s1 + $0xd28] sm:$0xff]
      %v681 = vld [vmem:[%s1 + $0xd30] sm:$0xff]
      %v682 = vld [vmem:[%s1 + $0xd38] sm:$0xff]
      %v683 = vld [vmem:[%s1 + $0xd40] sm:$0xff]
      %v684 = vld [vmem:[%s1 + $0xd48] sm:$0xff]
      %v685 = vld [vmem:[%s1 + $0xd50] sm:$0xff]
      %v686 = vld [vmem:[%s1 + $0xd58] sm:$0xff]
      %v687 = vld [vmem:[%s1 + $0xd60] sm:$0xff]
      %v688 = vld [vmem:[%s1 + $0xd68] sm:$0xff]
      %v689 = vld [vmem:[%s1 + $0xd70] sm:$0xff]
      %v690 = vld [vmem:[%s1 + $0xd78] sm:$0xff]
      %v691 = vld [vmem:[%s1 + $0xd80] sm:$0xff]
      %v692 = vld [vmem:[%s1 + $0xd88] sm:$0xff]
      %v693 = vld [vmem:[%s1 + $0xd90] sm:$0xff]
      %v694 = vld [vmem:[%s1 + $0xd98] sm:$0xff]
      %v695 = vld [vmem:[%s1 + $0xda0] sm:$0xff]
      %v696 = vld [vmem:[%s1 + $0xda8] sm:$0xff]
      %v697 = vld [vmem:[%s1 + $0xdb0] sm:$0xff]
      %v698 = vld [vmem:[%s1 + $0xdb8] sm:$0xff]
      %v699 = vld [vmem:[%s1 + $0xdc0] sm:$0xff]
      %v700 = vld [vmem:[%s1 + $0xdc8] sm:$0xff]
      %v701 = vld [vmem:[%s1 + $0xdd0] sm:$0xff]
      %v702 = vld [vmem:[%s1 + $0xdd8] sm:$0xff]
      %v703 = vld [vmem:[%s1 + $0xde0] sm:$0xff]
      %v704 = vld [vmem:[%s1 + $0xde8] sm:$0xff]
      %v705 = vld [vmem:[%s1 + $0xdf0] sm:$0xff]
      %v706 = vld [vmem:[%s1 + $0xdf8] sm:$0xff]
      %v707 = vld [vmem:[%s1 + $0xe00] sm:$0xff]
      %v708 = vld [vmem:[%s1 + $0xe08] sm:$0xff]
      %v709 = vld [vmem:[%s1 + $0xe10] sm:$0xff]
      %v710 = vld [vmem:[%s1 + $0xe18] sm:$0xff]
      %v711 = vld [vmem:[%s1 + $0xe20] sm:$0xff]
      %v712 = vld [vmem:[%s1 + $0xe28] sm:$0xff]
      %v713 = vld [vmem:[%s1 + $0xe30] sm:$0xff]
      %v714 = vld [vmem:[%s1 + $0xe38] sm:$0xff]
      %v715 = vld [vmem:[%s1 + $0xe40] sm:$0xff]
      %v716 = vld [vmem:[%s1 + $0xe48] sm:$0xff]
      %v717 = vld [vmem:[%s1 + $0xe50] sm:$0xff]
      %v718 = vld [vmem:[%s1 + $0xe58] sm:$0xff]
      %v719 = vld [vmem:[%s1 + $0xe60] sm:$0xff]
      %v720 = vld [vmem:[%s1 + $0xe68] sm:$0xff]
      %v721 = vld [vmem:[%s1 + $0xe70] sm:$0xff]
      %v722 = vld [vmem:[%s1 + $0xe78] sm:$0xff]
      %v723 = vld [vmem:[%s1 + $0xe80] sm:$0xff]
      %v724 = vld [vmem:[%s1 + $0xe88] sm:$0xff]
      %v725 = vld [vmem:[%s1 + $0xe90] sm:$0xff]
      %v726 = vld [vmem:[%s1 + $0xe98] sm:$0xff]
      %v727 = vld [vmem:[%s1 + $0xea0] sm:$0xff]
      %v728 = vld [vmem:[%s1 + $0xea8] sm:$0xff]
      %v729 = vld [vmem:[%s1 + $0xeb0] sm:$0xff]
      %v730 = vld [vmem:[%s1 + $0xeb8] sm:$0xff]
      %v731 = vld [vmem:[%s1 + $0xec0] sm:$0xff]
      %v732 = vld [vmem:[%s1 + $0xec8] sm:$0xff]
      %v733 = vld [vmem:[%s1 + $0xed0] sm:$0xff]
      %v734 = vld [vmem:[%s1 + $0xed8] sm:$0xff]
      %v735 = vld [vmem:[%s1 + $0xee0] sm:$0xff]
      %v736 = vld [vmem:[%s1 + $0xee8] sm:$0xff]
      %v737 = vld [vmem:[%s1 + $0xef0] sm:$0xff]
      %v738 = vld [vmem:[%s1 + $0xef8] sm:$0xff]
      %v739 = vld [vmem:[%s1 + $0xf00] sm:$0xff]
      %v740 = vld [vmem:[%s1 + $0xf08] sm:$0xff]
      %v741 = vld [vmem:[%s1 + $0xf10] sm:$0xff]
      %v742 = vld [vmem:[%s1 + $0xf18] sm:$0xff]
      %v743 = vld [vmem:[%s1 + $0xf20] sm:$0xff]
      %v744 = vld [vmem:[%s1 + $0xf28] sm:$0xff]
      %v745 = vld [vmem:[%s1 + $0xf30] sm:$0xff]
      %v746 = vld [vmem:[%s1 + $0xf38] sm:$0xff]
      %v747 = vld [vmem:[%s1 + $0xf40] sm:$0xff]
      %v748 = vld [vmem:[%s1 + $0xf48] sm:$0xff]
      %v749 = vld [vmem:[%s1 + $0xf50] sm:$0xff]
      %v750 = vld [vmem:[%s1 + $0xf58] sm:$0xff]
      %v751 = vld [vmem:[%s1 + $0xf60] sm:$0xff]
      %v752 = vld [vmem:[%s1 + $0xf68] sm:$0xff]
      %v753 = vld [vmem:[%s1 + $0xf70] sm:$0xff]
      %v754 = vld [vmem:[%s1 + $0xf78] sm:$0xff]
      %v755 = vld [vmem:[%s1 + $0xf80] sm:$0xff]
      %v756 = vld [vmem:[%s1 + $0xf88] sm:$0xff]
      %v757 = vld [vmem:[%s1 + $0xf90] sm:$0xff]
      %v758 = vld [vmem:[%s1 + $0xf98] sm:$0xff]
      %v759 = vld [vmem:[%s1 + $0xfa0] sm:$0xff]
      %v760 = vld [vmem:[%s1 + $0xfa8] sm:$0xff]
      %v761 = vld [vmem:[%s1 + $0xfb0] sm:$0xff]
      %v762 = vld [vmem:[%s1 + $0xfb8] sm:$0xff]
      %v763 = vld [vmem:[%s1 + $0xfc0] sm:$0xff]
      %v764 = vld [vmem:[%s1 + $0xfc8] sm:$0xff]
      %v765 = vld [vmem:[%s1 + $0xfd0] sm:$0xff]
      %v766 = vld [vmem:[%s1 + $0xfd8] sm:$0xff]
      %v767 = vld [vmem:[%s1 + $0xfe0] sm:$0xff]
      %v768 = vld [vmem:[%s1 + $0xfe8] sm:$0xff]
      %v769 = vld [vmem:[%s1 + $0xff0] sm:$0xff]
      %v770 = vld [vmem:[%s1 + $0xff8] sm:$0xff]
      %v771 = vld [vmem:[%s1 + $0x1000] sm:$0xff]
      %v772 = vld [vmem:[%s1 + $0x1008] sm:$0xff]
      %v773 = vld [vmem:[%s1 + $0x1010] sm:$0xff]
      %v774 = vld [vmem:[%s1 + $0x1018] sm:$0xff]
      %v775 = vld [vmem:[%s1 + $0x1020] sm:$0xff]
      %v776 = vld [vmem:[%s1 + $0x1028] sm:$0xff]
      %v777 = vld [vmem:[%s1 + $0x1030] sm:$0xff]
      %v778 = vld [vmem:[%s1 + $0x1038] sm:$0xff]
      %v779 = vld [vmem:[%s1 + $0x1040] sm:$0xff]
      %v780 = vld [vmem:[%s1 + $0x1048] sm:$0xff]
      %v781 = vld [vmem:[%s1 + $0x1050] sm:$0xff]
      %v782 = vld [vmem:[%s1 + $0x1058] sm:$0xff]
      %v783 = vld [vmem:[%s1 + $0x1060] sm:$0xff]
      %v784 = vld [vmem:[%s1 + $0x1068] sm:$0xff]
      %v785 = vld [vmem:[%s1 + $0x1070] sm:$0xff]
      %v786 = vld [vmem:[%s1 + $0x1078] sm:$0xff]
      %v787 = vld [vmem:[%s1 + $0x1080] sm:$0xff]
      %v788 = vld [vmem:[%s1 + $0x1088] sm:$0xff]
      %v789 = vld [vmem:[%s1 + $0x1090] sm:$0xff]
      %v790 = vld [vmem:[%s1 + $0x1098] sm:$0xff]
      %v791 = vld [vmem:[%s1 + $0x10a0] sm:$0xff]
      %v792 = vld [vmem:[%s1 + $0x10a8] sm:$0xff]
      %v793 = vld [vmem:[%s1 + $0x10b0] sm:$0xff]
      %v794 = vld [vmem:[%s1 + $0x10b8] sm:$0xff]
      %v795 = vld [vmem:[%s1 + $0x10c0] sm:$0xff]
      %v796 = vld [vmem:[%s1 + $0x10c8] sm:$0xff]
      %v797 = vld [vmem:[%s1 + $0x10d0] sm:$0xff]
      %v798 = vld [vmem:[%s1 + $0x10d8] sm:$0xff]
      %v799 = vld [vmem:[%s1 + $0x10e0] sm:$0xff]
      %v800 = vld [vmem:[%s1 + $0x10e8] sm:$0xff]
      %v801 = vld [vmem:[%s1 + $0x10f0] sm:$0xff]
      %v802 = vld [vmem:[%s1 + $0x10f8] sm:$0xff]
      %v803 = vld [vmem:[%s1 + $0x1100] sm:$0xff]
      %v804 = vld [vmem:[%s1 + $0x1108] sm:$0xff]
      %v805 = vld [vmem:[%s1 + $0x1110] sm:$0xff]
      %v806 = vld [vmem:[%s1 + $0x1118] sm:$0xff]
      %v807 = vld [vmem:[%s1 + $0x1120] sm:$0xff]
      %v808 = vld [vmem:[%s1 + $0x1128] sm:$0xff]
      %v809 = vld [vmem:[%s1 + $0x1130] sm:$0xff]
      %v810 = vld [vmem:[%s1 + $0x1138] sm:$0xff]
      %v811 = vld [vmem:[%s1 + $0x1140] sm:$0xff]
      %v812 = vld [vmem:[%s1 + $0x1148] sm:$0xff]
      %v813 = vld [vmem:[%s1 + $0x1150] sm:$0xff]
      %v814 = vld [vmem:[%s1 + $0x1158] sm:$0xff]
      %v815 = vld [vmem:[%s1 + $0x1160] sm:$0xff]
      %v816 = vld [vmem:[%s1 + $0x1168] sm:$0xff]
      %v817 = vld [vmem:[%s1 + $0x1170] sm:$0xff]
      %v818 = vld [vmem:[%s1 + $0x1178] sm:$0xff]
      %v819 = vld [vmem:[%s1 + $0x1180] sm:$0xff]
      %v820 = vld [vmem:[%s1 + $0x1188] sm:$0xff]
      %v821 = vld [vmem:[%s1 + $0x1190] sm:$0xff]
      %v822 = vld [vmem:[%s1 + $0x1198] sm:$0xff]
      %v823 = vld [vmem:[%s1 + $0x11a0] sm:$0xff]
      %v824 = vld [vmem:[%s1 + $0x11a8] sm:$0xff]
      %v825 = vld [vmem:[%s1 + $0x11b0] sm:$0xff]
      %v826 = vld [vmem:[%s1 + $0x11b8] sm:$0xff]
      %v827 = vld [vmem:[%s1 + $0x11c0] sm:$0xff]
      %v828 = vld [vmem:[%s1 + $0x11c8] sm:$0xff]
      %v829 = vld [vmem:[%s1 + $0x11d0] sm:$0xff]
      %v830 = vld [vmem:[%s1 + $0x11d8] sm:$0xff]
      %v831 = vld [vmem:[%s1 + $0x11e0] sm:$0xff]
      %v832 = vld [vmem:[%s1 + $0x11e8] sm:$0xff]
      %v833 = vld [vmem:[%s1 + $0x11f0] sm:$0xff]
      %v834 = vld [vmem:[%s1 + $0x11f8] sm:$0xff]
      %v835 = vld [vmem:[%s1 + $0x1200] sm:$0xff]
      %v836 = vld [vmem:[%s1 + $0x1208] sm:$0xff]
      %v837 = vld [vmem:[%s1 + $0x1210] sm:$0xff]
      %v838 = vld [vmem:[%s1 + $0x1218] sm:$0xff]
      %v839 = vld [vmem:[%s1 + $0x1220] sm:$0xff]
      %v840 = vld [vmem:[%s1 + $0x1228] sm:$0xff]
      %v841 = vld [vmem:[%s1 + $0x1230] sm:$0xff]
      %v842 = vld [vmem:[%s1 + $0x1238] sm:$0xff]
      %v843 = vld [vmem:[%s1 + $0x1240] sm:$0xff]
      %v844 = vld [vmem:[%s1 + $0x1248] sm:$0xff]
      %v845 = vld [vmem:[%s1 + $0x1250] sm:$0xff]
      %v846 = vld [vmem:[%s1 + $0x1258] sm:$0xff]
      %v847 = vld [vmem:[%s1 + $0x1260] sm:$0xff]
      %v848 = vld [vmem:[%s1 + $0x1268] sm:$0xff]
      %v849 = vld [vmem:[%s1 + $0x1270] sm:$0xff]
      %v850 = vld [vmem:[%s1 + $0x1278] sm:$0xff]
      %v851 = vld [vmem:[%s1 + $0x1280] sm:$0xff]
      %v852 = vld [vmem:[%s1 + $0x1288] sm:$0xff]
      %v853 = vld [vmem:[%s1 + $0x1290] sm:$0xff]
      %v854 = vld [vmem:[%s1 + $0x1298] sm:$0xff]
      %v855 = vld [vmem:[%s1 + $0x12a0] sm:$0xff]
      %v856 = vld [vmem:[%s1 + $0x12a8] sm:$0xff]
      %v857 = vld [vmem:[%s1 + $0x12b0] sm:$0xff]
      %v858 = vld [vmem:[%s1 + $0x12b8] sm:$0xff]
      %v859 = vld [vmem:[%s1 + $0x12c0] sm:$0xff]
      %v860 = vld [vmem:[%s1 + $0x12c8] sm:$0xff]
      %v861 = vld [vmem:[%s1 + $0x12d0] sm:$0xff]
      %v862 = vld [vmem:[%s1 + $0x12d8] sm:$0xff]
      %v863 = vld [vmem:[%s1 + $0x12e0] sm:$0xff]
      %v864 = vld [vmem:[%s1 + $0x12e8] sm:$0xff]
      %v865 = vld [vmem:[%s1 + $0x12f0] sm:$0xff]
      %v866 = vld [vmem:[%s1 + $0x12f8] sm:$0xff]
      %v867 = vld [vmem:[%s1 + $0x1300] sm:$0xff]
      %v868 = vld [vmem:[%s1 + $0x1308] sm:$0xff]
      %v869 = vld [vmem:[%s1 + $0x1310] sm:$0xff]
      %v870 = vld [vmem:[%s1 + $0x1318] sm:$0xff]
      %v871 = vld [vmem:[%s1 + $0x1320] sm:$0xff]
      %v872 = vld [vmem:[%s1 + $0x1328] sm:$0xff]
      %v873 = vld [vmem:[%s1 + $0x1330] sm:$0xff]
      %v874 = vld [vmem:[%s1 + $0x1338] sm:$0xff]
      %v875 = vld [vmem:[%s1 + $0x1340] sm:$0xff]
      %v876 = vld [vmem:[%s1 + $0x1348] sm:$0xff]
      %v877 = vld [vmem:[%s1 + $0x1350] sm:$0xff]
      %v878 = vld [vmem:[%s1 + $0x1358] sm:$0xff]
      %v879 = vld [vmem:[%s1 + $0x1360] sm:$0xff]
      %v880 = vld [vmem:[%s1 + $0x1368] sm:$0xff]
      %v881 = vld [vmem:[%s1 + $0x1370] sm:$0xff]
      %v882 = vld [vmem:[%s1 + $0x1378] sm:$0xff]
      %v883 = vld [vmem:[%s1 + $0x1380] sm:$0xff]
      %v884 = vld [vmem:[%s1 + $0x1388] sm:$0xff]
      %v885 = vld [vmem:[%s1 + $0x1390] sm:$0xff]
      %v886 = vld [vmem:[%s1 + $0x1398] sm:$0xff]
      %v887 = vld [vmem:[%s1 + $0x13a0] sm:$0xff]
      %v888 = vld [vmem:[%s1 + $0x13a8] sm:$0xff]
      %v889 = vld [vmem:[%s1 + $0x13b0] sm:$0xff]
      %v890 = vld [vmem:[%s1 + $0x13b8] sm:$0xff]
      %v891 = vld [vmem:[%s1 + $0x13c0] sm:$0xff]
      %v892 = vld [vmem:[%s1 + $0x13c8] sm:$0xff]
      %v893 = vld [vmem:[%s1 + $0x13d0] sm:$0xff]
      %v894 = vld [vmem:[%s1 + $0x13d8] sm:$0xff]
      %v895 = vld [vmem:[%s1 + $0x13e0] sm:$0xff]
      %v896 = vld [vmem:[%s1 + $0x13e8] sm:$0xff]
      %v897 = vld [vmem:[%s1 + $0x13f0] sm:$0xff]
      %v898 = vld [vmem:[%s1 + $0x13f8] sm:$0xff]
      %v899 = vld [vmem:[%s1 + $0x1400] sm:$0xff]
      %v900 = vld [vmem:[%s1 + $0x1408] sm:$0xff]
      %v901 = vld [vmem:[%s1 + $0x1410] sm:$0xff]
      %v902 = vld [vmem:[%s1 + $0x1418] sm:$0xff]
      %v903 = vld [vmem:[%s1 + $0x1420] sm:$0xff]
      %v904 = vld [vmem:[%s1 + $0x1428] sm:$0xff]
      %v905 = vld [vmem:[%s1 + $0x1430] sm:$0xff]
      %v906 = vld [vmem:[%s1 + $0x1438] sm:$0xff]
      %v907 = vld [vmem:[%s1 + $0x1440] sm:$0xff]
      %v908 = vld [vmem:[%s1 + $0x1448] sm:$0xff]
      %v909 = vld [vmem:[%s1 + $0x1450] sm:$0xff]
      %v910 = vld [vmem:[%s1 + $0x1458] sm:$0xff]
      %v911 = vld [vmem:[%s1 + $0x1460] sm:$0xff]
      %v912 = vld [vmem:[%s1 + $0x1468] sm:$0xff]
      %v913 = vld [vmem:[%s1 + $0x1470] sm:$0xff]
      %v914 = vld [vmem:[%s1 + $0x1478] sm:$0xff]
      %v915 = vld [vmem:[%s1 + $0x1480] sm:$0xff]
      %v916 = vld [vmem:[%s1 + $0x1488] sm:$0xff]
      %v917 = vld [vmem:[%s1 + $0x1490] sm:$0xff]
      %v918 = vld [vmem:[%s1 + $0x1498] sm:$0xff]
      %v919 = vld [vmem:[%s1 + $0x14a0] sm:$0xff]
      %v920 = vld [vmem:[%s1 + $0x14a8] sm:$0xff]
      %v921 = vld [vmem:[%s1 + $0x14b0] sm:$0xff]
      %v922 = vld [vmem:[%s1 + $0x14b8] sm:$0xff]
      %v923 = vld [vmem:[%s1 + $0x14c0] sm:$0xff]
      %v924 = vld [vmem:[%s1 + $0x14c8] sm:$0xff]
      %v925 = vld [vmem:[%s1 + $0x14d0] sm:$0xff]
      %v926 = vld [vmem:[%s1 + $0x14d8] sm:$0xff]
      %v927 = vld [vmem:[%s1 + $0x14e0] sm:$0xff]
      %v928 = vld [vmem:[%s1 + $0x14e8] sm:$0xff]
      %v929 = vld [vmem:[%s1 + $0x14f0] sm:$0xff]
      %v930 = vld [vmem:[%s1 + $0x14f8] sm:$0xff]
      %v931 = vld [vmem:[%s1 + $0x1500] sm:$0xff]
      %v932 = vld [vmem:[%s1 + $0x1508] sm:$0xff]
      %v933 = vld [vmem:[%s1 + $0x1510] sm:$0xff]
      %v934 = vld [vmem:[%s1 + $0x1518] sm:$0xff]
      %v935 = vld [vmem:[%s1 + $0x1520] sm:$0xff]
      %v936 = vld [vmem:[%s1 + $0x1528] sm:$0xff]
      %v937 = vld [vmem:[%s1 + $0x1530] sm:$0xff]
      %v938 = vld [vmem:[%s1 + $0x1538] sm:$0xff]
      %v939 = vld [vmem:[%s1 + $0x1540] sm:$0xff]
      %v940 = vld [vmem:[%s1 + $0x1548] sm:$0xff]
      %v941 = vld [vmem:[%s1 + $0x1550] sm:$0xff]
      %v942 = vld [vmem:[%s1 + $0x1558] sm:$0xff]
      %v943 = vld [vmem:[%s1 + $0x1560] sm:$0xff]
      %v944 = vld [vmem:[%s1 + $0x1568] sm:$0xff]
      %v945 = vld [vmem:[%s1 + $0x1570] sm:$0xff]
      %v946 = vld [vmem:[%s1 + $0x1578] sm:$0xff]
      %v947 = vld [vmem:[%s1 + $0x1580] sm:$0xff]
      %v948 = vld [vmem:[%s1 + $0x1588] sm:$0xff]
      %v949 = vld [vmem:[%s1 + $0x1590] sm:$0xff]
      %v950 = vld [vmem:[%s1 + $0x1598] sm:$0xff]
      %v951 = vld [vmem:[%s1 + $0x15a0] sm:$0xff]
      %v952 = vld [vmem:[%s1 + $0x15a8] sm:$0xff]
      %v953 = vld [vmem:[%s1 + $0x15b0] sm:$0xff]
      %v954 = vld [vmem:[%s1 + $0x15b8] sm:$0xff]
      %v955 = vld [vmem:[%s1 + $0x15c0] sm:$0xff]
      %v956 = vld [vmem:[%s1 + $0x15c8] sm:$0xff]
      %v957 = vld [vmem:[%s1 + $0x15d0] sm:$0xff]
      %v958 = vld [vmem:[%s1 + $0x15d8] sm:$0xff]
      %v959 = vld [vmem:[%s1 + $0x15e0] sm:$0xff]
      %v960 = vld [vmem:[%s1 + $0x15e8] sm:$0xff]
      %v961 = vld [vmem:[%s1 + $0x15f0] sm:$0xff]
      %v962 = vld [vmem:[%s1 + $0x15f8] sm:$0xff]
      %v963 = vld [vmem:[%s1 + $0x1600] sm:$0xff]
      %v964 = vld [vmem:[%s1 + $0x1608] sm:$0xff]
      %v965 = vld [vmem:[%s1 + $0x1610] sm:$0xff]
      %v966 = vld [vmem:[%s1 + $0x1618] sm:$0xff]
      %v967 = vld [vmem:[%s1 + $0x1620] sm:$0xff]
      %v968 = vld [vmem:[%s1 + $0x1628] sm:$0xff]
      %v969 = vld [vmem:[%s1 + $0x1630] sm:$0xff]
      %v970 = vld [vmem:[%s1 + $0x1638] sm:$0xff]
      %v971 = vld [vmem:[%s1 + $0x1640] sm:$0xff]
      %v972 = vld [vmem:[%s1 + $0x1648] sm:$0xff]
      %v973 = vld [vmem:[%s1 + $0x1650] sm:$0xff]
      %v974 = vld [vmem:[%s1 + $0x1658] sm:$0xff]
      %v975 = vld [vmem:[%s1 + $0x1660] sm:$0xff]
      %v976 = vld [vmem:[%s1 + $0x1668] sm:$0xff]
      %v977 = vld [vmem:[%s1 + $0x1670] sm:$0xff]
      %v978 = vld [vmem:[%s1 + $0x1678] sm:$0xff]
      %979 = vmatpush.msra.mxu0 %v334
      %980 = vmatpush.msra.mxu0 %v329
      %981 = vmatpush.msra.mxu0 %v324
      %982 = vmatpush.msra.mxu0 %v319
      %983 = vmatpush.msra.mxu0 %v314
      %984 = vmatpush.msra.mxu0 %v309
      %985 = vmatpush.msra.mxu0 %v304
      %986 = vmatpush.msra.mxu0 %v299
      %987 = vmatpush.msra.mxu0 %v294
      %988 = vmatpush.msra.mxu0 %v289
      %989 = vmatpush.msra.mxu0 %v284
      %990 = vmatpush.msra.mxu0 %v279
      %991 = vmatpush.msra.mxu0 %v274
      %992 = vmatpush.msra.mxu0 %v269
      %993 = vmatpush.msra.mxu0 %v264
      %994 = vmatpush.msra.mxu0 %v259
      %995 = vmatmul.f32.gmra.mxu0 %v250
      %v996 = vpop.f32.mrf.mxu0
      %v997 = vadd.f32 0.0, %v996
      %998 = vdwg.mxu0
      %999 = vmatpush.msra.mxu0 %v414
      %1000 = vmatpush.msra.mxu0 %v409
      %1001 = vmatpush.msra.mxu0 %v404
      %1002 = vmatpush.msra.mxu0 %v399
      %1003 = vmatpush.msra.mxu0 %v394
      %1004 = vmatpush.msra.mxu0 %v389
      %1005 = vmatpush.msra.mxu0 %v384
      %1006 = vmatpush.msra.mxu0 %v379
      %1007 = vmatpush.msra.mxu0 %v374
      %1008 = vmatpush.msra.mxu0 %v369
      %1009 = vmatpush.msra.mxu0 %v364
      %1010 = vmatpush.msra.mxu0 %v359
      %1011 = vmatpush.msra.mxu0 %v354
      %1012 = vmatpush.msra.mxu0 %v349
      %1013 = vmatpush.msra.mxu0 %v344
      %1014 = vmatpush.msra.mxu0 %v339
      %1015 = vmatmul.f32.gmra.mxu0 %v251
      %v1016 = vpop.f32.mrf.mxu0
      %v1017 = vadd.f32 %v997, %v1016
      %1018 = vdwg.mxu0
      %1019 = vmatpush.msra.mxu0 %v494
      %1020 = vmatpush.msra.mxu0 %v489
      %1021 = vmatpush.msra.mxu0 %v484
      %1022 = vmatpush.msra.mxu0 %v479
      %1023 = vmatpush.msra.mxu0 %v474
      %1024 = vmatpush.msra.mxu0 %v469
      %1025 = vmatpush.msra.mxu0 %v464
      %1026 = vmatpush.msra.mxu0 %v459
      %1027 = vmatpush.msra.mxu0 %v454
      %1028 = vmatpush.msra.mxu0 %v449
      %1029 = vmatpush.msra.mxu0 %v444
      %1030 = vmatpush.msra.mxu0 %v439
      %1031 = vmatpush.msra.mxu0 %v434
      %1032 = vmatpush.msra.mxu0 %v429
      %1033 = vmatpush.msra.mxu0 %v424
      %1034 = vmatpush.msra.mxu0 %v419
      %1035 = vmatmul.f32.gmra.mxu0 %v252
      %v1036 = vpop.f32.mrf.mxu0
      %v1037 = vadd.f32 %v1017, %v1036
      %1038 = vdwg.mxu0
      %1039 = vmatpush.msra.mxu0 %v574
      %1040 = vmatpush.msra.mxu0 %v569
      %1041 = vmatpush.msra.mxu0 %v564
      %1042 = vmatpush.msra.mxu0 %v559
      %1043 = vmatpush.msra.mxu0 %v554
      %1044 = vmatpush.msra.mxu0 %v549
      %1045 = vmatpush.msra.mxu0 %v544
      %1046 = vmatpush.msra.mxu0 %v539
      %1047 = vmatpush.msra.mxu0 %v534
      %1048 = vmatpush.msra.mxu0 %v529
      %1049 = vmatpush.msra.mxu0 %v524
      %1050 = vmatpush.msra.mxu0 %v519
      %1051 = vmatpush.msra.mxu0 %v514
      %1052 = vmatpush.msra.mxu0 %v509
      %1053 = vmatpush.msra.mxu0 %v504
      %1054 = vmatpush.msra.mxu0 %v499
      %1055 = vmatmul.f32.gmra.mxu0 %v253
      %v1056 = vpop.f32.mrf.mxu0
      %v1057 = vadd.f32 %v1037, %v1056
      %1058 = vdwg.mxu0
      %1059 = vmatpush.msra.mxu0 %v654
      %1060 = vmatpush.msra.mxu0 %v649
      %1061 = vmatpush.msra.mxu0 %v644
      %1062 = vmatpush.msra.mxu0 %v639
      %1063 = vmatpush.msra.mxu0 %v634
      %1064 = vmatpush.msra.mxu0 %v629
      %1065 = vmatpush.msra.mxu0 %v624
      %1066 = vmatpush.msra.mxu0 %v619
      %1067 = vmatpush.msra.mxu0 %v614
      %1068 = vmatpush.msra.mxu0 %v609
      %1069 = vmatpush.msra.mxu0 %v604
      %1070 = vmatpush.msra.mxu0 %v599
      %1071 = vmatpush.msra.mxu0 %v594
      %1072 = vmatpush.msra.mxu0 %v589
      %1073 = vmatpush.msra.mxu0 %v584
      %1074 = vmatpush.msra.mxu0 %v579
      %1075 = vmatmul.f32.gmra.mxu0 %v254
      %v1076 = vpop.f32.mrf.mxu0
      %v1077 = vadd.f32 %v1057, %v1076
      %1078 = vdwg.mxu0
      %1079 = vmatpush.msra.mxu0 %v734
      %1080 = vmatpush.msra.mxu0 %v729
      %1081 = vmatpush.msra.mxu0 %v724
      %1082 = vmatpush.msra.mxu0 %v719
      %1083 = vmatpush.msra.mxu0 %v714
      %1084 = vmatpush.msra.mxu0 %v709
      %1085 = vmatpush.msra.mxu0 %v704
      %1086 = vmatpush.msra.mxu0 %v699
      %1087 = vmatpush.msra.mxu0 %v694
      %1088 = vmatpush.msra.mxu0 %v689
      %1089 = vmatpush.msra.mxu0 %v684
      %1090 = vmatpush.msra.mxu0 %v679
      %1091 = vmatpush.msra.mxu0 %v674
      %1092 = vmatpush.msra.mxu0 %v669
      %1093 = vmatpush.msra.mxu0 %v664
      %1094 = vmatpush.msra.mxu0 %v659
      %1095 = vmatmul.f32.gmra.mxu0 %v255
      %v1096 = vpop.f32.mrf.mxu0
      %v1097 = vadd.f32 %v1077, %v1096
      %1098 = vdwg.mxu0
      %1099 = vmatpush.msra.mxu0 %v814
      %1100 = vmatpush.msra.mxu0 %v809
      %1101 = vmatpush.msra.mxu0 %v804
      %1102 = vmatpush.msra.mxu0 %v799
      %1103 = vmatpush.msra.mxu0 %v794
      %1104 = vmatpush.msra.mxu0 %v789
      %1105 = vmatpush.msra.mxu0 %v784
      %1106 = vmatpush.msra.mxu0 %v779
      %1107 = vmatpush.msra.mxu0 %v774
      %1108 = vmatpush.msra.mxu0 %v769
      %1109 = vmatpush.msra.mxu0 %v764
      %1110 = vmatpush.msra.mxu0 %v759
      %1111 = vmatpush.msra.mxu0 %v754
      %1112 = vmatpush.msra.mxu0 %v749
      %1113 = vmatpush.msra.mxu0 %v744
      %1114 = vmatpush.msra.mxu0 %v739
      %1115 = vmatmul.f32.gmra.mxu0 %v256
      %v1116 = vpop.f32.mrf.mxu0
      %v1117 = vadd.f32 %v1097, %v1116
      %1118 = vdwg.mxu0
      %1119 = vmatpush.msra.mxu0 %v894
      %1120 = vmatpush.msra.mxu0 %v889
      %1121 = vmatpush.msra.mxu0 %v884
      %1122 = vmatpush.msra.mxu0 %v879
      %1123 = vmatpush.msra.mxu0 %v874
      %1124 = vmatpush.msra.mxu0 %v869
      %1125 = vmatpush.msra.mxu0 %v864
      %1126 = vmatpush.msra.mxu0 %v859
      %1127 = vmatpush.msra.mxu0 %v854
      %1128 = vmatpush.msra.mxu0 %v849
      %1129 = vmatpush.msra.mxu0 %v844
      %1130 = vmatpush.msra.mxu0 %v839
      %1131 = vmatpush.msra.mxu0 %v834
      %1132 = vmatpush.msra.mxu0 %v829
      %1133 = vmatpush.msra.mxu0 %v824
      %1134 = vmatpush.msra.mxu0 %v819
      %1135 = vmatmul.f32.gmra.mxu0 %v257
      %v1136 = vpop.f32.mrf.mxu0
      %v1137 = vadd.f32 %v1117, %v1136
      %1138 = vdwg.mxu0
      %1139 = vmatpush.msra.mxu0 %v974
      %1140 = vmatpush.msra.mxu0 %v969
      %1141 = vmatpush.msra.mxu0 %v964
      %1142 = vmatpush.msra.mxu0 %v959
      %1143 = vmatpush.msra.mxu0 %v954
      %1144 = vmatpush.msra.mxu0 %v949
      %1145 = vmatpush.msra.mxu0 %v944
      %1146 = vmatpush.msra.mxu0 %v939
      %1147 = vmatpush.msra.mxu0 %v934
      %1148 = vmatpush.msra.mxu0 %v929
      %1149 = vmatpush.msra.mxu0 %v924
      %1150 = vmatpush.msra.mxu0 %v919
      %1151 = vmatpush.msra.mxu0 %v914
      %1152 = vmatpush.msra.mxu0 %v909
      %1153 = vmatpush.msra.mxu0 %v904
      %1154 = vmatpush.msra.mxu0 %v899
      %1155 = vmatmul.f32.gmra.mxu0 %v258
      %v1156 = vpop.f32.mrf.mxu0
      %v1157 = vadd.f32 %v1137, %v1156
      %1158 = vdwg.mxu0
      %1159 = vmatpush.msra.mxu0 %v335
      %1160 = vmatpush.msra.mxu0 %v330
      %1161 = vmatpush.msra.mxu0 %v325
      %1162 = vmatpush.msra.mxu0 %v320
      %1163 = vmatpush.msra.mxu0 %v315
      %1164 = vmatpush.msra.mxu0 %v310
      %1165 = vmatpush.msra.mxu0 %v305
      %1166 = vmatpush.msra.mxu0 %v300
      %1167 = vmatpush.msra.mxu0 %v295
      %1168 = vmatpush.msra.mxu0 %v290
      %1169 = vmatpush.msra.mxu0 %v285
      %1170 = vmatpush.msra.mxu0 %v280
      %1171 = vmatpush.msra.mxu0 %v275
      %1172 = vmatpush.msra.mxu0 %v270
      %1173 = vmatpush.msra.mxu0 %v265
      %1174 = vmatpush.msra.mxu0 %v260
      %1175 = vmatmul.f32.gmra.mxu0 %v250
      %v1176 = vpop.f32.mrf.mxu0
      %v1177 = vadd.f32 0.0, %v1176
      %1178 = vdwg.mxu0
      %1179 = vmatpush.msra.mxu0 %v415
      %1180 = vmatpush.msra.mxu0 %v410
      %1181 = vmatpush.msra.mxu0 %v405
      %1182 = vmatpush.msra.mxu0 %v400
      %1183 = vmatpush.msra.mxu0 %v395
      %1184 = vmatpush.msra.mxu0 %v390
      %1185 = vmatpush.msra.mxu0 %v385
      %1186 = vmatpush.msra.mxu0 %v380
      %1187 = vmatpush.msra.mxu0 %v375
      %1188 = vmatpush.msra.mxu0 %v370
      %1189 = vmatpush.msra.mxu0 %v365
      %1190 = vmatpush.msra.mxu0 %v360
      %1191 = vmatpush.msra.mxu0 %v355
      %1192 = vmatpush.msra.mxu0 %v350
      %1193 = vmatpush.msra.mxu0 %v345
      %1194 = vmatpush.msra.mxu0 %v340
      %1195 = vmatmul.f32.gmra.mxu0 %v251
      %v1196 = vpop.f32.mrf.mxu0
      %v1197 = vadd.f32 %v1177, %v1196
      %1198 = vdwg.mxu0
      %1199 = vmatpush.msra.mxu0 %v495
      %1200 = vmatpush.msra.mxu0 %v490
      %1201 = vmatpush.msra.mxu0 %v485
      %1202 = vmatpush.msra.mxu0 %v480
      %1203 = vmatpush.msra.mxu0 %v475
      %1204 = vmatpush.msra.mxu0 %v470
      %1205 = vmatpush.msra.mxu0 %v465
      %1206 = vmatpush.msra.mxu0 %v460
      %1207 = vmatpush.msra.mxu0 %v455
      %1208 = vmatpush.msra.mxu0 %v450
      %1209 = vmatpush.msra.mxu0 %v445
      %1210 = vmatpush.msra.mxu0 %v440
      %1211 = vmatpush.msra.mxu0 %v435
      %1212 = vmatpush.msra.mxu0 %v430
      %1213 = vmatpush.msra.mxu0 %v425
      %1214 = vmatpush.msra.mxu0 %v420
      %1215 = vmatmul.f32.gmra.mxu0 %v252
      %v1216 = vpop.f32.mrf.mxu0
      %v1217 = vadd.f32 %v1197, %v1216
      %1218 = vdwg.mxu0
      %1219 = vmatpush.msra.mxu0 %v575
      %1220 = vmatpush.msra.mxu0 %v570
      %1221 = vmatpush.msra.mxu0 %v565
      %1222 = vmatpush.msra.mxu0 %v560
      %1223 = vmatpush.msra.mxu0 %v555
      %1224 = vmatpush.msra.mxu0 %v550
      %1225 = vmatpush.msra.mxu0 %v545
      %1226 = vmatpush.msra.mxu0 %v540
      %1227 = vmatpush.msra.mxu0 %v535
      %1228 = vmatpush.msra.mxu0 %v530
      %1229 = vmatpush.msra.mxu0 %v525
      %1230 = vmatpush.msra.mxu0 %v520
      %1231 = vmatpush.msra.mxu0 %v515
      %1232 = vmatpush.msra.mxu0 %v510
      %1233 = vmatpush.msra.mxu0 %v505
      %1234 = vmatpush.msra.mxu0 %v500
      %1235 = vmatmul.f32.gmra.mxu0 %v253
      %v1236 = vpop.f32.mrf.mxu0
      %v1237 = vadd.f32 %v1217, %v1236
      %1238 = vdwg.mxu0
      %1239 = vmatpush.msra.mxu0 %v655
      %1240 = vmatpush.msra.mxu0 %v650
      %1241 = vmatpush.msra.mxu0 %v645
      %1242 = vmatpush.msra.mxu0 %v640
      %1243 = vmatpush.msra.mxu0 %v635
      %1244 = vmatpush.msra.mxu0 %v630
      %1245 = vmatpush.msra.mxu0 %v625
      %1246 = vmatpush.msra.mxu0 %v620
      %1247 = vmatpush.msra.mxu0 %v615
      %1248 = vmatpush.msra.mxu0 %v610
      %1249 = vmatpush.msra.mxu0 %v605
      %1250 = vmatpush.msra.mxu0 %v600
      %1251 = vmatpush.msra.mxu0 %v595
      %1252 = vmatpush.msra.mxu0 %v590
      %1253 = vmatpush.msra.mxu0 %v585
      %1254 = vmatpush.msra.mxu0 %v580
      %1255 = vmatmul.f32.gmra.mxu0 %v254
      %v1256 = vpop.f32.mrf.mxu0
      %v1257 = vadd.f32 %v1237, %v1256
      %1258 = vdwg.mxu0
      %1259 = vmatpush.msra.mxu0 %v735
      %1260 = vmatpush.msra.mxu0 %v730
      %1261 = vmatpush.msra.mxu0 %v725
      %1262 = vmatpush.msra.mxu0 %v720
      %1263 = vmatpush.msra.mxu0 %v715
      %1264 = vmatpush.msra.mxu0 %v710
      %1265 = vmatpush.msra.mxu0 %v705
      %1266 = vmatpush.msra.mxu0 %v700
      %1267 = vmatpush.msra.mxu0 %v695
      %1268 = vmatpush.msra.mxu0 %v690
      %1269 = vmatpush.msra.mxu0 %v685
      %1270 = vmatpush.msra.mxu0 %v680
      %1271 = vmatpush.msra.mxu0 %v675
      %1272 = vmatpush.msra.mxu0 %v670
      %1273 = vmatpush.msra.mxu0 %v665
      %1274 = vmatpush.msra.mxu0 %v660
      %1275 = vmatmul.f32.gmra.mxu0 %v255
      %v1276 = vpop.f32.mrf.mxu0
      %v1277 = vadd.f32 %v1257, %v1276
      %1278 = vdwg.mxu0
      %1279 = vmatpush.msra.mxu0 %v815
      %1280 = vmatpush.msra.mxu0 %v810
      %1281 = vmatpush.msra.mxu0 %v805
      %1282 = vmatpush.msra.mxu0 %v800
      %1283 = vmatpush.msra.mxu0 %v795
      %1284 = vmatpush.msra.mxu0 %v790
      %1285 = vmatpush.msra.mxu0 %v785
      %1286 = vmatpush.msra.mxu0 %v780
      %1287 = vmatpush.msra.mxu0 %v775
      %1288 = vmatpush.msra.mxu0 %v770
      %1289 = vmatpush.msra.mxu0 %v765
      %1290 = vmatpush.msra.mxu0 %v760
      %1291 = vmatpush.msra.mxu0 %v755
      %1292 = vmatpush.msra.mxu0 %v750
      %1293 = vmatpush.msra.mxu0 %v745
      %1294 = vmatpush.msra.mxu0 %v740
      %1295 = vmatmul.f32.gmra.mxu0 %v256
      %v1296 = vpop.f32.mrf.mxu0
      %v1297 = vadd.f32 %v1277, %v1296
      %1298 = vdwg.mxu0
      %1299 = vmatpush.msra.mxu0 %v895
      %1300 = vmatpush.msra.mxu0 %v890
      %1301 = vmatpush.msra.mxu0 %v885
      %1302 = vmatpush.msra.mxu0 %v880
      %1303 = vmatpush.msra.mxu0 %v875
      %1304 = vmatpush.msra.mxu0 %v870
      %1305 = vmatpush.msra.mxu0 %v865
      %1306 = vmatpush.msra.mxu0 %v860
      %1307 = vmatpush.msra.mxu0 %v855
      %1308 = vmatpush.msra.mxu0 %v850
      %1309 = vmatpush.msra.mxu0 %v845
      %1310 = vmatpush.msra.mxu0 %v840
      %1311 = vmatpush.msra.mxu0 %v835
      %1312 = vmatpush.msra.mxu0 %v830
      %1313 = vmatpush.msra.mxu0 %v825
      %1314 = vmatpush.msra.mxu0 %v820
      %1315 = vmatmul.f32.gmra.mxu0 %v257
      %v1316 = vpop.f32.mrf.mxu0
      %v1317 = vadd.f32 %v1297, %v1316
      %1318 = vdwg.mxu0
      %1319 = vmatpush.msra.mxu0 %v975
      %1320 = vmatpush.msra.mxu0 %v970
      %1321 = vmatpush.msra.mxu0 %v965
      %1322 = vmatpush.msra.mxu0 %v960
      %1323 = vmatpush.msra.mxu0 %v955
      %1324 = vmatpush.msra.mxu0 %v950
      %1325 = vmatpush.msra.mxu0 %v945
      %1326 = vmatpush.msra.mxu0 %v940
      %1327 = vmatpush.msra.mxu0 %v935
      %1328 = vmatpush.msra.mxu0 %v930
      %1329 = vmatpush.msra.mxu0 %v925
      %1330 = vmatpush.msra.mxu0 %v920
      %1331 = vmatpush.msra.mxu0 %v915
      %1332 = vmatpush.msra.mxu0 %v910
      %1333 = vmatpush.msra.mxu0 %v905
      %1334 = vmatpush.msra.mxu0 %v900
      %1335 = vmatmul.f32.gmra.mxu0 %v258
      %v1336 = vpop.f32.mrf.mxu0
      %v1337 = vadd.f32 %v1317, %v1336
      %1338 = vdwg.mxu0
      %1339 = vmatpush.msra.mxu0 %v336
      %1340 = vmatpush.msra.mxu0 %v331
      %1341 = vmatpush.msra.mxu0 %v326
      %1342 = vmatpush.msra.mxu0 %v321
      %1343 = vmatpush.msra.mxu0 %v316
      %1344 = vmatpush.msra.mxu0 %v311
      %1345 = vmatpush.msra.mxu0 %v306
      %1346 = vmatpush.msra.mxu0 %v301
      %1347 = vmatpush.msra.mxu0 %v296
      %1348 = vmatpush.msra.mxu0 %v291
      %1349 = vmatpush.msra.mxu0 %v286
      %1350 = vmatpush.msra.mxu0 %v281
      %1351 = vmatpush.msra.mxu0 %v276
      %1352 = vmatpush.msra.mxu0 %v271
      %1353 = vmatpush.msra.mxu0 %v266
      %1354 = vmatpush.msra.mxu0 %v261
      %1355 = vmatmul.f32.gmra.mxu0 %v250
      %v1356 = vpop.f32.mrf.mxu0
      %v1357 = vadd.f32 0.0, %v1356
      %1358 = vdwg.mxu0
      %1359 = vmatpush.msra.mxu0 %v416
      %1360 = vmatpush.msra.mxu0 %v411
      %1361 = vmatpush.msra.mxu0 %v406
      %1362 = vmatpush.msra.mxu0 %v401
      %1363 = vmatpush.msra.mxu0 %v396
      %1364 = vmatpush.msra.mxu0 %v391
      %1365 = vmatpush.msra.mxu0 %v386
      %1366 = vmatpush.msra.mxu0 %v381
      %1367 = vmatpush.msra.mxu0 %v376
      %1368 = vmatpush.msra.mxu0 %v371
      %1369 = vmatpush.msra.mxu0 %v366
      %1370 = vmatpush.msra.mxu0 %v361
      %1371 = vmatpush.msra.mxu0 %v356
      %1372 = vmatpush.msra.mxu0 %v351
      %1373 = vmatpush.msra.mxu0 %v346
      %1374 = vmatpush.msra.mxu0 %v341
      %1375 = vmatmul.f32.gmra.mxu0 %v251
      %v1376 = vpop.f32.mrf.mxu0
      %v1377 = vadd.f32 %v1357, %v1376
      %1378 = vdwg.mxu0
      %1379 = vmatpush.msra.mxu0 %v496
      %1380 = vmatpush.msra.mxu0 %v491
      %1381 = vmatpush.msra.mxu0 %v486
      %1382 = vmatpush.msra.mxu0 %v481
      %1383 = vmatpush.msra.mxu0 %v476
      %1384 = vmatpush.msra.mxu0 %v471
      %1385 = vmatpush.msra.mxu0 %v466
      %1386 = vmatpush.msra.mxu0 %v461
      %1387 = vmatpush.msra.mxu0 %v456
      %1388 = vmatpush.msra.mxu0 %v451
      %1389 = vmatpush.msra.mxu0 %v446
      %1390 = vmatpush.msra.mxu0 %v441
      %1391 = vmatpush.msra.mxu0 %v436
      %1392 = vmatpush.msra.mxu0 %v431
      %1393 = vmatpush.msra.mxu0 %v426
      %1394 = vmatpush.msra.mxu0 %v421
      %1395 = vmatmul.f32.gmra.mxu0 %v252
      %v1396 = vpop.f32.mrf.mxu0
      %v1397 = vadd.f32 %v1377, %v1396
      %1398 = vdwg.mxu0
      %1399 = vmatpush.msra.mxu0 %v576
      %1400 = vmatpush.msra.mxu0 %v571
      %1401 = vmatpush.msra.mxu0 %v566
      %1402 = vmatpush.msra.mxu0 %v561
      %1403 = vmatpush.msra.mxu0 %v556
      %1404 = vmatpush.msra.mxu0 %v551
      %1405 = vmatpush.msra.mxu0 %v546
      %1406 = vmatpush.msra.mxu0 %v541
      %1407 = vmatpush.msra.mxu0 %v536
      %1408 = vmatpush.msra.mxu0 %v531
      %1409 = vmatpush.msra.mxu0 %v526
      %1410 = vmatpush.msra.mxu0 %v521
      %1411 = vmatpush.msra.mxu0 %v516
      %1412 = vmatpush.msra.mxu0 %v511
      %1413 = vmatpush.msra.mxu0 %v506
      %1414 = vmatpush.msra.mxu0 %v501
      %1415 = vmatmul.f32.gmra.mxu0 %v253
      %v1416 = vpop.f32.mrf.mxu0
      %v1417 = vadd.f32 %v1397, %v1416
      %1418 = vdwg.mxu0
      %1419 = vmatpush.msra.mxu0 %v656
      %1420 = vmatpush.msra.mxu0 %v651
      %1421 = vmatpush.msra.mxu0 %v646
      %1422 = vmatpush.msra.mxu0 %v641
      %1423 = vmatpush.msra.mxu0 %v636
      %1424 = vmatpush.msra.mxu0 %v631
      %1425 = vmatpush.msra.mxu0 %v626
      %1426 = vmatpush.msra.mxu0 %v621
      %1427 = vmatpush.msra.mxu0 %v616
      %1428 = vmatpush.msra.mxu0 %v611
      %1429 = vmatpush.msra.mxu0 %v606
      %1430 = vmatpush.msra.mxu0 %v601
      %1431 = vmatpush.msra.mxu0 %v596
      %1432 = vmatpush.msra.mxu0 %v591
      %1433 = vmatpush.msra.mxu0 %v586
      %1434 = vmatpush.msra.mxu0 %v581
      %1435 = vmatmul.f32.gmra.mxu0 %v254
      %v1436 = vpop.f32.mrf.mxu0
      %v1437 = vadd.f32 %v1417, %v1436
      %1438 = vdwg.mxu0
      %1439 = vmatpush.msra.mxu0 %v736
      %1440 = vmatpush.msra.mxu0 %v731
      %1441 = vmatpush.msra.mxu0 %v726
      %1442 = vmatpush.msra.mxu0 %v721
      %1443 = vmatpush.msra.mxu0 %v716
      %1444 = vmatpush.msra.mxu0 %v711
      %1445 = vmatpush.msra.mxu0 %v706
      %1446 = vmatpush.msra.mxu0 %v701
      %1447 = vmatpush.msra.mxu0 %v696
      %1448 = vmatpush.msra.mxu0 %v691
      %1449 = vmatpush.msra.mxu0 %v686
      %1450 = vmatpush.msra.mxu0 %v681
      %1451 = vmatpush.msra.mxu0 %v676
      %1452 = vmatpush.msra.mxu0 %v671
      %1453 = vmatpush.msra.mxu0 %v666
      %1454 = vmatpush.msra.mxu0 %v661
      %1455 = vmatmul.f32.gmra.mxu0 %v255
      %v1456 = vpop.f32.mrf.mxu0
      %v1457 = vadd.f32 %v1437, %v1456
      %1458 = vdwg.mxu0
      %1459 = vmatpush.msra.mxu0 %v816
      %1460 = vmatpush.msra.mxu0 %v811
      %1461 = vmatpush.msra.mxu0 %v806
      %1462 = vmatpush.msra.mxu0 %v801
      %1463 = vmatpush.msra.mxu0 %v796
      %1464 = vmatpush.msra.mxu0 %v791
      %1465 = vmatpush.msra.mxu0 %v786
      %1466 = vmatpush.msra.mxu0 %v781
      %1467 = vmatpush.msra.mxu0 %v776
      %1468 = vmatpush.msra.mxu0 %v771
      %1469 = vmatpush.msra.mxu0 %v766
      %1470 = vmatpush.msra.mxu0 %v761
      %1471 = vmatpush.msra.mxu0 %v756
      %1472 = vmatpush.msra.mxu0 %v751
      %1473 = vmatpush.msra.mxu0 %v746
      %1474 = vmatpush.msra.mxu0 %v741
      %1475 = vmatmul.f32.gmra.mxu0 %v256
      %v1476 = vpop.f32.mrf.mxu0
      %v1477 = vadd.f32 %v1457, %v1476
      %1478 = vdwg.mxu0
      %1479 = vmatpush.msra.mxu0 %v896
      %1480 = vmatpush.msra.mxu0 %v891
      %1481 = vmatpush.msra.mxu0 %v886
      %1482 = vmatpush.msra.mxu0 %v881
      %1483 = vmatpush.msra.mxu0 %v876
      %1484 = vmatpush.msra.mxu0 %v871
      %1485 = vmatpush.msra.mxu0 %v866
      %1486 = vmatpush.msra.mxu0 %v861
      %1487 = vmatpush.msra.mxu0 %v856
      %1488 = vmatpush.msra.mxu0 %v851
      %1489 = vmatpush.msra.mxu0 %v846
      %1490 = vmatpush.msra.mxu0 %v841
      %1491 = vmatpush.msra.mxu0 %v836
      %1492 = vmatpush.msra.mxu0 %v831
      %1493 = vmatpush.msra.mxu0 %v826
      %1494 = vmatpush.msra.mxu0 %v821
      %1495 = vmatmul.f32.gmra.mxu0 %v257
      %v1496 = vpop.f32.mrf.mxu0
      %v1497 = vadd.f32 %v1477, %v1496
      %1498 = vdwg.mxu0
      %1499 = vmatpush.msra.mxu0 %v976
      %1500 = vmatpush.msra.mxu0 %v971
      %1501 = vmatpush.msra.mxu0 %v966
      %1502 = vmatpush.msra.mxu0 %v961
      %1503 = vmatpush.msra.mxu0 %v956
      %1504 = vmatpush.msra.mxu0 %v951
      %1505 = vmatpush.msra.mxu0 %v946
      %1506 = vmatpush.msra.mxu0 %v941
      %1507 = vmatpush.msra.mxu0 %v936
      %1508 = vmatpush.msra.mxu0 %v931
      %1509 = vmatpush.msra.mxu0 %v926
      %1510 = vmatpush.msra.mxu0 %v921
      %1511 = vmatpush.msra.mxu0 %v916
      %1512 = vmatpush.msra.mxu0 %v911
      %1513 = vmatpush.msra.mxu0 %v906
      %1514 = vmatpush.msra.mxu0 %v901
      %1515 = vmatmul.f32.gmra.mxu0 %v258
      %v1516 = vpop.f32.mrf.mxu0
      %v1517 = vadd.f32 %v1497, %v1516
      %1518 = vdwg.mxu0
      %1519 = vmatpush.msra.mxu0 %v337
      %1520 = vmatpush.msra.mxu0 %v332
      %1521 = vmatpush.msra.mxu0 %v327
      %1522 = vmatpush.msra.mxu0 %v322
      %1523 = vmatpush.msra.mxu0 %v317
      %1524 = vmatpush.msra.mxu0 %v312
      %1525 = vmatpush.msra.mxu0 %v307
      %1526 = vmatpush.msra.mxu0 %v302
      %1527 = vmatpush.msra.mxu0 %v297
      %1528 = vmatpush.msra.mxu0 %v292
      %1529 = vmatpush.msra.mxu0 %v287
      %1530 = vmatpush.msra.mxu0 %v282
      %1531 = vmatpush.msra.mxu0 %v277
      %1532 = vmatpush.msra.mxu0 %v272
      %1533 = vmatpush.msra.mxu0 %v267
      %1534 = vmatpush.msra.mxu0 %v262
      %1535 = vmatmul.f32.gmra.mxu0 %v250
      %v1536 = vpop.f32.mrf.mxu0
      %v1537 = vadd.f32 0.0, %v1536
      %1538 = vdwg.mxu0
      %1539 = vmatpush.msra.mxu0 %v417
      %1540 = vmatpush.msra.mxu0 %v412
      %1541 = vmatpush.msra.mxu0 %v407
      %1542 = vmatpush.msra.mxu0 %v402
      %1543 = vmatpush.msra.mxu0 %v397
      %1544 = vmatpush.msra.mxu0 %v392
      %1545 = vmatpush.msra.mxu0 %v387
      %1546 = vmatpush.msra.mxu0 %v382
      %1547 = vmatpush.msra.mxu0 %v377
      %1548 = vmatpush.msra.mxu0 %v372
      %1549 = vmatpush.msra.mxu0 %v367
      %1550 = vmatpush.msra.mxu0 %v362
      %1551 = vmatpush.msra.mxu0 %v357
      %1552 = vmatpush.msra.mxu0 %v352
      %1553 = vmatpush.msra.mxu0 %v347
      %1554 = vmatpush.msra.mxu0 %v342
      %1555 = vmatmul.f32.gmra.mxu0 %v251
      %v1556 = vpop.f32.mrf.mxu0
      %v1557 = vadd.f32 %v1537, %v1556
      %1558 = vdwg.mxu0
      %1559 = vmatpush.msra.mxu0 %v497
      %1560 = vmatpush.msra.mxu0 %v492
      %1561 = vmatpush.msra.mxu0 %v487
      %1562 = vmatpush.msra.mxu0 %v482
      %1563 = vmatpush.msra.mxu0 %v477
      %1564 = vmatpush.msra.mxu0 %v472
      %1565 = vmatpush.msra.mxu0 %v467
      %1566 = vmatpush.msra.mxu0 %v462
      %1567 = vmatpush.msra.mxu0 %v457
      %1568 = vmatpush.msra.mxu0 %v452
      %1569 = vmatpush.msra.mxu0 %v447
      %1570 = vmatpush.msra.mxu0 %v442
      %1571 = vmatpush.msra.mxu0 %v437
      %1572 = vmatpush.msra.mxu0 %v432
      %1573 = vmatpush.msra.mxu0 %v427
      %1574 = vmatpush.msra.mxu0 %v422
      %1575 = vmatmul.f32.gmra.mxu0 %v252
      %v1576 = vpop.f32.mrf.mxu0
      %v1577 = vadd.f32 %v1557, %v1576
      %1578 = vdwg.mxu0
      %1579 = vmatpush.msra.mxu0 %v577
      %1580 = vmatpush.msra.mxu0 %v572
      %1581 = vmatpush.msra.mxu0 %v567
      %1582 = vmatpush.msra.mxu0 %v562
      %1583 = vmatpush.msra.mxu0 %v557
      %1584 = vmatpush.msra.mxu0 %v552
      %1585 = vmatpush.msra.mxu0 %v547
      %1586 = vmatpush.msra.mxu0 %v542
      %1587 = vmatpush.msra.mxu0 %v537
      %1588 = vmatpush.msra.mxu0 %v532
      %1589 = vmatpush.msra.mxu0 %v527
      %1590 = vmatpush.msra.mxu0 %v522
      %1591 = vmatpush.msra.mxu0 %v517
      %1592 = vmatpush.msra.mxu0 %v512
      %1593 = vmatpush.msra.mxu0 %v507
      %1594 = vmatpush.msra.mxu0 %v502
      %1595 = vmatmul.f32.gmra.mxu0 %v253
      %v1596 = vpop.f32.mrf.mxu0
      %v1597 = vadd.f32 %v1577, %v1596
      %1598 = vdwg.mxu0
      %1599 = vmatpush.msra.mxu0 %v657
      %1600 = vmatpush.msra.mxu0 %v652
      %1601 = vmatpush.msra.mxu0 %v647
      %1602 = vmatpush.msra.mxu0 %v642
      %1603 = vmatpush.msra.mxu0 %v637
      %1604 = vmatpush.msra.mxu0 %v632
      %1605 = vmatpush.msra.mxu0 %v627
      %1606 = vmatpush.msra.mxu0 %v622
      %1607 = vmatpush.msra.mxu0 %v617
      %1608 = vmatpush.msra.mxu0 %v612
      %1609 = vmatpush.msra.mxu0 %v607
      %1610 = vmatpush.msra.mxu0 %v602
      %1611 = vmatpush.msra.mxu0 %v597
      %1612 = vmatpush.msra.mxu0 %v592
      %1613 = vmatpush.msra.mxu0 %v587
      %1614 = vmatpush.msra.mxu0 %v582
      %1615 = vmatmul.f32.gmra.mxu0 %v254
      %v1616 = vpop.f32.mrf.mxu0
      %v1617 = vadd.f32 %v1597, %v1616
      %1618 = vdwg.mxu0
      %1619 = vmatpush.msra.mxu0 %v737
      %1620 = vmatpush.msra.mxu0 %v732
      %1621 = vmatpush.msra.mxu0 %v727
      %1622 = vmatpush.msra.mxu0 %v722
      %1623 = vmatpush.msra.mxu0 %v717
      %1624 = vmatpush.msra.mxu0 %v712
      %1625 = vmatpush.msra.mxu0 %v707
      %1626 = vmatpush.msra.mxu0 %v702
      %1627 = vmatpush.msra.mxu0 %v697
      %1628 = vmatpush.msra.mxu0 %v692
      %1629 = vmatpush.msra.mxu0 %v687
      %1630 = vmatpush.msra.mxu0 %v682
      %1631 = vmatpush.msra.mxu0 %v677
      %1632 = vmatpush.msra.mxu0 %v672
      %1633 = vmatpush.msra.mxu0 %v667
      %1634 = vmatpush.msra.mxu0 %v662
      %1635 = vmatmul.f32.gmra.mxu0 %v255
      %v1636 = vpop.f32.mrf.mxu0
      %v1637 = vadd.f32 %v1617, %v1636
      %1638 = vdwg.mxu0
      %1639 = vmatpush.msra.mxu0 %v817
      %1640 = vmatpush.msra.mxu0 %v812
      %1641 = vmatpush.msra.mxu0 %v807
      %1642 = vmatpush.msra.mxu0 %v802
      %1643 = vmatpush.msra.mxu0 %v797
      %1644 = vmatpush.msra.mxu0 %v792
      %1645 = vmatpush.msra.mxu0 %v787
      %1646 = vmatpush.msra.mxu0 %v782
      %1647 = vmatpush.msra.mxu0 %v777
      %1648 = vmatpush.msra.mxu0 %v772
      %1649 = vmatpush.msra.mxu0 %v767
      %1650 = vmatpush.msra.mxu0 %v762
      %1651 = vmatpush.msra.mxu0 %v757
      %1652 = vmatpush.msra.mxu0 %v752
      %1653 = vmatpush.msra.mxu0 %v747
      %1654 = vmatpush.msra.mxu0 %v742
      %1655 = vmatmul.f32.gmra.mxu0 %v256
      %v1656 = vpop.f32.mrf.mxu0
      %v1657 = vadd.f32 %v1637, %v1656
      %1658 = vdwg.mxu0
      %1659 = vmatpush.msra.mxu0 %v897
      %1660 = vmatpush.msra.mxu0 %v892
      %1661 = vmatpush.msra.mxu0 %v887
      %1662 = vmatpush.msra.mxu0 %v882
      %1663 = vmatpush.msra.mxu0 %v877
      %1664 = vmatpush.msra.mxu0 %v872
      %1665 = vmatpush.msra.mxu0 %v867
      %1666 = vmatpush.msra.mxu0 %v862
      %1667 = vmatpush.msra.mxu0 %v857
      %1668 = vmatpush.msra.mxu0 %v852
      %1669 = vmatpush.msra.mxu0 %v847
      %1670 = vmatpush.msra.mxu0 %v842
      %1671 = vmatpush.msra.mxu0 %v837
      %1672 = vmatpush.msra.mxu0 %v832
      %1673 = vmatpush.msra.mxu0 %v827
      %1674 = vmatpush.msra.mxu0 %v822
      %1675 = vmatmul.f32.gmra.mxu0 %v257
      %v1676 = vpop.f32.mrf.mxu0
      %v1677 = vadd.f32 %v1657, %v1676
      %1678 = vdwg.mxu0
      %1679 = vmatpush.msra.mxu0 %v977
      %1680 = vmatpush.msra.mxu0 %v972
      %1681 = vmatpush.msra.mxu0 %v967
      %1682 = vmatpush.msra.mxu0 %v962
      %1683 = vmatpush.msra.mxu0 %v957
      %1684 = vmatpush.msra.mxu0 %v952
      %1685 = vmatpush.msra.mxu0 %v947
      %1686 = vmatpush.msra.mxu0 %v942
      %1687 = vmatpush.msra.mxu0 %v937
      %1688 = vmatpush.msra.mxu0 %v932
      %1689 = vmatpush.msra.mxu0 %v927
      %1690 = vmatpush.msra.mxu0 %v922
      %1691 = vmatpush.msra.mxu0 %v917
      %1692 = vmatpush.msra.mxu0 %v912
      %1693 = vmatpush.msra.mxu0 %v907
      %1694 = vmatpush.msra.mxu0 %v902
      %1695 = vmatmul.f32.gmra.mxu0 %v258
      %v1696 = vpop.f32.mrf.mxu0
      %v1697 = vadd.f32 %v1677, %v1696
      %1698 = vdwg.mxu0
      %1699 = vmatpush.msra.mxu0 %v338
      %1700 = vmatpush.msra.mxu0 %v333
      %1701 = vmatpush.msra.mxu0 %v328
      %1702 = vmatpush.msra.mxu0 %v323
      %1703 = vmatpush.msra.mxu0 %v318
      %1704 = vmatpush.msra.mxu0 %v313
      %1705 = vmatpush.msra.mxu0 %v308
      %1706 = vmatpush.msra.mxu0 %v303
      %1707 = vmatpush.msra.mxu0 %v298
      %1708 = vmatpush.msra.mxu0 %v293
      %1709 = vmatpush.msra.mxu0 %v288
      %1710 = vmatpush.msra.mxu0 %v283
      %1711 = vmatpush.msra.mxu0 %v278
      %1712 = vmatpush.msra.mxu0 %v273
      %1713 = vmatpush.msra.mxu0 %v268
      %1714 = vmatpush.msra.mxu0 %v263
      %1715 = vmatmul.f32.gmra.mxu0 %v250
      %v1716 = vpop.f32.mrf.mxu0
      %v1717 = vadd.f32 0.0, %v1716
      %1718 = vdwg.mxu0
      %1719 = vmatpush.msra.mxu0 %v418
      %1720 = vmatpush.msra.mxu0 %v413
      %1721 = vmatpush.msra.mxu0 %v408
      %1722 = vmatpush.msra.mxu0 %v403
      %1723 = vmatpush.msra.mxu0 %v398
      %1724 = vmatpush.msra.mxu0 %v393
      %1725 = vmatpush.msra.mxu0 %v388
      %1726 = vmatpush.msra.mxu0 %v383
      %1727 = vmatpush.msra.mxu0 %v378
      %1728 = vmatpush.msra.mxu0 %v373
      %1729 = vmatpush.msra.mxu0 %v368
      %1730 = vmatpush.msra.mxu0 %v363
      %1731 = vmatpush.msra.mxu0 %v358
      %1732 = vmatpush.msra.mxu0 %v353
      %1733 = vmatpush.msra.mxu0 %v348
      %1734 = vmatpush.msra.mxu0 %v343
      %1735 = vmatmul.f32.gmra.mxu0 %v251
      %v1736 = vpop.f32.mrf.mxu0
      %v1737 = vadd.f32 %v1717, %v1736
      %1738 = vdwg.mxu0
      %1739 = vmatpush.msra.mxu0 %v498
      %1740 = vmatpush.msra.mxu0 %v493
      %1741 = vmatpush.msra.mxu0 %v488
      %1742 = vmatpush.msra.mxu0 %v483
      %1743 = vmatpush.msra.mxu0 %v478
      %1744 = vmatpush.msra.mxu0 %v473
      %1745 = vmatpush.msra.mxu0 %v468
      %1746 = vmatpush.msra.mxu0 %v463
      %1747 = vmatpush.msra.mxu0 %v458
      %1748 = vmatpush.msra.mxu0 %v453
      %1749 = vmatpush.msra.mxu0 %v448
      %1750 = vmatpush.msra.mxu0 %v443
      %1751 = vmatpush.msra.mxu0 %v438
      %1752 = vmatpush.msra.mxu0 %v433
      %1753 = vmatpush.msra.mxu0 %v428
      %1754 = vmatpush.msra.mxu0 %v423
      %1755 = vmatmul.f32.gmra.mxu0 %v252
      %v1756 = vpop.f32.mrf.mxu0
      %v1757 = vadd.f32 %v1737, %v1756
      %1758 = vdwg.mxu0
      %1759 = vmatpush.msra.mxu0 %v578
      %1760 = vmatpush.msra.mxu0 %v573
      %1761 = vmatpush.msra.mxu0 %v568
      %1762 = vmatpush.msra.mxu0 %v563
      %1763 = vmatpush.msra.mxu0 %v558
      %1764 = vmatpush.msra.mxu0 %v553
      %1765 = vmatpush.msra.mxu0 %v548
      %1766 = vmatpush.msra.mxu0 %v543
      %1767 = vmatpush.msra.mxu0 %v538
      %1768 = vmatpush.msra.mxu0 %v533
      %1769 = vmatpush.msra.mxu0 %v528
      %1770 = vmatpush.msra.mxu0 %v523
      %1771 = vmatpush.msra.mxu0 %v518
      %1772 = vmatpush.msra.mxu0 %v513
      %1773 = vmatpush.msra.mxu0 %v508
      %1774 = vmatpush.msra.mxu0 %v503
      %1775 = vmatmul.f32.gmra.mxu0 %v253
      %v1776 = vpop.f32.mrf.mxu0
      %v1777 = vadd.f32 %v1757, %v1776
      %1778 = vdwg.mxu0
      %1779 = vmatpush.msra.mxu0 %v658
      %1780 = vmatpush.msra.mxu0 %v653
      %1781 = vmatpush.msra.mxu0 %v648
      %1782 = vmatpush.msra.mxu0 %v643
      %1783 = vmatpush.msra.mxu0 %v638
      %1784 = vmatpush.msra.mxu0 %v633
      %1785 = vmatpush.msra.mxu0 %v628
      %1786 = vmatpush.msra.mxu0 %v623
      %1787 = vmatpush.msra.mxu0 %v618
      %1788 = vmatpush.msra.mxu0 %v613
      %1789 = vmatpush.msra.mxu0 %v608
      %1790 = vmatpush.msra.mxu0 %v603
      %1791 = vmatpush.msra.mxu0 %v598
      %1792 = vmatpush.msra.mxu0 %v593
      %1793 = vmatpush.msra.mxu0 %v588
      %1794 = vmatpush.msra.mxu0 %v583
      %1795 = vmatmul.f32.gmra.mxu0 %v254
      %v1796 = vpop.f32.mrf.mxu0
      %v1797 = vadd.f32 %v1777, %v1796
      %1798 = vdwg.mxu0
      %1799 = vmatpush.msra.mxu0 %v738
      %1800 = vmatpush.msra.mxu0 %v733
      %1801 = vmatpush.msra.mxu0 %v728
      %1802 = vmatpush.msra.mxu0 %v723
      %1803 = vmatpush.msra.mxu0 %v718
      %1804 = vmatpush.msra.mxu0 %v713
      %1805 = vmatpush.msra.mxu0 %v708
      %1806 = vmatpush.msra.mxu0 %v703
      %1807 = vmatpush.msra.mxu0 %v698
      %1808 = vmatpush.msra.mxu0 %v693
      %1809 = vmatpush.msra.mxu0 %v688
      %1810 = vmatpush.msra.mxu0 %v683
      %1811 = vmatpush.msra.mxu0 %v678
      %1812 = vmatpush.msra.mxu0 %v673
      %1813 = vmatpush.msra.mxu0 %v668
      %1814 = vmatpush.msra.mxu0 %v663
      %1815 = vmatmul.f32.gmra.mxu0 %v255
      %v1816 = vpop.f32.mrf.mxu0
      %v1817 = vadd.f32 %v1797, %v1816
      %1818 = vdwg.mxu0
      %1819 = vmatpush.msra.mxu0 %v818
      %1820 = vmatpush.msra.mxu0 %v813
      %1821 = vmatpush.msra.mxu0 %v808
      %1822 = vmatpush.msra.mxu0 %v803
      %1823 = vmatpush.msra.mxu0 %v798
      %1824 = vmatpush.msra.mxu0 %v793
      %1825 = vmatpush.msra.mxu0 %v788
      %1826 = vmatpush.msra.mxu0 %v783
      %1827 = vmatpush.msra.mxu0 %v778
      %1828 = vmatpush.msra.mxu0 %v773
      %1829 = vmatpush.msra.mxu0 %v768
      %1830 = vmatpush.msra.mxu0 %v763
      %1831 = vmatpush.msra.mxu0 %v758
      %1832 = vmatpush.msra.mxu0 %v753
      %1833 = vmatpush.msra.mxu0 %v748
      %1834 = vmatpush.msra.mxu0 %v743
      %1835 = vmatmul.f32.gmra.mxu0 %v256
      %v1836 = vpop.f32.mrf.mxu0
      %v1837 = vadd.f32 %v1817, %v1836
      %1838 = vdwg.mxu0
      %1839 = vmatpush.msra.mxu0 %v898
      %1840 = vmatpush.msra.mxu0 %v893
      %1841 = vmatpush.msra.mxu0 %v888
      %1842 = vmatpush.msra.mxu0 %v883
      %1843 = vmatpush.msra.mxu0 %v878
      %1844 = vmatpush.msra.mxu0 %v873
      %1845 = vmatpush.msra.mxu0 %v868
      %1846 = vmatpush.msra.mxu0 %v863
      %1847 = vmatpush.msra.mxu0 %v858
      %1848 = vmatpush.msra.mxu0 %v853
      %1849 = vmatpush.msra.mxu0 %v848
      %1850 = vmatpush.msra.mxu0 %v843
      %1851 = vmatpush.msra.mxu0 %v838
      %1852 = vmatpush.msra.mxu0 %v833
      %1853 = vmatpush.msra.mxu0 %v828
      %1854 = vmatpush.msra.mxu0 %v823
      %1855 = vmatmul.f32.gmra.mxu0 %v257
      %v1856 = vpop.f32.mrf.mxu0
      %v1857 = vadd.f32 %v1837, %v1856
      %1858 = vdwg.mxu0
      %1859 = vmatpush.msra.mxu0 %v978
      %1860 = vmatpush.msra.mxu0 %v973
      %1861 = vmatpush.msra.mxu0 %v968
      %1862 = vmatpush.msra.mxu0 %v963
      %1863 = vmatpush.msra.mxu0 %v958
      %1864 = vmatpush.msra.mxu0 %v953
      %1865 = vmatpush.msra.mxu0 %v948
      %1866 = vmatpush.msra.mxu0 %v943
      %1867 = vmatpush.msra.mxu0 %v938
      %1868 = vmatpush.msra.mxu0 %v933
      %1869 = vmatpush.msra.mxu0 %v928
      %1870 = vmatpush.msra.mxu0 %v923
      %1871 = vmatpush.msra.mxu0 %v918
      %1872 = vmatpush.msra.mxu0 %v913
      %1873 = vmatpush.msra.mxu0 %v908
      %1874 = vmatpush.msra.mxu0 %v903
      %1875 = vmatmul.f32.gmra.mxu0 %v258
      %v1876 = vpop.f32.mrf.mxu0
      %v1877 = vadd.f32 %v1857, %v1876
      %1878 = vdwg.mxu0
      %v1879 = vrot.slane %v1157, 4
      %v1880 = vadd.f32 %v1157, %v1879
      %v1881 = vrot.slane %v1880, 2
      %v1882 = vadd.f32 %v1880, %v1881
      %v1883 = vrot.slane %v1882, 1
      %v1884 = vadd.f32 %v1882, %v1883
      %v1885 = vrot.slane %v1337, 4
      %v1886 = vadd.f32 %v1337, %v1885
      %v1887 = vrot.slane %v1886, 2
      %v1888 = vadd.f32 %v1886, %v1887
      %v1889 = vrot.slane %v1888, 1
      %v1890 = vadd.f32 %v1888, %v1889
      %v1891 = vrot.slane %v1517, 4
      %v1892 = vadd.f32 %v1517, %v1891
      %v1893 = vrot.slane %v1892, 2
      %v1894 = vadd.f32 %v1892, %v1893
      %v1895 = vrot.slane %v1894, 1
      %v1896 = vadd.f32 %v1894, %v1895
      %v1897 = vrot.slane %v1697, 4
      %v1898 = vadd.f32 %v1697, %v1897
      %v1899 = vrot.slane %v1898, 2
      %v1900 = vadd.f32 %v1898, %v1899
      %v1901 = vrot.slane %v1900, 1
      %v1902 = vadd.f32 %v1900, %v1901
      %v1903 = vrot.slane %v1877, 4
      %v1904 = vadd.f32 %v1877, %v1903
      %v1905 = vrot.slane %v1904, 2
      %v1906 = vadd.f32 %v1904, %v1905
      %v1907 = vrot.slane %v1906, 1
      %v1908 = vadd.f32 %v1906, %v1907
      %v1909 = vmul.f32 %v1884, 0.125
      %v1910 = vmul.f32 %v1890, 0.125
      %v1911 = vmul.f32 %v1896, 0.125
      %v1912 = vmul.f32 %v1902, 0.125
      %v1913 = vmul.f32 %v1908, 0.125
      %v1914 = vmul.f32 %v1157, %v1157
      %v1915 = vmul.f32 %v1337, %v1337
      %v1916 = vmul.f32 %v1517, %v1517
      %v1917 = vmul.f32 %v1697, %v1697
      %v1918 = vmul.f32 %v1877, %v1877
      %v1919 = vrot.slane %v1914, 4
      %v1920 = vadd.f32 %v1914, %v1919
      %v1921 = vrot.slane %v1920, 2
      %v1922 = vadd.f32 %v1920, %v1921
      %v1923 = vrot.slane %v1922, 1
      %v1924 = vadd.f32 %v1922, %v1923
      %v1925 = vrot.slane %v1915, 4
      %v1926 = vadd.f32 %v1915, %v1925
      %v1927 = vrot.slane %v1926, 2
      %v1928 = vadd.f32 %v1926, %v1927
      %v1929 = vrot.slane %v1928, 1
      %v1930 = vadd.f32 %v1928, %v1929
      %v1931 = vrot.slane %v1916, 4
      %v1932 = vadd.f32 %v1916, %v1931
      %v1933 = vrot.slane %v1932, 2
      %v1934 = vadd.f32 %v1932, %v1933
      %v1935 = vrot.slane %v1934, 1
      %v1936 = vadd.f32 %v1934, %v1935
      %v1937 = vrot.slane %v1917, 4
      %v1938 = vadd.f32 %v1917, %v1937
      %v1939 = vrot.slane %v1938, 2
      %v1940 = vadd.f32 %v1938, %v1939
      %v1941 = vrot.slane %v1940, 1
      %v1942 = vadd.f32 %v1940, %v1941
      %v1943 = vrot.slane %v1918, 4
      %v1944 = vadd.f32 %v1918, %v1943
      %v1945 = vrot.slane %v1944, 2
      %v1946 = vadd.f32 %v1944, %v1945
      %v1947 = vrot.slane %v1946, 1
      %v1948 = vadd.f32 %v1946, %v1947
      %v1949 = vmul.f32 %v1924, 0.125
      %v1950 = vmul.f32 %v1930, 0.125
      %v1951 = vmul.f32 %v1936, 0.125
      %v1952 = vmul.f32 %v1942, 0.125
      %v1953 = vmul.f32 %v1948, 0.125
      %v1954 = vmul.f32 %v1909, %v1909
      %v1955 = vmul.f32 %v1910, %v1910
      %v1956 = vmul.f32 %v1911, %v1911
      %v1957 = vmul.f32 %v1912, %v1912
      %v1958 = vmul.f32 %v1913, %v1913
      %v1959 = vsub.f32 %v1949, %v1954
      %v1960 = vsub.f32 %v1950, %v1955
      %v1961 = vsub.f32 %v1951, %v1956
      %v1962 = vsub.f32 %v1952, %v1957
      %v1963 = vsub.f32 %v1953, %v1958
      %v1964 = vmax.f32 %v1959, 0.0
      %v1965 = vmax.f32 %v1960, 0.0
      %v1966 = vmax.f32 %v1961, 0.0
      %v1967 = vmax.f32 %v1962, 0.0
      %v1968 = vmax.f32 %v1963, 0.0
      %v1969 = vsub.f32 %v1157, %v1909
      %v1970 = vsub.f32 %v1337, %v1910
      %v1971 = vsub.f32 %v1517, %v1911
      %v1972 = vsub.f32 %v1697, %v1912
      %v1973 = vsub.f32 %v1877, %v1913
      %v1974 = vadd.f32 %v1964, 1e-05
      %v1975 = vadd.f32 %v1965, 1e-05
      %v1976 = vadd.f32 %v1966, 1e-05
      %v1977 = vadd.f32 %v1967, 1e-05
      %v1978 = vadd.f32 %v1968, 1e-05
      %v1979 = vrsqrt.pop %v1974
      %v1980 = vmul.f32 %v1979, %v1974
      %v1981 = vmul.f32 %v1980, %v1979
      %v1982 = vmul.f32 0.5, %v1981
      %v1983 = vsub.f32 1.5, %v1982
      %v1984 = vmul.f32 %v1979, %v1983
      %vm1985 = vweird.f32 %v1974
      %vm1986 = vweird.f32 %v1979
      %vm1987 = vmor %vm1985, %vm1986
      %v1988 = vsel %vm1987, %v1979, %v1984
      %v1989 = vrsqrt.pop %v1975
      %v1990 = vmul.f32 %v1989, %v1975
      %v1991 = vmul.f32 %v1990, %v1989
      %v1992 = vmul.f32 0.5, %v1991
      %v1993 = vsub.f32 1.5, %v1992
      %v1994 = vmul.f32 %v1989, %v1993
      %vm1995 = vweird.f32 %v1975
      %vm1996 = vweird.f32 %v1989
      %vm1997 = vmor %vm1995, %vm1996
      %v1998 = vsel %vm1997, %v1989, %v1994
      %v1999 = vrsqrt.pop %v1976
      %v2000 = vmul.f32 %v1999, %v1976
      %v2001 = vmul.f32 %v2000, %v1999
      %v2002 = vmul.f32 0.5, %v2001
      %v2003 = vsub.f32 1.5, %v2002
      %v2004 = vmul.f32 %v1999, %v2003
      %vm2005 = vweird.f32 %v1976
      %vm2006 = vweird.f32 %v1999
      %vm2007 = vmor %vm2005, %vm2006
      %v2008 = vsel %vm2007, %v1999, %v2004
      %v2009 = vrsqrt.pop %v1977
      %v2010 = vmul.f32 %v2009, %v1977
      %v2011 = vmul.f32 %v2010, %v2009
      %v2012 = vmul.f32 0.5, %v2011
      %v2013 = vsub.f32 1.5, %v2012
      %v2014 = vmul.f32 %v2009, %v2013
      %vm2015 = vweird.f32 %v1977
      %vm2016 = vweird.f32 %v2009
      %vm2017 = vmor %vm2015, %vm2016
      %v2018 = vsel %vm2017, %v2009, %v2014
      %v2019 = vrsqrt.pop %v1978
      %v2020 = vmul.f32 %v2019, %v1978
      %v2021 = vmul.f32 %v2020, %v2019
      %v2022 = vmul.f32 0.5, %v2021
      %v2023 = vsub.f32 1.5, %v2022
      %v2024 = vmul.f32 %v2019, %v2023
      %vm2025 = vweird.f32 %v1978
      %vm2026 = vweird.f32 %v2019
      %vm2027 = vmor %vm2025, %vm2026
      %v2028 = vsel %vm2027, %v2019, %v2024
      %v2029 = vmul.f32 %v1969, %v1988
      %v2030 = vmul.f32 %v1970, %v1998
      %v2031 = vmul.f32 %v1971, %v2008
      %v2032 = vmul.f32 %v1972, %v2018
      %v2033 = vmul.f32 %v1973, %v2028
      %v2034 = vld [vmem:[%s2] sm:$0x1f]
      %v2036 = vperm.slane %v2034, 0
      %v2037 = vperm.slane %v2034, 1
      %v2038 = vperm.slane %v2034, 2
      %v2039 = vperm.slane %v2034, 3
      %v2040 = vperm.slane %v2034, 4
      %v2046 = vmul.f32 %v2029, %v2036
      %v2047 = vmul.f32 %v2030, %v2037
      %v2048 = vmul.f32 %v2031, %v2038
      %v2049 = vmul.f32 %v2032, %v2039
      %v2050 = vmul.f32 %v2033, %v2040
      %v2051 = vld [vmem:[%s3] sm:$0x1f]
      %v2053 = vperm.slane %v2051, 0
      %v2054 = vperm.slane %v2051, 1
      %v2055 = vperm.slane %v2051, 2
      %v2056 = vperm.slane %v2051, 3
      %v2057 = vperm.slane %v2051, 4
      %v2063 = vadd.f32 %v2046, %v2053
      %v2064 = vadd.f32 %v2047, %v2054
      %v2065 = vadd.f32 %v2048, %v2055
      %v2066 = vadd.f32 %v2049, %v2056
      %v2067 = vadd.f32 %v2050, %v2057
      %v2068 = vmax.f32 %v2063, 0.0
      %v2069 = vmax.f32 %v2064, 0.0
      %v2070 = vmax.f32 %v2065, 0.0
      %v2071 = vmax.f32 %v2066, 0.0
      %v2072 = vmax.f32 %v2067, 0.0
      %vm2073 = vcmask 1043456
      %v2074 = vsel %vm2073, %v2068, -inf
      %v2075 = vrot.slane %v2074, 4
      %v2076 = vmax.f32 %v2074, %v2075
      %v2077 = vrot.slane %v2076, 2
      %v2078 = vmax.f32 %v2076, %v2077
      %v2079 = vrot.slane %v2078, 1
      %v2080 = vmax.f32 %v2078, %v2079
      %v2081 = vsel %vm2073, %v2069, -inf
      %v2082 = vrot.slane %v2081, 4
      %v2083 = vmax.f32 %v2081, %v2082
      %v2084 = vrot.slane %v2083, 2
      %v2085 = vmax.f32 %v2083, %v2084
      %v2086 = vrot.slane %v2085, 1
      %v2087 = vmax.f32 %v2085, %v2086
      %v2088 = vsel %vm2073, %v2070, -inf
      %v2089 = vrot.slane %v2088, 4
      %v2090 = vmax.f32 %v2088, %v2089
      %v2091 = vrot.slane %v2090, 2
      %v2092 = vmax.f32 %v2090, %v2091
      %v2093 = vrot.slane %v2092, 1
      %v2094 = vmax.f32 %v2092, %v2093
      %v2095 = vsel %vm2073, %v2071, -inf
      %v2096 = vrot.slane %v2095, 4
      %v2097 = vmax.f32 %v2095, %v2096
      %v2098 = vrot.slane %v2097, 2
      %v2099 = vmax.f32 %v2097, %v2098
      %v2100 = vrot.slane %v2099, 1
      %v2101 = vmax.f32 %v2099, %v2100
      %v2102 = vsel %vm2073, %v2072, -inf
      %v2103 = vrot.slane %v2102, 4
      %v2104 = vmax.f32 %v2102, %v2103
      %v2105 = vrot.slane %v2104, 2
      %v2106 = vmax.f32 %v2104, %v2105
      %v2107 = vrot.slane %v2106, 1
      %v2108 = vmax.f32 %v2106, %v2107
      %vm2109 = vcmask 1047556
      %v2110 = vsel %vm2109, %v2068, -inf
      %v2111 = vrot.slane %v2110, 4
      %v2112 = vmax.f32 %v2110, %v2111
      %v2113 = vrot.slane %v2112, 2
      %v2114 = vmax.f32 %v2112, %v2113
      %v2115 = vrot.slane %v2114, 1
      %v2116 = vmax.f32 %v2114, %v2115
      %v2117 = vsel %vm2109, %v2069, -inf
      %v2118 = vrot.slane %v2117, 4
      %v2119 = vmax.f32 %v2117, %v2118
      %v2120 = vrot.slane %v2119, 2
      %v2121 = vmax.f32 %v2119, %v2120
      %v2122 = vrot.slane %v2121, 1
      %v2123 = vmax.f32 %v2121, %v2122
      %v2124 = vsel %vm2109, %v2070, -inf
      %v2125 = vrot.slane %v2124, 4
      %v2126 = vmax.f32 %v2124, %v2125
      %v2127 = vrot.slane %v2126, 2
      %v2128 = vmax.f32 %v2126, %v2127
      %v2129 = vrot.slane %v2128, 1
      %v2130 = vmax.f32 %v2128, %v2129
      %v2131 = vsel %vm2109, %v2071, -inf
      %v2132 = vrot.slane %v2131, 4
      %v2133 = vmax.f32 %v2131, %v2132
      %v2134 = vrot.slane %v2133, 2
      %v2135 = vmax.f32 %v2133, %v2134
      %v2136 = vrot.slane %v2135, 1
      %v2137 = vmax.f32 %v2135, %v2136
      %v2138 = vsel %vm2109, %v2072, -inf
      %v2139 = vrot.slane %v2138, 4
      %v2140 = vmax.f32 %v2138, %v2139
      %v2141 = vrot.slane %v2140, 2
      %v2142 = vmax.f32 %v2140, %v2141
      %v2143 = vrot.slane %v2142, 1
      %v2144 = vmax.f32 %v2142, %v2143
      %vm2145 = vcmask 1040384
      %v2146 = vsel %vm2145, %v2080, %v2116
      %v2147 = vsel %vm2145, %v2087, %v2123
      %v2148 = vsel %vm2145, %v2094, %v2130
      %v2149 = vsel %vm2145, %v2101, %v2137
      %v2150 = vsel %vm2145, %v2108, %v2144
      %v2151 = vld [vmem:[%s4] sm:$0xff]
      %v2152 = vld [vmem:[%s4 + $0x8] sm:$0xff]
      %v2153 = vld [vmem:[%s4 + $0x10] sm:$0xff]
      %v2154 = vld [vmem:[%s4 + $0x18] sm:$0xff]
      %v2155 = vld [vmem:[%s4 + $0x20] sm:$0xff]
      %v2156 = vld [vmem:[%s4 + $0x28] sm:$0xff]
      %v2157 = vld [vmem:[%s4 + $0x30] sm:$0xff]
      %v2158 = vld [vmem:[%s4 + $0x38] sm:$0xff]
      %v2159 = vld [vmem:[%s4 + $0x40] sm:$0xff]
      %v2160 = vld [vmem:[%s4 + $0x48] sm:$0xff]
      %v2161 = vld [vmem:[%s4 + $0x50] sm:$0xff]
      %v2162 = vld [vmem:[%s4 + $0x58] sm:$0xff]
      %v2163 = vld [vmem:[%s4 + $0x60] sm:$0xff]
      %v2164 = vld [vmem:[%s4 + $0x68] sm:$0xff]
      %v2165 = vld [vmem:[%s4 + $0x70] sm:$0xff]
      %v2166 = vld [vmem:[%s4 + $0x78] sm:$0xff]
      %v2167 = vld [vmem:[%s4 + $0x80] sm:$0xff]
      %v2168 = vld [vmem:[%s4 + $0x88] sm:$0xff]
      %v2169 = vld [vmem:[%s4 + $0x90] sm:$0xff]
      %v2170 = vld [vmem:[%s4 + $0x98] sm:$0xff]
      %v2171 = vld [vmem:[%s4 + $0xa0] sm:$0xff]
      %v2172 = vld [vmem:[%s4 + $0xa8] sm:$0xff]
      %v2173 = vld [vmem:[%s4 + $0xb0] sm:$0xff]
      %v2174 = vld [vmem:[%s4 + $0xb8] sm:$0xff]
      %v2175 = vld [vmem:[%s4 + $0xc0] sm:$0xff]
      %v2176 = vld [vmem:[%s4 + $0xc8] sm:$0xff]
      %v2177 = vld [vmem:[%s4 + $0xd0] sm:$0xff]
      %v2178 = vld [vmem:[%s4 + $0xd8] sm:$0xff]
      %v2179 = vld [vmem:[%s4 + $0xe0] sm:$0xff]
      %v2180 = vld [vmem:[%s4 + $0xe8] sm:$0xff]
      %v2181 = vld [vmem:[%s4 + $0xf0] sm:$0xff]
      %v2182 = vld [vmem:[%s4 + $0xf8] sm:$0xff]
      %v2183 = vld [vmem:[%s4 + $0x100] sm:$0xff]
      %v2184 = vld [vmem:[%s4 + $0x108] sm:$0xff]
      %v2185 = vld [vmem:[%s4 + $0x110] sm:$0xff]
      %v2186 = vld [vmem:[%s4 + $0x118] sm:$0xff]
      %v2187 = vld [vmem:[%s4 + $0x120] sm:$0xff]
      %v2188 = vld [vmem:[%s4 + $0x128] sm:$0xff]
      %v2189 = vld [vmem:[%s4 + $0x130] sm:$0xff]
      %v2190 = vld [vmem:[%s4 + $0x138] sm:$0xff]
      %v2191 = vld [vmem:[%s4 + $0x140] sm:$0xff]
      %v2192 = vld [vmem:[%s4 + $0x148] sm:$0xff]
      %v2193 = vld [vmem:[%s4 + $0x150] sm:$0xff]
      %v2194 = vld [vmem:[%s4 + $0x158] sm:$0xff]
      %v2195 = vld [vmem:[%s4 + $0x160] sm:$0xff]
      %v2196 = vld [vmem:[%s4 + $0x168] sm:$0xff]
      %v2197 = vld [vmem:[%s4 + $0x170] sm:$0xff]
      %v2198 = vld [vmem:[%s4 + $0x178] sm:$0xff]
      %v2199 = vld [vmem:[%s4 + $0x180] sm:$0xff]
      %v2200 = vld [vmem:[%s4 + $0x188] sm:$0xff]
      %v2201 = vld [vmem:[%s4 + $0x190] sm:$0xff]
      %v2202 = vld [vmem:[%s4 + $0x198] sm:$0xff]
      %v2203 = vld [vmem:[%s4 + $0x1a0] sm:$0xff]
      %v2204 = vld [vmem:[%s4 + $0x1a8] sm:$0xff]
      %v2205 = vld [vmem:[%s4 + $0x1b0] sm:$0xff]
      %v2206 = vld [vmem:[%s4 + $0x1b8] sm:$0xff]
      %v2207 = vld [vmem:[%s4 + $0x1c0] sm:$0xff]
      %v2208 = vld [vmem:[%s4 + $0x1c8] sm:$0xff]
      %v2209 = vld [vmem:[%s4 + $0x1d0] sm:$0xff]
      %v2210 = vld [vmem:[%s4 + $0x1d8] sm:$0xff]
      %v2211 = vld [vmem:[%s4 + $0x1e0] sm:$0xff]
      %v2212 = vld [vmem:[%s4 + $0x1e8] sm:$0xff]
      %v2213 = vld [vmem:[%s4 + $0x1f0] sm:$0xff]
      %v2214 = vld [vmem:[%s4 + $0x1f8] sm:$0xff]
      %v2215 = vld [vmem:[%s4 + $0x200] sm:$0xff]
      %v2216 = vld [vmem:[%s4 + $0x208] sm:$0xff]
      %v2217 = vld [vmem:[%s4 + $0x210] sm:$0xff]
      %v2218 = vld [vmem:[%s4 + $0x218] sm:$0xff]
      %v2219 = vld [vmem:[%s4 + $0x220] sm:$0xff]
      %v2220 = vld [vmem:[%s4 + $0x228] sm:$0xff]
      %v2221 = vld [vmem:[%s4 + $0x230] sm:$0xff]
      %v2222 = vld [vmem:[%s4 + $0x238] sm:$0xff]
      %v2223 = vld [vmem:[%s4 + $0x240] sm:$0xff]
      %v2224 = vld [vmem:[%s4 + $0x248] sm:$0xff]
      %v2225 = vld [vmem:[%s4 + $0x250] sm:$0xff]
      %v2226 = vld [vmem:[%s4 + $0x258] sm:$0xff]
      %v2227 = vld [vmem:[%s4 + $0x260] sm:$0xff]
      %v2228 = vld [vmem:[%s4 + $0x268] sm:$0xff]
      %v2229 = vld [vmem:[%s4 + $0x270] sm:$0xff]
      %v2230 = vld [vmem:[%s4 + $0x278] sm:$0xff]
      %v2231 = vld [vmem:[%s5] sm:$0x1]
      %v2233 = vperm.slane %v2231, 0
      %2235 = vmatpush.msra.mxu0 %v2166
      %2236 = vmatpush.msra.mxu0 %v2165
      %2237 = vmatpush.msra.mxu0 %v2164
      %2238 = vmatpush.msra.mxu0 %v2163
      %2239 = vmatpush.msra.mxu0 %v2162
      %2240 = vmatpush.msra.mxu0 %v2161
      %2241 = vmatpush.msra.mxu0 %v2160
      %2242 = vmatpush.msra.mxu0 %v2159
      %2243 = vmatpush.msra.mxu0 %v2158
      %2244 = vmatpush.msra.mxu0 %v2157
      %2245 = vmatpush.msra.mxu0 %v2156
      %2246 = vmatpush.msra.mxu0 %v2155
      %2247 = vmatpush.msra.mxu0 %v2154
      %2248 = vmatpush.msra.mxu0 %v2153
      %2249 = vmatpush.msra.mxu0 %v2152
      %2250 = vmatpush.msra.mxu0 %v2151
      %2251 = vmatmul.f32.gmra.mxu0 %v2146
      %v2252 = vpop.f32.mrf.mxu0
      %v2253 = vadd.f32 %v2233, %v2252
      %2254 = vdwg.mxu0
      %2255 = vmatpush.msra.mxu0 %v2182
      %2256 = vmatpush.msra.mxu0 %v2181
      %2257 = vmatpush.msra.mxu0 %v2180
      %2258 = vmatpush.msra.mxu0 %v2179
      %2259 = vmatpush.msra.mxu0 %v2178
      %2260 = vmatpush.msra.mxu0 %v2177
      %2261 = vmatpush.msra.mxu0 %v2176
      %2262 = vmatpush.msra.mxu0 %v2175
      %2263 = vmatpush.msra.mxu0 %v2174
      %2264 = vmatpush.msra.mxu0 %v2173
      %2265 = vmatpush.msra.mxu0 %v2172
      %2266 = vmatpush.msra.mxu0 %v2171
      %2267 = vmatpush.msra.mxu0 %v2170
      %2268 = vmatpush.msra.mxu0 %v2169
      %2269 = vmatpush.msra.mxu0 %v2168
      %2270 = vmatpush.msra.mxu0 %v2167
      %2271 = vmatmul.f32.gmra.mxu0 %v2147
      %v2272 = vpop.f32.mrf.mxu0
      %v2273 = vadd.f32 %v2253, %v2272
      %2274 = vdwg.mxu0
      %2275 = vmatpush.msra.mxu0 %v2198
      %2276 = vmatpush.msra.mxu0 %v2197
      %2277 = vmatpush.msra.mxu0 %v2196
      %2278 = vmatpush.msra.mxu0 %v2195
      %2279 = vmatpush.msra.mxu0 %v2194
      %2280 = vmatpush.msra.mxu0 %v2193
      %2281 = vmatpush.msra.mxu0 %v2192
      %2282 = vmatpush.msra.mxu0 %v2191
      %2283 = vmatpush.msra.mxu0 %v2190
      %2284 = vmatpush.msra.mxu0 %v2189
      %2285 = vmatpush.msra.mxu0 %v2188
      %2286 = vmatpush.msra.mxu0 %v2187
      %2287 = vmatpush.msra.mxu0 %v2186
      %2288 = vmatpush.msra.mxu0 %v2185
      %2289 = vmatpush.msra.mxu0 %v2184
      %2290 = vmatpush.msra.mxu0 %v2183
      %2291 = vmatmul.f32.gmra.mxu0 %v2148
      %v2292 = vpop.f32.mrf.mxu0
      %v2293 = vadd.f32 %v2273, %v2292
      %2294 = vdwg.mxu0
      %2295 = vmatpush.msra.mxu0 %v2214
      %2296 = vmatpush.msra.mxu0 %v2213
      %2297 = vmatpush.msra.mxu0 %v2212
      %2298 = vmatpush.msra.mxu0 %v2211
      %2299 = vmatpush.msra.mxu0 %v2210
      %2300 = vmatpush.msra.mxu0 %v2209
      %2301 = vmatpush.msra.mxu0 %v2208
      %2302 = vmatpush.msra.mxu0 %v2207
      %2303 = vmatpush.msra.mxu0 %v2206
      %2304 = vmatpush.msra.mxu0 %v2205
      %2305 = vmatpush.msra.mxu0 %v2204
      %2306 = vmatpush.msra.mxu0 %v2203
      %2307 = vmatpush.msra.mxu0 %v2202
      %2308 = vmatpush.msra.mxu0 %v2201
      %2309 = vmatpush.msra.mxu0 %v2200
      %2310 = vmatpush.msra.mxu0 %v2199
      %2311 = vmatmul.f32.gmra.mxu0 %v2149
      %v2312 = vpop.f32.mrf.mxu0
      %v2313 = vadd.f32 %v2293, %v2312
      %2314 = vdwg.mxu0
      %2315 = vmatpush.msra.mxu0 %v2230
      %2316 = vmatpush.msra.mxu0 %v2229
      %2317 = vmatpush.msra.mxu0 %v2228
      %2318 = vmatpush.msra.mxu0 %v2227
      %2319 = vmatpush.msra.mxu0 %v2226
      %2320 = vmatpush.msra.mxu0 %v2225
      %2321 = vmatpush.msra.mxu0 %v2224
      %2322 = vmatpush.msra.mxu0 %v2223
      %2323 = vmatpush.msra.mxu0 %v2222
      %2324 = vmatpush.msra.mxu0 %v2221
      %2325 = vmatpush.msra.mxu0 %v2220
      %2326 = vmatpush.msra.mxu0 %v2219
      %2327 = vmatpush.msra.mxu0 %v2218
      %2328 = vmatpush.msra.mxu0 %v2217
      %2329 = vmatpush.msra.mxu0 %v2216
      %2330 = vmatpush.msra.mxu0 %v2215
      %2331 = vmatmul.f32.gmra.mxu0 %v2150
      %v2332 = vpop.f32.mrf.mxu0
      %v2333 = vadd.f32 %v2313, %v2332
      %2334 = vdwg.mxu0
      %v2335 = vmax.f32 %v2333, 0.0
      %2336 = vst [vmem:[%s249] sm:$0x3] %v2335
      %p2337 = scmp.lt.s32.totalorder %s17, 1
      %s2338 = scalar_select %p2337, %s17, 1
      %s2339 = smul.addr %s2338, 2
      %s2340 = scalar_lea.vmem %s6, %s2339
      // Predicated region
      $region45: #{siamese_forward.7} parent=43 // pred_check
        %p2341 = pneg %p166
      $region46: #{siamese_forward.7} parent=43 // pred_check_branch
        %2343 = sbr.rel (%p2341) target = $region48
      $region47: #{siamese_forward.7} parent=43 // pred_region
        _
      $region48: #{siamese_forward.7} parent=43 // pred_fallthru
        _
    $region44: #{siamese_forward.7} parent=5 // pred_fallthru
      _
    %p2344 = scmp.le.s32.totalorder 2, %s12
    // Predicated region
    $region49: #{siamese_forward.7} parent=5 // pred_check
      %p2345 = pneg %p2344
    $region50: #{siamese_forward.7} parent=5 // pred_check_branch
      %2347 = sbr.rel (%p2345) target = $region52
    $region51: #{siamese_forward.7} parent=5 // pred_region
      %s2348 = ssub.s32 %s12, 2
      // Predicated region
      $region53: #{siamese_forward.7} parent=51 // pred_check
        %p2349 = pneg %p172
      $region54: #{siamese_forward.7} parent=51 // pred_check_branch
        %2351 = sbr.rel (%p2349) target = $region56
      $region55: #{siamese_forward.7} parent=51 // pred_region
        %p2352 = scmp.lt.s32.totalorder %s18, 1
        %s2353 = scalar_select %p2352, %s18, 1
        %s2354 = smul.addr %s2353, 2
        %s2355 = scalar_lea.vmem %s6, %s2354
      $region56: #{siamese_forward.7} parent=51 // pred_fallthru
        _
    $region52: #{siamese_forward.7} parent=5 // pred_fallthru
      _
  $region6: #{siamese_forward.7} parent=0 // loop_footer
    %s16 = sadd.s32 1, %s12
  $region7: #{siamese_forward.7} parent=0 // loop_footer_branch
    %11 = sbr.rel target = $region3
  $region8: #{siamese_forward.7} parent=0 // loop_exit
    _

</llo_original>
